<compile_context>
chip_gen: v5e
topology: v5e:2x2
jax: 0.10.0
libtpu: 0.0.40
codegen_flags: <defaults>
</compile_context>

<pallas_src>
import math

import jax
import jax.numpy as jnp
from jax import lax
from jax.experimental import pallas as pl
from jax.experimental.pallas import tpu as pltpu

# ----------------------------- config ---------------------------------------
D_MODEL = 32
NHEAD = 4
HEAD_DIM = D_MODEL // NHEAD
DIM_FF = 64
N_ENC_LAYERS = 2
N_DEC_LAYERS = 2
SRC_VOCAB = 50
TGT_VOCAB = 60
BATCH = 2
SRC_LEN = 16
TGT_LEN = 8
LN_EPS = 1e-5
ATT_SCALE = 1.0 / math.sqrt(HEAD_DIM)

# ----------------------------- weight slab layout ----------------------------
_SLAB_ALIGN = 8          # every piece starts on an 8-row (sublane) boundary
SLAB_W = 3 * D_MODEL     # 96 lanes (lane-dense enough; padded to 128 in VMEM)


def _build_slab_layout():
    entries = []

    def add(name, r, c):
        entries.append((name, r, c))

    for l in range(N_ENC_LAYERS):
        p = f"enc{l}_"
        add(p + "ln1_a", 1, D_MODEL); add(p + "ln1_b", 1, D_MODEL)
        add(p + "wqkv", D_MODEL, 3 * D_MODEL)
        add(p + "wo", D_MODEL, D_MODEL)
        add(p + "ln2_a", 1, D_MODEL); add(p + "ln2_b", 1, D_MODEL)
        add(p + "w1", D_MODEL, DIM_FF); add(p + "b1", 1, DIM_FF)
        add(p + "w2", DIM_FF, D_MODEL); add(p + "b2", 1, D_MODEL)
    add("enc_lnf_a", 1, D_MODEL); add("enc_lnf_b", 1, D_MODEL)

    for l in range(N_DEC_LAYERS):
        p = f"dec{l}_"
        add(p + "ln1_a", 1, D_MODEL); add(p + "ln1_b", 1, D_MODEL)
        add(p + "self_wqkv", D_MODEL, 3 * D_MODEL)
        add(p + "self_wo", D_MODEL, D_MODEL)
        add(p + "ln2_a", 1, D_MODEL); add(p + "ln2_b", 1, D_MODEL)
        add(p + "cross_wqkv", D_MODEL, 3 * D_MODEL)
        add(p + "cross_wo", D_MODEL, D_MODEL)
        add(p + "ln3_a", 1, D_MODEL); add(p + "ln3_b", 1, D_MODEL)
        add(p + "w1", D_MODEL, DIM_FF); add(p + "b1", 1, DIM_FF)
        add(p + "w2", DIM_FF, D_MODEL); add(p + "b2", 1, D_MODEL)
    add("dec_lnf_a", 1, D_MODEL); add("dec_lnf_b", 1, D_MODEL)

    off, row = {}, 0
    for name, r, c in entries:
        off[name] = (row, r, c)
        row = -(-(row + r) // _SLAB_ALIGN) * _SLAB_ALIGN
    return off, row


SLAB_OFF, SLAB_ROWS = _build_slab_layout()   # 1024 rows x 96 cols (fp32, ~384 KiB)


def pack_slab(named):
    slab = jnp.zeros((SLAB_ROWS, SLAB_W), jnp.float32)
    for name, (r0, nr, nc) in SLAB_OFF.items():
        slab = slab.at[r0:r0 + nr, 0:nc].set(named[name].reshape(nr, nc))
    return slab


# ------------------------ in-kernel building blocks --------------------------
def _ln(x, a, b):
    # Matches the PyTorch module: alpha*(x-mean)/(std+eps)+bias, unbiased std (ddof=1).
    # Exact divide (review: do not use approx reciprocal inside LayerNorm).
    mean = jnp.mean(x, axis=-1, keepdims=True)
    diff = x - mean
    var = jnp.sum(diff * diff, axis=-1, keepdims=True) * (1.0 / (D_MODEL - 1))
    return a * (diff / (jnp.sqrt(var) + LN_EPS)) + b


def _attention(q, k, v, wo, sq, sk):
    # q: (B*sq, D), k/v: (B*sk, D), wo: (D, D). Returns (B*sq, D).
    # Only the inherently tiny per-(batch, head) QK^T / PV matmuls stay per-head;
    # the output projection uses per-head ROWS of the original Wo (math identical
    # to concat-heads @ Wo), avoiding any lane-dim concatenation.
    nb = q.shape[0] // sq
    acc = [None] * nb
    for h in range(NHEAD):
        lo = h * HEAD_DIM
        q_h = q[:, lo:lo + HEAD_DIM]
        k_h = k[:, lo:lo + HEAD_DIM]
        v_h = v[:, lo:lo + HEAD_DIM]
        wo_h = wo[lo:lo + HEAD_DIM, :]                       # (Dh, D)
        for b in range(nb):
            qb = q_h[b * sq:(b + 1) * sq, :]
            kb = k_h[b * sk:(b + 1) * sk, :]
            vb = v_h[b * sk:(b + 1) * sk, :]
            s = lax.dot_general(qb, kb, (((1,), (1,)), ((), ())),
                                preferred_element_type=jnp.float32) * ATT_SCALE
            s = s - jnp.max(s, axis=-1, keepdims=True)
            p = jnp.exp(s)
            p = p * pl.reciprocal(jnp.sum(p, axis=-1, keepdims=True), approx=True)
            o = jnp.dot(p, vb, preferred_element_type=jnp.float32)        # (sq, Dh)
            c = jnp.dot(o, wo_h, preferred_element_type=jnp.float32)      # (sq, D)
            acc[b] = c if acc[b] is None else acc[b] + c
    return jnp.concatenate(acc, axis=0) if nb > 1 else acc[0]


def _self_mha(x, wqkv, wo, s_len):
    # ONE lane-dense (B*S,32)x(32,96) projection for all heads / Q / K / V.
    qkv = jnp.dot(x, wqkv, preferred_element_type=jnp.float32)
    q = qkv[:, 0:D_MODEL]
    k = qkv[:, D_MODEL:2 * D_MODEL]
    v = qkv[:, 2 * D_MODEL:3 * D_MODEL]
    return _attention(q, k, v, wo, s_len, s_len)


def _cross_mha(x, enc, wq, wkv, wo, sq, sk):
    q = jnp.dot(x, wq, preferred_element_type=jnp.float32)        # (B*sq, 32)
    kv = jnp.dot(enc, wkv, preferred_element_type=jnp.float32)    # (B*sk, 64)
    k = kv[:, 0:D_MODEL]
    v = kv[:, D_MODEL:2 * D_MODEL]
    return _attention(q, k, v, wo, sq, sk)


def _ffn(x, w1, b1, w2, b2):
    h = jnp.maximum(jnp.dot(x, w1, preferred_element_type=jnp.float32) + b1, 0.0)
    return jnp.dot(h, w2, preferred_element_type=jnp.float32) + b2


# ----------------------------- fused kernel ----------------------------------
def _transformer_kernel(src_ref, tgt_ref, slab_ref, out_ref):
    def w(name, c0=0, c1=None):
        r0, nr, nc = SLAB_OFF[name]
        return slab_ref[r0:r0 + nr, c0:(nc if c1 is None else c1)]   # static slice load

    # ---- encoder stack (rows = BATCH*SRC_LEN) ----
    x = src_ref[...]
    for l in range(N_ENC_LAYERS):
        p = f"enc{l}_"
        h = _ln(x, w(p + "ln1_a"), w(p + "ln1_b"))
        x = x + _self_mha(h, w(p + "wqkv"), w(p + "wo"), SRC_LEN)
        h = _ln(x, w(p + "ln2_a"), w(p + "ln2_b"))
        x = x + _ffn(h, w(p + "w1"), w(p + "b1"), w(p + "w2"), w(p + "b2"))
    enc = _ln(x, w("enc_lnf_a"), w("enc_lnf_b"))        # stays in vregs/VMEM

    # ---- decoder stack (rows = BATCH*TGT_LEN) ----
    y = tgt_ref[...]
    for l in range(N_DEC_LAYERS):
        p = f"dec{l}_"
        h = _ln(y, w(p + "ln1_a"), w(p + "ln1_b"))
        y = y + _self_mha(h, w(p + "self_wqkv"), w(p + "self_wo"), TGT_LEN)
        h = _ln(y, w(p + "ln2_a"), w(p + "ln2_b"))
        y = y + _cross_mha(h, enc,
                           w(p + "cross_wqkv", 0, D_MODEL),
                           w(p + "cross_wqkv", D_MODEL, 3 * D_MODEL),
                           w(p + "cross_wo"), TGT_LEN, SRC_LEN)
        h = _ln(y, w(p + "ln3_a"), w(p + "ln3_b"))
        y = y + _ffn(h, w(p + "w1"), w(p + "b1"), w(p + "w2"), w(p + "b2"))
    out_ref[...] = _ln(y, w("dec_lnf_a"), w("dec_lnf_b")).astype(out_ref.dtype)


# ----------------------------- pallas_call wrapper ----------------------------
def _pallas_transformer(src_flat, tgt_flat, slab):
    ns, d = src_flat.shape
    nt, _ = tgt_flat.shape
    return pl.pallas_call(
        _transformer_kernel,
        grid=(1,),                                   # single step: one dispatch, no
        in_specs=[                                   # per-grid-step pipeline overhead
            pl.BlockSpec((ns, d), lambda i: (0, 0)),
            pl.BlockSpec((nt, d), lambda i: (0, 0)),
            pl.BlockSpec(slab.shape, lambda i: (0, 0)),   # one weight slab = one DMA
        ],
        out_specs=pl.BlockSpec((nt, d), lambda i: (0, 0)),
        out_shape=jax.ShapeDtypeStruct((nt, d), jnp.float32),
        compiler_params=pltpu.CompilerParams(dimension_semantics=("arbitrary",)),
    )(src_flat, tgt_flat, slab)


# ----------------------------- parameters ------------------------------------
def make_pos_encoding(max_len, d_model):
    pos = jnp.arange(max_len, dtype=jnp.float32)[:, None]
    div = jnp.exp(
        jnp.arange(0, d_model, 2, dtype=jnp.float32) * -(math.log(10000.0) / d_model))
    scaled = pos * div
    pe = jnp.zeros((max_len, d_model), jnp.float32)
    pe = pe.at[:, 0::2].set(jnp.sin(scaled))
    pe = pe.at[:, 1::2].set(jnp.cos(scaled))
    return pe[None]  # (1, max_len, d_model)


def _xavier(key, shape):
    fan_in, fan_out = shape
    limit = math.sqrt(6.0 / (fan_in + fan_out))
    return jax.random.uniform(key, shape, jnp.float32, -limit, limit)


def init_params(key):
    k_se, k_te, k_rest = jax.random.split(key, 3)
    keys = iter(jax.random.split(k_rest, 64))
    named = {}

    def nk():
        return next(keys)

    def add_ln(name):
        named[name + "_a"] = jnp.ones((1, D_MODEL), jnp.float32)
        named[name + "_b"] = jnp.zeros((1, D_MODEL), jnp.float32)

    def add_mha(prefix):
        wq = _xavier(nk(), (D_MODEL, D_MODEL))
        wk = _xavier(nk(), (D_MODEL, D_MODEL))
        wv = _xavier(nk(), (D_MODEL, D_MODEL))
        named[prefix + "wqkv"] = jnp.concatenate([wq, wk, wv], axis=1)   # (32, 96)
        named[prefix + "wo"] = _xavier(nk(), (D_MODEL, D_MODEL))         # (32, 32)

    def add_ffn(prefix):
        named[prefix + "w1"] = _xavier(nk(), (D_MODEL, DIM_FF))
        named[prefix + "b1"] = jnp.zeros((1, DIM_FF), jnp.float32)
        named[prefix + "w2"] = _xavier(nk(), (DIM_FF, D_MODEL))
        named[prefix + "b2"] = jnp.zeros((1, D_MODEL), jnp.float32)

    for l in range(N_ENC_LAYERS):
        p = f"enc{l}_"
        add_ln(p + "ln1"); add_mha(p); add_ln(p + "ln2"); add_ffn(p)
    add_ln("enc_lnf")
    for l in range(N_DEC_LAYERS):
        p = f"dec{l}_"
        add_ln(p + "ln1"); add_mha(p + "self_")
        add_ln(p + "ln2"); add_mha(p + "cross_")
        add_ln(p + "ln3"); add_ffn(p)
    add_ln("dec_lnf")

    return {
        "named": named,
        "slab": pack_slab(named),
        "src_emb": _xavier(k_se, (SRC_VOCAB, D_MODEL)),
        "tgt_emb": _xavier(k_te, (TGT_VOCAB, D_MODEL)),
        "src_pe": make_pos_encoding(SRC_LEN, D_MODEL),
        "tgt_pe": make_pos_encoding(TGT_LEN, D_MODEL),
    }


# ----------------------------- forward ---------------------------------------
def transformer_forward(params, src_tokens, tgt_tokens):
    # src_mask / tgt_mask == None (reference forward default); dropout = eval identity.
    d_sqrt = math.sqrt(D_MODEL)
    src = jnp.take(params["src_emb"], src_tokens, axis=0) * d_sqrt
    src = src + params["src_pe"][:, :src.shape[1], :]
    tgt = jnp.take(params["tgt_emb"], tgt_tokens, axis=0) * d_sqrt
    tgt = tgt + params["tgt_pe"][:, :tgt.shape[1], :]

    B = src.shape[0]
    out = _pallas_transformer(src.reshape(B * SRC_LEN, D_MODEL),
                              tgt.reshape(B * TGT_LEN, D_MODEL),
                              params["slab"])
    return out.reshape(B, TGT_LEN, D_MODEL)


# ----------------------------- pure-JAX reference -----------------------------
def _ln_ref(x, a, b):
    mean = jnp.mean(x, axis=-1, keepdims=True)
    diff = x - mean
    var = jnp.sum(diff * diff, axis=-1, keepdims=True) / (D_MODEL - 1)
    return a * diff / (jnp.sqrt(var) + LN_EPS) + b


def _mha_ref(q_in, kv_in, wqkv, wo):
    q = q_in @ wqkv[:, 0:D_MODEL]
    k = kv_in @ wqkv[:, D_MODEL:2 * D_MODEL]
    v = kv_in @ wqkv[:, 2 * D_MODEL:3 * D_MODEL]
    B, Sq, _ = q.shape
    Sk = k.shape[1]
    qh = q.reshape(B, Sq, NHEAD, HEAD_DIM).transpose(0, 2, 1, 3)
    kh = k.reshape(B, Sk, NHEAD, HEAD_DIM).transpose(0, 2, 1, 3)
    vh = v.reshape(B, Sk, NHEAD, HEAD_DIM).transpose(0, 2, 1, 3)
    s = jnp.einsum("bhqd,bhkd->bhqk", qh, kh) * ATT_SCALE
    p = jax.nn.softmax(s, axis=-1)
    o = jnp.einsum("bhqk,bhkd->bhqd", p, vh)
    o = o.transpose(0, 2, 1, 3).reshape(B, Sq, D_MODEL)
    return o @ wo


def _ffn_ref(x, w1, b1, w2, b2):
    return jnp.maximum(x @ w1 + b1, 0.0) @ w2 + b2


def transformer_reference(params, src_tokens, tgt_tokens):
    g = params["named"]
    d_sqrt = math.sqrt(D_MODEL)
    x = jnp.take(params["src_emb"], src_tokens, axis=0) * d_sqrt
    x = x + params["src_pe"][:, :x.shape[1], :]
    for l in range(N_ENC_LAYERS):
        p = f"enc{l}_"
        h = _ln_ref(x, g[p + "ln1_a"], g[p + "ln1_b"])
        x = x + _mha_ref(h, h, g[p + "wqkv"], g[p + "wo"])
        h = _ln_ref(x, g[p + "ln2_a"], g[p + "ln2_b"])
        x = x + _ffn_ref(h, g[p + "w1"], g[p + "b1"], g[p + "w2"], g[p + "b2"])
    enc = _ln_ref(x, g["enc_lnf_a"], g["enc_lnf_b"])

    y = jnp.take(params["tgt_emb"], tgt_tokens, axis=0) * d_sqrt
    y = y + params["tgt_pe"][:, :y.shape[1], :]
    for l in range(N_DEC_LAYERS):
        p = f"dec{l}_"
        h = _ln_ref(y, g[p + "ln1_a"], g[p + "ln1_b"])
        y = y + _mha_ref(h, h, g[p + "self_wqkv"], g[p + "self_wo"])
        h = _ln_ref(y, g[p + "ln2_a"], g[p + "ln2_b"])
        y = y + _mha_ref(h, enc, g[p + "cross_wqkv"], g[p + "cross_wo"])
        h = _ln_ref(y, g[p + "ln3_a"], g[p + "ln3_b"])
        y = y + _ffn_ref(h, g[p + "w1"], g[p + "b1"], g[p + "w2"], g[p + "b2"])
    return _ln_ref(y, g["dec_lnf_a"], g["dec_lnf_b"])


# ----------------------------- main -------------------------------------------
if __name__ == "__main__":
    key = jax.random.PRNGKey(0)
    k_params, k_src, k_tgt = jax.random.split(key, 3)
    params = init_params(k_params)

    src_tokens = jax.random.randint(k_src, (BATCH, SRC_LEN), 0, SRC_VOCAB, dtype=jnp.int32)
    tgt_tokens = jax.random.randint(k_tgt, (BATCH, TGT_LEN), 0, TGT_VOCAB, dtype=jnp.int32)

    fwd = jax.jit(transformer_forward)
    out = jax.block_until_ready(fwd(params, src_tokens, tgt_tokens))

    assert out.shape == (BATCH, TGT_LEN, D_MODEL), out.shape
    assert bool(jnp.all(jnp.isfinite(out)))

    # Correctness vs. pure-JAX reference. LayerNorm is now exact; remaining error
    # comes from the approx (EUP) softmax reciprocal and MXU vs XLA rounding.
    ref = jax.block_until_ready(jax.jit(transformer_reference)(params, src_tokens, tgt_tokens))
    err = float(jnp.max(jnp.abs(out - ref)))
    scale = float(jnp.max(jnp.abs(ref)))
    assert err <= 2e-2 * scale + 1e-3, (err, scale)

    print("KERNEL_OK")
</pallas_src>

<mosaic_0001>
module attributes {stable_mosaic.version = 11 : i64} {
  func.func @_transformer_kernel(%arg0: i32, %arg1: memref<32x32xf32, #tpu.memory_space<vmem>>, %arg2: memref<16x32xf32, #tpu.memory_space<vmem>>, %arg3: memref<1024x96xf32, #tpu.memory_space<vmem>>, %arg4: memref<16x32xf32, #tpu.memory_space<vmem>>) attributes {dimension_semantics = [#tpu.dimension_semantics<arbitrary>], iteration_bounds = array<i64: 1>, scalar_prefetch = 0 : i64, scratch_operands = 0 : i64, tpu.core_type = #tpu.core_type<tc>, window_params = [{pipeline_mode = #tpu.pipeline_mode<synchronous>, transform_indices = @transform_0, window_bounds = array<i64: 32, 32>}, {pipeline_mode = #tpu.pipeline_mode<synchronous>, transform_indices = @transform_1, window_bounds = array<i64: 16, 32>}, {pipeline_mode = #tpu.pipeline_mode<synchronous>, transform_indices = @transform_2, window_bounds = array<i64: 1024, 96>}, {pipeline_mode = #tpu.pipeline_mode<synchronous>, transform_indices = @transform_3, window_bounds = array<i64: 16, 32>}]} {
    %c0 = arith.constant 0 : index
    %c0_0 = arith.constant 0 : index
    %0 = vector.load %arg1[%c0, %c0_0] : memref<32x32xf32, #tpu.memory_space<vmem>>, vector<32x32xf32>
    %c0_1 = arith.constant 0 : index
    %c0_2 = arith.constant 0 : index
    %1 = vector.load %arg3[%c0_1, %c0_2] : memref<1024x96xf32, #tpu.memory_space<vmem>>, vector<1x32xf32>
    %c8 = arith.constant 8 : index
    %c0_3 = arith.constant 0 : index
    %2 = vector.load %arg3[%c8, %c0_3] : memref<1024x96xf32, #tpu.memory_space<vmem>>, vector<1x32xf32>
    %cst = arith.constant dense<0.000000e+00> : vector<32xf32>
    %3 = vector.multi_reduction <add>, %0, %cst [1] : vector<32x32xf32> to vector<32xf32>
    %4 = vector.shape_cast %3 : vector<32xf32> to vector<32x1xf32>
    %cst_4 = arith.constant 3.200000e+01 : f32
    %5 = vector.broadcast %cst_4 : f32 to vector<32x1xf32>
    %6 = arith.divf %4, %5 : vector<32x1xf32>
    %7 = vector.broadcast %6 : vector<32x1xf32> to vector<32x32xf32>
    %8 = arith.subf %0, %7 : vector<32x32xf32>
    %9 = arith.mulf %8, %8 : vector<32x32xf32>
    %cst_5 = arith.constant dense<0.000000e+00> : vector<32xf32>
    %10 = vector.multi_reduction <add>, %9, %cst_5 [1] : vector<32x32xf32> to vector<32xf32>
    %11 = vector.shape_cast %10 : vector<32xf32> to vector<32x1xf32>
    %cst_6 = arith.constant 0.0322580636 : f32
    %12 = vector.broadcast %cst_6 : f32 to vector<32x1xf32>
    %13 = arith.mulf %11, %12 : vector<32x1xf32>
    %14 = math.sqrt %13 : vector<32x1xf32>
    %cst_7 = arith.constant 9.99999974E-6 : f32
    %15 = vector.broadcast %cst_7 : f32 to vector<32x1xf32>
    %16 = arith.addf %14, %15 : vector<32x1xf32>
    %17 = vector.broadcast %16 : vector<32x1xf32> to vector<32x32xf32>
    %18 = arith.divf %8, %17 : vector<32x32xf32>
    %19 = vector.broadcast %1 : vector<1x32xf32> to vector<32x32xf32>
    %20 = arith.mulf %19, %18 : vector<32x32xf32>
    %21 = vector.broadcast %2 : vector<1x32xf32> to vector<32x32xf32>
    %22 = arith.addf %20, %21 : vector<32x32xf32>
    %c16 = arith.constant 16 : index
    %c0_8 = arith.constant 0 : index
    %23 = vector.load %arg3[%c16, %c0_8] : memref<1024x96xf32, #tpu.memory_space<vmem>>, vector<32x96xf32>
    %c48 = arith.constant 48 : index
    %c0_9 = arith.constant 0 : index
    %24 = vector.load %arg3[%c48, %c0_9] : memref<1024x96xf32, #tpu.memory_space<vmem>>, vector<32x32xf32>
    %cst_10 = arith.constant dense<0.000000e+00> : vector<32x96xf32>
    %25 = tpu.matmul %22, %23, %cst_10 {dimension_numbers = #tpu.dot_dimension_numbers<[1], [0], [0], [1], [0, 0, 1, 1], [], []>} : vector<32x32xf32>, vector<32x96xf32>, vector<32x96xf32> -> vector<32x96xf32>
    %26 = vector.extract_strided_slice %25 {offsets = [0, 0], sizes = [32, 32], strides = [1, 1]} : vector<32x96xf32> to vector<32x32xf32>
    %27 = vector.extract_strided_slice %25 {offsets = [0, 32], sizes = [32, 32], strides = [1, 1]} : vector<32x96xf32> to vector<32x32xf32>
    %28 = vector.extract_strided_slice %25 {offsets = [0, 64], sizes = [32, 32], strides = [1, 1]} : vector<32x96xf32> to vector<32x32xf32>
    %29 = vector.extract_strided_slice %26 {offsets = [0, 0], sizes = [32, 8], strides = [1, 1]} : vector<32x32xf32> to vector<32x8xf32>
    %30 = vector.extract_strided_slice %27 {offsets = [0, 0], sizes = [32, 8], strides = [1, 1]} : vector<32x32xf32> to vector<32x8xf32>
    %31 = vector.extract_strided_slice %28 {offsets = [0, 0], sizes = [32, 8], strides = [1, 1]} : vector<32x32xf32> to vector<32x8xf32>
    %32 = vector.extract_strided_slice %24 {offsets = [0, 0], sizes = [8, 32], strides = [1, 1]} : vector<32x32xf32> to vector<8x32xf32>
    %33 = vector.extract_strided_slice %29 {offsets = [0, 0], sizes = [16, 8], strides = [1, 1]} : vector<32x8xf32> to vector<16x8xf32>
    %34 = vector.extract_strided_slice %30 {offsets = [0, 0], sizes = [16, 8], strides = [1, 1]} : vector<32x8xf32> to vector<16x8xf32>
    %35 = vector.extract_strided_slice %31 {offsets = [0, 0], sizes = [16, 8], strides = [1, 1]} : vector<32x8xf32> to vector<16x8xf32>
    %cst_11 = arith.constant dense<0.000000e+00> : vector<16x16xf32>
    %36 = tpu.matmul %33, %34, %cst_11 {dimension_numbers = #tpu.dot_dimension_numbers<[1], [1], [0], [0], [0, 0, 1, 0], [], []>} : vector<16x8xf32>, vector<16x8xf32>, vector<16x16xf32> -> vector<16x16xf32>
    %cst_12 = arith.constant 0.353553385 : f32
    %37 = vector.broadcast %cst_12 : f32 to vector<16x16xf32>
    %38 = arith.mulf %36, %37 : vector<16x16xf32>
    %cst_13 = arith.constant dense<0xFF800000> : vector<16xf32>
    %39 = vector.multi_reduction <maximumf>, %38, %cst_13 [1] : vector<16x16xf32> to vector<16xf32>
    %40 = vector.shape_cast %39 : vector<16xf32> to vector<16x1xf32>
    %41 = vector.broadcast %40 : vector<16x1xf32> to vector<16x16xf32>
    %42 = arith.subf %38, %41 : vector<16x16xf32>
    %43 = math.exp %42 : vector<16x16xf32>
    %cst_14 = arith.constant dense<0.000000e+00> : vector<16xf32>
    %44 = vector.multi_reduction <add>, %43, %cst_14 [1] : vector<16x16xf32> to vector<16xf32>
    %45 = vector.shape_cast %44 : vector<16xf32> to vector<16x1xf32>
    %46 = tpu.reciprocal %45 {approx = true} : vector<16x1xf32> -> vector<16x1xf32>
    %47 = vector.broadcast %46 : vector<16x1xf32> to vector<16x16xf32>
    %48 = arith.mulf %43, %47 : vector<16x16xf32>
    %cst_15 = arith.constant dense<0.000000e+00> : vector<16x8xf32>
    %49 = tpu.matmul %48, %35, %cst_15 {dimension_numbers = #tpu.dot_dimension_numbers<[1], [0], [0], [1], [0, 0, 1, 1], [], []>} : vector<16x16xf32>, vector<16x8xf32>, vector<16x8xf32> -> vector<16x8xf32>
    %cst_16 = arith.constant dense<0.000000e+00> : vector<16x32xf32>
    %50 = tpu.matmul %49, %32, %cst_16 {dimension_numbers = #tpu.dot_dimension_numbers<[1], [0], [0], [1], [0, 0, 1, 1], [], []>} : vector<16x8xf32>, vector<8x32xf32>, vector<16x32xf32> -> vector<16x32xf32>
    %51 = vector.extract_strided_slice %29 {offsets = [16, 0], sizes = [16, 8], strides = [1, 1]} : vector<32x8xf32> to vector<16x8xf32>
    %52 = vector.extract_strided_slice %30 {offsets = [16, 0], sizes = [16, 8], strides = [1, 1]} : vector<32x8xf32> to vector<16x8xf32>
    %53 = vector.extract_strided_slice %31 {offsets = [16, 0], sizes = [16, 8], strides = [1, 1]} : vector<32x8xf32> to vector<16x8xf32>
    %cst_17 = arith.constant dense<0.000000e+00> : vector<16x16xf32>
    %54 = tpu.matmul %51, %52, %cst_17 {dimension_numbers = #tpu.dot_dimension_numbers<[1], [1], [0], [0], [0, 0, 1, 0], [], []>} : vector<16x8xf32>, vector<16x8xf32>, vector<16x16xf32> -> vector<16x16xf32>
    %cst_18 = arith.constant 0.353553385 : f32
    %55 = vector.broadcast %cst_18 : f32 to vector<16x16xf32>
    %56 = arith.mulf %54, %55 : vector<16x16xf32>
    %cst_19 = arith.constant dense<0xFF800000> : vector<16xf32>
    %57 = vector.multi_reduction <maximumf>, %56, %cst_19 [1] : vector<16x16xf32> to vector<16xf32>
    %58 = vector.shape_cast %57 : vector<16xf32> to vector<16x1xf32>
    %59 = vector.broadcast %58 : vector<16x1xf32> to vector<16x16xf32>
    %60 = arith.subf %56, %59 : vector<16x16xf32>
    %61 = math.exp %60 : vector<16x16xf32>
    %cst_20 = arith.constant dense<0.000000e+00> : vector<16xf32>
    %62 = vector.multi_reduction <add>, %61, %cst_20 [1] : vector<16x16xf32> to vector<16xf32>
    %63 = vector.shape_cast %62 : vector<16xf32> to vector<16x1xf32>
    %64 = tpu.reciprocal %63 {approx = true} : vector<16x1xf32> -> vector<16x1xf32>
    %65 = vector.broadcast %64 : vector<16x1xf32> to vector<16x16xf32>
    %66 = arith.mulf %61, %65 : vector<16x16xf32>
    %cst_21 = arith.constant dense<0.000000e+00> : vector<16x8xf32>
    %67 = tpu.matmul %66, %53, %cst_21 {dimension_numbers = #tpu.dot_dimension_numbers<[1], [0], [0], [1], [0, 0, 1, 1], [], []>} : vector<16x16xf32>, vector<16x8xf32>, vector<16x8xf32> -> vector<16x8xf32>
    %cst_22 = arith.constant dense<0.000000e+00> : vector<16x32xf32>
    %68 = tpu.matmul %67, %32, %cst_22 {dimension_numbers = #tpu.dot_dimension_numbers<[1], [0], [0], [1], [0, 0, 1, 1], [], []>} : vector<16x8xf32>, vector<8x32xf32>, vector<16x32xf32> -> vector<16x32xf32>
    %69 = vector.extract_strided_slice %26 {offsets = [0, 8], sizes = [32, 8], strides = [1, 1]} : vector<32x32xf32> to vector<32x8xf32>
    %70 = vector.extract_strided_slice %27 {offsets = [0, 8], sizes = [32, 8], strides = [1, 1]} : vector<32x32xf32> to vector<32x8xf32>
    %71 = vector.extract_strided_slice %28 {offsets = [0, 8], sizes = [32, 8], strides = [1, 1]} : vector<32x32xf32> to vector<32x8xf32>
    %72 = vector.extract_strided_slice %24 {offsets = [8, 0], sizes = [8, 32], strides = [1, 1]} : vector<32x32xf32> to vector<8x32xf32>
    %73 = vector.extract_strided_slice %69 {offsets = [0, 0], sizes = [16, 8], strides = [1, 1]} : vector<32x8xf32> to vector<16x8xf32>
    %74 = vector.extract_strided_slice %70 {offsets = [0, 0], sizes = [16, 8], strides = [1, 1]} : vector<32x8xf32> to vector<16x8xf32>
    %75 = vector.extract_strided_slice %71 {offsets = [0, 0], sizes = [16, 8], strides = [1, 1]} : vector<32x8xf32> to vector<16x8xf32>
    %cst_23 = arith.constant dense<0.000000e+00> : vector<16x16xf32>
    %76 = tpu.matmul %73, %74, %cst_23 {dimension_numbers = #tpu.dot_dimension_numbers<[1], [1], [0], [0], [0, 0, 1, 0], [], []>} : vector<16x8xf32>, vector<16x8xf32>, vector<16x16xf32> -> vector<16x16xf32>
    %cst_24 = arith.constant 0.353553385 : f32
    %77 = vector.broadcast %cst_24 : f32 to vector<16x16xf32>
    %78 = arith.mulf %76, %77 : vector<16x16xf32>
    %cst_25 = arith.constant dense<0xFF800000> : vector<16xf32>
    %79 = vector.multi_reduction <maximumf>, %78, %cst_25 [1] : vector<16x16xf32> to vector<16xf32>
    %80 = vector.shape_cast %79 : vector<16xf32> to vector<16x1xf32>
    %81 = vector.broadcast %80 : vector<16x1xf32> to vector<16x16xf32>
    %82 = arith.subf %78, %81 : vector<16x16xf32>
    %83 = math.exp %82 : vector<16x16xf32>
    %cst_26 = arith.constant dense<0.000000e+00> : vector<16xf32>
    %84 = vector.multi_reduction <add>, %83, %cst_26 [1] : vector<16x16xf32> to vector<16xf32>
    %85 = vector.shape_cast %84 : vector<16xf32> to vector<16x1xf32>
    %86 = tpu.reciprocal %85 {approx = true} : vector<16x1xf32> -> vector<16x1xf32>
    %87 = vector.broadcast %86 : vector<16x1xf32> to vector<16x16xf32>
    %88 = arith.mulf %83, %87 : vector<16x16xf32>
    %cst_27 = arith.constant dense<0.000000e+00> : vector<16x8xf32>
    %89 = tpu.matmul %88, %75, %cst_27 {dimension_numbers = #tpu.dot_dimension_numbers<[1], [0], [0], [1], [0, 0, 1, 1], [], []>} : vector<16x16xf32>, vector<16x8xf32>, vector<16x8xf32> -> vector<16x8xf32>
    %cst_28 = arith.constant dense<0.000000e+00> : vector<16x32xf32>
    %90 = tpu.matmul %89, %72, %cst_28 {dimension_numbers = #tpu.dot_dimension_numbers<[1], [0], [0], [1], [0, 0, 1, 1], [], []>} : vector<16x8xf32>, vector<8x32xf32>, vector<16x32xf32> -> vector<16x32xf32>
    %91 = arith.addf %50, %90 : vector<16x32xf32>
    %92 = vector.extract_strided_slice %69 {offsets = [16, 0], sizes = [16, 8], strides = [1, 1]} : vector<32x8xf32> to vector<16x8xf32>
    %93 = vector.extract_strided_slice %70 {offsets = [16, 0], sizes = [16, 8], strides = [1, 1]} : vector<32x8xf32> to vector<16x8xf32>
    %94 = vector.extract_strided_slice %71 {offsets = [16, 0], sizes = [16, 8], strides = [1, 1]} : vector<32x8xf32> to vector<16x8xf32>
    %cst_29 = arith.constant dense<0.000000e+00> : vector<16x16xf32>
    %95 = tpu.matmul %92, %93, %cst_29 {dimension_numbers = #tpu.dot_dimension_numbers<[1], [1], [0], [0], [0, 0, 1, 0], [], []>} : vector<16x8xf32>, vector<16x8xf32>, vector<16x16xf32> -> vector<16x16xf32>
    %cst_30 = arith.constant 0.353553385 : f32
    %96 = vector.broadcast %cst_30 : f32 to vector<16x16xf32>
    %97 = arith.mulf %95, %96 : vector<16x16xf32>
    %cst_31 = arith.constant dense<0xFF800000> : vector<16xf32>
    %98 = vector.multi_reduction <maximumf>, %97, %cst_31 [1] : vector<16x16xf32> to vector<16xf32>
    %99 = vector.shape_cast %98 : vector<16xf32> to vector<16x1xf32>
    %100 = vector.broadcast %99 : vector<16x1xf32> to vector<16x16xf32>
    %101 = arith.subf %97, %100 : vector<16x16xf32>
    %102 = math.exp %101 : vector<16x16xf32>
    %cst_32 = arith.constant dense<0.000000e+00> : vector<16xf32>
    %103 = vector.multi_reduction <add>, %102, %cst_32 [1] : vector<16x16xf32> to vector<16xf32>
    %104 = vector.shape_cast %103 : vector<16xf32> to vector<16x1xf32>
    %105 = tpu.reciprocal %104 {approx = true} : vector<16x1xf32> -> vector<16x1xf32>
    %106 = vector.broadcast %105 : vector<16x1xf32> to vector<16x16xf32>
    %107 = arith.mulf %102, %106 : vector<16x16xf32>
    %cst_33 = arith.constant dense<0.000000e+00> : vector<16x8xf32>
    %108 = tpu.matmul %107, %94, %cst_33 {dimension_numbers = #tpu.dot_dimension_numbers<[1], [0], [0], [1], [0, 0, 1, 1], [], []>} : vector<16x16xf32>, vector<16x8xf32>, vector<16x8xf32> -> vector<16x8xf32>
    %cst_34 = arith.constant dense<0.000000e+00> : vector<16x32xf32>
    %109 = tpu.matmul %108, %72, %cst_34 {dimension_numbers = #tpu.dot_dimension_numbers<[1], [0], [0], [1], [0, 0, 1, 1], [], []>} : vector<16x8xf32>, vector<8x32xf32>, vector<16x32xf32> -> vector<16x32xf32>
    %110 = arith.addf %68, %109 : vector<16x32xf32>
    %111 = vector.extract_strided_slice %26 {offsets = [0, 16], sizes = [32, 8], strides = [1, 1]} : vector<32x32xf32> to vector<32x8xf32>
    %112 = vector.extract_strided_slice %27 {offsets = [0, 16], sizes = [32, 8], strides = [1, 1]} : vector<32x32xf32> to vector<32x8xf32>
    %113 = vector.extract_strided_slice %28 {offsets = [0, 16], sizes = [32, 8], strides = [1, 1]} : vector<32x32xf32> to vector<32x8xf32>
    %114 = vector.extract_strided_slice %24 {offsets = [16, 0], sizes = [8, 32], strides = [1, 1]} : vector<32x32xf32> to vector<8x32xf32>
    %115 = vector.extract_strided_slice %111 {offsets = [0, 0], sizes = [16, 8], strides = [1, 1]} : vector<32x8xf32> to vector<16x8xf32>
    %116 = vector.extract_strided_slice %112 {offsets = [0, 0], sizes = [16, 8], strides = [1, 1]} : vector<32x8xf32> to vector<16x8xf32>
    %117 = vector.extract_strided_slice %113 {offsets = [0, 0], sizes = [16, 8], strides = [1, 1]} : vector<32x8xf32> to vector<16x8xf32>
    %cst_35 = arith.constant dense<0.000000e+00> : vector<16x16xf32>
    %118 = tpu.matmul %115, %116, %cst_35 {dimension_numbers = #tpu.dot_dimension_numbers<[1], [1], [0], [0], [0, 0, 1, 0], [], []>} : vector<16x8xf32>, vector<16x8xf32>, vector<16x16xf32> -> vector<16x16xf32>
    %cst_36 = arith.constant 0.353553385 : f32
    %119 = vector.broadcast %cst_36 : f32 to vector<16x16xf32>
    %120 = arith.mulf %118, %119 : vector<16x16xf32>
    %cst_37 = arith.constant dense<0xFF800000> : vector<16xf32>
    %121 = vector.multi_reduction <maximumf>, %120, %cst_37 [1] : vector<16x16xf32> to vector<16xf32>
    %122 = vector.shape_cast %121 : vector<16xf32> to vector<16x1xf32>
    %123 = vector.broadcast %122 : vector<16x1xf32> to vector<16x16xf32>
    %124 = arith.subf %120, %123 : vector<16x16xf32>
    %125 = math.exp %124 : vector<16x16xf32>
    %cst_38 = arith.constant dense<0.000000e+00> : vector<16xf32>
    %126 = vector.multi_reduction <add>, %125, %cst_38 [1] : vector<16x16xf32> to vector<16xf32>
    %127 = vector.shape_cast %126 : vector<16xf32> to vector<16x1xf32>
    %128 = tpu.reciprocal %127 {approx = true} : vector<16x1xf32> -> vector<16x1xf32>
    %129 = vector.broadcast %128 : vector<16x1xf32> to vector<16x16xf32>
    %130 = arith.mulf %125, %129 : vector<16x16xf32>
    %cst_39 = arith.constant dense<0.000000e+00> : vector<16x8xf32>
    %131 = tpu.matmul %130, %117, %cst_39 {dimension_numbers = #tpu.dot_dimension_numbers<[1], [0], [0], [1], [0, 0, 1, 1], [], []>} : vector<16x16xf32>, vector<16x8xf32>, vector<16x8xf32> -> vector<16x8xf32>
    %cst_40 = arith.constant dense<0.000000e+00> : vector<16x32xf32>
    %132 = tpu.matmul %131, %114, %cst_40 {dimension_numbers = #tpu.dot_dimension_numbers<[1], [0], [0], [1], [0, 0, 1, 1], [], []>} : vector<16x8xf32>, vector<8x32xf32>, vector<16x32xf32> -> vector<16x32xf32>
    %133 = arith.addf %91, %132 : vector<16x32xf32>
    %134 = vector.extract_strided_slice %111 {offsets = [16, 0], sizes = [16, 8], strides = [1, 1]} : vector<32x8xf32> to vector<16x8xf32>
    %135 = vector.extract_strided_slice %112 {offsets = [16, 0], sizes = [16, 8], strides = [1, 1]} : vector<32x8xf32> to vector<16x8xf32>
    %136 = vector.extract_strided_slice %113 {offsets = [16, 0], sizes = [16, 8], strides = [1, 1]} : vector<32x8xf32> to vector<16x8xf32>
    %cst_41 = arith.constant dense<0.000000e+00> : vector<16x16xf32>
    %137 = tpu.matmul %134, %135, %cst_41 {dimension_numbers = #tpu.dot_dimension_numbers<[1], [1], [0], [0], [0, 0, 1, 0], [], []>} : vector<16x8xf32>, vector<16x8xf32>, vector<16x16xf32> -> vector<16x16xf32>
    %cst_42 = arith.constant 0.353553385 : f32
    %138 = vector.broadcast %cst_42 : f32 to vector<16x16xf32>
    %139 = arith.mulf %137, %138 : vector<16x16xf32>
    %cst_43 = arith.constant dense<0xFF800000> : vector<16xf32>
    %140 = vector.multi_reduction <maximumf>, %139, %cst_43 [1] : vector<16x16xf32> to vector<16xf32>
    %141 = vector.shape_cast %140 : vector<16xf32> to vector<16x1xf32>
    %142 = vector.broadcast %141 : vector<16x1xf32> to vector<16x16xf32>
    %143 = arith.subf %139, %142 : vector<16x16xf32>
    %144 = math.exp %143 : vector<16x16xf32>
    %cst_44 = arith.constant dense<0.000000e+00> : vector<16xf32>
    %145 = vector.multi_reduction <add>, %144, %cst_44 [1] : vector<16x16xf32> to vector<16xf32>
    %146 = vector.shape_cast %145 : vector<16xf32> to vector<16x1xf32>
    %147 = tpu.reciprocal %146 {approx = true} : vector<16x1xf32> -> vector<16x1xf32>
    %148 = vector.broadcast %147 : vector<16x1xf32> to vector<16x16xf32>
    %149 = arith.mulf %144, %148 : vector<16x16xf32>
    %cst_45 = arith.constant dense<0.000000e+00> : vector<16x8xf32>
    %150 = tpu.matmul %149, %136, %cst_45 {dimension_numbers = #tpu.dot_dimension_numbers<[1], [0], [0], [1], [0, 0, 1, 1], [], []>} : vector<16x16xf32>, vector<16x8xf32>, vector<16x8xf32> -> vector<16x8xf32>
    %cst_46 = arith.constant dense<0.000000e+00> : vector<16x32xf32>
    %151 = tpu.matmul %150, %114, %cst_46 {dimension_numbers = #tpu.dot_dimension_numbers<[1], [0], [0], [1], [0, 0, 1, 1], [], []>} : vector<16x8xf32>, vector<8x32xf32>, vector<16x32xf32> -> vector<16x32xf32>
    %152 = arith.addf %110, %151 : vector<16x32xf32>
    %153 = vector.extract_strided_slice %26 {offsets = [0, 24], sizes = [32, 8], strides = [1, 1]} : vector<32x32xf32> to vector<32x8xf32>
    %154 = vector.extract_strided_slice %27 {offsets = [0, 24], sizes = [32, 8], strides = [1, 1]} : vector<32x32xf32> to vector<32x8xf32>
    %155 = vector.extract_strided_slice %28 {offsets = [0, 24], sizes = [32, 8], strides = [1, 1]} : vector<32x32xf32> to vector<32x8xf32>
    %156 = vector.extract_strided_slice %24 {offsets = [24, 0], sizes = [8, 32], strides = [1, 1]} : vector<32x32xf32> to vector<8x32xf32>
    %157 = vector.extract_strided_slice %153 {offsets = [0, 0], sizes = [16, 8], strides = [1, 1]} : vector<32x8xf32> to vector<16x8xf32>
    %158 = vector.extract_strided_slice %154 {offsets = [0, 0], sizes = [16, 8], strides = [1, 1]} : vector<32x8xf32> to vector<16x8xf32>
    %159 = vector.extract_strided_slice %155 {offsets = [0, 0], sizes = [16, 8], strides = [1, 1]} : vector<32x8xf32> to vector<16x8xf32>
    %cst_47 = arith.constant dense<0.000000e+00> : vector<16x16xf32>
    %160 = tpu.matmul %157, %158, %cst_47 {dimension_numbers = #tpu.dot_dimension_numbers<[1], [1], [0], [0], [0, 0, 1, 0], [], []>} : vector<16x8xf32>, vector<16x8xf32>, vector<16x16xf32> -> vector<16x16xf32>
    %cst_48 = arith.constant 0.353553385 : f32
    %161 = vector.broadcast %cst_48 : f32 to vector<16x16xf32>
    %162 = arith.mulf %160, %161 : vector<16x16xf32>
    %cst_49 = arith.constant dense<0xFF800000> : vector<16xf32>
    %163 = vector.multi_reduction <maximumf>, %162, %cst_49 [1] : vector<16x16xf32> to vector<16xf32>
    %164 = vector.shape_cast %163 : vector<16xf32> to vector<16x1xf32>
    %165 = vector.broadcast %164 : vector<16x1xf32> to vector<16x16xf32>
    %166 = arith.subf %162, %165 : vector<16x16xf32>
    %167 = math.exp %166 : vector<16x16xf32>
    %cst_50 = arith.constant dense<0.000000e+00> : vector<16xf32>
    %168 = vector.multi_reduction <add>, %167, %cst_50 [1] : vector<16x16xf32> to vector<16xf32>
    %169 = vector.shape_cast %168 : vector<16xf32> to vector<16x1xf32>
    %170 = tpu.reciprocal %169 {approx = true} : vector<16x1xf32> -> vector<16x1xf32>
    %171 = vector.broadcast %170 : vector<16x1xf32> to vector<16x16xf32>
    %172 = arith.mulf %167, %171 : vector<16x16xf32>
    %cst_51 = arith.constant dense<0.000000e+00> : vector<16x8xf32>
    %173 = tpu.matmul %172, %159, %cst_51 {dimension_numbers = #tpu.dot_dimension_numbers<[1], [0], [0], [1], [0, 0, 1, 1], [], []>} : vector<16x16xf32>, vector<16x8xf32>, vector<16x8xf32> -> vector<16x8xf32>
    %cst_52 = arith.constant dense<0.000000e+00> : vector<16x32xf32>
    %174 = tpu.matmul %173, %156, %cst_52 {dimension_numbers = #tpu.dot_dimension_numbers<[1], [0], [0], [1], [0, 0, 1, 1], [], []>} : vector<16x8xf32>, vector<8x32xf32>, vector<16x32xf32> -> vector<16x32xf32>
    %175 = arith.addf %133, %174 : vector<16x32xf32>
    %176 = vector.extract_strided_slice %153 {offsets = [16, 0], sizes = [16, 8], strides = [1, 1]} : vector<32x8xf32> to vector<16x8xf32>
    %177 = vector.extract_strided_slice %154 {offsets = [16, 0], sizes = [16, 8], strides = [1, 1]} : vector<32x8xf32> to vector<16x8xf32>
    %178 = vector.extract_strided_slice %155 {offsets = [16, 0], sizes = [16, 8], strides = [1, 1]} : vector<32x8xf32> to vector<16x8xf32>
    %cst_53 = arith.constant dense<0.000000e+00> : vector<16x16xf32>
    %179 = tpu.matmul %176, %177, %cst_53 {dimension_numbers = #tpu.dot_dimension_numbers<[1], [1], [0], [0], [0, 0, 1, 0], [], []>} : vector<16x8xf32>, vector<16x8xf32>, vector<16x16xf32> -> vector<16x16xf32>
    %cst_54 = arith.constant 0.353553385 : f32
    %180 = vector.broadcast %cst_54 : f32 to vector<16x16xf32>
    %181 = arith.mulf %179, %180 : vector<16x16xf32>
    %cst_55 = arith.constant dense<0xFF800000> : vector<16xf32>
    %182 = vector.multi_reduction <maximumf>, %181, %cst_55 [1] : vector<16x16xf32> to vector<16xf32>
    %183 = vector.shape_cast %182 : vector<16xf32> to vector<16x1xf32>
    %184 = vector.broadcast %183 : vector<16x1xf32> to vector<16x16xf32>
    %185 = arith.subf %181, %184 : vector<16x16xf32>
    %186 = math.exp %185 : vector<16x16xf32>
    %cst_56 = arith.constant dense<0.000000e+00> : vector<16xf32>
    %187 = vector.multi_reduction <add>, %186, %cst_56 [1] : vector<16x16xf32> to vector<16xf32>
    %188 = vector.shape_cast %187 : vector<16xf32> to vector<16x1xf32>
    %189 = tpu.reciprocal %188 {approx = true} : vector<16x1xf32> -> vector<16x1xf32>
    %190 = vector.broadcast %189 : vector<16x1xf32> to vector<16x16xf32>
    %191 = arith.mulf %186, %190 : vector<16x16xf32>
    %cst_57 = arith.constant dense<0.000000e+00> : vector<16x8xf32>
    %192 = tpu.matmul %191, %178, %cst_57 {dimension_numbers = #tpu.dot_dimension_numbers<[1], [0], [0], [1], [0, 0, 1, 1], [], []>} : vector<16x16xf32>, vector<16x8xf32>, vector<16x8xf32> -> vector<16x8xf32>
    %cst_58 = arith.constant dense<0.000000e+00> : vector<16x32xf32>
    %193 = tpu.matmul %192, %156, %cst_58 {dimension_numbers = #tpu.dot_dimension_numbers<[1], [0], [0], [1], [0, 0, 1, 1], [], []>} : vector<16x8xf32>, vector<8x32xf32>, vector<16x32xf32> -> vector<16x32xf32>
    %194 = arith.addf %152, %193 : vector<16x32xf32>
    %195 = tpu.concatenate %175, %194 in 0 : vector<16x32xf32>, vector<16x32xf32> -> vector<32x32xf32>
    %196 = arith.addf %0, %195 : vector<32x32xf32>
    %c80 = arith.constant 80 : index
    %c0_59 = arith.constant 0 : index
    %197 = vector.load %arg3[%c80, %c0_59] : memref<1024x96xf32, #tpu.memory_space<vmem>>, vector<1x32xf32>
    %c88 = arith.constant 88 : index
    %c0_60 = arith.constant 0 : index
    %198 = vector.load %arg3[%c88, %c0_60] : memref<1024x96xf32, #tpu.memory_space<vmem>>, vector<1x32xf32>
    %cst_61 = arith.constant dense<0.000000e+00> : vector<32xf32>
    %199 = vector.multi_reduction <add>, %196, %cst_61 [1] : vector<32x32xf32> to vector<32xf32>
    %200 = vector.shape_cast %199 : vector<32xf32> to vector<32x1xf32>
    %cst_62 = arith.constant 3.200000e+01 : f32
    %201 = vector.broadcast %cst_62 : f32 to vector<32x1xf32>
    %202 = arith.divf %200, %201 : vector<32x1xf32>
    %203 = vector.broadcast %202 : vector<32x1xf32> to vector<32x32xf32>
    %204 = arith.subf %196, %203 : vector<32x32xf32>
    %205 = arith.mulf %204, %204 : vector<32x32xf32>
    %cst_63 = arith.constant dense<0.000000e+00> : vector<32xf32>
    %206 = vector.multi_reduction <add>, %205, %cst_63 [1] : vector<32x32xf32> to vector<32xf32>
    %207 = vector.shape_cast %206 : vector<32xf32> to vector<32x1xf32>
    %cst_64 = arith.constant 0.0322580636 : f32
    %208 = vector.broadcast %cst_64 : f32 to vector<32x1xf32>
    %209 = arith.mulf %207, %208 : vector<32x1xf32>
    %210 = math.sqrt %209 : vector<32x1xf32>
    %cst_65 = arith.constant 9.99999974E-6 : f32
    %211 = vector.broadcast %cst_65 : f32 to vector<32x1xf32>
    %212 = arith.addf %210, %211 : vector<32x1xf32>
    %213 = vector.broadcast %212 : vector<32x1xf32> to vector<32x32xf32>
    %214 = arith.divf %204, %213 : vector<32x32xf32>
    %215 = vector.broadcast %197 : vector<1x32xf32> to vector<32x32xf32>
    %216 = arith.mulf %215, %214 : vector<32x32xf32>
    %217 = vector.broadcast %198 : vector<1x32xf32> to vector<32x32xf32>
    %218 = arith.addf %216, %217 : vector<32x32xf32>
    %c96 = arith.constant 96 : index
    %c0_66 = arith.constant 0 : index
    %219 = vector.load %arg3[%c96, %c0_66] : memref<1024x96xf32, #tpu.memory_space<vmem>>, vector<32x64xf32>
    %c128 = arith.constant 128 : index
    %c0_67 = arith.constant 0 : index
    %220 = vector.load %arg3[%c128, %c0_67] : memref<1024x96xf32, #tpu.memory_space<vmem>>, vector<1x64xf32>
    %c136 = arith.constant 136 : index
    %c0_68 = arith.constant 0 : index
    %221 = vector.load %arg3[%c136, %c0_68] : memref<1024x96xf32, #tpu.memory_space<vmem>>, vector<64x32xf32>
    %c200 = arith.constant 200 : index
    %c0_69 = arith.constant 0 : index
    %222 = vector.load %arg3[%c200, %c0_69] : memref<1024x96xf32, #tpu.memory_space<vmem>>, vector<1x32xf32>
    %cst_70 = arith.constant dense<0.000000e+00> : vector<32x64xf32>
    %223 = tpu.matmul %218, %219, %cst_70 {dimension_numbers = #tpu.dot_dimension_numbers<[1], [0], [0], [1], [0, 0, 1, 1], [], []>} : vector<32x32xf32>, vector<32x64xf32>, vector<32x64xf32> -> vector<32x64xf32>
    %224 = vector.broadcast %220 : vector<1x64xf32> to vector<32x64xf32>
    %225 = arith.addf %223, %224 : vector<32x64xf32>
    %cst_71 = arith.constant 0.000000e+00 : f32
    %226 = vector.broadcast %cst_71 : f32 to vector<32x64xf32>
    %227 = arith.maximumf %225, %226 : vector<32x64xf32>
    %cst_72 = arith.constant dense<0.000000e+00> : vector<32x32xf32>
    %228 = tpu.matmul %227, %221, %cst_72 {dimension_numbers = #tpu.dot_dimension_numbers<[1], [0], [0], [1], [0, 0, 1, 1], [], []>} : vector<32x64xf32>, vector<64x32xf32>, vector<32x32xf32> -> vector<32x32xf32>
    %229 = vector.broadcast %222 : vector<1x32xf32> to vector<32x32xf32>
    %230 = arith.addf %228, %229 : vector<32x32xf32>
    %231 = arith.addf %196, %230 : vector<32x32xf32>
    %c208 = arith.constant 208 : index
    %c0_73 = arith.constant 0 : index
    %232 = vector.load %arg3[%c208, %c0_73] : memref<1024x96xf32, #tpu.memory_space<vmem>>, vector<1x32xf32>
    %c216 = arith.constant 216 : index
    %c0_74 = arith.constant 0 : index
    %233 = vector.load %arg3[%c216, %c0_74] : memref<1024x96xf32, #tpu.memory_space<vmem>>, vector<1x32xf32>
    %cst_75 = arith.constant dense<0.000000e+00> : vector<32xf32>
    %234 = vector.multi_reduction <add>, %231, %cst_75 [1] : vector<32x32xf32> to vector<32xf32>
    %235 = vector.shape_cast %234 : vector<32xf32> to vector<32x1xf32>
    %cst_76 = arith.constant 3.200000e+01 : f32
    %236 = vector.broadcast %cst_76 : f32 to vector<32x1xf32>
    %237 = arith.divf %235, %236 : vector<32x1xf32>
    %238 = vector.broadcast %237 : vector<32x1xf32> to vector<32x32xf32>
    %239 = arith.subf %231, %238 : vector<32x32xf32>
    %240 = arith.mulf %239, %239 : vector<32x32xf32>
    %cst_77 = arith.constant dense<0.000000e+00> : vector<32xf32>
    %241 = vector.multi_reduction <add>, %240, %cst_77 [1] : vector<32x32xf32> to vector<32xf32>
    %242 = vector.shape_cast %241 : vector<32xf32> to vector<32x1xf32>
    %cst_78 = arith.constant 0.0322580636 : f32
    %243 = vector.broadcast %cst_78 : f32 to vector<32x1xf32>
    %244 = arith.mulf %242, %243 : vector<32x1xf32>
    %245 = math.sqrt %244 : vector<32x1xf32>
    %cst_79 = arith.constant 9.99999974E-6 : f32
    %246 = vector.broadcast %cst_79 : f32 to vector<32x1xf32>
    %247 = arith.addf %245, %246 : vector<32x1xf32>
    %248 = vector.broadcast %247 : vector<32x1xf32> to vector<32x32xf32>
    %249 = arith.divf %239, %248 : vector<32x32xf32>
    %250 = vector.broadcast %232 : vector<1x32xf32> to vector<32x32xf32>
    %251 = arith.mulf %250, %249 : vector<32x32xf32>
    %252 = vector.broadcast %233 : vector<1x32xf32> to vector<32x32xf32>
    %253 = arith.addf %251, %252 : vector<32x32xf32>
    %c224 = arith.constant 224 : index
    %c0_80 = arith.constant 0 : index
    %254 = vector.load %arg3[%c224, %c0_80] : memref<1024x96xf32, #tpu.memory_space<vmem>>, vector<32x96xf32>
    %c256 = arith.constant 256 : index
    %c0_81 = arith.constant 0 : index
    %255 = vector.load %arg3[%c256, %c0_81] : memref<1024x96xf32, #tpu.memory_space<vmem>>, vector<32x32xf32>
    %cst_82 = arith.constant dense<0.000000e+00> : vector<32x96xf32>
    %256 = tpu.matmul %253, %254, %cst_82 {dimension_numbers = #tpu.dot_dimension_numbers<[1], [0], [0], [1], [0, 0, 1, 1], [], []>} : vector<32x32xf32>, vector<32x96xf32>, vector<32x96xf32> -> vector<32x96xf32>
    %257 = vector.extract_strided_slice %256 {offsets = [0, 0], sizes = [32, 32], strides = [1, 1]} : vector<32x96xf32> to vector<32x32xf32>
    %258 = vector.extract_strided_slice %256 {offsets = [0, 32], sizes = [32, 32], strides = [1, 1]} : vector<32x96xf32> to vector<32x32xf32>
    %259 = vector.extract_strided_slice %256 {offsets = [0, 64], sizes = [32, 32], strides = [1, 1]} : vector<32x96xf32> to vector<32x32xf32>
    %260 = vector.extract_strided_slice %257 {offsets = [0, 0], sizes = [32, 8], strides = [1, 1]} : vector<32x32xf32> to vector<32x8xf32>
    %261 = vector.extract_strided_slice %258 {offsets = [0, 0], sizes = [32, 8], strides = [1, 1]} : vector<32x32xf32> to vector<32x8xf32>
    %262 = vector.extract_strided_slice %259 {offsets = [0, 0], sizes = [32, 8], strides = [1, 1]} : vector<32x32xf32> to vector<32x8xf32>
    %263 = vector.extract_strided_slice %255 {offsets = [0, 0], sizes = [8, 32], strides = [1, 1]} : vector<32x32xf32> to vector<8x32xf32>
    %264 = vector.extract_strided_slice %260 {offsets = [0, 0], sizes = [16, 8], strides = [1, 1]} : vector<32x8xf32> to vector<16x8xf32>
    %265 = vector.extract_strided_slice %261 {offsets = [0, 0], sizes = [16, 8], strides = [1, 1]} : vector<32x8xf32> to vector<16x8xf32>
    %266 = vector.extract_strided_slice %262 {offsets = [0, 0], sizes = [16, 8], strides = [1, 1]} : vector<32x8xf32> to vector<16x8xf32>
    %cst_83 = arith.constant dense<0.000000e+00> : vector<16x16xf32>
    %267 = tpu.matmul %264, %265, %cst_83 {dimension_numbers = #tpu.dot_dimension_numbers<[1], [1], [0], [0], [0, 0, 1, 0], [], []>} : vector<16x8xf32>, vector<16x8xf32>, vector<16x16xf32> -> vector<16x16xf32>
    %cst_84 = arith.constant 0.353553385 : f32
    %268 = vector.broadcast %cst_84 : f32 to vector<16x16xf32>
    %269 = arith.mulf %267, %268 : vector<16x16xf32>
    %cst_85 = arith.constant dense<0xFF800000> : vector<16xf32>
    %270 = vector.multi_reduction <maximumf>, %269, %cst_85 [1] : vector<16x16xf32> to vector<16xf32>
    %271 = vector.shape_cast %270 : vector<16xf32> to vector<16x1xf32>
    %272 = vector.broadcast %271 : vector<16x1xf32> to vector<16x16xf32>
    %273 = arith.subf %269, %272 : vector<16x16xf32>
    %274 = math.exp %273 : vector<16x16xf32>
    %cst_86 = arith.constant dense<0.000000e+00> : vector<16xf32>
    %275 = vector.multi_reduction <add>, %274, %cst_86 [1] : vector<16x16xf32> to vector<16xf32>
    %276 = vector.shape_cast %275 : vector<16xf32> to vector<16x1xf32>
    %277 = tpu.reciprocal %276 {approx = true} : vector<16x1xf32> -> vector<16x1xf32>
    %278 = vector.broadcast %277 : vector<16x1xf32> to vector<16x16xf32>
    %279 = arith.mulf %274, %278 : vector<16x16xf32>
    %cst_87 = arith.constant dense<0.000000e+00> : vector<16x8xf32>
    %280 = tpu.matmul %279, %266, %cst_87 {dimension_numbers = #tpu.dot_dimension_numbers<[1], [0], [0], [1], [0, 0, 1, 1], [], []>} : vector<16x16xf32>, vector<16x8xf32>, vector<16x8xf32> -> vector<16x8xf32>
    %cst_88 = arith.constant dense<0.000000e+00> : vector<16x32xf32>
    %281 = tpu.matmul %280, %263, %cst_88 {dimension_numbers = #tpu.dot_dimension_numbers<[1], [0], [0], [1], [0, 0, 1, 1], [], []>} : vector<16x8xf32>, vector<8x32xf32>, vector<16x32xf32> -> vector<16x32xf32>
    %282 = vector.extract_strided_slice %260 {offsets = [16, 0], sizes = [16, 8], strides = [1, 1]} : vector<32x8xf32> to vector<16x8xf32>
    %283 = vector.extract_strided_slice %261 {offsets = [16, 0], sizes = [16, 8], strides = [1, 1]} : vector<32x8xf32> to vector<16x8xf32>
    %284 = vector.extract_strided_slice %262 {offsets = [16, 0], sizes = [16, 8], strides = [1, 1]} : vector<32x8xf32> to vector<16x8xf32>
    %cst_89 = arith.constant dense<0.000000e+00> : vector<16x16xf32>
    %285 = tpu.matmul %282, %283, %cst_89 {dimension_numbers = #tpu.dot_dimension_numbers<[1], [1], [0], [0], [0, 0, 1, 0], [], []>} : vector<16x8xf32>, vector<16x8xf32>, vector<16x16xf32> -> vector<16x16xf32>
    %cst_90 = arith.constant 0.353553385 : f32
    %286 = vector.broadcast %cst_90 : f32 to vector<16x16xf32>
    %287 = arith.mulf %285, %286 : vector<16x16xf32>
    %cst_91 = arith.constant dense<0xFF800000> : vector<16xf32>
    %288 = vector.multi_reduction <maximumf>, %287, %cst_91 [1] : vector<16x16xf32> to vector<16xf32>
    %289 = vector.shape_cast %288 : vector<16xf32> to vector<16x1xf32>
    %290 = vector.broadcast %289 : vector<16x1xf32> to vector<16x16xf32>
    %291 = arith.subf %287, %290 : vector<16x16xf32>
    %292 = math.exp %291 : vector<16x16xf32>
    %cst_92 = arith.constant dense<0.000000e+00> : vector<16xf32>
    %293 = vector.multi_reduction <add>, %292, %cst_92 [1] : vector<16x16xf32> to vector<16xf32>
    %294 = vector.shape_cast %293 : vector<16xf32> to vector<16x1xf32>
    %295 = tpu.reciprocal %294 {approx = true} : vector<16x1xf32> -> vector<16x1xf32>
    %296 = vector.broadcast %295 : vector<16x1xf32> to vector<16x16xf32>
    %297 = arith.mulf %292, %296 : vector<16x16xf32>
    %cst_93 = arith.constant dense<0.000000e+00> : vector<16x8xf32>
    %298 = tpu.matmul %297, %284, %cst_93 {dimension_numbers = #tpu.dot_dimension_numbers<[1], [0], [0], [1], [0, 0, 1, 1], [], []>} : vector<16x16xf32>, vector<16x8xf32>, vector<16x8xf32> -> vector<16x8xf32>
    %cst_94 = arith.constant dense<0.000000e+00> : vector<16x32xf32>
    %299 = tpu.matmul %298, %263, %cst_94 {dimension_numbers = #tpu.dot_dimension_numbers<[1], [0], [0], [1], [0, 0, 1, 1], [], []>} : vector<16x8xf32>, vector<8x32xf32>, vector<16x32xf32> -> vector<16x32xf32>
    %300 = vector.extract_strided_slice %257 {offsets = [0, 8], sizes = [32, 8], strides = [1, 1]} : vector<32x32xf32> to vector<32x8xf32>
    %301 = vector.extract_strided_slice %258 {offsets = [0, 8], sizes = [32, 8], strides = [1, 1]} : vector<32x32xf32> to vector<32x8xf32>
    %302 = vector.extract_strided_slice %259 {offsets = [0, 8], sizes = [32, 8], strides = [1, 1]} : vector<32x32xf32> to vector<32x8xf32>
    %303 = vector.extract_strided_slice %255 {offsets = [8, 0], sizes = [8, 32], strides = [1, 1]} : vector<32x32xf32> to vector<8x32xf32>
    %304 = vector.extract_strided_slice %300 {offsets = [0, 0], sizes = [16, 8], strides = [1, 1]} : vector<32x8xf32> to vector<16x8xf32>
    %305 = vector.extract_strided_slice %301 {offsets = [0, 0], sizes = [16, 8], strides = [1, 1]} : vector<32x8xf32> to vector<16x8xf32>
    %306 = vector.extract_strided_slice %302 {offsets = [0, 0], sizes = [16, 8], strides = [1, 1]} : vector<32x8xf32> to vector<16x8xf32>
    %cst_95 = arith.constant dense<0.000000e+00> : vector<16x16xf32>
    %307 = tpu.matmul %304, %305, %cst_95 {dimension_numbers = #tpu.dot_dimension_numbers<[1], [1], [0], [0], [0, 0, 1, 0], [], []>} : vector<16x8xf32>, vector<16x8xf32>, vector<16x16xf32> -> vector<16x16xf32>
    %cst_96 = arith.constant 0.353553385 : f32
    %308 = vector.broadcast %cst_96 : f32 to vector<16x16xf32>
    %309 = arith.mulf %307, %308 : vector<16x16xf32>
    %cst_97 = arith.constant dense<0xFF800000> : vector<16xf32>
    %310 = vector.multi_reduction <maximumf>, %309, %cst_97 [1] : vector<16x16xf32> to vector<16xf32>
    %311 = vector.shape_cast %310 : vector<16xf32> to vector<16x1xf32>
    %312 = vector.broadcast %311 : vector<16x1xf32> to vector<16x16xf32>
    %313 = arith.subf %309, %312 : vector<16x16xf32>
    %314 = math.exp %313 : vector<16x16xf32>
    %cst_98 = arith.constant dense<0.000000e+00> : vector<16xf32>
    %315 = vector.multi_reduction <add>, %314, %cst_98 [1] : vector<16x16xf32> to vector<16xf32>
    %316 = vector.shape_cast %315 : vector<16xf32> to vector<16x1xf32>
    %317 = tpu.reciprocal %316 {approx = true} : vector<16x1xf32> -> vector<16x1xf32>
    %318 = vector.broadcast %317 : vector<16x1xf32> to vector<16x16xf32>
    %319 = arith.mulf %314, %318 : vector<16x16xf32>
    %cst_99 = arith.constant dense<0.000000e+00> : vector<16x8xf32>
    %320 = tpu.matmul %319, %306, %cst_99 {dimension_numbers = #tpu.dot_dimension_numbers<[1], [0], [0], [1], [0, 0, 1, 1], [], []>} : vector<16x16xf32>, vector<16x8xf32>, vector<16x8xf32> -> vector<16x8xf32>
    %cst_100 = arith.constant dense<0.000000e+00> : vector<16x32xf32>
    %321 = tpu.matmul %320, %303, %cst_100 {dimension_numbers = #tpu.dot_dimension_numbers<[1], [0], [0], [1], [0, 0, 1, 1], [], []>} : vector<16x8xf32>, vector<8x32xf32>, vector<16x32xf32> -> vector<16x32xf32>
    %322 = arith.addf %281, %321 : vector<16x32xf32>
    %323 = vector.extract_strided_slice %300 {offsets = [16, 0], sizes = [16, 8], strides = [1, 1]} : vector<32x8xf32> to vector<16x8xf32>
    %324 = vector.extract_strided_slice %301 {offsets = [16, 0], sizes = [16, 8], strides = [1, 1]} : vector<32x8xf32> to vector<16x8xf32>
    %325 = vector.extract_strided_slice %302 {offsets = [16, 0], sizes = [16, 8], strides = [1, 1]} : vector<32x8xf32> to vector<16x8xf32>
    %cst_101 = arith.constant dense<0.000000e+00> : vector<16x16xf32>
    %326 = tpu.matmul %323, %324, %cst_101 {dimension_numbers = #tpu.dot_dimension_numbers<[1], [1], [0], [0], [0, 0, 1, 0], [], []>} : vector<16x8xf32>, vector<16x8xf32>, vector<16x16xf32> -> vector<16x16xf32>
    %cst_102 = arith.constant 0.353553385 : f32
    %327 = vector.broadcast %cst_102 : f32 to vector<16x16xf32>
    %328 = arith.mulf %326, %327 : vector<16x16xf32>
    %cst_103 = arith.constant dense<0xFF800000> : vector<16xf32>
    %329 = vector.multi_reduction <maximumf>, %328, %cst_103 [1] : vector<16x16xf32> to vector<16xf32>
    %330 = vector.shape_cast %329 : vector<16xf32> to vector<16x1xf32>
    %331 = vector.broadcast %330 : vector<16x1xf32> to vector<16x16xf32>
    %332 = arith.subf %328, %331 : vector<16x16xf32>
    %333 = math.exp %332 : vector<16x16xf32>
    %cst_104 = arith.constant dense<0.000000e+00> : vector<16xf32>
    %334 = vector.multi_reduction <add>, %333, %cst_104 [1] : vector<16x16xf32> to vector<16xf32>
    %335 = vector.shape_cast %334 : vector<16xf32> to vector<16x1xf32>
    %336 = tpu.reciprocal %335 {approx = true} : vector<16x1xf32> -> vector<16x1xf32>
    %337 = vector.broadcast %336 : vector<16x1xf32> to vector<16x16xf32>
    %338 = arith.mulf %333, %337 : vector<16x16xf32>
    %cst_105 = arith.constant dense<0.000000e+00> : vector<16x8xf32>
    %339 = tpu.matmul %338, %325, %cst_105 {dimension_numbers = #tpu.dot_dimension_numbers<[1], [0], [0], [1], [0, 0, 1, 1], [], []>} : vector<16x16xf32>, vector<16x8xf32>, vector<16x8xf32> -> vector<16x8xf32>
    %cst_106 = arith.constant dense<0.000000e+00> : vector<16x32xf32>
    %340 = tpu.matmul %339, %303, %cst_106 {dimension_numbers = #tpu.dot_dimension_numbers<[1], [0], [0], [1], [0, 0, 1, 1], [], []>} : vector<16x8xf32>, vector<8x32xf32>, vector<16x32xf32> -> vector<16x32xf32>
    %341 = arith.addf %299, %340 : vector<16x32xf32>
    %342 = vector.extract_strided_slice %257 {offsets = [0, 16], sizes = [32, 8], strides = [1, 1]} : vector<32x32xf32> to vector<32x8xf32>
    %343 = vector.extract_strided_slice %258 {offsets = [0, 16], sizes = [32, 8], strides = [1, 1]} : vector<32x32xf32> to vector<32x8xf32>
    %344 = vector.extract_strided_slice %259 {offsets = [0, 16], sizes = [32, 8], strides = [1, 1]} : vector<32x32xf32> to vector<32x8xf32>
    %345 = vector.extract_strided_slice %255 {offsets = [16, 0], sizes = [8, 32], strides = [1, 1]} : vector<32x32xf32> to vector<8x32xf32>
    %346 = vector.extract_strided_slice %342 {offsets = [0, 0], sizes = [16, 8], strides = [1, 1]} : vector<32x8xf32> to vector<16x8xf32>
    %347 = vector.extract_strided_slice %343 {offsets = [0, 0], sizes = [16, 8], strides = [1, 1]} : vector<32x8xf32> to vector<16x8xf32>
    %348 = vector.extract_strided_slice %344 {offsets = [0, 0], sizes = [16, 8], strides = [1, 1]} : vector<32x8xf32> to vector<16x8xf32>
    %cst_107 = arith.constant dense<0.000000e+00> : vector<16x16xf32>
    %349 = tpu.matmul %346, %347, %cst_107 {dimension_numbers = #tpu.dot_dimension_numbers<[1], [1], [0], [0], [0, 0, 1, 0], [], []>} : vector<16x8xf32>, vector<16x8xf32>, vector<16x16xf32> -> vector<16x16xf32>
    %cst_108 = arith.constant 0.353553385 : f32
    %350 = vector.broadcast %cst_108 : f32 to vector<16x16xf32>
    %351 = arith.mulf %349, %350 : vector<16x16xf32>
    %cst_109 = arith.constant dense<0xFF800000> : vector<16xf32>
    %352 = vector.multi_reduction <maximumf>, %351, %cst_109 [1] : vector<16x16xf32> to vector<16xf32>
    %353 = vector.shape_cast %352 : vector<16xf32> to vector<16x1xf32>
    %354 = vector.broadcast %353 : vector<16x1xf32> to vector<16x16xf32>
    %355 = arith.subf %351, %354 : vector<16x16xf32>
    %356 = math.exp %355 : vector<16x16xf32>
    %cst_110 = arith.constant dense<0.000000e+00> : vector<16xf32>
    %357 = vector.multi_reduction <add>, %356, %cst_110 [1] : vector<16x16xf32> to vector<16xf32>
    %358 = vector.shape_cast %357 : vector<16xf32> to vector<16x1xf32>
    %359 = tpu.reciprocal %358 {approx = true} : vector<16x1xf32> -> vector<16x1xf32>
    %360 = vector.broadcast %359 : vector<16x1xf32> to vector<16x16xf32>
    %361 = arith.mulf %356, %360 : vector<16x16xf32>
    %cst_111 = arith.constant dense<0.000000e+00> : vector<16x8xf32>
    %362 = tpu.matmul %361, %348, %cst_111 {dimension_numbers = #tpu.dot_dimension_numbers<[1], [0], [0], [1], [0, 0, 1, 1], [], []>} : vector<16x16xf32>, vector<16x8xf32>, vector<16x8xf32> -> vector<16x8xf32>
    %cst_112 = arith.constant dense<0.000000e+00> : vector<16x32xf32>
    %363 = tpu.matmul %362, %345, %cst_112 {dimension_numbers = #tpu.dot_dimension_numbers<[1], [0], [0], [1], [0, 0, 1, 1], [], []>} : vector<16x8xf32>, vector<8x32xf32>, vector<16x32xf32> -> vector<16x32xf32>
    %364 = arith.addf %322, %363 : vector<16x32xf32>
    %365 = vector.extract_strided_slice %342 {offsets = [16, 0], sizes = [16, 8], strides = [1, 1]} : vector<32x8xf32> to vector<16x8xf32>
    %366 = vector.extract_strided_slice %343 {offsets = [16, 0], sizes = [16, 8], strides = [1, 1]} : vector<32x8xf32> to vector<16x8xf32>
    %367 = vector.extract_strided_slice %344 {offsets = [16, 0], sizes = [16, 8], strides = [1, 1]} : vector<32x8xf32> to vector<16x8xf32>
    %cst_113 = arith.constant dense<0.000000e+00> : vector<16x16xf32>
    %368 = tpu.matmul %365, %366, %cst_113 {dimension_numbers = #tpu.dot_dimension_numbers<[1], [1], [0], [0], [0, 0, 1, 0], [], []>} : vector<16x8xf32>, vector<16x8xf32>, vector<16x16xf32> -> vector<16x16xf32>
    %cst_114 = arith.constant 0.353553385 : f32
    %369 = vector.broadcast %cst_114 : f32 to vector<16x16xf32>
    %370 = arith.mulf %368, %369 : vector<16x16xf32>
    %cst_115 = arith.constant dense<0xFF800000> : vector<16xf32>
    %371 = vector.multi_reduction <maximumf>, %370, %cst_115 [1] : vector<16x16xf32> to vector<16xf32>
    %372 = vector.shape_cast %371 : vector<16xf32> to vector<16x1xf32>
    %373 = vector.broadcast %372 : vector<16x1xf32> to vector<16x16xf32>
    %374 = arith.subf %370, %373 : vector<16x16xf32>
    %375 = math.exp %374 : vector<16x16xf32>
    %cst_116 = arith.constant dense<0.000000e+00> : vector<16xf32>
    %376 = vector.multi_reduction <add>, %375, %cst_116 [1] : vector<16x16xf32> to vector<16xf32>
    %377 = vector.shape_cast %376 : vector<16xf32> to vector<16x1xf32>
    %378 = tpu.reciprocal %377 {approx = true} : vector<16x1xf32> -> vector<16x1xf32>
    %379 = vector.broadcast %378 : vector<16x1xf32> to vector<16x16xf32>
    %380 = arith.mulf %375, %379 : vector<16x16xf32>
    %cst_117 = arith.constant dense<0.000000e+00> : vector<16x8xf32>
    %381 = tpu.matmul %380, %367, %cst_117 {dimension_numbers = #tpu.dot_dimension_numbers<[1], [0], [0], [1], [0, 0, 1, 1], [], []>} : vector<16x16xf32>, vector<16x8xf32>, vector<16x8xf32> -> vector<16x8xf32>
    %cst_118 = arith.constant dense<0.000000e+00> : vector<16x32xf32>
    %382 = tpu.matmul %381, %345, %cst_118 {dimension_numbers = #tpu.dot_dimension_numbers<[1], [0], [0], [1], [0, 0, 1, 1], [], []>} : vector<16x8xf32>, vector<8x32xf32>, vector<16x32xf32> -> vector<16x32xf32>
    %383 = arith.addf %341, %382 : vector<16x32xf32>
    %384 = vector.extract_strided_slice %257 {offsets = [0, 24], sizes = [32, 8], strides = [1, 1]} : vector<32x32xf32> to vector<32x8xf32>
    %385 = vector.extract_strided_slice %258 {offsets = [0, 24], sizes = [32, 8], strides = [1, 1]} : vector<32x32xf32> to vector<32x8xf32>
    %386 = vector.extract_strided_slice %259 {offsets = [0, 24], sizes = [32, 8], strides = [1, 1]} : vector<32x32xf32> to vector<32x8xf32>
    %387 = vector.extract_strided_slice %255 {offsets = [24, 0], sizes = [8, 32], strides = [1, 1]} : vector<32x32xf32> to vector<8x32xf32>
    %388 = vector.extract_strided_slice %384 {offsets = [0, 0], sizes = [16, 8], strides = [1, 1]} : vector<32x8xf32> to vector<16x8xf32>
    %389 = vector.extract_strided_slice %385 {offsets = [0, 0], sizes = [16, 8], strides = [1, 1]} : vector<32x8xf32> to vector<16x8xf32>
    %390 = vector.extract_strided_slice %386 {offsets = [0, 0], sizes = [16, 8], strides = [1, 1]} : vector<32x8xf32> to vector<16x8xf32>
    %cst_119 = arith.constant dense<0.000000e+00> : vector<16x16xf32>
    %391 = tpu.matmul %388, %389, %cst_119 {dimension_numbers = #tpu.dot_dimension_numbers<[1], [1], [0], [0], [0, 0, 1, 0], [], []>} : vector<16x8xf32>, vector<16x8xf32>, vector<16x16xf32> -> vector<16x16xf32>
    %cst_120 = arith.constant 0.353553385 : f32
    %392 = vector.broadcast %cst_120 : f32 to vector<16x16xf32>
    %393 = arith.mulf %391, %392 : vector<16x16xf32>
    %cst_121 = arith.constant dense<0xFF800000> : vector<16xf32>
    %394 = vector.multi_reduction <maximumf>, %393, %cst_121 [1] : vector<16x16xf32> to vector<16xf32>
    %395 = vector.shape_cast %394 : vector<16xf32> to vector<16x1xf32>
    %396 = vector.broadcast %395 : vector<16x1xf32> to vector<16x16xf32>
    %397 = arith.subf %393, %396 : vector<16x16xf32>
    %398 = math.exp %397 : vector<16x16xf32>
    %cst_122 = arith.constant dense<0.000000e+00> : vector<16xf32>
    %399 = vector.multi_reduction <add>, %398, %cst_122 [1] : vector<16x16xf32> to vector<16xf32>
    %400 = vector.shape_cast %399 : vector<16xf32> to vector<16x1xf32>
    %401 = tpu.reciprocal %400 {approx = true} : vector<16x1xf32> -> vector<16x1xf32>
    %402 = vector.broadcast %401 : vector<16x1xf32> to vector<16x16xf32>
    %403 = arith.mulf %398, %402 : vector<16x16xf32>
    %cst_123 = arith.constant dense<0.000000e+00> : vector<16x8xf32>
    %404 = tpu.matmul %403, %390, %cst_123 {dimension_numbers = #tpu.dot_dimension_numbers<[1], [0], [0], [1], [0, 0, 1, 1], [], []>} : vector<16x16xf32>, vector<16x8xf32>, vector<16x8xf32> -> vector<16x8xf32>
    %cst_124 = arith.constant dense<0.000000e+00> : vector<16x32xf32>
    %405 = tpu.matmul %404, %387, %cst_124 {dimension_numbers = #tpu.dot_dimension_numbers<[1], [0], [0], [1], [0, 0, 1, 1], [], []>} : vector<16x8xf32>, vector<8x32xf32>, vector<16x32xf32> -> vector<16x32xf32>
    %406 = arith.addf %364, %405 : vector<16x32xf32>
    %407 = vector.extract_strided_slice %384 {offsets = [16, 0], sizes = [16, 8], strides = [1, 1]} : vector<32x8xf32> to vector<16x8xf32>
    %408 = vector.extract_strided_slice %385 {offsets = [16, 0], sizes = [16, 8], strides = [1, 1]} : vector<32x8xf32> to vector<16x8xf32>
    %409 = vector.extract_strided_slice %386 {offsets = [16, 0], sizes = [16, 8], strides = [1, 1]} : vector<32x8xf32> to vector<16x8xf32>
    %cst_125 = arith.constant dense<0.000000e+00> : vector<16x16xf32>
    %410 = tpu.matmul %407, %408, %cst_125 {dimension_numbers = #tpu.dot_dimension_numbers<[1], [1], [0], [0], [0, 0, 1, 0], [], []>} : vector<16x8xf32>, vector<16x8xf32>, vector<16x16xf32> -> vector<16x16xf32>
    %cst_126 = arith.constant 0.353553385 : f32
    %411 = vector.broadcast %cst_126 : f32 to vector<16x16xf32>
    %412 = arith.mulf %410, %411 : vector<16x16xf32>
    %cst_127 = arith.constant dense<0xFF800000> : vector<16xf32>
    %413 = vector.multi_reduction <maximumf>, %412, %cst_127 [1] : vector<16x16xf32> to vector<16xf32>
    %414 = vector.shape_cast %413 : vector<16xf32> to vector<16x1xf32>
    %415 = vector.broadcast %414 : vector<16x1xf32> to vector<16x16xf32>
    %416 = arith.subf %412, %415 : vector<16x16xf32>
    %417 = math.exp %416 : vector<16x16xf32>
    %cst_128 = arith.constant dense<0.000000e+00> : vector<16xf32>
    %418 = vector.multi_reduction <add>, %417, %cst_128 [1] : vector<16x16xf32> to vector<16xf32>
    %419 = vector.shape_cast %418 : vector<16xf32> to vector<16x1xf32>
    %420 = tpu.reciprocal %419 {approx = true} : vector<16x1xf32> -> vector<16x1xf32>
    %421 = vector.broadcast %420 : vector<16x1xf32> to vector<16x16xf32>
    %422 = arith.mulf %417, %421 : vector<16x16xf32>
    %cst_129 = arith.constant dense<0.000000e+00> : vector<16x8xf32>
    %423 = tpu.matmul %422, %409, %cst_129 {dimension_numbers = #tpu.dot_dimension_numbers<[1], [0], [0], [1], [0, 0, 1, 1], [], []>} : vector<16x16xf32>, vector<16x8xf32>, vector<16x8xf32> -> vector<16x8xf32>
    %cst_130 = arith.constant dense<0.000000e+00> : vector<16x32xf32>
    %424 = tpu.matmul %423, %387, %cst_130 {dimension_numbers = #tpu.dot_dimension_numbers<[1], [0], [0], [1], [0, 0, 1, 1], [], []>} : vector<16x8xf32>, vector<8x32xf32>, vector<16x32xf32> -> vector<16x32xf32>
    %425 = arith.addf %383, %424 : vector<16x32xf32>
    %426 = tpu.concatenate %406, %425 in 0 : vector<16x32xf32>, vector<16x32xf32> -> vector<32x32xf32>
    %427 = arith.addf %231, %426 : vector<32x32xf32>
    %c288 = arith.constant 288 : index
    %c0_131 = arith.constant 0 : index
    %428 = vector.load %arg3[%c288, %c0_131] : memref<1024x96xf32, #tpu.memory_space<vmem>>, vector<1x32xf32>
    %c296 = arith.constant 296 : index
    %c0_132 = arith.constant 0 : index
    %429 = vector.load %arg3[%c296, %c0_132] : memref<1024x96xf32, #tpu.memory_space<vmem>>, vector<1x32xf32>
    %cst_133 = arith.constant dense<0.000000e+00> : vector<32xf32>
    %430 = vector.multi_reduction <add>, %427, %cst_133 [1] : vector<32x32xf32> to vector<32xf32>
    %431 = vector.shape_cast %430 : vector<32xf32> to vector<32x1xf32>
    %cst_134 = arith.constant 3.200000e+01 : f32
    %432 = vector.broadcast %cst_134 : f32 to vector<32x1xf32>
    %433 = arith.divf %431, %432 : vector<32x1xf32>
    %434 = vector.broadcast %433 : vector<32x1xf32> to vector<32x32xf32>
    %435 = arith.subf %427, %434 : vector<32x32xf32>
    %436 = arith.mulf %435, %435 : vector<32x32xf32>
    %cst_135 = arith.constant dense<0.000000e+00> : vector<32xf32>
    %437 = vector.multi_reduction <add>, %436, %cst_135 [1] : vector<32x32xf32> to vector<32xf32>
    %438 = vector.shape_cast %437 : vector<32xf32> to vector<32x1xf32>
    %cst_136 = arith.constant 0.0322580636 : f32
    %439 = vector.broadcast %cst_136 : f32 to vector<32x1xf32>
    %440 = arith.mulf %438, %439 : vector<32x1xf32>
    %441 = math.sqrt %440 : vector<32x1xf32>
    %cst_137 = arith.constant 9.99999974E-6 : f32
    %442 = vector.broadcast %cst_137 : f32 to vector<32x1xf32>
    %443 = arith.addf %441, %442 : vector<32x1xf32>
    %444 = vector.broadcast %443 : vector<32x1xf32> to vector<32x32xf32>
    %445 = arith.divf %435, %444 : vector<32x32xf32>
    %446 = vector.broadcast %428 : vector<1x32xf32> to vector<32x32xf32>
    %447 = arith.mulf %446, %445 : vector<32x32xf32>
    %448 = vector.broadcast %429 : vector<1x32xf32> to vector<32x32xf32>
    %449 = arith.addf %447, %448 : vector<32x32xf32>
    %c304 = arith.constant 304 : index
    %c0_138 = arith.constant 0 : index
    %450 = vector.load %arg3[%c304, %c0_138] : memref<1024x96xf32, #tpu.memory_space<vmem>>, vector<32x64xf32>
    %c336 = arith.constant 336 : index
    %c0_139 = arith.constant 0 : index
    %451 = vector.load %arg3[%c336, %c0_139] : memref<1024x96xf32, #tpu.memory_space<vmem>>, vector<1x64xf32>
    %c344 = arith.constant 344 : index
    %c0_140 = arith.constant 0 : index
    %452 = vector.load %arg3[%c344, %c0_140] : memref<1024x96xf32, #tpu.memory_space<vmem>>, vector<64x32xf32>
    %c408 = arith.constant 408 : index
    %c0_141 = arith.constant 0 : index
    %453 = vector.load %arg3[%c408, %c0_141] : memref<1024x96xf32, #tpu.memory_space<vmem>>, vector<1x32xf32>
    %cst_142 = arith.constant dense<0.000000e+00> : vector<32x64xf32>
    %454 = tpu.matmul %449, %450, %cst_142 {dimension_numbers = #tpu.dot_dimension_numbers<[1], [0], [0], [1], [0, 0, 1, 1], [], []>} : vector<32x32xf32>, vector<32x64xf32>, vector<32x64xf32> -> vector<32x64xf32>
    %455 = vector.broadcast %451 : vector<1x64xf32> to vector<32x64xf32>
    %456 = arith.addf %454, %455 : vector<32x64xf32>
    %cst_143 = arith.constant 0.000000e+00 : f32
    %457 = vector.broadcast %cst_143 : f32 to vector<32x64xf32>
    %458 = arith.maximumf %456, %457 : vector<32x64xf32>
    %cst_144 = arith.constant dense<0.000000e+00> : vector<32x32xf32>
    %459 = tpu.matmul %458, %452, %cst_144 {dimension_numbers = #tpu.dot_dimension_numbers<[1], [0], [0], [1], [0, 0, 1, 1], [], []>} : vector<32x64xf32>, vector<64x32xf32>, vector<32x32xf32> -> vector<32x32xf32>
    %460 = vector.broadcast %453 : vector<1x32xf32> to vector<32x32xf32>
    %461 = arith.addf %459, %460 : vector<32x32xf32>
    %462 = arith.addf %427, %461 : vector<32x32xf32>
    %c416 = arith.constant 416 : index
    %c0_145 = arith.constant 0 : index
    %463 = vector.load %arg3[%c416, %c0_145] : memref<1024x96xf32, #tpu.memory_space<vmem>>, vector<1x32xf32>
    %c424 = arith.constant 424 : index
    %c0_146 = arith.constant 0 : index
    %464 = vector.load %arg3[%c424, %c0_146] : memref<1024x96xf32, #tpu.memory_space<vmem>>, vector<1x32xf32>
    %cst_147 = arith.constant dense<0.000000e+00> : vector<32xf32>
    %465 = vector.multi_reduction <add>, %462, %cst_147 [1] : vector<32x32xf32> to vector<32xf32>
    %466 = vector.shape_cast %465 : vector<32xf32> to vector<32x1xf32>
    %cst_148 = arith.constant 3.200000e+01 : f32
    %467 = vector.broadcast %cst_148 : f32 to vector<32x1xf32>
    %468 = arith.divf %466, %467 : vector<32x1xf32>
    %469 = vector.broadcast %468 : vector<32x1xf32> to vector<32x32xf32>
    %470 = arith.subf %462, %469 : vector<32x32xf32>
    %471 = arith.mulf %470, %470 : vector<32x32xf32>
    %cst_149 = arith.constant dense<0.000000e+00> : vector<32xf32>
    %472 = vector.multi_reduction <add>, %471, %cst_149 [1] : vector<32x32xf32> to vector<32xf32>
    %473 = vector.shape_cast %472 : vector<32xf32> to vector<32x1xf32>
    %cst_150 = arith.constant 0.0322580636 : f32
    %474 = vector.broadcast %cst_150 : f32 to vector<32x1xf32>
    %475 = arith.mulf %473, %474 : vector<32x1xf32>
    %476 = math.sqrt %475 : vector<32x1xf32>
    %cst_151 = arith.constant 9.99999974E-6 : f32
    %477 = vector.broadcast %cst_151 : f32 to vector<32x1xf32>
    %478 = arith.addf %476, %477 : vector<32x1xf32>
    %479 = vector.broadcast %478 : vector<32x1xf32> to vector<32x32xf32>
    %480 = arith.divf %470, %479 : vector<32x32xf32>
    %481 = vector.broadcast %463 : vector<1x32xf32> to vector<32x32xf32>
    %482 = arith.mulf %481, %480 : vector<32x32xf32>
    %483 = vector.broadcast %464 : vector<1x32xf32> to vector<32x32xf32>
    %484 = arith.addf %482, %483 : vector<32x32xf32>
    %c0_152 = arith.constant 0 : index
    %c0_153 = arith.constant 0 : index
    %485 = vector.load %arg2[%c0_152, %c0_153] : memref<16x32xf32, #tpu.memory_space<vmem>>, vector<16x32xf32>
    %c432 = arith.constant 432 : index
    %c0_154 = arith.constant 0 : index
    %486 = vector.load %arg3[%c432, %c0_154] : memref<1024x96xf32, #tpu.memory_space<vmem>>, vector<1x32xf32>
    %c440 = arith.constant 440 : index
    %c0_155 = arith.constant 0 : index
    %487 = vector.load %arg3[%c440, %c0_155] : memref<1024x96xf32, #tpu.memory_space<vmem>>, vector<1x32xf32>
    %cst_156 = arith.constant dense<0.000000e+00> : vector<16xf32>
    %488 = vector.multi_reduction <add>, %485, %cst_156 [1] : vector<16x32xf32> to vector<16xf32>
    %489 = vector.shape_cast %488 : vector<16xf32> to vector<16x1xf32>
    %cst_157 = arith.constant 3.200000e+01 : f32
    %490 = vector.broadcast %cst_157 : f32 to vector<16x1xf32>
    %491 = arith.divf %489, %490 : vector<16x1xf32>
    %492 = vector.broadcast %491 : vector<16x1xf32> to vector<16x32xf32>
    %493 = arith.subf %485, %492 : vector<16x32xf32>
    %494 = arith.mulf %493, %493 : vector<16x32xf32>
    %cst_158 = arith.constant dense<0.000000e+00> : vector<16xf32>
    %495 = vector.multi_reduction <add>, %494, %cst_158 [1] : vector<16x32xf32> to vector<16xf32>
    %496 = vector.shape_cast %495 : vector<16xf32> to vector<16x1xf32>
    %cst_159 = arith.constant 0.0322580636 : f32
    %497 = vector.broadcast %cst_159 : f32 to vector<16x1xf32>
    %498 = arith.mulf %496, %497 : vector<16x1xf32>
    %499 = math.sqrt %498 : vector<16x1xf32>
    %cst_160 = arith.constant 9.99999974E-6 : f32
    %500 = vector.broadcast %cst_160 : f32 to vector<16x1xf32>
    %501 = arith.addf %499, %500 : vector<16x1xf32>
    %502 = vector.broadcast %501 : vector<16x1xf32> to vector<16x32xf32>
    %503 = arith.divf %493, %502 : vector<16x32xf32>
    %504 = vector.broadcast %486 : vector<1x32xf32> to vector<16x32xf32>
    %505 = arith.mulf %504, %503 : vector<16x32xf32>
    %506 = vector.broadcast %487 : vector<1x32xf32> to vector<16x32xf32>
    %507 = arith.addf %505, %506 : vector<16x32xf32>
    %c448 = arith.constant 448 : index
    %c0_161 = arith.constant 0 : index
    %508 = vector.load %arg3[%c448, %c0_161] : memref<1024x96xf32, #tpu.memory_space<vmem>>, vector<32x96xf32>
    %c480 = arith.constant 480 : index
    %c0_162 = arith.constant 0 : index
    %509 = vector.load %arg3[%c480, %c0_162] : memref<1024x96xf32, #tpu.memory_space<vmem>>, vector<32x32xf32>
    %cst_163 = arith.constant dense<0.000000e+00> : vector<16x96xf32>
    %510 = tpu.matmul %507, %508, %cst_163 {dimension_numbers = #tpu.dot_dimension_numbers<[1], [0], [0], [1], [0, 0, 1, 1], [], []>} : vector<16x32xf32>, vector<32x96xf32>, vector<16x96xf32> -> vector<16x96xf32>
    %511 = vector.extract_strided_slice %510 {offsets = [0, 0], sizes = [16, 32], strides = [1, 1]} : vector<16x96xf32> to vector<16x32xf32>
    %512 = vector.extract_strided_slice %510 {offsets = [0, 32], sizes = [16, 32], strides = [1, 1]} : vector<16x96xf32> to vector<16x32xf32>
    %513 = vector.extract_strided_slice %510 {offsets = [0, 64], sizes = [16, 32], strides = [1, 1]} : vector<16x96xf32> to vector<16x32xf32>
    %514 = vector.extract_strided_slice %511 {offsets = [0, 0], sizes = [16, 8], strides = [1, 1]} : vector<16x32xf32> to vector<16x8xf32>
    %515 = vector.extract_strided_slice %512 {offsets = [0, 0], sizes = [16, 8], strides = [1, 1]} : vector<16x32xf32> to vector<16x8xf32>
    %516 = vector.extract_strided_slice %513 {offsets = [0, 0], sizes = [16, 8], strides = [1, 1]} : vector<16x32xf32> to vector<16x8xf32>
    %517 = vector.extract_strided_slice %509 {offsets = [0, 0], sizes = [8, 32], strides = [1, 1]} : vector<32x32xf32> to vector<8x32xf32>
    %518 = vector.extract_strided_slice %514 {offsets = [0, 0], sizes = [8, 8], strides = [1, 1]} : vector<16x8xf32> to vector<8x8xf32>
    %519 = vector.extract_strided_slice %515 {offsets = [0, 0], sizes = [8, 8], strides = [1, 1]} : vector<16x8xf32> to vector<8x8xf32>
    %520 = vector.extract_strided_slice %516 {offsets = [0, 0], sizes = [8, 8], strides = [1, 1]} : vector<16x8xf32> to vector<8x8xf32>
    %cst_164 = arith.constant dense<0.000000e+00> : vector<8x8xf32>
    %521 = tpu.matmul %518, %519, %cst_164 {dimension_numbers = #tpu.dot_dimension_numbers<[1], [1], [0], [0], [0, 0, 1, 0], [], []>} : vector<8x8xf32>, vector<8x8xf32>, vector<8x8xf32> -> vector<8x8xf32>
    %cst_165 = arith.constant 0.353553385 : f32
    %522 = vector.broadcast %cst_165 : f32 to vector<8x8xf32>
    %523 = arith.mulf %521, %522 : vector<8x8xf32>
    %cst_166 = arith.constant dense<0xFF800000> : vector<8xf32>
    %524 = vector.multi_reduction <maximumf>, %523, %cst_166 [1] : vector<8x8xf32> to vector<8xf32>
    %525 = vector.shape_cast %524 : vector<8xf32> to vector<8x1xf32>
    %526 = vector.broadcast %525 : vector<8x1xf32> to vector<8x8xf32>
    %527 = arith.subf %523, %526 : vector<8x8xf32>
    %528 = math.exp %527 : vector<8x8xf32>
    %cst_167 = arith.constant dense<0.000000e+00> : vector<8xf32>
    %529 = vector.multi_reduction <add>, %528, %cst_167 [1] : vector<8x8xf32> to vector<8xf32>
    %530 = vector.shape_cast %529 : vector<8xf32> to vector<8x1xf32>
    %531 = tpu.reciprocal %530 {approx = true} : vector<8x1xf32> -> vector<8x1xf32>
    %532 = vector.broadcast %531 : vector<8x1xf32> to vector<8x8xf32>
    %533 = arith.mulf %528, %532 : vector<8x8xf32>
    %cst_168 = arith.constant dense<0.000000e+00> : vector<8x8xf32>
    %534 = tpu.matmul %533, %520, %cst_168 {dimension_numbers = #tpu.dot_dimension_numbers<[1], [0], [0], [1], [0, 0, 1, 1], [], []>} : vector<8x8xf32>, vector<8x8xf32>, vector<8x8xf32> -> vector<8x8xf32>
    %cst_169 = arith.constant dense<0.000000e+00> : vector<8x32xf32>
    %535 = tpu.matmul %534, %517, %cst_169 {dimension_numbers = #tpu.dot_dimension_numbers<[1], [0], [0], [1], [0, 0, 1, 1], [], []>} : vector<8x8xf32>, vector<8x32xf32>, vector<8x32xf32> -> vector<8x32xf32>
    %536 = vector.extract_strided_slice %514 {offsets = [8, 0], sizes = [8, 8], strides = [1, 1]} : vector<16x8xf32> to vector<8x8xf32>
    %537 = vector.extract_strided_slice %515 {offsets = [8, 0], sizes = [8, 8], strides = [1, 1]} : vector<16x8xf32> to vector<8x8xf32>
    %538 = vector.extract_strided_slice %516 {offsets = [8, 0], sizes = [8, 8], strides = [1, 1]} : vector<16x8xf32> to vector<8x8xf32>
    %cst_170 = arith.constant dense<0.000000e+00> : vector<8x8xf32>
    %539 = tpu.matmul %536, %537, %cst_170 {dimension_numbers = #tpu.dot_dimension_numbers<[1], [1], [0], [0], [0, 0, 1, 0], [], []>} : vector<8x8xf32>, vector<8x8xf32>, vector<8x8xf32> -> vector<8x8xf32>
    %cst_171 = arith.constant 0.353553385 : f32
    %540 = vector.broadcast %cst_171 : f32 to vector<8x8xf32>
    %541 = arith.mulf %539, %540 : vector<8x8xf32>
    %cst_172 = arith.constant dense<0xFF800000> : vector<8xf32>
    %542 = vector.multi_reduction <maximumf>, %541, %cst_172 [1] : vector<8x8xf32> to vector<8xf32>
    %543 = vector.shape_cast %542 : vector<8xf32> to vector<8x1xf32>
    %544 = vector.broadcast %543 : vector<8x1xf32> to vector<8x8xf32>
    %545 = arith.subf %541, %544 : vector<8x8xf32>
    %546 = math.exp %545 : vector<8x8xf32>
    %cst_173 = arith.constant dense<0.000000e+00> : vector<8xf32>
    %547 = vector.multi_reduction <add>, %546, %cst_173 [1] : vector<8x8xf32> to vector<8xf32>
    %548 = vector.shape_cast %547 : vector<8xf32> to vector<8x1xf32>
    %549 = tpu.reciprocal %548 {approx = true} : vector<8x1xf32> -> vector<8x1xf32>
    %550 = vector.broadcast %549 : vector<8x1xf32> to vector<8x8xf32>
    %551 = arith.mulf %546, %550 : vector<8x8xf32>
    %cst_174 = arith.constant dense<0.000000e+00> : vector<8x8xf32>
    %552 = tpu.matmul %551, %538, %cst_174 {dimension_numbers = #tpu.dot_dimension_numbers<[1], [0], [0], [1], [0, 0, 1, 1], [], []>} : vector<8x8xf32>, vector<8x8xf32>, vector<8x8xf32> -> vector<8x8xf32>
    %cst_175 = arith.constant dense<0.000000e+00> : vector<8x32xf32>
    %553 = tpu.matmul %552, %517, %cst_175 {dimension_numbers = #tpu.dot_dimension_numbers<[1], [0], [0], [1], [0, 0, 1, 1], [], []>} : vector<8x8xf32>, vector<8x32xf32>, vector<8x32xf32> -> vector<8x32xf32>
    %554 = vector.extract_strided_slice %511 {offsets = [0, 8], sizes = [16, 8], strides = [1, 1]} : vector<16x32xf32> to vector<16x8xf32>
    %555 = vector.extract_strided_slice %512 {offsets = [0, 8], sizes = [16, 8], strides = [1, 1]} : vector<16x32xf32> to vector<16x8xf32>
    %556 = vector.extract_strided_slice %513 {offsets = [0, 8], sizes = [16, 8], strides = [1, 1]} : vector<16x32xf32> to vector<16x8xf32>
    %557 = vector.extract_strided_slice %509 {offsets = [8, 0], sizes = [8, 32], strides = [1, 1]} : vector<32x32xf32> to vector<8x32xf32>
    %558 = vector.extract_strided_slice %554 {offsets = [0, 0], sizes = [8, 8], strides = [1, 1]} : vector<16x8xf32> to vector<8x8xf32>
    %559 = vector.extract_strided_slice %555 {offsets = [0, 0], sizes = [8, 8], strides = [1, 1]} : vector<16x8xf32> to vector<8x8xf32>
    %560 = vector.extract_strided_slice %556 {offsets = [0, 0], sizes = [8, 8], strides = [1, 1]} : vector<16x8xf32> to vector<8x8xf32>
    %cst_176 = arith.constant dense<0.000000e+00> : vector<8x8xf32>
    %561 = tpu.matmul %558, %559, %cst_176 {dimension_numbers = #tpu.dot_dimension_numbers<[1], [1], [0], [0], [0, 0, 1, 0], [], []>} : vector<8x8xf32>, vector<8x8xf32>, vector<8x8xf32> -> vector<8x8xf32>
    %cst_177 = arith.constant 0.353553385 : f32
    %562 = vector.broadcast %cst_177 : f32 to vector<8x8xf32>
    %563 = arith.mulf %561, %562 : vector<8x8xf32>
    %cst_178 = arith.constant dense<0xFF800000> : vector<8xf32>
    %564 = vector.multi_reduction <maximumf>, %563, %cst_178 [1] : vector<8x8xf32> to vector<8xf32>
    %565 = vector.shape_cast %564 : vector<8xf32> to vector<8x1xf32>
    %566 = vector.broadcast %565 : vector<8x1xf32> to vector<8x8xf32>
    %567 = arith.subf %563, %566 : vector<8x8xf32>
    %568 = math.exp %567 : vector<8x8xf32>
    %cst_179 = arith.constant dense<0.000000e+00> : vector<8xf32>
    %569 = vector.multi_reduction <add>, %568, %cst_179 [1] : vector<8x8xf32> to vector<8xf32>
    %570 = vector.shape_cast %569 : vector<8xf32> to vector<8x1xf32>
    %571 = tpu.reciprocal %570 {approx = true} : vector<8x1xf32> -> vector<8x1xf32>
    %572 = vector.broadcast %571 : vector<8x1xf32> to vector<8x8xf32>
    %573 = arith.mulf %568, %572 : vector<8x8xf32>
    %cst_180 = arith.constant dense<0.000000e+00> : vector<8x8xf32>
    %574 = tpu.matmul %573, %560, %cst_180 {dimension_numbers = #tpu.dot_dimension_numbers<[1], [0], [0], [1], [0, 0, 1, 1], [], []>} : vector<8x8xf32>, vector<8x8xf32>, vector<8x8xf32> -> vector<8x8xf32>
    %cst_181 = arith.constant dense<0.000000e+00> : vector<8x32xf32>
    %575 = tpu.matmul %574, %557, %cst_181 {dimension_numbers = #tpu.dot_dimension_numbers<[1], [0], [0], [1], [0, 0, 1, 1], [], []>} : vector<8x8xf32>, vector<8x32xf32>, vector<8x32xf32> -> vector<8x32xf32>
    %576 = arith.addf %535, %575 : vector<8x32xf32>
    %577 = vector.extract_strided_slice %554 {offsets = [8, 0], sizes = [8, 8], strides = [1, 1]} : vector<16x8xf32> to vector<8x8xf32>
    %578 = vector.extract_strided_slice %555 {offsets = [8, 0], sizes = [8, 8], strides = [1, 1]} : vector<16x8xf32> to vector<8x8xf32>
    %579 = vector.extract_strided_slice %556 {offsets = [8, 0], sizes = [8, 8], strides = [1, 1]} : vector<16x8xf32> to vector<8x8xf32>
    %cst_182 = arith.constant dense<0.000000e+00> : vector<8x8xf32>
    %580 = tpu.matmul %577, %578, %cst_182 {dimension_numbers = #tpu.dot_dimension_numbers<[1], [1], [0], [0], [0, 0, 1, 0], [], []>} : vector<8x8xf32>, vector<8x8xf32>, vector<8x8xf32> -> vector<8x8xf32>
    %cst_183 = arith.constant 0.353553385 : f32
    %581 = vector.broadcast %cst_183 : f32 to vector<8x8xf32>
    %582 = arith.mulf %580, %581 : vector<8x8xf32>
    %cst_184 = arith.constant dense<0xFF800000> : vector<8xf32>
    %583 = vector.multi_reduction <maximumf>, %582, %cst_184 [1] : vector<8x8xf32> to vector<8xf32>
    %584 = vector.shape_cast %583 : vector<8xf32> to vector<8x1xf32>
    %585 = vector.broadcast %584 : vector<8x1xf32> to vector<8x8xf32>
    %586 = arith.subf %582, %585 : vector<8x8xf32>
    %587 = math.exp %586 : vector<8x8xf32>
    %cst_185 = arith.constant dense<0.000000e+00> : vector<8xf32>
    %588 = vector.multi_reduction <add>, %587, %cst_185 [1] : vector<8x8xf32> to vector<8xf32>
    %589 = vector.shape_cast %588 : vector<8xf32> to vector<8x1xf32>
    %590 = tpu.reciprocal %589 {approx = true} : vector<8x1xf32> -> vector<8x1xf32>
    %591 = vector.broadcast %590 : vector<8x1xf32> to vector<8x8xf32>
    %592 = arith.mulf %587, %591 : vector<8x8xf32>
    %cst_186 = arith.constant dense<0.000000e+00> : vector<8x8xf32>
    %593 = tpu.matmul %592, %579, %cst_186 {dimension_numbers = #tpu.dot_dimension_numbers<[1], [0], [0], [1], [0, 0, 1, 1], [], []>} : vector<8x8xf32>, vector<8x8xf32>, vector<8x8xf32> -> vector<8x8xf32>
    %cst_187 = arith.constant dense<0.000000e+00> : vector<8x32xf32>
    %594 = tpu.matmul %593, %557, %cst_187 {dimension_numbers = #tpu.dot_dimension_numbers<[1], [0], [0], [1], [0, 0, 1, 1], [], []>} : vector<8x8xf32>, vector<8x32xf32>, vector<8x32xf32> -> vector<8x32xf32>
    %595 = arith.addf %553, %594 : vector<8x32xf32>
    %596 = vector.extract_strided_slice %511 {offsets = [0, 16], sizes = [16, 8], strides = [1, 1]} : vector<16x32xf32> to vector<16x8xf32>
    %597 = vector.extract_strided_slice %512 {offsets = [0, 16], sizes = [16, 8], strides = [1, 1]} : vector<16x32xf32> to vector<16x8xf32>
    %598 = vector.extract_strided_slice %513 {offsets = [0, 16], sizes = [16, 8], strides = [1, 1]} : vector<16x32xf32> to vector<16x8xf32>
    %599 = vector.extract_strided_slice %509 {offsets = [16, 0], sizes = [8, 32], strides = [1, 1]} : vector<32x32xf32> to vector<8x32xf32>
    %600 = vector.extract_strided_slice %596 {offsets = [0, 0], sizes = [8, 8], strides = [1, 1]} : vector<16x8xf32> to vector<8x8xf32>
    %601 = vector.extract_strided_slice %597 {offsets = [0, 0], sizes = [8, 8], strides = [1, 1]} : vector<16x8xf32> to vector<8x8xf32>
    %602 = vector.extract_strided_slice %598 {offsets = [0, 0], sizes = [8, 8], strides = [1, 1]} : vector<16x8xf32> to vector<8x8xf32>
    %cst_188 = arith.constant dense<0.000000e+00> : vector<8x8xf32>
    %603 = tpu.matmul %600, %601, %cst_188 {dimension_numbers = #tpu.dot_dimension_numbers<[1], [1], [0], [0], [0, 0, 1, 0], [], []>} : vector<8x8xf32>, vector<8x8xf32>, vector<8x8xf32> -> vector<8x8xf32>
    %cst_189 = arith.constant 0.353553385 : f32
    %604 = vector.broadcast %cst_189 : f32 to vector<8x8xf32>
    %605 = arith.mulf %603, %604 : vector<8x8xf32>
    %cst_190 = arith.constant dense<0xFF800000> : vector<8xf32>
    %606 = vector.multi_reduction <maximumf>, %605, %cst_190 [1] : vector<8x8xf32> to vector<8xf32>
    %607 = vector.shape_cast %606 : vector<8xf32> to vector<8x1xf32>
    %608 = vector.broadcast %607 : vector<8x1xf32> to vector<8x8xf32>
    %609 = arith.subf %605, %608 : vector<8x8xf32>
    %610 = math.exp %609 : vector<8x8xf32>
    %cst_191 = arith.constant dense<0.000000e+00> : vector<8xf32>
    %611 = vector.multi_reduction <add>, %610, %cst_191 [1] : vector<8x8xf32> to vector<8xf32>
    %612 = vector.shape_cast %611 : vector<8xf32> to vector<8x1xf32>
    %613 = tpu.reciprocal %612 {approx = true} : vector<8x1xf32> -> vector<8x1xf32>
    %614 = vector.broadcast %613 : vector<8x1xf32> to vector<8x8xf32>
    %615 = arith.mulf %610, %614 : vector<8x8xf32>
    %cst_192 = arith.constant dense<0.000000e+00> : vector<8x8xf32>
    %616 = tpu.matmul %615, %602, %cst_192 {dimension_numbers = #tpu.dot_dimension_numbers<[1], [0], [0], [1], [0, 0, 1, 1], [], []>} : vector<8x8xf32>, vector<8x8xf32>, vector<8x8xf32> -> vector<8x8xf32>
    %cst_193 = arith.constant dense<0.000000e+00> : vector<8x32xf32>
    %617 = tpu.matmul %616, %599, %cst_193 {dimension_numbers = #tpu.dot_dimension_numbers<[1], [0], [0], [1], [0, 0, 1, 1], [], []>} : vector<8x8xf32>, vector<8x32xf32>, vector<8x32xf32> -> vector<8x32xf32>
    %618 = arith.addf %576, %617 : vector<8x32xf32>
    %619 = vector.extract_strided_slice %596 {offsets = [8, 0], sizes = [8, 8], strides = [1, 1]} : vector<16x8xf32> to vector<8x8xf32>
    %620 = vector.extract_strided_slice %597 {offsets = [8, 0], sizes = [8, 8], strides = [1, 1]} : vector<16x8xf32> to vector<8x8xf32>
    %621 = vector.extract_strided_slice %598 {offsets = [8, 0], sizes = [8, 8], strides = [1, 1]} : vector<16x8xf32> to vector<8x8xf32>
    %cst_194 = arith.constant dense<0.000000e+00> : vector<8x8xf32>
    %622 = tpu.matmul %619, %620, %cst_194 {dimension_numbers = #tpu.dot_dimension_numbers<[1], [1], [0], [0], [0, 0, 1, 0], [], []>} : vector<8x8xf32>, vector<8x8xf32>, vector<8x8xf32> -> vector<8x8xf32>
    %cst_195 = arith.constant 0.353553385 : f32
    %623 = vector.broadcast %cst_195 : f32 to vector<8x8xf32>
    %624 = arith.mulf %622, %623 : vector<8x8xf32>
    %cst_196 = arith.constant dense<0xFF800000> : vector<8xf32>
    %625 = vector.multi_reduction <maximumf>, %624, %cst_196 [1] : vector<8x8xf32> to vector<8xf32>
    %626 = vector.shape_cast %625 : vector<8xf32> to vector<8x1xf32>
    %627 = vector.broadcast %626 : vector<8x1xf32> to vector<8x8xf32>
    %628 = arith.subf %624, %627 : vector<8x8xf32>
    %629 = math.exp %628 : vector<8x8xf32>
    %cst_197 = arith.constant dense<0.000000e+00> : vector<8xf32>
    %630 = vector.multi_reduction <add>, %629, %cst_197 [1] : vector<8x8xf32> to vector<8xf32>
    %631 = vector.shape_cast %630 : vector<8xf32> to vector<8x1xf32>
    %632 = tpu.reciprocal %631 {approx = true} : vector<8x1xf32> -> vector<8x1xf32>
    %633 = vector.broadcast %632 : vector<8x1xf32> to vector<8x8xf32>
    %634 = arith.mulf %629, %633 : vector<8x8xf32>
    %cst_198 = arith.constant dense<0.000000e+00> : vector<8x8xf32>
    %635 = tpu.matmul %634, %621, %cst_198 {dimension_numbers = #tpu.dot_dimension_numbers<[1], [0], [0], [1], [0, 0, 1, 1], [], []>} : vector<8x8xf32>, vector<8x8xf32>, vector<8x8xf32> -> vector<8x8xf32>
    %cst_199 = arith.constant dense<0.000000e+00> : vector<8x32xf32>
    %636 = tpu.matmul %635, %599, %cst_199 {dimension_numbers = #tpu.dot_dimension_numbers<[1], [0], [0], [1], [0, 0, 1, 1], [], []>} : vector<8x8xf32>, vector<8x32xf32>, vector<8x32xf32> -> vector<8x32xf32>
    %637 = arith.addf %595, %636 : vector<8x32xf32>
    %638 = vector.extract_strided_slice %511 {offsets = [0, 24], sizes = [16, 8], strides = [1, 1]} : vector<16x32xf32> to vector<16x8xf32>
    %639 = vector.extract_strided_slice %512 {offsets = [0, 24], sizes = [16, 8], strides = [1, 1]} : vector<16x32xf32> to vector<16x8xf32>
    %640 = vector.extract_strided_slice %513 {offsets = [0, 24], sizes = [16, 8], strides = [1, 1]} : vector<16x32xf32> to vector<16x8xf32>
    %641 = vector.extract_strided_slice %509 {offsets = [24, 0], sizes = [8, 32], strides = [1, 1]} : vector<32x32xf32> to vector<8x32xf32>
    %642 = vector.extract_strided_slice %638 {offsets = [0, 0], sizes = [8, 8], strides = [1, 1]} : vector<16x8xf32> to vector<8x8xf32>
    %643 = vector.extract_strided_slice %639 {offsets = [0, 0], sizes = [8, 8], strides = [1, 1]} : vector<16x8xf32> to vector<8x8xf32>
    %644 = vector.extract_strided_slice %640 {offsets = [0, 0], sizes = [8, 8], strides = [1, 1]} : vector<16x8xf32> to vector<8x8xf32>
    %cst_200 = arith.constant dense<0.000000e+00> : vector<8x8xf32>
    %645 = tpu.matmul %642, %643, %cst_200 {dimension_numbers = #tpu.dot_dimension_numbers<[1], [1], [0], [0], [0, 0, 1, 0], [], []>} : vector<8x8xf32>, vector<8x8xf32>, vector<8x8xf32> -> vector<8x8xf32>
    %cst_201 = arith.constant 0.353553385 : f32
    %646 = vector.broadcast %cst_201 : f32 to vector<8x8xf32>
    %647 = arith.mulf %645, %646 : vector<8x8xf32>
    %cst_202 = arith.constant dense<0xFF800000> : vector<8xf32>
    %648 = vector.multi_reduction <maximumf>, %647, %cst_202 [1] : vector<8x8xf32> to vector<8xf32>
    %649 = vector.shape_cast %648 : vector<8xf32> to vector<8x1xf32>
    %650 = vector.broadcast %649 : vector<8x1xf32> to vector<8x8xf32>
    %651 = arith.subf %647, %650 : vector<8x8xf32>
    %652 = math.exp %651 : vector<8x8xf32>
    %cst_203 = arith.constant dense<0.000000e+00> : vector<8xf32>
    %653 = vector.multi_reduction <add>, %652, %cst_203 [1] : vector<8x8xf32> to vector<8xf32>
    %654 = vector.shape_cast %653 : vector<8xf32> to vector<8x1xf32>
    %655 = tpu.reciprocal %654 {approx = true} : vector<8x1xf32> -> vector<8x1xf32>
    %656 = vector.broadcast %655 : vector<8x1xf32> to vector<8x8xf32>
    %657 = arith.mulf %652, %656 : vector<8x8xf32>
    %cst_204 = arith.constant dense<0.000000e+00> : vector<8x8xf32>
    %658 = tpu.matmul %657, %644, %cst_204 {dimension_numbers = #tpu.dot_dimension_numbers<[1], [0], [0], [1], [0, 0, 1, 1], [], []>} : vector<8x8xf32>, vector<8x8xf32>, vector<8x8xf32> -> vector<8x8xf32>
    %cst_205 = arith.constant dense<0.000000e+00> : vector<8x32xf32>
    %659 = tpu.matmul %658, %641, %cst_205 {dimension_numbers = #tpu.dot_dimension_numbers<[1], [0], [0], [1], [0, 0, 1, 1], [], []>} : vector<8x8xf32>, vector<8x32xf32>, vector<8x32xf32> -> vector<8x32xf32>
    %660 = arith.addf %618, %659 : vector<8x32xf32>
    %661 = vector.extract_strided_slice %638 {offsets = [8, 0], sizes = [8, 8], strides = [1, 1]} : vector<16x8xf32> to vector<8x8xf32>
    %662 = vector.extract_strided_slice %639 {offsets = [8, 0], sizes = [8, 8], strides = [1, 1]} : vector<16x8xf32> to vector<8x8xf32>
    %663 = vector.extract_strided_slice %640 {offsets = [8, 0], sizes = [8, 8], strides = [1, 1]} : vector<16x8xf32> to vector<8x8xf32>
    %cst_206 = arith.constant dense<0.000000e+00> : vector<8x8xf32>
    %664 = tpu.matmul %661, %662, %cst_206 {dimension_numbers = #tpu.dot_dimension_numbers<[1], [1], [0], [0], [0, 0, 1, 0], [], []>} : vector<8x8xf32>, vector<8x8xf32>, vector<8x8xf32> -> vector<8x8xf32>
    %cst_207 = arith.constant 0.353553385 : f32
    %665 = vector.broadcast %cst_207 : f32 to vector<8x8xf32>
    %666 = arith.mulf %664, %665 : vector<8x8xf32>
    %cst_208 = arith.constant dense<0xFF800000> : vector<8xf32>
    %667 = vector.multi_reduction <maximumf>, %666, %cst_208 [1] : vector<8x8xf32> to vector<8xf32>
    %668 = vector.shape_cast %667 : vector<8xf32> to vector<8x1xf32>
    %669 = vector.broadcast %668 : vector<8x1xf32> to vector<8x8xf32>
    %670 = arith.subf %666, %669 : vector<8x8xf32>
    %671 = math.exp %670 : vector<8x8xf32>
    %cst_209 = arith.constant dense<0.000000e+00> : vector<8xf32>
    %672 = vector.multi_reduction <add>, %671, %cst_209 [1] : vector<8x8xf32> to vector<8xf32>
    %673 = vector.shape_cast %672 : vector<8xf32> to vector<8x1xf32>
    %674 = tpu.reciprocal %673 {approx = true} : vector<8x1xf32> -> vector<8x1xf32>
    %675 = vector.broadcast %674 : vector<8x1xf32> to vector<8x8xf32>
    %676 = arith.mulf %671, %675 : vector<8x8xf32>
    %cst_210 = arith.constant dense<0.000000e+00> : vector<8x8xf32>
    %677 = tpu.matmul %676, %663, %cst_210 {dimension_numbers = #tpu.dot_dimension_numbers<[1], [0], [0], [1], [0, 0, 1, 1], [], []>} : vector<8x8xf32>, vector<8x8xf32>, vector<8x8xf32> -> vector<8x8xf32>
    %cst_211 = arith.constant dense<0.000000e+00> : vector<8x32xf32>
    %678 = tpu.matmul %677, %641, %cst_211 {dimension_numbers = #tpu.dot_dimension_numbers<[1], [0], [0], [1], [0, 0, 1, 1], [], []>} : vector<8x8xf32>, vector<8x32xf32>, vector<8x32xf32> -> vector<8x32xf32>
    %679 = arith.addf %637, %678 : vector<8x32xf32>
    %680 = tpu.concatenate %660, %679 in 0 : vector<8x32xf32>, vector<8x32xf32> -> vector<16x32xf32>
    %681 = arith.addf %485, %680 : vector<16x32xf32>
    %c512 = arith.constant 512 : index
    %c0_212 = arith.constant 0 : index
    %682 = vector.load %arg3[%c512, %c0_212] : memref<1024x96xf32, #tpu.memory_space<vmem>>, vector<1x32xf32>
    %c520 = arith.constant 520 : index
    %c0_213 = arith.constant 0 : index
    %683 = vector.load %arg3[%c520, %c0_213] : memref<1024x96xf32, #tpu.memory_space<vmem>>, vector<1x32xf32>
    %cst_214 = arith.constant dense<0.000000e+00> : vector<16xf32>
    %684 = vector.multi_reduction <add>, %681, %cst_214 [1] : vector<16x32xf32> to vector<16xf32>
    %685 = vector.shape_cast %684 : vector<16xf32> to vector<16x1xf32>
    %cst_215 = arith.constant 3.200000e+01 : f32
    %686 = vector.broadcast %cst_215 : f32 to vector<16x1xf32>
    %687 = arith.divf %685, %686 : vector<16x1xf32>
    %688 = vector.broadcast %687 : vector<16x1xf32> to vector<16x32xf32>
    %689 = arith.subf %681, %688 : vector<16x32xf32>
    %690 = arith.mulf %689, %689 : vector<16x32xf32>
    %cst_216 = arith.constant dense<0.000000e+00> : vector<16xf32>
    %691 = vector.multi_reduction <add>, %690, %cst_216 [1] : vector<16x32xf32> to vector<16xf32>
    %692 = vector.shape_cast %691 : vector<16xf32> to vector<16x1xf32>
    %cst_217 = arith.constant 0.0322580636 : f32
    %693 = vector.broadcast %cst_217 : f32 to vector<16x1xf32>
    %694 = arith.mulf %692, %693 : vector<16x1xf32>
    %695 = math.sqrt %694 : vector<16x1xf32>
    %cst_218 = arith.constant 9.99999974E-6 : f32
    %696 = vector.broadcast %cst_218 : f32 to vector<16x1xf32>
    %697 = arith.addf %695, %696 : vector<16x1xf32>
    %698 = vector.broadcast %697 : vector<16x1xf32> to vector<16x32xf32>
    %699 = arith.divf %689, %698 : vector<16x32xf32>
    %700 = vector.broadcast %682 : vector<1x32xf32> to vector<16x32xf32>
    %701 = arith.mulf %700, %699 : vector<16x32xf32>
    %702 = vector.broadcast %683 : vector<1x32xf32> to vector<16x32xf32>
    %703 = arith.addf %701, %702 : vector<16x32xf32>
    %c528 = arith.constant 528 : index
    %c0_219 = arith.constant 0 : index
    %704 = vector.load %arg3[%c528, %c0_219] : memref<1024x96xf32, #tpu.memory_space<vmem>>, vector<32x32xf32>
    %c528_220 = arith.constant 528 : index
    %c32 = arith.constant 32 : index
    %705 = vector.load %arg3[%c528_220, %c32] : memref<1024x96xf32, #tpu.memory_space<vmem>>, vector<32x64xf32>
    %c560 = arith.constant 560 : index
    %c0_221 = arith.constant 0 : index
    %706 = vector.load %arg3[%c560, %c0_221] : memref<1024x96xf32, #tpu.memory_space<vmem>>, vector<32x32xf32>
    %cst_222 = arith.constant dense<0.000000e+00> : vector<16x32xf32>
    %707 = tpu.matmul %703, %704, %cst_222 {dimension_numbers = #tpu.dot_dimension_numbers<[1], [0], [0], [1], [0, 0, 1, 1], [], []>} : vector<16x32xf32>, vector<32x32xf32>, vector<16x32xf32> -> vector<16x32xf32>
    %cst_223 = arith.constant dense<0.000000e+00> : vector<32x64xf32>
    %708 = tpu.matmul %484, %705, %cst_223 {dimension_numbers = #tpu.dot_dimension_numbers<[1], [0], [0], [1], [0, 0, 1, 1], [], []>} : vector<32x32xf32>, vector<32x64xf32>, vector<32x64xf32> -> vector<32x64xf32>
    %709 = vector.extract_strided_slice %708 {offsets = [0, 0], sizes = [32, 32], strides = [1, 1]} : vector<32x64xf32> to vector<32x32xf32>
    %710 = vector.extract_strided_slice %708 {offsets = [0, 32], sizes = [32, 32], strides = [1, 1]} : vector<32x64xf32> to vector<32x32xf32>
    %711 = vector.extract_strided_slice %707 {offsets = [0, 0], sizes = [16, 8], strides = [1, 1]} : vector<16x32xf32> to vector<16x8xf32>
    %712 = vector.extract_strided_slice %709 {offsets = [0, 0], sizes = [32, 8], strides = [1, 1]} : vector<32x32xf32> to vector<32x8xf32>
    %713 = vector.extract_strided_slice %710 {offsets = [0, 0], sizes = [32, 8], strides = [1, 1]} : vector<32x32xf32> to vector<32x8xf32>
    %714 = vector.extract_strided_slice %706 {offsets = [0, 0], sizes = [8, 32], strides = [1, 1]} : vector<32x32xf32> to vector<8x32xf32>
    %715 = vector.extract_strided_slice %711 {offsets = [0, 0], sizes = [8, 8], strides = [1, 1]} : vector<16x8xf32> to vector<8x8xf32>
    %716 = vector.extract_strided_slice %712 {offsets = [0, 0], sizes = [16, 8], strides = [1, 1]} : vector<32x8xf32> to vector<16x8xf32>
    %717 = vector.extract_strided_slice %713 {offsets = [0, 0], sizes = [16, 8], strides = [1, 1]} : vector<32x8xf32> to vector<16x8xf32>
    %cst_224 = arith.constant dense<0.000000e+00> : vector<8x16xf32>
    %718 = tpu.matmul %715, %716, %cst_224 {dimension_numbers = #tpu.dot_dimension_numbers<[1], [1], [0], [0], [0, 0, 1, 0], [], []>} : vector<8x8xf32>, vector<16x8xf32>, vector<8x16xf32> -> vector<8x16xf32>
    %cst_225 = arith.constant 0.353553385 : f32
    %719 = vector.broadcast %cst_225 : f32 to vector<8x16xf32>
    %720 = arith.mulf %718, %719 : vector<8x16xf32>
    %cst_226 = arith.constant dense<0xFF800000> : vector<8xf32>
    %721 = vector.multi_reduction <maximumf>, %720, %cst_226 [1] : vector<8x16xf32> to vector<8xf32>
    %722 = vector.shape_cast %721 : vector<8xf32> to vector<8x1xf32>
    %723 = vector.broadcast %722 : vector<8x1xf32> to vector<8x16xf32>
    %724 = arith.subf %720, %723 : vector<8x16xf32>
    %725 = math.exp %724 : vector<8x16xf32>
    %cst_227 = arith.constant dense<0.000000e+00> : vector<8xf32>
    %726 = vector.multi_reduction <add>, %725, %cst_227 [1] : vector<8x16xf32> to vector<8xf32>
    %727 = vector.shape_cast %726 : vector<8xf32> to vector<8x1xf32>
    %728 = tpu.reciprocal %727 {approx = true} : vector<8x1xf32> -> vector<8x1xf32>
    %729 = vector.broadcast %728 : vector<8x1xf32> to vector<8x16xf32>
    %730 = arith.mulf %725, %729 : vector<8x16xf32>
    %cst_228 = arith.constant dense<0.000000e+00> : vector<8x8xf32>
    %731 = tpu.matmul %730, %717, %cst_228 {dimension_numbers = #tpu.dot_dimension_numbers<[1], [0], [0], [1], [0, 0, 1, 1], [], []>} : vector<8x16xf32>, vector<16x8xf32>, vector<8x8xf32> -> vector<8x8xf32>
    %cst_229 = arith.constant dense<0.000000e+00> : vector<8x32xf32>
    %732 = tpu.matmul %731, %714, %cst_229 {dimension_numbers = #tpu.dot_dimension_numbers<[1], [0], [0], [1], [0, 0, 1, 1], [], []>} : vector<8x8xf32>, vector<8x32xf32>, vector<8x32xf32> -> vector<8x32xf32>
    %733 = vector.extract_strided_slice %711 {offsets = [8, 0], sizes = [8, 8], strides = [1, 1]} : vector<16x8xf32> to vector<8x8xf32>
    %734 = vector.extract_strided_slice %712 {offsets = [16, 0], sizes = [16, 8], strides = [1, 1]} : vector<32x8xf32> to vector<16x8xf32>
    %735 = vector.extract_strided_slice %713 {offsets = [16, 0], sizes = [16, 8], strides = [1, 1]} : vector<32x8xf32> to vector<16x8xf32>
    %cst_230 = arith.constant dense<0.000000e+00> : vector<8x16xf32>
    %736 = tpu.matmul %733, %734, %cst_230 {dimension_numbers = #tpu.dot_dimension_numbers<[1], [1], [0], [0], [0, 0, 1, 0], [], []>} : vector<8x8xf32>, vector<16x8xf32>, vector<8x16xf32> -> vector<8x16xf32>
    %cst_231 = arith.constant 0.353553385 : f32
    %737 = vector.broadcast %cst_231 : f32 to vector<8x16xf32>
    %738 = arith.mulf %736, %737 : vector<8x16xf32>
    %cst_232 = arith.constant dense<0xFF800000> : vector<8xf32>
    %739 = vector.multi_reduction <maximumf>, %738, %cst_232 [1] : vector<8x16xf32> to vector<8xf32>
    %740 = vector.shape_cast %739 : vector<8xf32> to vector<8x1xf32>
    %741 = vector.broadcast %740 : vector<8x1xf32> to vector<8x16xf32>
    %742 = arith.subf %738, %741 : vector<8x16xf32>
    %743 = math.exp %742 : vector<8x16xf32>
    %cst_233 = arith.constant dense<0.000000e+00> : vector<8xf32>
    %744 = vector.multi_reduction <add>, %743, %cst_233 [1] : vector<8x16xf32> to vector<8xf32>
    %745 = vector.shape_cast %744 : vector<8xf32> to vector<8x1xf32>
    %746 = tpu.reciprocal %745 {approx = true} : vector<8x1xf32> -> vector<8x1xf32>
    %747 = vector.broadcast %746 : vector<8x1xf32> to vector<8x16xf32>
    %748 = arith.mulf %743, %747 : vector<8x16xf32>
    %cst_234 = arith.constant dense<0.000000e+00> : vector<8x8xf32>
    %749 = tpu.matmul %748, %735, %cst_234 {dimension_numbers = #tpu.dot_dimension_numbers<[1], [0], [0], [1], [0, 0, 1, 1], [], []>} : vector<8x16xf32>, vector<16x8xf32>, vector<8x8xf32> -> vector<8x8xf32>
    %cst_235 = arith.constant dense<0.000000e+00> : vector<8x32xf32>
    %750 = tpu.matmul %749, %714, %cst_235 {dimension_numbers = #tpu.dot_dimension_numbers<[1], [0], [0], [1], [0, 0, 1, 1], [], []>} : vector<8x8xf32>, vector<8x32xf32>, vector<8x32xf32> -> vector<8x32xf32>
    %751 = vector.extract_strided_slice %707 {offsets = [0, 8], sizes = [16, 8], strides = [1, 1]} : vector<16x32xf32> to vector<16x8xf32>
    %752 = vector.extract_strided_slice %709 {offsets = [0, 8], sizes = [32, 8], strides = [1, 1]} : vector<32x32xf32> to vector<32x8xf32>
    %753 = vector.extract_strided_slice %710 {offsets = [0, 8], sizes = [32, 8], strides = [1, 1]} : vector<32x32xf32> to vector<32x8xf32>
    %754 = vector.extract_strided_slice %706 {offsets = [8, 0], sizes = [8, 32], strides = [1, 1]} : vector<32x32xf32> to vector<8x32xf32>
    %755 = vector.extract_strided_slice %751 {offsets = [0, 0], sizes = [8, 8], strides = [1, 1]} : vector<16x8xf32> to vector<8x8xf32>
    %756 = vector.extract_strided_slice %752 {offsets = [0, 0], sizes = [16, 8], strides = [1, 1]} : vector<32x8xf32> to vector<16x8xf32>
    %757 = vector.extract_strided_slice %753 {offsets = [0, 0], sizes = [16, 8], strides = [1, 1]} : vector<32x8xf32> to vector<16x8xf32>
    %cst_236 = arith.constant dense<0.000000e+00> : vector<8x16xf32>
    %758 = tpu.matmul %755, %756, %cst_236 {dimension_numbers = #tpu.dot_dimension_numbers<[1], [1], [0], [0], [0, 0, 1, 0], [], []>} : vector<8x8xf32>, vector<16x8xf32>, vector<8x16xf32> -> vector<8x16xf32>
    %cst_237 = arith.constant 0.353553385 : f32
    %759 = vector.broadcast %cst_237 : f32 to vector<8x16xf32>
    %760 = arith.mulf %758, %759 : vector<8x16xf32>
    %cst_238 = arith.constant dense<0xFF800000> : vector<8xf32>
    %761 = vector.multi_reduction <maximumf>, %760, %cst_238 [1] : vector<8x16xf32> to vector<8xf32>
    %762 = vector.shape_cast %761 : vector<8xf32> to vector<8x1xf32>
    %763 = vector.broadcast %762 : vector<8x1xf32> to vector<8x16xf32>
    %764 = arith.subf %760, %763 : vector<8x16xf32>
    %765 = math.exp %764 : vector<8x16xf32>
    %cst_239 = arith.constant dense<0.000000e+00> : vector<8xf32>
    %766 = vector.multi_reduction <add>, %765, %cst_239 [1] : vector<8x16xf32> to vector<8xf32>
    %767 = vector.shape_cast %766 : vector<8xf32> to vector<8x1xf32>
    %768 = tpu.reciprocal %767 {approx = true} : vector<8x1xf32> -> vector<8x1xf32>
    %769 = vector.broadcast %768 : vector<8x1xf32> to vector<8x16xf32>
    %770 = arith.mulf %765, %769 : vector<8x16xf32>
    %cst_240 = arith.constant dense<0.000000e+00> : vector<8x8xf32>
    %771 = tpu.matmul %770, %757, %cst_240 {dimension_numbers = #tpu.dot_dimension_numbers<[1], [0], [0], [1], [0, 0, 1, 1], [], []>} : vector<8x16xf32>, vector<16x8xf32>, vector<8x8xf32> -> vector<8x8xf32>
    %cst_241 = arith.constant dense<0.000000e+00> : vector<8x32xf32>
    %772 = tpu.matmul %771, %754, %cst_241 {dimension_numbers = #tpu.dot_dimension_numbers<[1], [0], [0], [1], [0, 0, 1, 1], [], []>} : vector<8x8xf32>, vector<8x32xf32>, vector<8x32xf32> -> vector<8x32xf32>
    %773 = arith.addf %732, %772 : vector<8x32xf32>
    %774 = vector.extract_strided_slice %751 {offsets = [8, 0], sizes = [8, 8], strides = [1, 1]} : vector<16x8xf32> to vector<8x8xf32>
    %775 = vector.extract_strided_slice %752 {offsets = [16, 0], sizes = [16, 8], strides = [1, 1]} : vector<32x8xf32> to vector<16x8xf32>
    %776 = vector.extract_strided_slice %753 {offsets = [16, 0], sizes = [16, 8], strides = [1, 1]} : vector<32x8xf32> to vector<16x8xf32>
    %cst_242 = arith.constant dense<0.000000e+00> : vector<8x16xf32>
    %777 = tpu.matmul %774, %775, %cst_242 {dimension_numbers = #tpu.dot_dimension_numbers<[1], [1], [0], [0], [0, 0, 1, 0], [], []>} : vector<8x8xf32>, vector<16x8xf32>, vector<8x16xf32> -> vector<8x16xf32>
    %cst_243 = arith.constant 0.353553385 : f32
    %778 = vector.broadcast %cst_243 : f32 to vector<8x16xf32>
    %779 = arith.mulf %777, %778 : vector<8x16xf32>
    %cst_244 = arith.constant dense<0xFF800000> : vector<8xf32>
    %780 = vector.multi_reduction <maximumf>, %779, %cst_244 [1] : vector<8x16xf32> to vector<8xf32>
    %781 = vector.shape_cast %780 : vector<8xf32> to vector<8x1xf32>
    %782 = vector.broadcast %781 : vector<8x1xf32> to vector<8x16xf32>
    %783 = arith.subf %779, %782 : vector<8x16xf32>
    %784 = math.exp %783 : vector<8x16xf32>
    %cst_245 = arith.constant dense<0.000000e+00> : vector<8xf32>
    %785 = vector.multi_reduction <add>, %784, %cst_245 [1] : vector<8x16xf32> to vector<8xf32>
    %786 = vector.shape_cast %785 : vector<8xf32> to vector<8x1xf32>
    %787 = tpu.reciprocal %786 {approx = true} : vector<8x1xf32> -> vector<8x1xf32>
    %788 = vector.broadcast %787 : vector<8x1xf32> to vector<8x16xf32>
    %789 = arith.mulf %784, %788 : vector<8x16xf32>
    %cst_246 = arith.constant dense<0.000000e+00> : vector<8x8xf32>
    %790 = tpu.matmul %789, %776, %cst_246 {dimension_numbers = #tpu.dot_dimension_numbers<[1], [0], [0], [1], [0, 0, 1, 1], [], []>} : vector<8x16xf32>, vector<16x8xf32>, vector<8x8xf32> -> vector<8x8xf32>
    %cst_247 = arith.constant dense<0.000000e+00> : vector<8x32xf32>
    %791 = tpu.matmul %790, %754, %cst_247 {dimension_numbers = #tpu.dot_dimension_numbers<[1], [0], [0], [1], [0, 0, 1, 1], [], []>} : vector<8x8xf32>, vector<8x32xf32>, vector<8x32xf32> -> vector<8x32xf32>
    %792 = arith.addf %750, %791 : vector<8x32xf32>
    %793 = vector.extract_strided_slice %707 {offsets = [0, 16], sizes = [16, 8], strides = [1, 1]} : vector<16x32xf32> to vector<16x8xf32>
    %794 = vector.extract_strided_slice %709 {offsets = [0, 16], sizes = [32, 8], strides = [1, 1]} : vector<32x32xf32> to vector<32x8xf32>
    %795 = vector.extract_strided_slice %710 {offsets = [0, 16], sizes = [32, 8], strides = [1, 1]} : vector<32x32xf32> to vector<32x8xf32>
    %796 = vector.extract_strided_slice %706 {offsets = [16, 0], sizes = [8, 32], strides = [1, 1]} : vector<32x32xf32> to vector<8x32xf32>
    %797 = vector.extract_strided_slice %793 {offsets = [0, 0], sizes = [8, 8], strides = [1, 1]} : vector<16x8xf32> to vector<8x8xf32>
    %798 = vector.extract_strided_slice %794 {offsets = [0, 0], sizes = [16, 8], strides = [1, 1]} : vector<32x8xf32> to vector<16x8xf32>
    %799 = vector.extract_strided_slice %795 {offsets = [0, 0], sizes = [16, 8], strides = [1, 1]} : vector<32x8xf32> to vector<16x8xf32>
    %cst_248 = arith.constant dense<0.000000e+00> : vector<8x16xf32>
    %800 = tpu.matmul %797, %798, %cst_248 {dimension_numbers = #tpu.dot_dimension_numbers<[1], [1], [0], [0], [0, 0, 1, 0], [], []>} : vector<8x8xf32>, vector<16x8xf32>, vector<8x16xf32> -> vector<8x16xf32>
    %cst_249 = arith.constant 0.353553385 : f32
    %801 = vector.broadcast %cst_249 : f32 to vector<8x16xf32>
    %802 = arith.mulf %800, %801 : vector<8x16xf32>
    %cst_250 = arith.constant dense<0xFF800000> : vector<8xf32>
    %803 = vector.multi_reduction <maximumf>, %802, %cst_250 [1] : vector<8x16xf32> to vector<8xf32>
    %804 = vector.shape_cast %803 : vector<8xf32> to vector<8x1xf32>
    %805 = vector.broadcast %804 : vector<8x1xf32> to vector<8x16xf32>
    %806 = arith.subf %802, %805 : vector<8x16xf32>
    %807 = math.exp %806 : vector<8x16xf32>
    %cst_251 = arith.constant dense<0.000000e+00> : vector<8xf32>
    %808 = vector.multi_reduction <add>, %807, %cst_251 [1] : vector<8x16xf32> to vector<8xf32>
    %809 = vector.shape_cast %808 : vector<8xf32> to vector<8x1xf32>
    %810 = tpu.reciprocal %809 {approx = true} : vector<8x1xf32> -> vector<8x1xf32>
    %811 = vector.broadcast %810 : vector<8x1xf32> to vector<8x16xf32>
    %812 = arith.mulf %807, %811 : vector<8x16xf32>
    %cst_252 = arith.constant dense<0.000000e+00> : vector<8x8xf32>
    %813 = tpu.matmul %812, %799, %cst_252 {dimension_numbers = #tpu.dot_dimension_numbers<[1], [0], [0], [1], [0, 0, 1, 1], [], []>} : vector<8x16xf32>, vector<16x8xf32>, vector<8x8xf32> -> vector<8x8xf32>
    %cst_253 = arith.constant dense<0.000000e+00> : vector<8x32xf32>
    %814 = tpu.matmul %813, %796, %cst_253 {dimension_numbers = #tpu.dot_dimension_numbers<[1], [0], [0], [1], [0, 0, 1, 1], [], []>} : vector<8x8xf32>, vector<8x32xf32>, vector<8x32xf32> -> vector<8x32xf32>
    %815 = arith.addf %773, %814 : vector<8x32xf32>
    %816 = vector.extract_strided_slice %793 {offsets = [8, 0], sizes = [8, 8], strides = [1, 1]} : vector<16x8xf32> to vector<8x8xf32>
    %817 = vector.extract_strided_slice %794 {offsets = [16, 0], sizes = [16, 8], strides = [1, 1]} : vector<32x8xf32> to vector<16x8xf32>
    %818 = vector.extract_strided_slice %795 {offsets = [16, 0], sizes = [16, 8], strides = [1, 1]} : vector<32x8xf32> to vector<16x8xf32>
    %cst_254 = arith.constant dense<0.000000e+00> : vector<8x16xf32>
    %819 = tpu.matmul %816, %817, %cst_254 {dimension_numbers = #tpu.dot_dimension_numbers<[1], [1], [0], [0], [0, 0, 1, 0], [], []>} : vector<8x8xf32>, vector<16x8xf32>, vector<8x16xf32> -> vector<8x16xf32>
    %cst_255 = arith.constant 0.353553385 : f32
    %820 = vector.broadcast %cst_255 : f32 to vector<8x16xf32>
    %821 = arith.mulf %819, %820 : vector<8x16xf32>
    %cst_256 = arith.constant dense<0xFF800000> : vector<8xf32>
    %822 = vector.multi_reduction <maximumf>, %821, %cst_256 [1] : vector<8x16xf32> to vector<8xf32>
    %823 = vector.shape_cast %822 : vector<8xf32> to vector<8x1xf32>
    %824 = vector.broadcast %823 : vector<8x1xf32> to vector<8x16xf32>
    %825 = arith.subf %821, %824 : vector<8x16xf32>
    %826 = math.exp %825 : vector<8x16xf32>
    %cst_257 = arith.constant dense<0.000000e+00> : vector<8xf32>
    %827 = vector.multi_reduction <add>, %826, %cst_257 [1] : vector<8x16xf32> to vector<8xf32>
    %828 = vector.shape_cast %827 : vector<8xf32> to vector<8x1xf32>
    %829 = tpu.reciprocal %828 {approx = true} : vector<8x1xf32> -> vector<8x1xf32>
    %830 = vector.broadcast %829 : vector<8x1xf32> to vector<8x16xf32>
    %831 = arith.mulf %826, %830 : vector<8x16xf32>
    %cst_258 = arith.constant dense<0.000000e+00> : vector<8x8xf32>
    %832 = tpu.matmul %831, %818, %cst_258 {dimension_numbers = #tpu.dot_dimension_numbers<[1], [0], [0], [1], [0, 0, 1, 1], [], []>} : vector<8x16xf32>, vector<16x8xf32>, vector<8x8xf32> -> vector<8x8xf32>
    %cst_259 = arith.constant dense<0.000000e+00> : vector<8x32xf32>
    %833 = tpu.matmul %832, %796, %cst_259 {dimension_numbers = #tpu.dot_dimension_numbers<[1], [0], [0], [1], [0, 0, 1, 1], [], []>} : vector<8x8xf32>, vector<8x32xf32>, vector<8x32xf32> -> vector<8x32xf32>
    %834 = arith.addf %792, %833 : vector<8x32xf32>
    %835 = vector.extract_strided_slice %707 {offsets = [0, 24], sizes = [16, 8], strides = [1, 1]} : vector<16x32xf32> to vector<16x8xf32>
    %836 = vector.extract_strided_slice %709 {offsets = [0, 24], sizes = [32, 8], strides = [1, 1]} : vector<32x32xf32> to vector<32x8xf32>
    %837 = vector.extract_strided_slice %710 {offsets = [0, 24], sizes = [32, 8], strides = [1, 1]} : vector<32x32xf32> to vector<32x8xf32>
    %838 = vector.extract_strided_slice %706 {offsets = [24, 0], sizes = [8, 32], strides = [1, 1]} : vector<32x32xf32> to vector<8x32xf32>
    %839 = vector.extract_strided_slice %835 {offsets = [0, 0], sizes = [8, 8], strides = [1, 1]} : vector<16x8xf32> to vector<8x8xf32>
    %840 = vector.extract_strided_slice %836 {offsets = [0, 0], sizes = [16, 8], strides = [1, 1]} : vector<32x8xf32> to vector<16x8xf32>
    %841 = vector.extract_strided_slice %837 {offsets = [0, 0], sizes = [16, 8], strides = [1, 1]} : vector<32x8xf32> to vector<16x8xf32>
    %cst_260 = arith.constant dense<0.000000e+00> : vector<8x16xf32>
    %842 = tpu.matmul %839, %840, %cst_260 {dimension_numbers = #tpu.dot_dimension_numbers<[1], [1], [0], [0], [0, 0, 1, 0], [], []>} : vector<8x8xf32>, vector<16x8xf32>, vector<8x16xf32> -> vector<8x16xf32>
    %cst_261 = arith.constant 0.353553385 : f32
    %843 = vector.broadcast %cst_261 : f32 to vector<8x16xf32>
    %844 = arith.mulf %842, %843 : vector<8x16xf32>
    %cst_262 = arith.constant dense<0xFF800000> : vector<8xf32>
    %845 = vector.multi_reduction <maximumf>, %844, %cst_262 [1] : vector<8x16xf32> to vector<8xf32>
    %846 = vector.shape_cast %845 : vector<8xf32> to vector<8x1xf32>
    %847 = vector.broadcast %846 : vector<8x1xf32> to vector<8x16xf32>
    %848 = arith.subf %844, %847 : vector<8x16xf32>
    %849 = math.exp %848 : vector<8x16xf32>
    %cst_263 = arith.constant dense<0.000000e+00> : vector<8xf32>
    %850 = vector.multi_reduction <add>, %849, %cst_263 [1] : vector<8x16xf32> to vector<8xf32>
    %851 = vector.shape_cast %850 : vector<8xf32> to vector<8x1xf32>
    %852 = tpu.reciprocal %851 {approx = true} : vector<8x1xf32> -> vector<8x1xf32>
    %853 = vector.broadcast %852 : vector<8x1xf32> to vector<8x16xf32>
    %854 = arith.mulf %849, %853 : vector<8x16xf32>
    %cst_264 = arith.constant dense<0.000000e+00> : vector<8x8xf32>
    %855 = tpu.matmul %854, %841, %cst_264 {dimension_numbers = #tpu.dot_dimension_numbers<[1], [0], [0], [1], [0, 0, 1, 1], [], []>} : vector<8x16xf32>, vector<16x8xf32>, vector<8x8xf32> -> vector<8x8xf32>
    %cst_265 = arith.constant dense<0.000000e+00> : vector<8x32xf32>
    %856 = tpu.matmul %855, %838, %cst_265 {dimension_numbers = #tpu.dot_dimension_numbers<[1], [0], [0], [1], [0, 0, 1, 1], [], []>} : vector<8x8xf32>, vector<8x32xf32>, vector<8x32xf32> -> vector<8x32xf32>
    %857 = arith.addf %815, %856 : vector<8x32xf32>
    %858 = vector.extract_strided_slice %835 {offsets = [8, 0], sizes = [8, 8], strides = [1, 1]} : vector<16x8xf32> to vector<8x8xf32>
    %859 = vector.extract_strided_slice %836 {offsets = [16, 0], sizes = [16, 8], strides = [1, 1]} : vector<32x8xf32> to vector<16x8xf32>
    %860 = vector.extract_strided_slice %837 {offsets = [16, 0], sizes = [16, 8], strides = [1, 1]} : vector<32x8xf32> to vector<16x8xf32>
    %cst_266 = arith.constant dense<0.000000e+00> : vector<8x16xf32>
    %861 = tpu.matmul %858, %859, %cst_266 {dimension_numbers = #tpu.dot_dimension_numbers<[1], [1], [0], [0], [0, 0, 1, 0], [], []>} : vector<8x8xf32>, vector<16x8xf32>, vector<8x16xf32> -> vector<8x16xf32>
    %cst_267 = arith.constant 0.353553385 : f32
    %862 = vector.broadcast %cst_267 : f32 to vector<8x16xf32>
    %863 = arith.mulf %861, %862 : vector<8x16xf32>
    %cst_268 = arith.constant dense<0xFF800000> : vector<8xf32>
    %864 = vector.multi_reduction <maximumf>, %863, %cst_268 [1] : vector<8x16xf32> to vector<8xf32>
    %865 = vector.shape_cast %864 : vector<8xf32> to vector<8x1xf32>
    %866 = vector.broadcast %865 : vector<8x1xf32> to vector<8x16xf32>
    %867 = arith.subf %863, %866 : vector<8x16xf32>
    %868 = math.exp %867 : vector<8x16xf32>
    %cst_269 = arith.constant dense<0.000000e+00> : vector<8xf32>
    %869 = vector.multi_reduction <add>, %868, %cst_269 [1] : vector<8x16xf32> to vector<8xf32>
    %870 = vector.shape_cast %869 : vector<8xf32> to vector<8x1xf32>
    %871 = tpu.reciprocal %870 {approx = true} : vector<8x1xf32> -> vector<8x1xf32>
    %872 = vector.broadcast %871 : vector<8x1xf32> to vector<8x16xf32>
    %873 = arith.mulf %868, %872 : vector<8x16xf32>
    %cst_270 = arith.constant dense<0.000000e+00> : vector<8x8xf32>
    %874 = tpu.matmul %873, %860, %cst_270 {dimension_numbers = #tpu.dot_dimension_numbers<[1], [0], [0], [1], [0, 0, 1, 1], [], []>} : vector<8x16xf32>, vector<16x8xf32>, vector<8x8xf32> -> vector<8x8xf32>
    %cst_271 = arith.constant dense<0.000000e+00> : vector<8x32xf32>
    %875 = tpu.matmul %874, %838, %cst_271 {dimension_numbers = #tpu.dot_dimension_numbers<[1], [0], [0], [1], [0, 0, 1, 1], [], []>} : vector<8x8xf32>, vector<8x32xf32>, vector<8x32xf32> -> vector<8x32xf32>
    %876 = arith.addf %834, %875 : vector<8x32xf32>
    %877 = tpu.concatenate %857, %876 in 0 : vector<8x32xf32>, vector<8x32xf32> -> vector<16x32xf32>
    %878 = arith.addf %681, %877 : vector<16x32xf32>
    %c592 = arith.constant 592 : index
    %c0_272 = arith.constant 0 : index
    %879 = vector.load %arg3[%c592, %c0_272] : memref<1024x96xf32, #tpu.memory_space<vmem>>, vector<1x32xf32>
    %c600 = arith.constant 600 : index
    %c0_273 = arith.constant 0 : index
    %880 = vector.load %arg3[%c600, %c0_273] : memref<1024x96xf32, #tpu.memory_space<vmem>>, vector<1x32xf32>
    %cst_274 = arith.constant dense<0.000000e+00> : vector<16xf32>
    %881 = vector.multi_reduction <add>, %878, %cst_274 [1] : vector<16x32xf32> to vector<16xf32>
    %882 = vector.shape_cast %881 : vector<16xf32> to vector<16x1xf32>
    %cst_275 = arith.constant 3.200000e+01 : f32
    %883 = vector.broadcast %cst_275 : f32 to vector<16x1xf32>
    %884 = arith.divf %882, %883 : vector<16x1xf32>
    %885 = vector.broadcast %884 : vector<16x1xf32> to vector<16x32xf32>
    %886 = arith.subf %878, %885 : vector<16x32xf32>
    %887 = arith.mulf %886, %886 : vector<16x32xf32>
    %cst_276 = arith.constant dense<0.000000e+00> : vector<16xf32>
    %888 = vector.multi_reduction <add>, %887, %cst_276 [1] : vector<16x32xf32> to vector<16xf32>
    %889 = vector.shape_cast %888 : vector<16xf32> to vector<16x1xf32>
    %cst_277 = arith.constant 0.0322580636 : f32
    %890 = vector.broadcast %cst_277 : f32 to vector<16x1xf32>
    %891 = arith.mulf %889, %890 : vector<16x1xf32>
    %892 = math.sqrt %891 : vector<16x1xf32>
    %cst_278 = arith.constant 9.99999974E-6 : f32
    %893 = vector.broadcast %cst_278 : f32 to vector<16x1xf32>
    %894 = arith.addf %892, %893 : vector<16x1xf32>
    %895 = vector.broadcast %894 : vector<16x1xf32> to vector<16x32xf32>
    %896 = arith.divf %886, %895 : vector<16x32xf32>
    %897 = vector.broadcast %879 : vector<1x32xf32> to vector<16x32xf32>
    %898 = arith.mulf %897, %896 : vector<16x32xf32>
    %899 = vector.broadcast %880 : vector<1x32xf32> to vector<16x32xf32>
    %900 = arith.addf %898, %899 : vector<16x32xf32>
    %c608 = arith.constant 608 : index
    %c0_279 = arith.constant 0 : index
    %901 = vector.load %arg3[%c608, %c0_279] : memref<1024x96xf32, #tpu.memory_space<vmem>>, vector<32x64xf32>
    %c640 = arith.constant 640 : index
    %c0_280 = arith.constant 0 : index
    %902 = vector.load %arg3[%c640, %c0_280] : memref<1024x96xf32, #tpu.memory_space<vmem>>, vector<1x64xf32>
    %c648 = arith.constant 648 : index
    %c0_281 = arith.constant 0 : index
    %903 = vector.load %arg3[%c648, %c0_281] : memref<1024x96xf32, #tpu.memory_space<vmem>>, vector<64x32xf32>
    %c712 = arith.constant 712 : index
    %c0_282 = arith.constant 0 : index
    %904 = vector.load %arg3[%c712, %c0_282] : memref<1024x96xf32, #tpu.memory_space<vmem>>, vector<1x32xf32>
    %cst_283 = arith.constant dense<0.000000e+00> : vector<16x64xf32>
    %905 = tpu.matmul %900, %901, %cst_283 {dimension_numbers = #tpu.dot_dimension_numbers<[1], [0], [0], [1], [0, 0, 1, 1], [], []>} : vector<16x32xf32>, vector<32x64xf32>, vector<16x64xf32> -> vector<16x64xf32>
    %906 = vector.broadcast %902 : vector<1x64xf32> to vector<16x64xf32>
    %907 = arith.addf %905, %906 : vector<16x64xf32>
    %cst_284 = arith.constant 0.000000e+00 : f32
    %908 = vector.broadcast %cst_284 : f32 to vector<16x64xf32>
    %909 = arith.maximumf %907, %908 : vector<16x64xf32>
    %cst_285 = arith.constant dense<0.000000e+00> : vector<16x32xf32>
    %910 = tpu.matmul %909, %903, %cst_285 {dimension_numbers = #tpu.dot_dimension_numbers<[1], [0], [0], [1], [0, 0, 1, 1], [], []>} : vector<16x64xf32>, vector<64x32xf32>, vector<16x32xf32> -> vector<16x32xf32>
    %911 = vector.broadcast %904 : vector<1x32xf32> to vector<16x32xf32>
    %912 = arith.addf %910, %911 : vector<16x32xf32>
    %913 = arith.addf %878, %912 : vector<16x32xf32>
    %c720 = arith.constant 720 : index
    %c0_286 = arith.constant 0 : index
    %914 = vector.load %arg3[%c720, %c0_286] : memref<1024x96xf32, #tpu.memory_space<vmem>>, vector<1x32xf32>
    %c728 = arith.constant 728 : index
    %c0_287 = arith.constant 0 : index
    %915 = vector.load %arg3[%c728, %c0_287] : memref<1024x96xf32, #tpu.memory_space<vmem>>, vector<1x32xf32>
    %cst_288 = arith.constant dense<0.000000e+00> : vector<16xf32>
    %916 = vector.multi_reduction <add>, %913, %cst_288 [1] : vector<16x32xf32> to vector<16xf32>
    %917 = vector.shape_cast %916 : vector<16xf32> to vector<16x1xf32>
    %cst_289 = arith.constant 3.200000e+01 : f32
    %918 = vector.broadcast %cst_289 : f32 to vector<16x1xf32>
    %919 = arith.divf %917, %918 : vector<16x1xf32>
    %920 = vector.broadcast %919 : vector<16x1xf32> to vector<16x32xf32>
    %921 = arith.subf %913, %920 : vector<16x32xf32>
    %922 = arith.mulf %921, %921 : vector<16x32xf32>
    %cst_290 = arith.constant dense<0.000000e+00> : vector<16xf32>
    %923 = vector.multi_reduction <add>, %922, %cst_290 [1] : vector<16x32xf32> to vector<16xf32>
    %924 = vector.shape_cast %923 : vector<16xf32> to vector<16x1xf32>
    %cst_291 = arith.constant 0.0322580636 : f32
    %925 = vector.broadcast %cst_291 : f32 to vector<16x1xf32>
    %926 = arith.mulf %924, %925 : vector<16x1xf32>
    %927 = math.sqrt %926 : vector<16x1xf32>
    %cst_292 = arith.constant 9.99999974E-6 : f32
    %928 = vector.broadcast %cst_292 : f32 to vector<16x1xf32>
    %929 = arith.addf %927, %928 : vector<16x1xf32>
    %930 = vector.broadcast %929 : vector<16x1xf32> to vector<16x32xf32>
    %931 = arith.divf %921, %930 : vector<16x32xf32>
    %932 = vector.broadcast %914 : vector<1x32xf32> to vector<16x32xf32>
    %933 = arith.mulf %932, %931 : vector<16x32xf32>
    %934 = vector.broadcast %915 : vector<1x32xf32> to vector<16x32xf32>
    %935 = arith.addf %933, %934 : vector<16x32xf32>
    %c736 = arith.constant 736 : index
    %c0_293 = arith.constant 0 : index
    %936 = vector.load %arg3[%c736, %c0_293] : memref<1024x96xf32, #tpu.memory_space<vmem>>, vector<32x96xf32>
    %c768 = arith.constant 768 : index
    %c0_294 = arith.constant 0 : index
    %937 = vector.load %arg3[%c768, %c0_294] : memref<1024x96xf32, #tpu.memory_space<vmem>>, vector<32x32xf32>
    %cst_295 = arith.constant dense<0.000000e+00> : vector<16x96xf32>
    %938 = tpu.matmul %935, %936, %cst_295 {dimension_numbers = #tpu.dot_dimension_numbers<[1], [0], [0], [1], [0, 0, 1, 1], [], []>} : vector<16x32xf32>, vector<32x96xf32>, vector<16x96xf32> -> vector<16x96xf32>
    %939 = vector.extract_strided_slice %938 {offsets = [0, 0], sizes = [16, 32], strides = [1, 1]} : vector<16x96xf32> to vector<16x32xf32>
    %940 = vector.extract_strided_slice %938 {offsets = [0, 32], sizes = [16, 32], strides = [1, 1]} : vector<16x96xf32> to vector<16x32xf32>
    %941 = vector.extract_strided_slice %938 {offsets = [0, 64], sizes = [16, 32], strides = [1, 1]} : vector<16x96xf32> to vector<16x32xf32>
    %942 = vector.extract_strided_slice %939 {offsets = [0, 0], sizes = [16, 8], strides = [1, 1]} : vector<16x32xf32> to vector<16x8xf32>
    %943 = vector.extract_strided_slice %940 {offsets = [0, 0], sizes = [16, 8], strides = [1, 1]} : vector<16x32xf32> to vector<16x8xf32>
    %944 = vector.extract_strided_slice %941 {offsets = [0, 0], sizes = [16, 8], strides = [1, 1]} : vector<16x32xf32> to vector<16x8xf32>
    %945 = vector.extract_strided_slice %937 {offsets = [0, 0], sizes = [8, 32], strides = [1, 1]} : vector<32x32xf32> to vector<8x32xf32>
    %946 = vector.extract_strided_slice %942 {offsets = [0, 0], sizes = [8, 8], strides = [1, 1]} : vector<16x8xf32> to vector<8x8xf32>
    %947 = vector.extract_strided_slice %943 {offsets = [0, 0], sizes = [8, 8], strides = [1, 1]} : vector<16x8xf32> to vector<8x8xf32>
    %948 = vector.extract_strided_slice %944 {offsets = [0, 0], sizes = [8, 8], strides = [1, 1]} : vector<16x8xf32> to vector<8x8xf32>
    %cst_296 = arith.constant dense<0.000000e+00> : vector<8x8xf32>
    %949 = tpu.matmul %946, %947, %cst_296 {dimension_numbers = #tpu.dot_dimension_numbers<[1], [1], [0], [0], [0, 0, 1, 0], [], []>} : vector<8x8xf32>, vector<8x8xf32>, vector<8x8xf32> -> vector<8x8xf32>
    %cst_297 = arith.constant 0.353553385 : f32
    %950 = vector.broadcast %cst_297 : f32 to vector<8x8xf32>
    %951 = arith.mulf %949, %950 : vector<8x8xf32>
    %cst_298 = arith.constant dense<0xFF800000> : vector<8xf32>
    %952 = vector.multi_reduction <maximumf>, %951, %cst_298 [1] : vector<8x8xf32> to vector<8xf32>
    %953 = vector.shape_cast %952 : vector<8xf32> to vector<8x1xf32>
    %954 = vector.broadcast %953 : vector<8x1xf32> to vector<8x8xf32>
    %955 = arith.subf %951, %954 : vector<8x8xf32>
    %956 = math.exp %955 : vector<8x8xf32>
    %cst_299 = arith.constant dense<0.000000e+00> : vector<8xf32>
    %957 = vector.multi_reduction <add>, %956, %cst_299 [1] : vector<8x8xf32> to vector<8xf32>
    %958 = vector.shape_cast %957 : vector<8xf32> to vector<8x1xf32>
    %959 = tpu.reciprocal %958 {approx = true} : vector<8x1xf32> -> vector<8x1xf32>
    %960 = vector.broadcast %959 : vector<8x1xf32> to vector<8x8xf32>
    %961 = arith.mulf %956, %960 : vector<8x8xf32>
    %cst_300 = arith.constant dense<0.000000e+00> : vector<8x8xf32>
    %962 = tpu.matmul %961, %948, %cst_300 {dimension_numbers = #tpu.dot_dimension_numbers<[1], [0], [0], [1], [0, 0, 1, 1], [], []>} : vector<8x8xf32>, vector<8x8xf32>, vector<8x8xf32> -> vector<8x8xf32>
    %cst_301 = arith.constant dense<0.000000e+00> : vector<8x32xf32>
    %963 = tpu.matmul %962, %945, %cst_301 {dimension_numbers = #tpu.dot_dimension_numbers<[1], [0], [0], [1], [0, 0, 1, 1], [], []>} : vector<8x8xf32>, vector<8x32xf32>, vector<8x32xf32> -> vector<8x32xf32>
    %964 = vector.extract_strided_slice %942 {offsets = [8, 0], sizes = [8, 8], strides = [1, 1]} : vector<16x8xf32> to vector<8x8xf32>
    %965 = vector.extract_strided_slice %943 {offsets = [8, 0], sizes = [8, 8], strides = [1, 1]} : vector<16x8xf32> to vector<8x8xf32>
    %966 = vector.extract_strided_slice %944 {offsets = [8, 0], sizes = [8, 8], strides = [1, 1]} : vector<16x8xf32> to vector<8x8xf32>
    %cst_302 = arith.constant dense<0.000000e+00> : vector<8x8xf32>
    %967 = tpu.matmul %964, %965, %cst_302 {dimension_numbers = #tpu.dot_dimension_numbers<[1], [1], [0], [0], [0, 0, 1, 0], [], []>} : vector<8x8xf32>, vector<8x8xf32>, vector<8x8xf32> -> vector<8x8xf32>
    %cst_303 = arith.constant 0.353553385 : f32
    %968 = vector.broadcast %cst_303 : f32 to vector<8x8xf32>
    %969 = arith.mulf %967, %968 : vector<8x8xf32>
    %cst_304 = arith.constant dense<0xFF800000> : vector<8xf32>
    %970 = vector.multi_reduction <maximumf>, %969, %cst_304 [1] : vector<8x8xf32> to vector<8xf32>
    %971 = vector.shape_cast %970 : vector<8xf32> to vector<8x1xf32>
    %972 = vector.broadcast %971 : vector<8x1xf32> to vector<8x8xf32>
    %973 = arith.subf %969, %972 : vector<8x8xf32>
    %974 = math.exp %973 : vector<8x8xf32>
    %cst_305 = arith.constant dense<0.000000e+00> : vector<8xf32>
    %975 = vector.multi_reduction <add>, %974, %cst_305 [1] : vector<8x8xf32> to vector<8xf32>
    %976 = vector.shape_cast %975 : vector<8xf32> to vector<8x1xf32>
    %977 = tpu.reciprocal %976 {approx = true} : vector<8x1xf32> -> vector<8x1xf32>
    %978 = vector.broadcast %977 : vector<8x1xf32> to vector<8x8xf32>
    %979 = arith.mulf %974, %978 : vector<8x8xf32>
    %cst_306 = arith.constant dense<0.000000e+00> : vector<8x8xf32>
    %980 = tpu.matmul %979, %966, %cst_306 {dimension_numbers = #tpu.dot_dimension_numbers<[1], [0], [0], [1], [0, 0, 1, 1], [], []>} : vector<8x8xf32>, vector<8x8xf32>, vector<8x8xf32> -> vector<8x8xf32>
    %cst_307 = arith.constant dense<0.000000e+00> : vector<8x32xf32>
    %981 = tpu.matmul %980, %945, %cst_307 {dimension_numbers = #tpu.dot_dimension_numbers<[1], [0], [0], [1], [0, 0, 1, 1], [], []>} : vector<8x8xf32>, vector<8x32xf32>, vector<8x32xf32> -> vector<8x32xf32>
    %982 = vector.extract_strided_slice %939 {offsets = [0, 8], sizes = [16, 8], strides = [1, 1]} : vector<16x32xf32> to vector<16x8xf32>
    %983 = vector.extract_strided_slice %940 {offsets = [0, 8], sizes = [16, 8], strides = [1, 1]} : vector<16x32xf32> to vector<16x8xf32>
    %984 = vector.extract_strided_slice %941 {offsets = [0, 8], sizes = [16, 8], strides = [1, 1]} : vector<16x32xf32> to vector<16x8xf32>
    %985 = vector.extract_strided_slice %937 {offsets = [8, 0], sizes = [8, 32], strides = [1, 1]} : vector<32x32xf32> to vector<8x32xf32>
    %986 = vector.extract_strided_slice %982 {offsets = [0, 0], sizes = [8, 8], strides = [1, 1]} : vector<16x8xf32> to vector<8x8xf32>
    %987 = vector.extract_strided_slice %983 {offsets = [0, 0], sizes = [8, 8], strides = [1, 1]} : vector<16x8xf32> to vector<8x8xf32>
    %988 = vector.extract_strided_slice %984 {offsets = [0, 0], sizes = [8, 8], strides = [1, 1]} : vector<16x8xf32> to vector<8x8xf32>
    %cst_308 = arith.constant dense<0.000000e+00> : vector<8x8xf32>
    %989 = tpu.matmul %986, %987, %cst_308 {dimension_numbers = #tpu.dot_dimension_numbers<[1], [1], [0], [0], [0, 0, 1, 0], [], []>} : vector<8x8xf32>, vector<8x8xf32>, vector<8x8xf32> -> vector<8x8xf32>
    %cst_309 = arith.constant 0.353553385 : f32
    %990 = vector.broadcast %cst_309 : f32 to vector<8x8xf32>
    %991 = arith.mulf %989, %990 : vector<8x8xf32>
    %cst_310 = arith.constant dense<0xFF800000> : vector<8xf32>
    %992 = vector.multi_reduction <maximumf>, %991, %cst_310 [1] : vector<8x8xf32> to vector<8xf32>
    %993 = vector.shape_cast %992 : vector<8xf32> to vector<8x1xf32>
    %994 = vector.broadcast %993 : vector<8x1xf32> to vector<8x8xf32>
    %995 = arith.subf %991, %994 : vector<8x8xf32>
    %996 = math.exp %995 : vector<8x8xf32>
    %cst_311 = arith.constant dense<0.000000e+00> : vector<8xf32>
    %997 = vector.multi_reduction <add>, %996, %cst_311 [1] : vector<8x8xf32> to vector<8xf32>
    %998 = vector.shape_cast %997 : vector<8xf32> to vector<8x1xf32>
    %999 = tpu.reciprocal %998 {approx = true} : vector<8x1xf32> -> vector<8x1xf32>
    %1000 = vector.broadcast %999 : vector<8x1xf32> to vector<8x8xf32>
    %1001 = arith.mulf %996, %1000 : vector<8x8xf32>
    %cst_312 = arith.constant dense<0.000000e+00> : vector<8x8xf32>
    %1002 = tpu.matmul %1001, %988, %cst_312 {dimension_numbers = #tpu.dot_dimension_numbers<[1], [0], [0], [1], [0, 0, 1, 1], [], []>} : vector<8x8xf32>, vector<8x8xf32>, vector<8x8xf32> -> vector<8x8xf32>
    %cst_313 = arith.constant dense<0.000000e+00> : vector<8x32xf32>
    %1003 = tpu.matmul %1002, %985, %cst_313 {dimension_numbers = #tpu.dot_dimension_numbers<[1], [0], [0], [1], [0, 0, 1, 1], [], []>} : vector<8x8xf32>, vector<8x32xf32>, vector<8x32xf32> -> vector<8x32xf32>
    %1004 = arith.addf %963, %1003 : vector<8x32xf32>
    %1005 = vector.extract_strided_slice %982 {offsets = [8, 0], sizes = [8, 8], strides = [1, 1]} : vector<16x8xf32> to vector<8x8xf32>
    %1006 = vector.extract_strided_slice %983 {offsets = [8, 0], sizes = [8, 8], strides = [1, 1]} : vector<16x8xf32> to vector<8x8xf32>
    %1007 = vector.extract_strided_slice %984 {offsets = [8, 0], sizes = [8, 8], strides = [1, 1]} : vector<16x8xf32> to vector<8x8xf32>
    %cst_314 = arith.constant dense<0.000000e+00> : vector<8x8xf32>
    %1008 = tpu.matmul %1005, %1006, %cst_314 {dimension_numbers = #tpu.dot_dimension_numbers<[1], [1], [0], [0], [0, 0, 1, 0], [], []>} : vector<8x8xf32>, vector<8x8xf32>, vector<8x8xf32> -> vector<8x8xf32>
    %cst_315 = arith.constant 0.353553385 : f32
    %1009 = vector.broadcast %cst_315 : f32 to vector<8x8xf32>
    %1010 = arith.mulf %1008, %1009 : vector<8x8xf32>
    %cst_316 = arith.constant dense<0xFF800000> : vector<8xf32>
    %1011 = vector.multi_reduction <maximumf>, %1010, %cst_316 [1] : vector<8x8xf32> to vector<8xf32>
    %1012 = vector.shape_cast %1011 : vector<8xf32> to vector<8x1xf32>
    %1013 = vector.broadcast %1012 : vector<8x1xf32> to vector<8x8xf32>
    %1014 = arith.subf %1010, %1013 : vector<8x8xf32>
    %1015 = math.exp %1014 : vector<8x8xf32>
    %cst_317 = arith.constant dense<0.000000e+00> : vector<8xf32>
    %1016 = vector.multi_reduction <add>, %1015, %cst_317 [1] : vector<8x8xf32> to vector<8xf32>
    %1017 = vector.shape_cast %1016 : vector<8xf32> to vector<8x1xf32>
    %1018 = tpu.reciprocal %1017 {approx = true} : vector<8x1xf32> -> vector<8x1xf32>
    %1019 = vector.broadcast %1018 : vector<8x1xf32> to vector<8x8xf32>
    %1020 = arith.mulf %1015, %1019 : vector<8x8xf32>
    %cst_318 = arith.constant dense<0.000000e+00> : vector<8x8xf32>
    %1021 = tpu.matmul %1020, %1007, %cst_318 {dimension_numbers = #tpu.dot_dimension_numbers<[1], [0], [0], [1], [0, 0, 1, 1], [], []>} : vector<8x8xf32>, vector<8x8xf32>, vector<8x8xf32> -> vector<8x8xf32>
    %cst_319 = arith.constant dense<0.000000e+00> : vector<8x32xf32>
    %1022 = tpu.matmul %1021, %985, %cst_319 {dimension_numbers = #tpu.dot_dimension_numbers<[1], [0], [0], [1], [0, 0, 1, 1], [], []>} : vector<8x8xf32>, vector<8x32xf32>, vector<8x32xf32> -> vector<8x32xf32>
    %1023 = arith.addf %981, %1022 : vector<8x32xf32>
    %1024 = vector.extract_strided_slice %939 {offsets = [0, 16], sizes = [16, 8], strides = [1, 1]} : vector<16x32xf32> to vector<16x8xf32>
    %1025 = vector.extract_strided_slice %940 {offsets = [0, 16], sizes = [16, 8], strides = [1, 1]} : vector<16x32xf32> to vector<16x8xf32>
    %1026 = vector.extract_strided_slice %941 {offsets = [0, 16], sizes = [16, 8], strides = [1, 1]} : vector<16x32xf32> to vector<16x8xf32>
    %1027 = vector.extract_strided_slice %937 {offsets = [16, 0], sizes = [8, 32], strides = [1, 1]} : vector<32x32xf32> to vector<8x32xf32>
    %1028 = vector.extract_strided_slice %1024 {offsets = [0, 0], sizes = [8, 8], strides = [1, 1]} : vector<16x8xf32> to vector<8x8xf32>
    %1029 = vector.extract_strided_slice %1025 {offsets = [0, 0], sizes = [8, 8], strides = [1, 1]} : vector<16x8xf32> to vector<8x8xf32>
    %1030 = vector.extract_strided_slice %1026 {offsets = [0, 0], sizes = [8, 8], strides = [1, 1]} : vector<16x8xf32> to vector<8x8xf32>
    %cst_320 = arith.constant dense<0.000000e+00> : vector<8x8xf32>
    %1031 = tpu.matmul %1028, %1029, %cst_320 {dimension_numbers = #tpu.dot_dimension_numbers<[1], [1], [0], [0], [0, 0, 1, 0], [], []>} : vector<8x8xf32>, vector<8x8xf32>, vector<8x8xf32> -> vector<8x8xf32>
    %cst_321 = arith.constant 0.353553385 : f32
    %1032 = vector.broadcast %cst_321 : f32 to vector<8x8xf32>
    %1033 = arith.mulf %1031, %1032 : vector<8x8xf32>
    %cst_322 = arith.constant dense<0xFF800000> : vector<8xf32>
    %1034 = vector.multi_reduction <maximumf>, %1033, %cst_322 [1] : vector<8x8xf32> to vector<8xf32>
    %1035 = vector.shape_cast %1034 : vector<8xf32> to vector<8x1xf32>
    %1036 = vector.broadcast %1035 : vector<8x1xf32> to vector<8x8xf32>
    %1037 = arith.subf %1033, %1036 : vector<8x8xf32>
    %1038 = math.exp %1037 : vector<8x8xf32>
    %cst_323 = arith.constant dense<0.000000e+00> : vector<8xf32>
    %1039 = vector.multi_reduction <add>, %1038, %cst_323 [1] : vector<8x8xf32> to vector<8xf32>
    %1040 = vector.shape_cast %1039 : vector<8xf32> to vector<8x1xf32>
    %1041 = tpu.reciprocal %1040 {approx = true} : vector<8x1xf32> -> vector<8x1xf32>
    %1042 = vector.broadcast %1041 : vector<8x1xf32> to vector<8x8xf32>
    %1043 = arith.mulf %1038, %1042 : vector<8x8xf32>
    %cst_324 = arith.constant dense<0.000000e+00> : vector<8x8xf32>
    %1044 = tpu.matmul %1043, %1030, %cst_324 {dimension_numbers = #tpu.dot_dimension_numbers<[1], [0], [0], [1], [0, 0, 1, 1], [], []>} : vector<8x8xf32>, vector<8x8xf32>, vector<8x8xf32> -> vector<8x8xf32>
    %cst_325 = arith.constant dense<0.000000e+00> : vector<8x32xf32>
    %1045 = tpu.matmul %1044, %1027, %cst_325 {dimension_numbers = #tpu.dot_dimension_numbers<[1], [0], [0], [1], [0, 0, 1, 1], [], []>} : vector<8x8xf32>, vector<8x32xf32>, vector<8x32xf32> -> vector<8x32xf32>
    %1046 = arith.addf %1004, %1045 : vector<8x32xf32>
    %1047 = vector.extract_strided_slice %1024 {offsets = [8, 0], sizes = [8, 8], strides = [1, 1]} : vector<16x8xf32> to vector<8x8xf32>
    %1048 = vector.extract_strided_slice %1025 {offsets = [8, 0], sizes = [8, 8], strides = [1, 1]} : vector<16x8xf32> to vector<8x8xf32>
    %1049 = vector.extract_strided_slice %1026 {offsets = [8, 0], sizes = [8, 8], strides = [1, 1]} : vector<16x8xf32> to vector<8x8xf32>
    %cst_326 = arith.constant dense<0.000000e+00> : vector<8x8xf32>
    %1050 = tpu.matmul %1047, %1048, %cst_326 {dimension_numbers = #tpu.dot_dimension_numbers<[1], [1], [0], [0], [0, 0, 1, 0], [], []>} : vector<8x8xf32>, vector<8x8xf32>, vector<8x8xf32> -> vector<8x8xf32>
    %cst_327 = arith.constant 0.353553385 : f32
    %1051 = vector.broadcast %cst_327 : f32 to vector<8x8xf32>
    %1052 = arith.mulf %1050, %1051 : vector<8x8xf32>
    %cst_328 = arith.constant dense<0xFF800000> : vector<8xf32>
    %1053 = vector.multi_reduction <maximumf>, %1052, %cst_328 [1] : vector<8x8xf32> to vector<8xf32>
    %1054 = vector.shape_cast %1053 : vector<8xf32> to vector<8x1xf32>
    %1055 = vector.broadcast %1054 : vector<8x1xf32> to vector<8x8xf32>
    %1056 = arith.subf %1052, %1055 : vector<8x8xf32>
    %1057 = math.exp %1056 : vector<8x8xf32>
    %cst_329 = arith.constant dense<0.000000e+00> : vector<8xf32>
    %1058 = vector.multi_reduction <add>, %1057, %cst_329 [1] : vector<8x8xf32> to vector<8xf32>
    %1059 = vector.shape_cast %1058 : vector<8xf32> to vector<8x1xf32>
    %1060 = tpu.reciprocal %1059 {approx = true} : vector<8x1xf32> -> vector<8x1xf32>
    %1061 = vector.broadcast %1060 : vector<8x1xf32> to vector<8x8xf32>
    %1062 = arith.mulf %1057, %1061 : vector<8x8xf32>
    %cst_330 = arith.constant dense<0.000000e+00> : vector<8x8xf32>
    %1063 = tpu.matmul %1062, %1049, %cst_330 {dimension_numbers = #tpu.dot_dimension_numbers<[1], [0], [0], [1], [0, 0, 1, 1], [], []>} : vector<8x8xf32>, vector<8x8xf32>, vector<8x8xf32> -> vector<8x8xf32>
    %cst_331 = arith.constant dense<0.000000e+00> : vector<8x32xf32>
    %1064 = tpu.matmul %1063, %1027, %cst_331 {dimension_numbers = #tpu.dot_dimension_numbers<[1], [0], [0], [1], [0, 0, 1, 1], [], []>} : vector<8x8xf32>, vector<8x32xf32>, vector<8x32xf32> -> vector<8x32xf32>
    %1065 = arith.addf %1023, %1064 : vector<8x32xf32>
    %1066 = vector.extract_strided_slice %939 {offsets = [0, 24], sizes = [16, 8], strides = [1, 1]} : vector<16x32xf32> to vector<16x8xf32>
    %1067 = vector.extract_strided_slice %940 {offsets = [0, 24], sizes = [16, 8], strides = [1, 1]} : vector<16x32xf32> to vector<16x8xf32>
    %1068 = vector.extract_strided_slice %941 {offsets = [0, 24], sizes = [16, 8], strides = [1, 1]} : vector<16x32xf32> to vector<16x8xf32>
    %1069 = vector.extract_strided_slice %937 {offsets = [24, 0], sizes = [8, 32], strides = [1, 1]} : vector<32x32xf32> to vector<8x32xf32>
    %1070 = vector.extract_strided_slice %1066 {offsets = [0, 0], sizes = [8, 8], strides = [1, 1]} : vector<16x8xf32> to vector<8x8xf32>
    %1071 = vector.extract_strided_slice %1067 {offsets = [0, 0], sizes = [8, 8], strides = [1, 1]} : vector<16x8xf32> to vector<8x8xf32>
    %1072 = vector.extract_strided_slice %1068 {offsets = [0, 0], sizes = [8, 8], strides = [1, 1]} : vector<16x8xf32> to vector<8x8xf32>
    %cst_332 = arith.constant dense<0.000000e+00> : vector<8x8xf32>
    %1073 = tpu.matmul %1070, %1071, %cst_332 {dimension_numbers = #tpu.dot_dimension_numbers<[1], [1], [0], [0], [0, 0, 1, 0], [], []>} : vector<8x8xf32>, vector<8x8xf32>, vector<8x8xf32> -> vector<8x8xf32>
    %cst_333 = arith.constant 0.353553385 : f32
    %1074 = vector.broadcast %cst_333 : f32 to vector<8x8xf32>
    %1075 = arith.mulf %1073, %1074 : vector<8x8xf32>
    %cst_334 = arith.constant dense<0xFF800000> : vector<8xf32>
    %1076 = vector.multi_reduction <maximumf>, %1075, %cst_334 [1] : vector<8x8xf32> to vector<8xf32>
    %1077 = vector.shape_cast %1076 : vector<8xf32> to vector<8x1xf32>
    %1078 = vector.broadcast %1077 : vector<8x1xf32> to vector<8x8xf32>
    %1079 = arith.subf %1075, %1078 : vector<8x8xf32>
    %1080 = math.exp %1079 : vector<8x8xf32>
    %cst_335 = arith.constant dense<0.000000e+00> : vector<8xf32>
    %1081 = vector.multi_reduction <add>, %1080, %cst_335 [1] : vector<8x8xf32> to vector<8xf32>
    %1082 = vector.shape_cast %1081 : vector<8xf32> to vector<8x1xf32>
    %1083 = tpu.reciprocal %1082 {approx = true} : vector<8x1xf32> -> vector<8x1xf32>
    %1084 = vector.broadcast %1083 : vector<8x1xf32> to vector<8x8xf32>
    %1085 = arith.mulf %1080, %1084 : vector<8x8xf32>
    %cst_336 = arith.constant dense<0.000000e+00> : vector<8x8xf32>
    %1086 = tpu.matmul %1085, %1072, %cst_336 {dimension_numbers = #tpu.dot_dimension_numbers<[1], [0], [0], [1], [0, 0, 1, 1], [], []>} : vector<8x8xf32>, vector<8x8xf32>, vector<8x8xf32> -> vector<8x8xf32>
    %cst_337 = arith.constant dense<0.000000e+00> : vector<8x32xf32>
    %1087 = tpu.matmul %1086, %1069, %cst_337 {dimension_numbers = #tpu.dot_dimension_numbers<[1], [0], [0], [1], [0, 0, 1, 1], [], []>} : vector<8x8xf32>, vector<8x32xf32>, vector<8x32xf32> -> vector<8x32xf32>
    %1088 = arith.addf %1046, %1087 : vector<8x32xf32>
    %1089 = vector.extract_strided_slice %1066 {offsets = [8, 0], sizes = [8, 8], strides = [1, 1]} : vector<16x8xf32> to vector<8x8xf32>
    %1090 = vector.extract_strided_slice %1067 {offsets = [8, 0], sizes = [8, 8], strides = [1, 1]} : vector<16x8xf32> to vector<8x8xf32>
    %1091 = vector.extract_strided_slice %1068 {offsets = [8, 0], sizes = [8, 8], strides = [1, 1]} : vector<16x8xf32> to vector<8x8xf32>
    %cst_338 = arith.constant dense<0.000000e+00> : vector<8x8xf32>
    %1092 = tpu.matmul %1089, %1090, %cst_338 {dimension_numbers = #tpu.dot_dimension_numbers<[1], [1], [0], [0], [0, 0, 1, 0], [], []>} : vector<8x8xf32>, vector<8x8xf32>, vector<8x8xf32> -> vector<8x8xf32>
    %cst_339 = arith.constant 0.353553385 : f32
    %1093 = vector.broadcast %cst_339 : f32 to vector<8x8xf32>
    %1094 = arith.mulf %1092, %1093 : vector<8x8xf32>
    %cst_340 = arith.constant dense<0xFF800000> : vector<8xf32>
    %1095 = vector.multi_reduction <maximumf>, %1094, %cst_340 [1] : vector<8x8xf32> to vector<8xf32>
    %1096 = vector.shape_cast %1095 : vector<8xf32> to vector<8x1xf32>
    %1097 = vector.broadcast %1096 : vector<8x1xf32> to vector<8x8xf32>
    %1098 = arith.subf %1094, %1097 : vector<8x8xf32>
    %1099 = math.exp %1098 : vector<8x8xf32>
    %cst_341 = arith.constant dense<0.000000e+00> : vector<8xf32>
    %1100 = vector.multi_reduction <add>, %1099, %cst_341 [1] : vector<8x8xf32> to vector<8xf32>
    %1101 = vector.shape_cast %1100 : vector<8xf32> to vector<8x1xf32>
    %1102 = tpu.reciprocal %1101 {approx = true} : vector<8x1xf32> -> vector<8x1xf32>
    %1103 = vector.broadcast %1102 : vector<8x1xf32> to vector<8x8xf32>
    %1104 = arith.mulf %1099, %1103 : vector<8x8xf32>
    %cst_342 = arith.constant dense<0.000000e+00> : vector<8x8xf32>
    %1105 = tpu.matmul %1104, %1091, %cst_342 {dimension_numbers = #tpu.dot_dimension_numbers<[1], [0], [0], [1], [0, 0, 1, 1], [], []>} : vector<8x8xf32>, vector<8x8xf32>, vector<8x8xf32> -> vector<8x8xf32>
    %cst_343 = arith.constant dense<0.000000e+00> : vector<8x32xf32>
    %1106 = tpu.matmul %1105, %1069, %cst_343 {dimension_numbers = #tpu.dot_dimension_numbers<[1], [0], [0], [1], [0, 0, 1, 1], [], []>} : vector<8x8xf32>, vector<8x32xf32>, vector<8x32xf32> -> vector<8x32xf32>
    %1107 = arith.addf %1065, %1106 : vector<8x32xf32>
    %1108 = tpu.concatenate %1088, %1107 in 0 : vector<8x32xf32>, vector<8x32xf32> -> vector<16x32xf32>
    %1109 = arith.addf %913, %1108 : vector<16x32xf32>
    %c800 = arith.constant 800 : index
    %c0_344 = arith.constant 0 : index
    %1110 = vector.load %arg3[%c800, %c0_344] : memref<1024x96xf32, #tpu.memory_space<vmem>>, vector<1x32xf32>
    %c808 = arith.constant 808 : index
    %c0_345 = arith.constant 0 : index
    %1111 = vector.load %arg3[%c808, %c0_345] : memref<1024x96xf32, #tpu.memory_space<vmem>>, vector<1x32xf32>
    %cst_346 = arith.constant dense<0.000000e+00> : vector<16xf32>
    %1112 = vector.multi_reduction <add>, %1109, %cst_346 [1] : vector<16x32xf32> to vector<16xf32>
    %1113 = vector.shape_cast %1112 : vector<16xf32> to vector<16x1xf32>
    %cst_347 = arith.constant 3.200000e+01 : f32
    %1114 = vector.broadcast %cst_347 : f32 to vector<16x1xf32>
    %1115 = arith.divf %1113, %1114 : vector<16x1xf32>
    %1116 = vector.broadcast %1115 : vector<16x1xf32> to vector<16x32xf32>
    %1117 = arith.subf %1109, %1116 : vector<16x32xf32>
    %1118 = arith.mulf %1117, %1117 : vector<16x32xf32>
    %cst_348 = arith.constant dense<0.000000e+00> : vector<16xf32>
    %1119 = vector.multi_reduction <add>, %1118, %cst_348 [1] : vector<16x32xf32> to vector<16xf32>
    %1120 = vector.shape_cast %1119 : vector<16xf32> to vector<16x1xf32>
    %cst_349 = arith.constant 0.0322580636 : f32
    %1121 = vector.broadcast %cst_349 : f32 to vector<16x1xf32>
    %1122 = arith.mulf %1120, %1121 : vector<16x1xf32>
    %1123 = math.sqrt %1122 : vector<16x1xf32>
    %cst_350 = arith.constant 9.99999974E-6 : f32
    %1124 = vector.broadcast %cst_350 : f32 to vector<16x1xf32>
    %1125 = arith.addf %1123, %1124 : vector<16x1xf32>
    %1126 = vector.broadcast %1125 : vector<16x1xf32> to vector<16x32xf32>
    %1127 = arith.divf %1117, %1126 : vector<16x32xf32>
    %1128 = vector.broadcast %1110 : vector<1x32xf32> to vector<16x32xf32>
    %1129 = arith.mulf %1128, %1127 : vector<16x32xf32>
    %1130 = vector.broadcast %1111 : vector<1x32xf32> to vector<16x32xf32>
    %1131 = arith.addf %1129, %1130 : vector<16x32xf32>
    %c816 = arith.constant 816 : index
    %c0_351 = arith.constant 0 : index
    %1132 = vector.load %arg3[%c816, %c0_351] : memref<1024x96xf32, #tpu.memory_space<vmem>>, vector<32x32xf32>
    %c816_352 = arith.constant 816 : index
    %c32_353 = arith.constant 32 : index
    %1133 = vector.load %arg3[%c816_352, %c32_353] : memref<1024x96xf32, #tpu.memory_space<vmem>>, vector<32x64xf32>
    %c848 = arith.constant 848 : index
    %c0_354 = arith.constant 0 : index
    %1134 = vector.load %arg3[%c848, %c0_354] : memref<1024x96xf32, #tpu.memory_space<vmem>>, vector<32x32xf32>
    %cst_355 = arith.constant dense<0.000000e+00> : vector<16x32xf32>
    %1135 = tpu.matmul %1131, %1132, %cst_355 {dimension_numbers = #tpu.dot_dimension_numbers<[1], [0], [0], [1], [0, 0, 1, 1], [], []>} : vector<16x32xf32>, vector<32x32xf32>, vector<16x32xf32> -> vector<16x32xf32>
    %cst_356 = arith.constant dense<0.000000e+00> : vector<32x64xf32>
    %1136 = tpu.matmul %484, %1133, %cst_356 {dimension_numbers = #tpu.dot_dimension_numbers<[1], [0], [0], [1], [0, 0, 1, 1], [], []>} : vector<32x32xf32>, vector<32x64xf32>, vector<32x64xf32> -> vector<32x64xf32>
    %1137 = vector.extract_strided_slice %1136 {offsets = [0, 0], sizes = [32, 32], strides = [1, 1]} : vector<32x64xf32> to vector<32x32xf32>
    %1138 = vector.extract_strided_slice %1136 {offsets = [0, 32], sizes = [32, 32], strides = [1, 1]} : vector<32x64xf32> to vector<32x32xf32>
    %1139 = vector.extract_strided_slice %1135 {offsets = [0, 0], sizes = [16, 8], strides = [1, 1]} : vector<16x32xf32> to vector<16x8xf32>
    %1140 = vector.extract_strided_slice %1137 {offsets = [0, 0], sizes = [32, 8], strides = [1, 1]} : vector<32x32xf32> to vector<32x8xf32>
    %1141 = vector.extract_strided_slice %1138 {offsets = [0, 0], sizes = [32, 8], strides = [1, 1]} : vector<32x32xf32> to vector<32x8xf32>
    %1142 = vector.extract_strided_slice %1134 {offsets = [0, 0], sizes = [8, 32], strides = [1, 1]} : vector<32x32xf32> to vector<8x32xf32>
    %1143 = vector.extract_strided_slice %1139 {offsets = [0, 0], sizes = [8, 8], strides = [1, 1]} : vector<16x8xf32> to vector<8x8xf32>
    %1144 = vector.extract_strided_slice %1140 {offsets = [0, 0], sizes = [16, 8], strides = [1, 1]} : vector<32x8xf32> to vector<16x8xf32>
    %1145 = vector.extract_strided_slice %1141 {offsets = [0, 0], sizes = [16, 8], strides = [1, 1]} : vector<32x8xf32> to vector<16x8xf32>
    %cst_357 = arith.constant dense<0.000000e+00> : vector<8x16xf32>
    %1146 = tpu.matmul %1143, %1144, %cst_357 {dimension_numbers = #tpu.dot_dimension_numbers<[1], [1], [0], [0], [0, 0, 1, 0], [], []>} : vector<8x8xf32>, vector<16x8xf32>, vector<8x16xf32> -> vector<8x16xf32>
    %cst_358 = arith.constant 0.353553385 : f32
    %1147 = vector.broadcast %cst_358 : f32 to vector<8x16xf32>
    %1148 = arith.mulf %1146, %1147 : vector<8x16xf32>
    %cst_359 = arith.constant dense<0xFF800000> : vector<8xf32>
    %1149 = vector.multi_reduction <maximumf>, %1148, %cst_359 [1] : vector<8x16xf32> to vector<8xf32>
    %1150 = vector.shape_cast %1149 : vector<8xf32> to vector<8x1xf32>
    %1151 = vector.broadcast %1150 : vector<8x1xf32> to vector<8x16xf32>
    %1152 = arith.subf %1148, %1151 : vector<8x16xf32>
    %1153 = math.exp %1152 : vector<8x16xf32>
    %cst_360 = arith.constant dense<0.000000e+00> : vector<8xf32>
    %1154 = vector.multi_reduction <add>, %1153, %cst_360 [1] : vector<8x16xf32> to vector<8xf32>
    %1155 = vector.shape_cast %1154 : vector<8xf32> to vector<8x1xf32>
    %1156 = tpu.reciprocal %1155 {approx = true} : vector<8x1xf32> -> vector<8x1xf32>
    %1157 = vector.broadcast %1156 : vector<8x1xf32> to vector<8x16xf32>
    %1158 = arith.mulf %1153, %1157 : vector<8x16xf32>
    %cst_361 = arith.constant dense<0.000000e+00> : vector<8x8xf32>
    %1159 = tpu.matmul %1158, %1145, %cst_361 {dimension_numbers = #tpu.dot_dimension_numbers<[1], [0], [0], [1], [0, 0, 1, 1], [], []>} : vector<8x16xf32>, vector<16x8xf32>, vector<8x8xf32> -> vector<8x8xf32>
    %cst_362 = arith.constant dense<0.000000e+00> : vector<8x32xf32>
    %1160 = tpu.matmul %1159, %1142, %cst_362 {dimension_numbers = #tpu.dot_dimension_numbers<[1], [0], [0], [1], [0, 0, 1, 1], [], []>} : vector<8x8xf32>, vector<8x32xf32>, vector<8x32xf32> -> vector<8x32xf32>
    %1161 = vector.extract_strided_slice %1139 {offsets = [8, 0], sizes = [8, 8], strides = [1, 1]} : vector<16x8xf32> to vector<8x8xf32>
    %1162 = vector.extract_strided_slice %1140 {offsets = [16, 0], sizes = [16, 8], strides = [1, 1]} : vector<32x8xf32> to vector<16x8xf32>
    %1163 = vector.extract_strided_slice %1141 {offsets = [16, 0], sizes = [16, 8], strides = [1, 1]} : vector<32x8xf32> to vector<16x8xf32>
    %cst_363 = arith.constant dense<0.000000e+00> : vector<8x16xf32>
    %1164 = tpu.matmul %1161, %1162, %cst_363 {dimension_numbers = #tpu.dot_dimension_numbers<[1], [1], [0], [0], [0, 0, 1, 0], [], []>} : vector<8x8xf32>, vector<16x8xf32>, vector<8x16xf32> -> vector<8x16xf32>
    %cst_364 = arith.constant 0.353553385 : f32
    %1165 = vector.broadcast %cst_364 : f32 to vector<8x16xf32>
    %1166 = arith.mulf %1164, %1165 : vector<8x16xf32>
    %cst_365 = arith.constant dense<0xFF800000> : vector<8xf32>
    %1167 = vector.multi_reduction <maximumf>, %1166, %cst_365 [1] : vector<8x16xf32> to vector<8xf32>
    %1168 = vector.shape_cast %1167 : vector<8xf32> to vector<8x1xf32>
    %1169 = vector.broadcast %1168 : vector<8x1xf32> to vector<8x16xf32>
    %1170 = arith.subf %1166, %1169 : vector<8x16xf32>
    %1171 = math.exp %1170 : vector<8x16xf32>
    %cst_366 = arith.constant dense<0.000000e+00> : vector<8xf32>
    %1172 = vector.multi_reduction <add>, %1171, %cst_366 [1] : vector<8x16xf32> to vector<8xf32>
    %1173 = vector.shape_cast %1172 : vector<8xf32> to vector<8x1xf32>
    %1174 = tpu.reciprocal %1173 {approx = true} : vector<8x1xf32> -> vector<8x1xf32>
    %1175 = vector.broadcast %1174 : vector<8x1xf32> to vector<8x16xf32>
    %1176 = arith.mulf %1171, %1175 : vector<8x16xf32>
    %cst_367 = arith.constant dense<0.000000e+00> : vector<8x8xf32>
    %1177 = tpu.matmul %1176, %1163, %cst_367 {dimension_numbers = #tpu.dot_dimension_numbers<[1], [0], [0], [1], [0, 0, 1, 1], [], []>} : vector<8x16xf32>, vector<16x8xf32>, vector<8x8xf32> -> vector<8x8xf32>
    %cst_368 = arith.constant dense<0.000000e+00> : vector<8x32xf32>
    %1178 = tpu.matmul %1177, %1142, %cst_368 {dimension_numbers = #tpu.dot_dimension_numbers<[1], [0], [0], [1], [0, 0, 1, 1], [], []>} : vector<8x8xf32>, vector<8x32xf32>, vector<8x32xf32> -> vector<8x32xf32>
    %1179 = vector.extract_strided_slice %1135 {offsets = [0, 8], sizes = [16, 8], strides = [1, 1]} : vector<16x32xf32> to vector<16x8xf32>
    %1180 = vector.extract_strided_slice %1137 {offsets = [0, 8], sizes = [32, 8], strides = [1, 1]} : vector<32x32xf32> to vector<32x8xf32>
    %1181 = vector.extract_strided_slice %1138 {offsets = [0, 8], sizes = [32, 8], strides = [1, 1]} : vector<32x32xf32> to vector<32x8xf32>
    %1182 = vector.extract_strided_slice %1134 {offsets = [8, 0], sizes = [8, 32], strides = [1, 1]} : vector<32x32xf32> to vector<8x32xf32>
    %1183 = vector.extract_strided_slice %1179 {offsets = [0, 0], sizes = [8, 8], strides = [1, 1]} : vector<16x8xf32> to vector<8x8xf32>
    %1184 = vector.extract_strided_slice %1180 {offsets = [0, 0], sizes = [16, 8], strides = [1, 1]} : vector<32x8xf32> to vector<16x8xf32>
    %1185 = vector.extract_strided_slice %1181 {offsets = [0, 0], sizes = [16, 8], strides = [1, 1]} : vector<32x8xf32> to vector<16x8xf32>
    %cst_369 = arith.constant dense<0.000000e+00> : vector<8x16xf32>
    %1186 = tpu.matmul %1183, %1184, %cst_369 {dimension_numbers = #tpu.dot_dimension_numbers<[1], [1], [0], [0], [0, 0, 1, 0], [], []>} : vector<8x8xf32>, vector<16x8xf32>, vector<8x16xf32> -> vector<8x16xf32>
    %cst_370 = arith.constant 0.353553385 : f32
    %1187 = vector.broadcast %cst_370 : f32 to vector<8x16xf32>
    %1188 = arith.mulf %1186, %1187 : vector<8x16xf32>
    %cst_371 = arith.constant dense<0xFF800000> : vector<8xf32>
    %1189 = vector.multi_reduction <maximumf>, %1188, %cst_371 [1] : vector<8x16xf32> to vector<8xf32>
    %1190 = vector.shape_cast %1189 : vector<8xf32> to vector<8x1xf32>
    %1191 = vector.broadcast %1190 : vector<8x1xf32> to vector<8x16xf32>
    %1192 = arith.subf %1188, %1191 : vector<8x16xf32>
    %1193 = math.exp %1192 : vector<8x16xf32>
    %cst_372 = arith.constant dense<0.000000e+00> : vector<8xf32>
    %1194 = vector.multi_reduction <add>, %1193, %cst_372 [1] : vector<8x16xf32> to vector<8xf32>
    %1195 = vector.shape_cast %1194 : vector<8xf32> to vector<8x1xf32>
    %1196 = tpu.reciprocal %1195 {approx = true} : vector<8x1xf32> -> vector<8x1xf32>
    %1197 = vector.broadcast %1196 : vector<8x1xf32> to vector<8x16xf32>
    %1198 = arith.mulf %1193, %1197 : vector<8x16xf32>
    %cst_373 = arith.constant dense<0.000000e+00> : vector<8x8xf32>
    %1199 = tpu.matmul %1198, %1185, %cst_373 {dimension_numbers = #tpu.dot_dimension_numbers<[1], [0], [0], [1], [0, 0, 1, 1], [], []>} : vector<8x16xf32>, vector<16x8xf32>, vector<8x8xf32> -> vector<8x8xf32>
    %cst_374 = arith.constant dense<0.000000e+00> : vector<8x32xf32>
    %1200 = tpu.matmul %1199, %1182, %cst_374 {dimension_numbers = #tpu.dot_dimension_numbers<[1], [0], [0], [1], [0, 0, 1, 1], [], []>} : vector<8x8xf32>, vector<8x32xf32>, vector<8x32xf32> -> vector<8x32xf32>
    %1201 = arith.addf %1160, %1200 : vector<8x32xf32>
    %1202 = vector.extract_strided_slice %1179 {offsets = [8, 0], sizes = [8, 8], strides = [1, 1]} : vector<16x8xf32> to vector<8x8xf32>
    %1203 = vector.extract_strided_slice %1180 {offsets = [16, 0], sizes = [16, 8], strides = [1, 1]} : vector<32x8xf32> to vector<16x8xf32>
    %1204 = vector.extract_strided_slice %1181 {offsets = [16, 0], sizes = [16, 8], strides = [1, 1]} : vector<32x8xf32> to vector<16x8xf32>
    %cst_375 = arith.constant dense<0.000000e+00> : vector<8x16xf32>
    %1205 = tpu.matmul %1202, %1203, %cst_375 {dimension_numbers = #tpu.dot_dimension_numbers<[1], [1], [0], [0], [0, 0, 1, 0], [], []>} : vector<8x8xf32>, vector<16x8xf32>, vector<8x16xf32> -> vector<8x16xf32>
    %cst_376 = arith.constant 0.353553385 : f32
    %1206 = vector.broadcast %cst_376 : f32 to vector<8x16xf32>
    %1207 = arith.mulf %1205, %1206 : vector<8x16xf32>
    %cst_377 = arith.constant dense<0xFF800000> : vector<8xf32>
    %1208 = vector.multi_reduction <maximumf>, %1207, %cst_377 [1] : vector<8x16xf32> to vector<8xf32>
    %1209 = vector.shape_cast %1208 : vector<8xf32> to vector<8x1xf32>
    %1210 = vector.broadcast %1209 : vector<8x1xf32> to vector<8x16xf32>
    %1211 = arith.subf %1207, %1210 : vector<8x16xf32>
    %1212 = math.exp %1211 : vector<8x16xf32>
    %cst_378 = arith.constant dense<0.000000e+00> : vector<8xf32>
    %1213 = vector.multi_reduction <add>, %1212, %cst_378 [1] : vector<8x16xf32> to vector<8xf32>
    %1214 = vector.shape_cast %1213 : vector<8xf32> to vector<8x1xf32>
    %1215 = tpu.reciprocal %1214 {approx = true} : vector<8x1xf32> -> vector<8x1xf32>
    %1216 = vector.broadcast %1215 : vector<8x1xf32> to vector<8x16xf32>
    %1217 = arith.mulf %1212, %1216 : vector<8x16xf32>
    %cst_379 = arith.constant dense<0.000000e+00> : vector<8x8xf32>
    %1218 = tpu.matmul %1217, %1204, %cst_379 {dimension_numbers = #tpu.dot_dimension_numbers<[1], [0], [0], [1], [0, 0, 1, 1], [], []>} : vector<8x16xf32>, vector<16x8xf32>, vector<8x8xf32> -> vector<8x8xf32>
    %cst_380 = arith.constant dense<0.000000e+00> : vector<8x32xf32>
    %1219 = tpu.matmul %1218, %1182, %cst_380 {dimension_numbers = #tpu.dot_dimension_numbers<[1], [0], [0], [1], [0, 0, 1, 1], [], []>} : vector<8x8xf32>, vector<8x32xf32>, vector<8x32xf32> -> vector<8x32xf32>
    %1220 = arith.addf %1178, %1219 : vector<8x32xf32>
    %1221 = vector.extract_strided_slice %1135 {offsets = [0, 16], sizes = [16, 8], strides = [1, 1]} : vector<16x32xf32> to vector<16x8xf32>
    %1222 = vector.extract_strided_slice %1137 {offsets = [0, 16], sizes = [32, 8], strides = [1, 1]} : vector<32x32xf32> to vector<32x8xf32>
    %1223 = vector.extract_strided_slice %1138 {offsets = [0, 16], sizes = [32, 8], strides = [1, 1]} : vector<32x32xf32> to vector<32x8xf32>
    %1224 = vector.extract_strided_slice %1134 {offsets = [16, 0], sizes = [8, 32], strides = [1, 1]} : vector<32x32xf32> to vector<8x32xf32>
    %1225 = vector.extract_strided_slice %1221 {offsets = [0, 0], sizes = [8, 8], strides = [1, 1]} : vector<16x8xf32> to vector<8x8xf32>
    %1226 = vector.extract_strided_slice %1222 {offsets = [0, 0], sizes = [16, 8], strides = [1, 1]} : vector<32x8xf32> to vector<16x8xf32>
    %1227 = vector.extract_strided_slice %1223 {offsets = [0, 0], sizes = [16, 8], strides = [1, 1]} : vector<32x8xf32> to vector<16x8xf32>
    %cst_381 = arith.constant dense<0.000000e+00> : vector<8x16xf32>
    %1228 = tpu.matmul %1225, %1226, %cst_381 {dimension_numbers = #tpu.dot_dimension_numbers<[1], [1], [0], [0], [0, 0, 1, 0], [], []>} : vector<8x8xf32>, vector<16x8xf32>, vector<8x16xf32> -> vector<8x16xf32>
    %cst_382 = arith.constant 0.353553385 : f32
    %1229 = vector.broadcast %cst_382 : f32 to vector<8x16xf32>
    %1230 = arith.mulf %1228, %1229 : vector<8x16xf32>
    %cst_383 = arith.constant dense<0xFF800000> : vector<8xf32>
    %1231 = vector.multi_reduction <maximumf>, %1230, %cst_383 [1] : vector<8x16xf32> to vector<8xf32>
    %1232 = vector.shape_cast %1231 : vector<8xf32> to vector<8x1xf32>
    %1233 = vector.broadcast %1232 : vector<8x1xf32> to vector<8x16xf32>
    %1234 = arith.subf %1230, %1233 : vector<8x16xf32>
    %1235 = math.exp %1234 : vector<8x16xf32>
    %cst_384 = arith.constant dense<0.000000e+00> : vector<8xf32>
    %1236 = vector.multi_reduction <add>, %1235, %cst_384 [1] : vector<8x16xf32> to vector<8xf32>
    %1237 = vector.shape_cast %1236 : vector<8xf32> to vector<8x1xf32>
    %1238 = tpu.reciprocal %1237 {approx = true} : vector<8x1xf32> -> vector<8x1xf32>
    %1239 = vector.broadcast %1238 : vector<8x1xf32> to vector<8x16xf32>
    %1240 = arith.mulf %1235, %1239 : vector<8x16xf32>
    %cst_385 = arith.constant dense<0.000000e+00> : vector<8x8xf32>
    %1241 = tpu.matmul %1240, %1227, %cst_385 {dimension_numbers = #tpu.dot_dimension_numbers<[1], [0], [0], [1], [0, 0, 1, 1], [], []>} : vector<8x16xf32>, vector<16x8xf32>, vector<8x8xf32> -> vector<8x8xf32>
    %cst_386 = arith.constant dense<0.000000e+00> : vector<8x32xf32>
    %1242 = tpu.matmul %1241, %1224, %cst_386 {dimension_numbers = #tpu.dot_dimension_numbers<[1], [0], [0], [1], [0, 0, 1, 1], [], []>} : vector<8x8xf32>, vector<8x32xf32>, vector<8x32xf32> -> vector<8x32xf32>
    %1243 = arith.addf %1201, %1242 : vector<8x32xf32>
    %1244 = vector.extract_strided_slice %1221 {offsets = [8, 0], sizes = [8, 8], strides = [1, 1]} : vector<16x8xf32> to vector<8x8xf32>
    %1245 = vector.extract_strided_slice %1222 {offsets = [16, 0], sizes = [16, 8], strides = [1, 1]} : vector<32x8xf32> to vector<16x8xf32>
    %1246 = vector.extract_strided_slice %1223 {offsets = [16, 0], sizes = [16, 8], strides = [1, 1]} : vector<32x8xf32> to vector<16x8xf32>
    %cst_387 = arith.constant dense<0.000000e+00> : vector<8x16xf32>
    %1247 = tpu.matmul %1244, %1245, %cst_387 {dimension_numbers = #tpu.dot_dimension_numbers<[1], [1], [0], [0], [0, 0, 1, 0], [], []>} : vector<8x8xf32>, vector<16x8xf32>, vector<8x16xf32> -> vector<8x16xf32>
    %cst_388 = arith.constant 0.353553385 : f32
    %1248 = vector.broadcast %cst_388 : f32 to vector<8x16xf32>
    %1249 = arith.mulf %1247, %1248 : vector<8x16xf32>
    %cst_389 = arith.constant dense<0xFF800000> : vector<8xf32>
    %1250 = vector.multi_reduction <maximumf>, %1249, %cst_389 [1] : vector<8x16xf32> to vector<8xf32>
    %1251 = vector.shape_cast %1250 : vector<8xf32> to vector<8x1xf32>
    %1252 = vector.broadcast %1251 : vector<8x1xf32> to vector<8x16xf32>
    %1253 = arith.subf %1249, %1252 : vector<8x16xf32>
    %1254 = math.exp %1253 : vector<8x16xf32>
    %cst_390 = arith.constant dense<0.000000e+00> : vector<8xf32>
    %1255 = vector.multi_reduction <add>, %1254, %cst_390 [1] : vector<8x16xf32> to vector<8xf32>
    %1256 = vector.shape_cast %1255 : vector<8xf32> to vector<8x1xf32>
    %1257 = tpu.reciprocal %1256 {approx = true} : vector<8x1xf32> -> vector<8x1xf32>
    %1258 = vector.broadcast %1257 : vector<8x1xf32> to vector<8x16xf32>
    %1259 = arith.mulf %1254, %1258 : vector<8x16xf32>
    %cst_391 = arith.constant dense<0.000000e+00> : vector<8x8xf32>
    %1260 = tpu.matmul %1259, %1246, %cst_391 {dimension_numbers = #tpu.dot_dimension_numbers<[1], [0], [0], [1], [0, 0, 1, 1], [], []>} : vector<8x16xf32>, vector<16x8xf32>, vector<8x8xf32> -> vector<8x8xf32>
    %cst_392 = arith.constant dense<0.000000e+00> : vector<8x32xf32>
    %1261 = tpu.matmul %1260, %1224, %cst_392 {dimension_numbers = #tpu.dot_dimension_numbers<[1], [0], [0], [1], [0, 0, 1, 1], [], []>} : vector<8x8xf32>, vector<8x32xf32>, vector<8x32xf32> -> vector<8x32xf32>
    %1262 = arith.addf %1220, %1261 : vector<8x32xf32>
    %1263 = vector.extract_strided_slice %1135 {offsets = [0, 24], sizes = [16, 8], strides = [1, 1]} : vector<16x32xf32> to vector<16x8xf32>
    %1264 = vector.extract_strided_slice %1137 {offsets = [0, 24], sizes = [32, 8], strides = [1, 1]} : vector<32x32xf32> to vector<32x8xf32>
    %1265 = vector.extract_strided_slice %1138 {offsets = [0, 24], sizes = [32, 8], strides = [1, 1]} : vector<32x32xf32> to vector<32x8xf32>
    %1266 = vector.extract_strided_slice %1134 {offsets = [24, 0], sizes = [8, 32], strides = [1, 1]} : vector<32x32xf32> to vector<8x32xf32>
    %1267 = vector.extract_strided_slice %1263 {offsets = [0, 0], sizes = [8, 8], strides = [1, 1]} : vector<16x8xf32> to vector<8x8xf32>
    %1268 = vector.extract_strided_slice %1264 {offsets = [0, 0], sizes = [16, 8], strides = [1, 1]} : vector<32x8xf32> to vector<16x8xf32>
    %1269 = vector.extract_strided_slice %1265 {offsets = [0, 0], sizes = [16, 8], strides = [1, 1]} : vector<32x8xf32> to vector<16x8xf32>
    %cst_393 = arith.constant dense<0.000000e+00> : vector<8x16xf32>
    %1270 = tpu.matmul %1267, %1268, %cst_393 {dimension_numbers = #tpu.dot_dimension_numbers<[1], [1], [0], [0], [0, 0, 1, 0], [], []>} : vector<8x8xf32>, vector<16x8xf32>, vector<8x16xf32> -> vector<8x16xf32>
    %cst_394 = arith.constant 0.353553385 : f32
    %1271 = vector.broadcast %cst_394 : f32 to vector<8x16xf32>
    %1272 = arith.mulf %1270, %1271 : vector<8x16xf32>
    %cst_395 = arith.constant dense<0xFF800000> : vector<8xf32>
    %1273 = vector.multi_reduction <maximumf>, %1272, %cst_395 [1] : vector<8x16xf32> to vector<8xf32>
    %1274 = vector.shape_cast %1273 : vector<8xf32> to vector<8x1xf32>
    %1275 = vector.broadcast %1274 : vector<8x1xf32> to vector<8x16xf32>
    %1276 = arith.subf %1272, %1275 : vector<8x16xf32>
    %1277 = math.exp %1276 : vector<8x16xf32>
    %cst_396 = arith.constant dense<0.000000e+00> : vector<8xf32>
    %1278 = vector.multi_reduction <add>, %1277, %cst_396 [1] : vector<8x16xf32> to vector<8xf32>
    %1279 = vector.shape_cast %1278 : vector<8xf32> to vector<8x1xf32>
    %1280 = tpu.reciprocal %1279 {approx = true} : vector<8x1xf32> -> vector<8x1xf32>
    %1281 = vector.broadcast %1280 : vector<8x1xf32> to vector<8x16xf32>
    %1282 = arith.mulf %1277, %1281 : vector<8x16xf32>
    %cst_397 = arith.constant dense<0.000000e+00> : vector<8x8xf32>
    %1283 = tpu.matmul %1282, %1269, %cst_397 {dimension_numbers = #tpu.dot_dimension_numbers<[1], [0], [0], [1], [0, 0, 1, 1], [], []>} : vector<8x16xf32>, vector<16x8xf32>, vector<8x8xf32> -> vector<8x8xf32>
    %cst_398 = arith.constant dense<0.000000e+00> : vector<8x32xf32>
    %1284 = tpu.matmul %1283, %1266, %cst_398 {dimension_numbers = #tpu.dot_dimension_numbers<[1], [0], [0], [1], [0, 0, 1, 1], [], []>} : vector<8x8xf32>, vector<8x32xf32>, vector<8x32xf32> -> vector<8x32xf32>
    %1285 = arith.addf %1243, %1284 : vector<8x32xf32>
    %1286 = vector.extract_strided_slice %1263 {offsets = [8, 0], sizes = [8, 8], strides = [1, 1]} : vector<16x8xf32> to vector<8x8xf32>
    %1287 = vector.extract_strided_slice %1264 {offsets = [16, 0], sizes = [16, 8], strides = [1, 1]} : vector<32x8xf32> to vector<16x8xf32>
    %1288 = vector.extract_strided_slice %1265 {offsets = [16, 0], sizes = [16, 8], strides = [1, 1]} : vector<32x8xf32> to vector<16x8xf32>
    %cst_399 = arith.constant dense<0.000000e+00> : vector<8x16xf32>
    %1289 = tpu.matmul %1286, %1287, %cst_399 {dimension_numbers = #tpu.dot_dimension_numbers<[1], [1], [0], [0], [0, 0, 1, 0], [], []>} : vector<8x8xf32>, vector<16x8xf32>, vector<8x16xf32> -> vector<8x16xf32>
    %cst_400 = arith.constant 0.353553385 : f32
    %1290 = vector.broadcast %cst_400 : f32 to vector<8x16xf32>
    %1291 = arith.mulf %1289, %1290 : vector<8x16xf32>
    %cst_401 = arith.constant dense<0xFF800000> : vector<8xf32>
    %1292 = vector.multi_reduction <maximumf>, %1291, %cst_401 [1] : vector<8x16xf32> to vector<8xf32>
    %1293 = vector.shape_cast %1292 : vector<8xf32> to vector<8x1xf32>
    %1294 = vector.broadcast %1293 : vector<8x1xf32> to vector<8x16xf32>
    %1295 = arith.subf %1291, %1294 : vector<8x16xf32>
    %1296 = math.exp %1295 : vector<8x16xf32>
    %cst_402 = arith.constant dense<0.000000e+00> : vector<8xf32>
    %1297 = vector.multi_reduction <add>, %1296, %cst_402 [1] : vector<8x16xf32> to vector<8xf32>
    %1298 = vector.shape_cast %1297 : vector<8xf32> to vector<8x1xf32>
    %1299 = tpu.reciprocal %1298 {approx = true} : vector<8x1xf32> -> vector<8x1xf32>
    %1300 = vector.broadcast %1299 : vector<8x1xf32> to vector<8x16xf32>
    %1301 = arith.mulf %1296, %1300 : vector<8x16xf32>
    %cst_403 = arith.constant dense<0.000000e+00> : vector<8x8xf32>
    %1302 = tpu.matmul %1301, %1288, %cst_403 {dimension_numbers = #tpu.dot_dimension_numbers<[1], [0], [0], [1], [0, 0, 1, 1], [], []>} : vector<8x16xf32>, vector<16x8xf32>, vector<8x8xf32> -> vector<8x8xf32>
    %cst_404 = arith.constant dense<0.000000e+00> : vector<8x32xf32>
    %1303 = tpu.matmul %1302, %1266, %cst_404 {dimension_numbers = #tpu.dot_dimension_numbers<[1], [0], [0], [1], [0, 0, 1, 1], [], []>} : vector<8x8xf32>, vector<8x32xf32>, vector<8x32xf32> -> vector<8x32xf32>
    %1304 = arith.addf %1262, %1303 : vector<8x32xf32>
    %1305 = tpu.concatenate %1285, %1304 in 0 : vector<8x32xf32>, vector<8x32xf32> -> vector<16x32xf32>
    %1306 = arith.addf %1109, %1305 : vector<16x32xf32>
    %c880 = arith.constant 880 : index
    %c0_405 = arith.constant 0 : index
    %1307 = vector.load %arg3[%c880, %c0_405] : memref<1024x96xf32, #tpu.memory_space<vmem>>, vector<1x32xf32>
    %c888 = arith.constant 888 : index
    %c0_406 = arith.constant 0 : index
    %1308 = vector.load %arg3[%c888, %c0_406] : memref<1024x96xf32, #tpu.memory_space<vmem>>, vector<1x32xf32>
    %cst_407 = arith.constant dense<0.000000e+00> : vector<16xf32>
    %1309 = vector.multi_reduction <add>, %1306, %cst_407 [1] : vector<16x32xf32> to vector<16xf32>
    %1310 = vector.shape_cast %1309 : vector<16xf32> to vector<16x1xf32>
    %cst_408 = arith.constant 3.200000e+01 : f32
    %1311 = vector.broadcast %cst_408 : f32 to vector<16x1xf32>
    %1312 = arith.divf %1310, %1311 : vector<16x1xf32>
    %1313 = vector.broadcast %1312 : vector<16x1xf32> to vector<16x32xf32>
    %1314 = arith.subf %1306, %1313 : vector<16x32xf32>
    %1315 = arith.mulf %1314, %1314 : vector<16x32xf32>
    %cst_409 = arith.constant dense<0.000000e+00> : vector<16xf32>
    %1316 = vector.multi_reduction <add>, %1315, %cst_409 [1] : vector<16x32xf32> to vector<16xf32>
    %1317 = vector.shape_cast %1316 : vector<16xf32> to vector<16x1xf32>
    %cst_410 = arith.constant 0.0322580636 : f32
    %1318 = vector.broadcast %cst_410 : f32 to vector<16x1xf32>
    %1319 = arith.mulf %1317, %1318 : vector<16x1xf32>
    %1320 = math.sqrt %1319 : vector<16x1xf32>
    %cst_411 = arith.constant 9.99999974E-6 : f32
    %1321 = vector.broadcast %cst_411 : f32 to vector<16x1xf32>
    %1322 = arith.addf %1320, %1321 : vector<16x1xf32>
    %1323 = vector.broadcast %1322 : vector<16x1xf32> to vector<16x32xf32>
    %1324 = arith.divf %1314, %1323 : vector<16x32xf32>
    %1325 = vector.broadcast %1307 : vector<1x32xf32> to vector<16x32xf32>
    %1326 = arith.mulf %1325, %1324 : vector<16x32xf32>
    %1327 = vector.broadcast %1308 : vector<1x32xf32> to vector<16x32xf32>
    %1328 = arith.addf %1326, %1327 : vector<16x32xf32>
    %c896 = arith.constant 896 : index
    %c0_412 = arith.constant 0 : index
    %1329 = vector.load %arg3[%c896, %c0_412] : memref<1024x96xf32, #tpu.memory_space<vmem>>, vector<32x64xf32>
    %c928 = arith.constant 928 : index
    %c0_413 = arith.constant 0 : index
    %1330 = vector.load %arg3[%c928, %c0_413] : memref<1024x96xf32, #tpu.memory_space<vmem>>, vector<1x64xf32>
    %c936 = arith.constant 936 : index
    %c0_414 = arith.constant 0 : index
    %1331 = vector.load %arg3[%c936, %c0_414] : memref<1024x96xf32, #tpu.memory_space<vmem>>, vector<64x32xf32>
    %c1000 = arith.constant 1000 : index
    %c0_415 = arith.constant 0 : index
    %1332 = vector.load %arg3[%c1000, %c0_415] : memref<1024x96xf32, #tpu.memory_space<vmem>>, vector<1x32xf32>
    %cst_416 = arith.constant dense<0.000000e+00> : vector<16x64xf32>
    %1333 = tpu.matmul %1328, %1329, %cst_416 {dimension_numbers = #tpu.dot_dimension_numbers<[1], [0], [0], [1], [0, 0, 1, 1], [], []>} : vector<16x32xf32>, vector<32x64xf32>, vector<16x64xf32> -> vector<16x64xf32>
    %1334 = vector.broadcast %1330 : vector<1x64xf32> to vector<16x64xf32>
    %1335 = arith.addf %1333, %1334 : vector<16x64xf32>
    %cst_417 = arith.constant 0.000000e+00 : f32
    %1336 = vector.broadcast %cst_417 : f32 to vector<16x64xf32>
    %1337 = arith.maximumf %1335, %1336 : vector<16x64xf32>
    %cst_418 = arith.constant dense<0.000000e+00> : vector<16x32xf32>
    %1338 = tpu.matmul %1337, %1331, %cst_418 {dimension_numbers = #tpu.dot_dimension_numbers<[1], [0], [0], [1], [0, 0, 1, 1], [], []>} : vector<16x64xf32>, vector<64x32xf32>, vector<16x32xf32> -> vector<16x32xf32>
    %1339 = vector.broadcast %1332 : vector<1x32xf32> to vector<16x32xf32>
    %1340 = arith.addf %1338, %1339 : vector<16x32xf32>
    %1341 = arith.addf %1306, %1340 : vector<16x32xf32>
    %c1008 = arith.constant 1008 : index
    %c0_419 = arith.constant 0 : index
    %1342 = vector.load %arg3[%c1008, %c0_419] : memref<1024x96xf32, #tpu.memory_space<vmem>>, vector<1x32xf32>
    %c1016 = arith.constant 1016 : index
    %c0_420 = arith.constant 0 : index
    %1343 = vector.load %arg3[%c1016, %c0_420] : memref<1024x96xf32, #tpu.memory_space<vmem>>, vector<1x32xf32>
    %cst_421 = arith.constant dense<0.000000e+00> : vector<16xf32>
    %1344 = vector.multi_reduction <add>, %1341, %cst_421 [1] : vector<16x32xf32> to vector<16xf32>
    %1345 = vector.shape_cast %1344 : vector<16xf32> to vector<16x1xf32>
    %cst_422 = arith.constant 3.200000e+01 : f32
    %1346 = vector.broadcast %cst_422 : f32 to vector<16x1xf32>
    %1347 = arith.divf %1345, %1346 : vector<16x1xf32>
    %1348 = vector.broadcast %1347 : vector<16x1xf32> to vector<16x32xf32>
    %1349 = arith.subf %1341, %1348 : vector<16x32xf32>
    %1350 = arith.mulf %1349, %1349 : vector<16x32xf32>
    %cst_423 = arith.constant dense<0.000000e+00> : vector<16xf32>
    %1351 = vector.multi_reduction <add>, %1350, %cst_423 [1] : vector<16x32xf32> to vector<16xf32>
    %1352 = vector.shape_cast %1351 : vector<16xf32> to vector<16x1xf32>
    %cst_424 = arith.constant 0.0322580636 : f32
    %1353 = vector.broadcast %cst_424 : f32 to vector<16x1xf32>
    %1354 = arith.mulf %1352, %1353 : vector<16x1xf32>
    %1355 = math.sqrt %1354 : vector<16x1xf32>
    %cst_425 = arith.constant 9.99999974E-6 : f32
    %1356 = vector.broadcast %cst_425 : f32 to vector<16x1xf32>
    %1357 = arith.addf %1355, %1356 : vector<16x1xf32>
    %1358 = vector.broadcast %1357 : vector<16x1xf32> to vector<16x32xf32>
    %1359 = arith.divf %1349, %1358 : vector<16x32xf32>
    %1360 = vector.broadcast %1342 : vector<1x32xf32> to vector<16x32xf32>
    %1361 = arith.mulf %1360, %1359 : vector<16x32xf32>
    %1362 = vector.broadcast %1343 : vector<1x32xf32> to vector<16x32xf32>
    %1363 = arith.addf %1361, %1362 : vector<16x32xf32>
    %c0_426 = arith.constant 0 : index
    %c0_427 = arith.constant 0 : index
    %1364 = vector.load %arg4[%c0_426, %c0_427] : memref<16x32xf32, #tpu.memory_space<vmem>>, vector<16x32xf32>
    tpu.vector_store %arg4[%c0_426, %c0_427], %1363 {strides = array<i32>} : memref<16x32xf32, #tpu.memory_space<vmem>>, vector<16x32xf32>,
    return
  }
  func.func @transform_0(%arg0: i32) -> (i32, i32) {
    %c0_i32 = arith.constant 0 : i32
    %c0_i32_0 = arith.constant 0 : i32
    %c0_i32_1 = arith.constant 0 : i32
    return %c0_i32, %c0_i32_0 : i32, i32
  }
  func.func @transform_1(%arg0: i32) -> (i32, i32) {
    %c0_i32 = arith.constant 0 : i32
    %c0_i32_0 = arith.constant 0 : i32
    %c0_i32_1 = arith.constant 0 : i32
    return %c0_i32, %c0_i32_0 : i32, i32
  }
  func.func @transform_2(%arg0: i32) -> (i32, i32) {
    %c0_i32 = arith.constant 0 : i32
    %c0_i32_0 = arith.constant 0 : i32
    %c0_i32_1 = arith.constant 0 : i32
    return %c0_i32, %c0_i32_0 : i32, i32
  }
  func.func @transform_3(%arg0: i32) -> (i32, i32) {
    %c0_i32 = arith.constant 0 : i32
    %c0_i32_0 = arith.constant 0 : i32
    %c0_i32_1 = arith.constant 0 : i32
    return %c0_i32, %c0_i32_0 : i32, i32
  }
}

</mosaic_0001>

<llo_original>
// kernel: transformer_forward.1
$region0: #{transformer_forward.1}
  #allocation0 [shape = 'u32[]', space=smem, size = 0x4, offset = 0x4, fixed_abs, tag = 'smem constant byte address 0x4 - core index']
  #allocation1 [shape = 'u32[72,128]{1,0:T(1,128)}', space=vmem, size = 0x9000, scoped, tag = 'internal scratch']
  %s0 = inlined_call_operand.vmem [shape: f32[32,32], index: 0, kind: input, shape index: {}]
  %s1 = inlined_call_operand.vmem [shape: f32[16,32], index: 1, kind: input, shape index: {}]
  %s2 = inlined_call_operand.vmem [shape: f32[1024,96], index: 2, kind: input, shape index: {}]
  %s3 = inlined_call_operand.hbm [shape: f32[16,32], index: 3, kind: output, shape index: {}]
  %s4 = sld [smem:[#allocation0]]
  $region22: #{transformer_forward.1} parent=0
    _
  %s6 = ssub.s32 1, %s4
  %s7 = scalar_select 0, %s6, %s4
  $region1: #{transformer_forward.1} parent=0
    #allocation2 [shape = 'u8[8192]{0}', space=vmem, size = 0x2000, scoped, tag = 'output window, operand 0, single buffered']
    #allocation3 [shape = 's32[1]{0}', space=sflag, size = 0x4, scoped, tag = 'scoped memory for transformer_forward.1']
    %8 = vsyncpa [#allocation3], 0
    // Predicated region
    $region2: #{transformer_forward.1} parent=1 // pred_check
      _
    $region3: #{transformer_forward.1} parent=1 // pred_check_branch
      %10 = sbr.rel (0) target = $region5
    $region4: #{transformer_forward.1} parent=1 // pred_region
      _
    $region5: #{transformer_forward.1} parent=1 // pred_fallthru
      _
    // Predicated region
    $region6: #{transformer_forward.1} parent=1 // pred_check
      _
    $region7: #{transformer_forward.1} parent=1 // pred_check_branch
      %12 = sbr.rel (0) target = $region9
    $region8: #{transformer_forward.1} parent=1 // pred_region
      _
    $region9: #{transformer_forward.1} parent=1 // pred_fallthru
      _
    // Predicated region
    $region10: #{transformer_forward.1} parent=1 // pred_check
      _
    $region11: #{transformer_forward.1} parent=1 // pred_check_branch
      %14 = sbr.rel (0) target = $region13
    $region12: #{transformer_forward.1} parent=1 // pred_region
      _
    $region13: #{transformer_forward.1} parent=1 // pred_fallthru
      _
    %v15 = vld [vmem:[%s0] sm:$0xff]
    %v16 = vld [vmem:[%s0 + $0x8] sm:$0xff]
    %v17 = vld [vmem:[%s0 + $0x10] sm:$0xff]
    %v18 = vld [vmem:[%s0 + $0x18] sm:$0xff]
    %v19 = vld [vmem:[%s2] sm:$0x1]
    %v20 = vld [vmem:[%s2 + $0x8] sm:$0x1]
    %vm21 = vcmask 261120
    %v22 = vsel %vm21, %v15, 0.0
    %23 = vadd.xlane.f32.xlu0 %v22
    %v24 = vpop.xlane.xlu0 %23
    %v25 = vsel %vm21, %v16, 0.0
    %26 = vadd.xlane.f32.xlu0 %v25
    %v27 = vpop.xlane.xlu0 %26
    %v28 = vsel %vm21, %v17, 0.0
    %29 = vadd.xlane.f32.xlu0 %v28
    %v30 = vpop.xlane.xlu0 %29
    %v31 = vsel %vm21, %v18, 0.0
    %32 = vadd.xlane.f32.xlu0 %v31
    %v33 = vpop.xlane.xlu0 %32
    %v34 = vrcp.pop 32.0
    %v35 = vmul.f32 32.0, %v34
    %v36 = vsub.f32 1.0, %v35
    %v37 = vmul.f32 %v34, %v36
    %v38 = vadd.f32 %v34, %v37
    %vm39 = vweird.f32 %v34
    %v40 = vsel %vm39, %v34, %v38
    %v41 = vmul.f32 %v24, %v40
    %v42 = vmul.f32 %v27, %v40
    %v43 = vmul.f32 %v30, %v40
    %v44 = vmul.f32 %v33, %v40
    %v45 = vsub.f32 %v15, %v41
    %v46 = vsub.f32 %v16, %v42
    %v47 = vsub.f32 %v17, %v43
    %v48 = vsub.f32 %v18, %v44
    %v49 = vmul.f32 %v45, %v45
    %v50 = vmul.f32 %v46, %v46
    %v51 = vmul.f32 %v47, %v47
    %v52 = vmul.f32 %v48, %v48
    %v53 = vsel %vm21, %v49, 0.0
    %54 = vadd.xlane.f32.xlu0 %v53
    %v55 = vpop.xlane.xlu0 %54
    %v56 = vsel %vm21, %v50, 0.0
    %57 = vadd.xlane.f32.xlu0 %v56
    %v58 = vpop.xlane.xlu0 %57
    %v59 = vsel %vm21, %v51, 0.0
    %60 = vadd.xlane.f32.xlu0 %v59
    %v61 = vpop.xlane.xlu0 %60
    %v62 = vsel %vm21, %v52, 0.0
    %63 = vadd.xlane.f32.xlu0 %v62
    %v64 = vpop.xlane.xlu0 %63
    %v65 = vmul.f32 %v55, 0.032258064
    %v66 = vmul.f32 %v58, 0.032258064
    %v67 = vmul.f32 %v61, 0.032258064
    %v68 = vmul.f32 %v64, 0.032258064
    %v69 = vrsqrt.pop %v65
    %v70 = vmul.f32 %v69, %v65
    %v71 = vmul.f32 %v70, %v69
    %v72 = vmul.f32 0.5, %v71
    %v73 = vsub.f32 1.5, %v72
    %v74 = vmul.f32 %v69, %v73
    %v75 = vmul.f32 %v65, %v74
    %vm76 = vcmp.eq.f32.partialorder %v65, inf
    %v77 = vsel %vm76, %v65, %v75
    %vm78 = vcmp.eq.f32.partialorder %v65, 0.0
    %v79 = vand.u32 %v65, 2147483648
    %v80 = vsel %vm78, %v79, %v77
    %v81 = vrsqrt.pop %v66
    %v82 = vmul.f32 %v81, %v66
    %v83 = vmul.f32 %v82, %v81
    %v84 = vmul.f32 0.5, %v83
    %v85 = vsub.f32 1.5, %v84
    %v86 = vmul.f32 %v81, %v85
    %v87 = vmul.f32 %v66, %v86
    %vm88 = vcmp.eq.f32.partialorder %v66, inf
    %v89 = vsel %vm88, %v66, %v87
    %vm90 = vcmp.eq.f32.partialorder %v66, 0.0
    %v91 = vand.u32 %v66, 2147483648
    %v92 = vsel %vm90, %v91, %v89
    %v93 = vrsqrt.pop %v67
    %v94 = vmul.f32 %v93, %v67
    %v95 = vmul.f32 %v94, %v93
    %v96 = vmul.f32 0.5, %v95
    %v97 = vsub.f32 1.5, %v96
    %v98 = vmul.f32 %v93, %v97
    %v99 = vmul.f32 %v67, %v98
    %vm100 = vcmp.eq.f32.partialorder %v67, inf
    %v101 = vsel %vm100, %v67, %v99
    %vm102 = vcmp.eq.f32.partialorder %v67, 0.0
    %v103 = vand.u32 %v67, 2147483648
    %v104 = vsel %vm102, %v103, %v101
    %v105 = vrsqrt.pop %v68
    %v106 = vmul.f32 %v105, %v68
    %v107 = vmul.f32 %v106, %v105
    %v108 = vmul.f32 0.5, %v107
    %v109 = vsub.f32 1.5, %v108
    %v110 = vmul.f32 %v105, %v109
    %v111 = vmul.f32 %v68, %v110
    %vm112 = vcmp.eq.f32.partialorder %v68, inf
    %v113 = vsel %vm112, %v68, %v111
    %vm114 = vcmp.eq.f32.partialorder %v68, 0.0
    %v115 = vand.u32 %v68, 2147483648
    %v116 = vsel %vm114, %v115, %v113
    %v117 = vadd.f32 %v80, 1e-05
    %v118 = vadd.f32 %v92, 1e-05
    %v119 = vadd.f32 %v104, 1e-05
    %v120 = vadd.f32 %v116, 1e-05
    %v121 = vrcp.pop %v117
    %v122 = vmul.f32 %v117, %v121
    %v123 = vsub.f32 1.0, %v122
    %v124 = vmul.f32 %v121, %v123
    %v125 = vadd.f32 %v121, %v124
    %vm126 = vweird.f32 %v117
    %vm127 = vweird.f32 %v121
    %vm128 = vmor %vm126, %vm127
    %v129 = vsel %vm128, %v121, %v125
    %v130 = vand.u32 2147483647, %v117
    %vm131 = vcmp.eq.f32.partialorder %v130, 8.507059e+37
    %v132 = vand.u32 %v117, 2147483648
    %v133 = vor.u32 1.1754944e-38, %v132
    %v134 = vsel %vm131, %v133, %v129
    %v135 = vmul.f32 %v45, %v134
    %v136 = vrcp.pop %v118
    %v137 = vmul.f32 %v118, %v136
    %v138 = vsub.f32 1.0, %v137
    %v139 = vmul.f32 %v136, %v138
    %v140 = vadd.f32 %v136, %v139
    %vm141 = vweird.f32 %v118
    %vm142 = vweird.f32 %v136
    %vm143 = vmor %vm141, %vm142
    %v144 = vsel %vm143, %v136, %v140
    %v145 = vand.u32 2147483647, %v118
    %vm146 = vcmp.eq.f32.partialorder %v145, 8.507059e+37
    %v147 = vand.u32 %v118, 2147483648
    %v148 = vor.u32 1.1754944e-38, %v147
    %v149 = vsel %vm146, %v148, %v144
    %v150 = vmul.f32 %v46, %v149
    %v151 = vrcp.pop %v119
    %v152 = vmul.f32 %v119, %v151
    %v153 = vsub.f32 1.0, %v152
    %v154 = vmul.f32 %v151, %v153
    %v155 = vadd.f32 %v151, %v154
    %vm156 = vweird.f32 %v119
    %vm157 = vweird.f32 %v151
    %vm158 = vmor %vm156, %vm157
    %v159 = vsel %vm158, %v151, %v155
    %v160 = vand.u32 2147483647, %v119
    %vm161 = vcmp.eq.f32.partialorder %v160, 8.507059e+37
    %v162 = vand.u32 %v119, 2147483648
    %v163 = vor.u32 1.1754944e-38, %v162
    %v164 = vsel %vm161, %v163, %v159
    %v165 = vmul.f32 %v47, %v164
    %v166 = vrcp.pop %v120
    %v167 = vmul.f32 %v120, %v166
    %v168 = vsub.f32 1.0, %v167
    %v169 = vmul.f32 %v166, %v168
    %v170 = vadd.f32 %v166, %v169
    %vm171 = vweird.f32 %v120
    %vm172 = vweird.f32 %v166
    %vm173 = vmor %vm171, %vm172
    %v174 = vsel %vm173, %v166, %v170
    %v175 = vand.u32 2147483647, %v120
    %vm176 = vcmp.eq.f32.partialorder %v175, 8.507059e+37
    %v177 = vand.u32 %v120, 2147483648
    %v178 = vor.u32 1.1754944e-38, %v177
    %v179 = vsel %vm176, %v178, %v174
    %v180 = vmul.f32 %v48, %v179
    %v181 = vperm.slane %v19, 0
    %v182 = vmul.f32 %v181, %v135
    %v183 = vmul.f32 %v181, %v150
    %v184 = vmul.f32 %v181, %v165
    %v185 = vmul.f32 %v181, %v180
    %v186 = vperm.slane %v20, 0
    %v187 = vadd.f32 %v182, %v186
    %v188 = vadd.f32 %v183, %v186
    %v189 = vadd.f32 %v184, %v186
    %v190 = vadd.f32 %v185, %v186
    %v191 = vld [vmem:[%s2 + $0x10] sm:$0xff]
    %v192 = vld [vmem:[%s2 + $0x18] sm:$0xff]
    %v193 = vld [vmem:[%s2 + $0x20] sm:$0xff]
    %v194 = vld [vmem:[%s2 + $0x28] sm:$0xff]
    %v195 = vld [vmem:[%s2 + $0x30] sm:$0xff]
    %v196 = vld [vmem:[%s2 + $0x38] sm:$0xff]
    %v197 = vld [vmem:[%s2 + $0x40] sm:$0xff]
    %v198 = vld [vmem:[%s2 + $0x48] sm:$0xff]
    %v200 = vsel %vm21, %v187, 0
    %v203 = vsel %vm21, %v188, 0
    %v206 = vsel %vm21, %v189, 0
    %v209 = vsel %vm21, %v190, 0
    %211 = vmatpush.msra.mxu0 0.0
    %212 = vmatpush.msra.mxu0 0.0
    %213 = vmatpush.msra.mxu0 0.0
    %214 = vmatpush.msra.mxu0 0.0
    %215 = vmatpush.msra.mxu0 0.0
    %216 = vmatpush.msra.mxu0 0.0
    %217 = vmatpush.msra.mxu0 0.0
    %218 = vmatpush.msra.mxu0 0.0
    %219 = vmatpush.msra.mxu0 0.0
    %220 = vmatpush.msra.mxu0 0.0
    %221 = vmatpush.msra.mxu0 0.0
    %222 = vmatpush.msra.mxu0 0.0
    %223 = vmatpush.msra.mxu0 %v194
    %224 = vmatpush.msra.mxu0 %v193
    %225 = vmatpush.msra.mxu0 %v192
    %226 = vmatpush.msra.mxu0 %v191
    %227 = vmatmul.f32.gmra.mxu0 %v200
    %v228 = vpop.f32.mrf.mxu0
    %v229 = vadd.f32 0.0, %v228
    %230 = vmatmul.f32.gmra.mxu0 %v203
    %v231 = vpop.f32.mrf.mxu0
    %v232 = vadd.f32 0.0, %v231
    %233 = vmatmul.f32.gmra.mxu0 %v206
    %v234 = vpop.f32.mrf.mxu0
    %v235 = vadd.f32 0.0, %v234
    %236 = vmatmul.f32.gmra.mxu0 %v209
    %v237 = vpop.f32.mrf.mxu0
    %v238 = vadd.f32 0.0, %v237
    %239 = vdwg.mxu0
    %242 = vrot.lane.b32.xlu0 %v229, 96
    %v243 = vpop.permute.xlu0 %242
    %244 = vrot.lane.b32.xlu0 %v232, 96
    %v245 = vpop.permute.xlu0 %244
    %vm246 = vcmask 64512
    %v247 = vsel %vm246, %v229, 0
    %v249 = vsel %vm246, %v232, 0
    %v251 = vsel %vm246, %v243, 0
    %v253 = vsel %vm246, %v245, 0
    %255 = vmatpush.xpose.msra.mxu0 0.0
    %256 = vmatpush.xpose.msra.mxu0 0.0
    %257 = vmatpush.xpose.msra.mxu0 0.0
    %258 = vmatpush.xpose.msra.mxu0 0.0
    %259 = vmatpush.xpose.msra.mxu0 0.0
    %260 = vmatpush.xpose.msra.mxu0 0.0
    %261 = vmatpush.xpose.msra.mxu0 0.0
    %262 = vmatpush.xpose.msra.mxu0 0.0
    %263 = vmatpush.xpose.msra.mxu0 0.0
    %264 = vmatpush.xpose.msra.mxu0 0.0
    %265 = vmatpush.xpose.msra.mxu0 0.0
    %266 = vmatpush.xpose.msra.mxu0 0.0
    %267 = vmatpush.xpose.msra.mxu0 0.0
    %268 = vmatpush.xpose.msra.mxu0 0.0
    %269 = vmatpush.xpose.msra.mxu0 %v253
    %270 = vmatpush.xpose.msra.mxu0 %v251
    %271 = vmatmul.f32.gmra.mxu0 %v247
    %v272 = vpop.f32.mrf.mxu0
    %v273 = vadd.f32 0.0, %v272
    %274 = vmatmul.f32.gmra.mxu0 %v249
    %v275 = vpop.f32.mrf.mxu0
    %v276 = vadd.f32 0.0, %v275
    %277 = vdwg.mxu0
    %v278 = vmul.f32 %v273, 0.35355338
    %v279 = vmul.f32 %v276, 0.35355338
    %vm280 = vcmask 130048
    %v281 = vsel %vm280, %v278, -inf
    %282 = vmax.xlane.f32.xlu0 %v281
    %v283 = vpop.xlane.xlu0 %282
    %v284 = vsel %vm280, %v279, -inf
    %285 = vmax.xlane.f32.xlu0 %v284
    %v286 = vpop.xlane.xlu0 %285
    %v287 = vsub.f32 %v278, %v283
    %v288 = vsub.f32 %v279, %v286
    %v289 = vmul.f32 %v287, 1.442695
    %v290 = vpow.pop %v289
    %v291 = vmul.f32 %v288, 1.442695
    %v292 = vpow.pop %v291
    %v293 = vsel %vm280, %v290, 0.0
    %294 = vadd.xlane.f32.xlu0 %v293
    %v295 = vpop.xlane.xlu0 %294
    %v296 = vsel %vm280, %v292, 0.0
    %297 = vadd.xlane.f32.xlu0 %v296
    %v298 = vpop.xlane.xlu0 %297
    %v299 = vrcp.pop %v295
    %v300 = vrcp.pop %v298
    %v301 = vmul.f32 %v290, %v299
    %v302 = vmul.f32 %v292, %v300
    %303 = vrot.lane.b32.xlu0 %v229, 64
    %v304 = vpop.permute.xlu0 %303
    %305 = vrot.lane.b32.xlu0 %v232, 64
    %v306 = vpop.permute.xlu0 %305
    %v310 = vsel %vm280, %v301, 0
    %v313 = vsel %vm280, %v302, 0
    %315 = vmatpush.msra.mxu0 0.0
    %316 = vmatpush.msra.mxu0 0.0
    %317 = vmatpush.msra.mxu0 0.0
    %318 = vmatpush.msra.mxu0 0.0
    %319 = vmatpush.msra.mxu0 0.0
    %320 = vmatpush.msra.mxu0 0.0
    %321 = vmatpush.msra.mxu0 0.0
    %322 = vmatpush.msra.mxu0 0.0
    %323 = vmatpush.msra.mxu0 0.0
    %324 = vmatpush.msra.mxu0 0.0
    %325 = vmatpush.msra.mxu0 0.0
    %326 = vmatpush.msra.mxu0 0.0
    %327 = vmatpush.msra.mxu0 0.0
    %328 = vmatpush.msra.mxu0 0.0
    %329 = vmatpush.msra.mxu0 %v306
    %330 = vmatpush.msra.mxu0 %v304
    %331 = vmatmul.f32.gmra.mxu0 %v310
    %v332 = vpop.f32.mrf.mxu0
    %v333 = vadd.f32 0.0, %v332
    %334 = vmatmul.f32.gmra.mxu0 %v313
    %v335 = vpop.f32.mrf.mxu0
    %v336 = vadd.f32 0.0, %v335
    %337 = vdwg.mxu0
    %340 = vrot.lane.b32.xlu0 %v235, 96
    %v341 = vpop.permute.xlu0 %340
    %342 = vrot.lane.b32.xlu0 %v238, 96
    %v343 = vpop.permute.xlu0 %342
    %v344 = vsel %vm246, %v235, 0
    %v346 = vsel %vm246, %v238, 0
    %v348 = vsel %vm246, %v341, 0
    %v350 = vsel %vm246, %v343, 0
    %352 = vmatpush.xpose.msra.mxu0 0.0
    %353 = vmatpush.xpose.msra.mxu0 0.0
    %354 = vmatpush.xpose.msra.mxu0 0.0
    %355 = vmatpush.xpose.msra.mxu0 0.0
    %356 = vmatpush.xpose.msra.mxu0 0.0
    %357 = vmatpush.xpose.msra.mxu0 0.0
    %358 = vmatpush.xpose.msra.mxu0 0.0
    %359 = vmatpush.xpose.msra.mxu0 0.0
    %360 = vmatpush.xpose.msra.mxu0 0.0
    %361 = vmatpush.xpose.msra.mxu0 0.0
    %362 = vmatpush.xpose.msra.mxu0 0.0
    %363 = vmatpush.xpose.msra.mxu0 0.0
    %364 = vmatpush.xpose.msra.mxu0 0.0
    %365 = vmatpush.xpose.msra.mxu0 0.0
    %366 = vmatpush.xpose.msra.mxu0 %v350
    %367 = vmatpush.xpose.msra.mxu0 %v348
    %368 = vmatmul.f32.gmra.mxu0 %v344
    %v369 = vpop.f32.mrf.mxu0
    %v370 = vadd.f32 0.0, %v369
    %371 = vmatmul.f32.gmra.mxu0 %v346
    %v372 = vpop.f32.mrf.mxu0
    %v373 = vadd.f32 0.0, %v372
    %374 = vdwg.mxu0
    %v375 = vmul.f32 %v370, 0.35355338
    %v376 = vmul.f32 %v373, 0.35355338
    %v377 = vsel %vm280, %v375, -inf
    %378 = vmax.xlane.f32.xlu0 %v377
    %v379 = vpop.xlane.xlu0 %378
    %v380 = vsel %vm280, %v376, -inf
    %381 = vmax.xlane.f32.xlu0 %v380
    %v382 = vpop.xlane.xlu0 %381
    %v383 = vsub.f32 %v375, %v379
    %v384 = vsub.f32 %v376, %v382
    %v385 = vmul.f32 %v383, 1.442695
    %v386 = vpow.pop %v385
    %v387 = vmul.f32 %v384, 1.442695
    %v388 = vpow.pop %v387
    %v389 = vsel %vm280, %v386, 0.0
    %390 = vadd.xlane.f32.xlu0 %v389
    %v391 = vpop.xlane.xlu0 %390
    %v392 = vsel %vm280, %v388, 0.0
    %393 = vadd.xlane.f32.xlu0 %v392
    %v394 = vpop.xlane.xlu0 %393
    %v395 = vrcp.pop %v391
    %v396 = vrcp.pop %v394
    %v397 = vmul.f32 %v386, %v395
    %v398 = vmul.f32 %v388, %v396
    %399 = vrot.lane.b32.xlu0 %v235, 64
    %v400 = vpop.permute.xlu0 %399
    %401 = vrot.lane.b32.xlu0 %v238, 64
    %v402 = vpop.permute.xlu0 %401
    %v406 = vsel %vm280, %v397, 0
    %v409 = vsel %vm280, %v398, 0
    %411 = vmatpush.msra.mxu0 0.0
    %412 = vmatpush.msra.mxu0 0.0
    %413 = vmatpush.msra.mxu0 0.0
    %414 = vmatpush.msra.mxu0 0.0
    %415 = vmatpush.msra.mxu0 0.0
    %416 = vmatpush.msra.mxu0 0.0
    %417 = vmatpush.msra.mxu0 0.0
    %418 = vmatpush.msra.mxu0 0.0
    %419 = vmatpush.msra.mxu0 0.0
    %420 = vmatpush.msra.mxu0 0.0
    %421 = vmatpush.msra.mxu0 0.0
    %422 = vmatpush.msra.mxu0 0.0
    %423 = vmatpush.msra.mxu0 0.0
    %424 = vmatpush.msra.mxu0 0.0
    %425 = vmatpush.msra.mxu0 %v402
    %426 = vmatpush.msra.mxu0 %v400
    %427 = vmatmul.f32.gmra.mxu0 %v406
    %v428 = vpop.f32.mrf.mxu0
    %v429 = vadd.f32 0.0, %v428
    %430 = vmatmul.f32.gmra.mxu0 %v409
    %v431 = vpop.f32.mrf.mxu0
    %v432 = vadd.f32 0.0, %v431
    %433 = vdwg.mxu0
    %434 = vrot.lane.b32.xlu0 %v229, 120
    %v435 = vpop.permute.xlu0 %434
    %436 = vrot.lane.b32.xlu0 %v232, 120
    %v437 = vpop.permute.xlu0 %436
    %438 = vrot.lane.b32.xlu0 %v229, 88
    %v439 = vpop.permute.xlu0 %438
    %440 = vrot.lane.b32.xlu0 %v232, 88
    %v441 = vpop.permute.xlu0 %440
    %v442 = vsel %vm246, %v435, 0
    %v444 = vsel %vm246, %v437, 0
    %v446 = vsel %vm246, %v439, 0
    %v448 = vsel %vm246, %v441, 0
    %450 = vmatpush.xpose.msra.mxu0 0.0
    %451 = vmatpush.xpose.msra.mxu0 0.0
    %452 = vmatpush.xpose.msra.mxu0 0.0
    %453 = vmatpush.xpose.msra.mxu0 0.0
    %454 = vmatpush.xpose.msra.mxu0 0.0
    %455 = vmatpush.xpose.msra.mxu0 0.0
    %456 = vmatpush.xpose.msra.mxu0 0.0
    %457 = vmatpush.xpose.msra.mxu0 0.0
    %458 = vmatpush.xpose.msra.mxu0 0.0
    %459 = vmatpush.xpose.msra.mxu0 0.0
    %460 = vmatpush.xpose.msra.mxu0 0.0
    %461 = vmatpush.xpose.msra.mxu0 0.0
    %462 = vmatpush.xpose.msra.mxu0 0.0
    %463 = vmatpush.xpose.msra.mxu0 0.0
    %464 = vmatpush.xpose.msra.mxu0 %v448
    %465 = vmatpush.xpose.msra.mxu0 %v446
    %466 = vmatmul.f32.gmra.mxu0 %v442
    %v467 = vpop.f32.mrf.mxu0
    %v468 = vadd.f32 0.0, %v467
    %469 = vmatmul.f32.gmra.mxu0 %v444
    %v470 = vpop.f32.mrf.mxu0
    %v471 = vadd.f32 0.0, %v470
    %472 = vdwg.mxu0
    %v473 = vmul.f32 %v468, 0.35355338
    %v474 = vmul.f32 %v471, 0.35355338
    %v475 = vsel %vm280, %v473, -inf
    %476 = vmax.xlane.f32.xlu0 %v475
    %v477 = vpop.xlane.xlu0 %476
    %v478 = vsel %vm280, %v474, -inf
    %479 = vmax.xlane.f32.xlu0 %v478
    %v480 = vpop.xlane.xlu0 %479
    %v481 = vsub.f32 %v473, %v477
    %v482 = vsub.f32 %v474, %v480
    %v483 = vmul.f32 %v481, 1.442695
    %v484 = vpow.pop %v483
    %v485 = vmul.f32 %v482, 1.442695
    %v486 = vpow.pop %v485
    %v487 = vsel %vm280, %v484, 0.0
    %488 = vadd.xlane.f32.xlu0 %v487
    %v489 = vpop.xlane.xlu0 %488
    %v490 = vsel %vm280, %v486, 0.0
    %491 = vadd.xlane.f32.xlu0 %v490
    %v492 = vpop.xlane.xlu0 %491
    %v493 = vrcp.pop %v489
    %v494 = vrcp.pop %v492
    %v495 = vmul.f32 %v484, %v493
    %v496 = vmul.f32 %v486, %v494
    %497 = vrot.lane.b32.xlu0 %v229, 56
    %v498 = vpop.permute.xlu0 %497
    %499 = vrot.lane.b32.xlu0 %v232, 56
    %v500 = vpop.permute.xlu0 %499
    %v504 = vsel %vm280, %v495, 0
    %v507 = vsel %vm280, %v496, 0
    %509 = vmatpush.msra.mxu0 0.0
    %510 = vmatpush.msra.mxu0 0.0
    %511 = vmatpush.msra.mxu0 0.0
    %512 = vmatpush.msra.mxu0 0.0
    %513 = vmatpush.msra.mxu0 0.0
    %514 = vmatpush.msra.mxu0 0.0
    %515 = vmatpush.msra.mxu0 0.0
    %516 = vmatpush.msra.mxu0 0.0
    %517 = vmatpush.msra.mxu0 0.0
    %518 = vmatpush.msra.mxu0 0.0
    %519 = vmatpush.msra.mxu0 0.0
    %520 = vmatpush.msra.mxu0 0.0
    %521 = vmatpush.msra.mxu0 0.0
    %522 = vmatpush.msra.mxu0 0.0
    %523 = vmatpush.msra.mxu0 %v500
    %524 = vmatpush.msra.mxu0 %v498
    %525 = vmatmul.f32.gmra.mxu0 %v504
    %v526 = vpop.f32.mrf.mxu0
    %v527 = vadd.f32 0.0, %v526
    %528 = vmatmul.f32.gmra.mxu0 %v507
    %v529 = vpop.f32.mrf.mxu0
    %v530 = vadd.f32 0.0, %v529
    %531 = vdwg.mxu0
    %v533 = vsel %vm246, %v527, 0
    %v536 = vsel %vm246, %v530, 0
    %538 = vmatpush.msra.mxu0 0.0
    %539 = vmatpush.msra.mxu0 0.0
    %540 = vmatpush.msra.mxu0 0.0
    %541 = vmatpush.msra.mxu0 0.0
    %542 = vmatpush.msra.mxu0 0.0
    %543 = vmatpush.msra.mxu0 0.0
    %544 = vmatpush.msra.mxu0 0.0
    %545 = vmatpush.msra.mxu0 0.0
    %546 = vmatpush.msra.mxu0 0.0
    %547 = vmatpush.msra.mxu0 0.0
    %548 = vmatpush.msra.mxu0 0.0
    %549 = vmatpush.msra.mxu0 0.0
    %550 = vmatpush.msra.mxu0 0.0
    %551 = vmatpush.msra.mxu0 0.0
    %552 = vmatpush.msra.mxu0 0.0
    %553 = vmatpush.msra.mxu0 %v196
    %554 = vmatmul.f32.gmra.mxu0 %v533
    %v555 = vpop.f32.mrf.mxu0
    %v556 = vadd.f32 0.0, %v555
    %557 = vmatmul.f32.gmra.mxu0 %v536
    %v558 = vpop.f32.mrf.mxu0
    %v559 = vadd.f32 0.0, %v558
    %560 = vdwg.mxu0
    %v562 = vsel %vm246, %v333, 0
    %v565 = vsel %vm246, %v336, 0
    %567 = vmatpush.msra.mxu0 0.0
    %568 = vmatpush.msra.mxu0 0.0
    %569 = vmatpush.msra.mxu0 0.0
    %570 = vmatpush.msra.mxu0 0.0
    %571 = vmatpush.msra.mxu0 0.0
    %572 = vmatpush.msra.mxu0 0.0
    %573 = vmatpush.msra.mxu0 0.0
    %574 = vmatpush.msra.mxu0 0.0
    %575 = vmatpush.msra.mxu0 0.0
    %576 = vmatpush.msra.mxu0 0.0
    %577 = vmatpush.msra.mxu0 0.0
    %578 = vmatpush.msra.mxu0 0.0
    %579 = vmatpush.msra.mxu0 0.0
    %580 = vmatpush.msra.mxu0 0.0
    %581 = vmatpush.msra.mxu0 0.0
    %582 = vmatpush.msra.mxu0 %v195
    %583 = vmatmul.f32.gmra.mxu0 %v562
    %v584 = vpop.f32.mrf.mxu0
    %v585 = vadd.f32 %v556, %v584
    %586 = vmatmul.f32.gmra.mxu0 %v565
    %v587 = vpop.f32.mrf.mxu0
    %v588 = vadd.f32 %v559, %v587
    %589 = vdwg.mxu0
    %590 = vrot.lane.b32.xlu0 %v235, 120
    %v591 = vpop.permute.xlu0 %590
    %592 = vrot.lane.b32.xlu0 %v238, 120
    %v593 = vpop.permute.xlu0 %592
    %594 = vrot.lane.b32.xlu0 %v235, 88
    %v595 = vpop.permute.xlu0 %594
    %596 = vrot.lane.b32.xlu0 %v238, 88
    %v597 = vpop.permute.xlu0 %596
    %v598 = vsel %vm246, %v591, 0
    %v600 = vsel %vm246, %v593, 0
    %v602 = vsel %vm246, %v595, 0
    %v604 = vsel %vm246, %v597, 0
    %606 = vmatpush.xpose.msra.mxu0 0.0
    %607 = vmatpush.xpose.msra.mxu0 0.0
    %608 = vmatpush.xpose.msra.mxu0 0.0
    %609 = vmatpush.xpose.msra.mxu0 0.0
    %610 = vmatpush.xpose.msra.mxu0 0.0
    %611 = vmatpush.xpose.msra.mxu0 0.0
    %612 = vmatpush.xpose.msra.mxu0 0.0
    %613 = vmatpush.xpose.msra.mxu0 0.0
    %614 = vmatpush.xpose.msra.mxu0 0.0
    %615 = vmatpush.xpose.msra.mxu0 0.0
    %616 = vmatpush.xpose.msra.mxu0 0.0
    %617 = vmatpush.xpose.msra.mxu0 0.0
    %618 = vmatpush.xpose.msra.mxu0 0.0
    %619 = vmatpush.xpose.msra.mxu0 0.0
    %620 = vmatpush.xpose.msra.mxu0 %v604
    %621 = vmatpush.xpose.msra.mxu0 %v602
    %622 = vmatmul.f32.gmra.mxu0 %v598
    %v623 = vpop.f32.mrf.mxu0
    %v624 = vadd.f32 0.0, %v623
    %625 = vmatmul.f32.gmra.mxu0 %v600
    %v626 = vpop.f32.mrf.mxu0
    %v627 = vadd.f32 0.0, %v626
    %628 = vdwg.mxu0
    %v629 = vmul.f32 %v624, 0.35355338
    %v630 = vmul.f32 %v627, 0.35355338
    %v631 = vsel %vm280, %v629, -inf
    %632 = vmax.xlane.f32.xlu0 %v631
    %v633 = vpop.xlane.xlu0 %632
    %v634 = vsel %vm280, %v630, -inf
    %635 = vmax.xlane.f32.xlu0 %v634
    %v636 = vpop.xlane.xlu0 %635
    %v637 = vsub.f32 %v629, %v633
    %v638 = vsub.f32 %v630, %v636
    %v639 = vmul.f32 %v637, 1.442695
    %v640 = vpow.pop %v639
    %v641 = vmul.f32 %v638, 1.442695
    %v642 = vpow.pop %v641
    %v643 = vsel %vm280, %v640, 0.0
    %644 = vadd.xlane.f32.xlu0 %v643
    %v645 = vpop.xlane.xlu0 %644
    %v646 = vsel %vm280, %v642, 0.0
    %647 = vadd.xlane.f32.xlu0 %v646
    %v648 = vpop.xlane.xlu0 %647
    %v649 = vrcp.pop %v645
    %v650 = vrcp.pop %v648
    %v651 = vmul.f32 %v640, %v649
    %v652 = vmul.f32 %v642, %v650
    %653 = vrot.lane.b32.xlu0 %v235, 56
    %v654 = vpop.permute.xlu0 %653
    %655 = vrot.lane.b32.xlu0 %v238, 56
    %v656 = vpop.permute.xlu0 %655
    %v660 = vsel %vm280, %v651, 0
    %v663 = vsel %vm280, %v652, 0
    %665 = vmatpush.msra.mxu0 0.0
    %666 = vmatpush.msra.mxu0 0.0
    %667 = vmatpush.msra.mxu0 0.0
    %668 = vmatpush.msra.mxu0 0.0
    %669 = vmatpush.msra.mxu0 0.0
    %670 = vmatpush.msra.mxu0 0.0
    %671 = vmatpush.msra.mxu0 0.0
    %672 = vmatpush.msra.mxu0 0.0
    %673 = vmatpush.msra.mxu0 0.0
    %674 = vmatpush.msra.mxu0 0.0
    %675 = vmatpush.msra.mxu0 0.0
    %676 = vmatpush.msra.mxu0 0.0
    %677 = vmatpush.msra.mxu0 0.0
    %678 = vmatpush.msra.mxu0 0.0
    %679 = vmatpush.msra.mxu0 %v656
    %680 = vmatpush.msra.mxu0 %v654
    %681 = vmatmul.f32.gmra.mxu0 %v660
    %v682 = vpop.f32.mrf.mxu0
    %v683 = vadd.f32 0.0, %v682
    %684 = vmatmul.f32.gmra.mxu0 %v663
    %v685 = vpop.f32.mrf.mxu0
    %v686 = vadd.f32 0.0, %v685
    %687 = vdwg.mxu0
    %v689 = vsel %vm246, %v683, 0
    %v692 = vsel %vm246, %v686, 0
    %694 = vmatpush.msra.mxu0 0.0
    %695 = vmatpush.msra.mxu0 0.0
    %696 = vmatpush.msra.mxu0 0.0
    %697 = vmatpush.msra.mxu0 0.0
    %698 = vmatpush.msra.mxu0 0.0
    %699 = vmatpush.msra.mxu0 0.0
    %700 = vmatpush.msra.mxu0 0.0
    %701 = vmatpush.msra.mxu0 0.0
    %702 = vmatpush.msra.mxu0 0.0
    %703 = vmatpush.msra.mxu0 0.0
    %704 = vmatpush.msra.mxu0 0.0
    %705 = vmatpush.msra.mxu0 0.0
    %706 = vmatpush.msra.mxu0 0.0
    %707 = vmatpush.msra.mxu0 0.0
    %708 = vmatpush.msra.mxu0 0.0
    %709 = vmatpush.msra.mxu0 %v196
    %710 = vmatmul.f32.gmra.mxu0 %v689
    %v711 = vpop.f32.mrf.mxu0
    %v712 = vadd.f32 0.0, %v711
    %713 = vmatmul.f32.gmra.mxu0 %v692
    %v714 = vpop.f32.mrf.mxu0
    %v715 = vadd.f32 0.0, %v714
    %716 = vdwg.mxu0
    %v718 = vsel %vm246, %v429, 0
    %v721 = vsel %vm246, %v432, 0
    %723 = vmatpush.msra.mxu0 0.0
    %724 = vmatpush.msra.mxu0 0.0
    %725 = vmatpush.msra.mxu0 0.0
    %726 = vmatpush.msra.mxu0 0.0
    %727 = vmatpush.msra.mxu0 0.0
    %728 = vmatpush.msra.mxu0 0.0
    %729 = vmatpush.msra.mxu0 0.0
    %730 = vmatpush.msra.mxu0 0.0
    %731 = vmatpush.msra.mxu0 0.0
    %732 = vmatpush.msra.mxu0 0.0
    %733 = vmatpush.msra.mxu0 0.0
    %734 = vmatpush.msra.mxu0 0.0
    %735 = vmatpush.msra.mxu0 0.0
    %736 = vmatpush.msra.mxu0 0.0
    %737 = vmatpush.msra.mxu0 0.0
    %738 = vmatpush.msra.mxu0 %v195
    %739 = vmatmul.f32.gmra.mxu0 %v718
    %v740 = vpop.f32.mrf.mxu0
    %v741 = vadd.f32 %v712, %v740
    %742 = vmatmul.f32.gmra.mxu0 %v721
    %v743 = vpop.f32.mrf.mxu0
    %v744 = vadd.f32 %v715, %v743
    %745 = vdwg.mxu0
    %746 = vrot.lane.b32.xlu0 %v229, 112
    %v747 = vpop.permute.xlu0 %746
    %748 = vrot.lane.b32.xlu0 %v232, 112
    %v749 = vpop.permute.xlu0 %748
    %750 = vrot.lane.b32.xlu0 %v229, 80
    %v751 = vpop.permute.xlu0 %750
    %752 = vrot.lane.b32.xlu0 %v232, 80
    %v753 = vpop.permute.xlu0 %752
    %v754 = vsel %vm246, %v747, 0
    %v756 = vsel %vm246, %v749, 0
    %v758 = vsel %vm246, %v751, 0
    %v760 = vsel %vm246, %v753, 0
    %762 = vmatpush.xpose.msra.mxu0 0.0
    %763 = vmatpush.xpose.msra.mxu0 0.0
    %764 = vmatpush.xpose.msra.mxu0 0.0
    %765 = vmatpush.xpose.msra.mxu0 0.0
    %766 = vmatpush.xpose.msra.mxu0 0.0
    %767 = vmatpush.xpose.msra.mxu0 0.0
    %768 = vmatpush.xpose.msra.mxu0 0.0
    %769 = vmatpush.xpose.msra.mxu0 0.0
    %770 = vmatpush.xpose.msra.mxu0 0.0
    %771 = vmatpush.xpose.msra.mxu0 0.0
    %772 = vmatpush.xpose.msra.mxu0 0.0
    %773 = vmatpush.xpose.msra.mxu0 0.0
    %774 = vmatpush.xpose.msra.mxu0 0.0
    %775 = vmatpush.xpose.msra.mxu0 0.0
    %776 = vmatpush.xpose.msra.mxu0 %v760
    %777 = vmatpush.xpose.msra.mxu0 %v758
    %778 = vmatmul.f32.gmra.mxu0 %v754
    %v779 = vpop.f32.mrf.mxu0
    %v780 = vadd.f32 0.0, %v779
    %781 = vmatmul.f32.gmra.mxu0 %v756
    %v782 = vpop.f32.mrf.mxu0
    %v783 = vadd.f32 0.0, %v782
    %784 = vdwg.mxu0
    %v785 = vmul.f32 %v780, 0.35355338
    %v786 = vmul.f32 %v783, 0.35355338
    %v787 = vsel %vm280, %v785, -inf
    %788 = vmax.xlane.f32.xlu0 %v787
    %v789 = vpop.xlane.xlu0 %788
    %v790 = vsel %vm280, %v786, -inf
    %791 = vmax.xlane.f32.xlu0 %v790
    %v792 = vpop.xlane.xlu0 %791
    %v793 = vsub.f32 %v785, %v789
    %v794 = vsub.f32 %v786, %v792
    %v795 = vmul.f32 %v793, 1.442695
    %v796 = vpow.pop %v795
    %v797 = vmul.f32 %v794, 1.442695
    %v798 = vpow.pop %v797
    %v799 = vsel %vm280, %v796, 0.0
    %800 = vadd.xlane.f32.xlu0 %v799
    %v801 = vpop.xlane.xlu0 %800
    %v802 = vsel %vm280, %v798, 0.0
    %803 = vadd.xlane.f32.xlu0 %v802
    %v804 = vpop.xlane.xlu0 %803
    %v805 = vrcp.pop %v801
    %v806 = vrcp.pop %v804
    %v807 = vmul.f32 %v796, %v805
    %v808 = vmul.f32 %v798, %v806
    %809 = vrot.lane.b32.xlu0 %v229, 48
    %v810 = vpop.permute.xlu0 %809
    %811 = vrot.lane.b32.xlu0 %v232, 48
    %v812 = vpop.permute.xlu0 %811
    %v816 = vsel %vm280, %v807, 0
    %v819 = vsel %vm280, %v808, 0
    %821 = vmatpush.msra.mxu0 0.0
    %822 = vmatpush.msra.mxu0 0.0
    %823 = vmatpush.msra.mxu0 0.0
    %824 = vmatpush.msra.mxu0 0.0
    %825 = vmatpush.msra.mxu0 0.0
    %826 = vmatpush.msra.mxu0 0.0
    %827 = vmatpush.msra.mxu0 0.0
    %828 = vmatpush.msra.mxu0 0.0
    %829 = vmatpush.msra.mxu0 0.0
    %830 = vmatpush.msra.mxu0 0.0
    %831 = vmatpush.msra.mxu0 0.0
    %832 = vmatpush.msra.mxu0 0.0
    %833 = vmatpush.msra.mxu0 0.0
    %834 = vmatpush.msra.mxu0 0.0
    %835 = vmatpush.msra.mxu0 %v812
    %836 = vmatpush.msra.mxu0 %v810
    %837 = vmatmul.f32.gmra.mxu0 %v816
    %v838 = vpop.f32.mrf.mxu0
    %v839 = vadd.f32 0.0, %v838
    %840 = vmatmul.f32.gmra.mxu0 %v819
    %v841 = vpop.f32.mrf.mxu0
    %v842 = vadd.f32 0.0, %v841
    %843 = vdwg.mxu0
    %v845 = vsel %vm246, %v839, 0
    %v848 = vsel %vm246, %v842, 0
    %850 = vmatpush.msra.mxu0 0.0
    %851 = vmatpush.msra.mxu0 0.0
    %852 = vmatpush.msra.mxu0 0.0
    %853 = vmatpush.msra.mxu0 0.0
    %854 = vmatpush.msra.mxu0 0.0
    %855 = vmatpush.msra.mxu0 0.0
    %856 = vmatpush.msra.mxu0 0.0
    %857 = vmatpush.msra.mxu0 0.0
    %858 = vmatpush.msra.mxu0 0.0
    %859 = vmatpush.msra.mxu0 0.0
    %860 = vmatpush.msra.mxu0 0.0
    %861 = vmatpush.msra.mxu0 0.0
    %862 = vmatpush.msra.mxu0 0.0
    %863 = vmatpush.msra.mxu0 0.0
    %864 = vmatpush.msra.mxu0 0.0
    %865 = vmatpush.msra.mxu0 %v197
    %866 = vmatmul.f32.gmra.mxu0 %v845
    %v867 = vpop.f32.mrf.mxu0
    %v868 = vadd.f32 0.0, %v867
    %869 = vmatmul.f32.gmra.mxu0 %v848
    %v870 = vpop.f32.mrf.mxu0
    %v871 = vadd.f32 0.0, %v870
    %872 = vdwg.mxu0
    %v873 = vadd.f32 %v585, %v868
    %v874 = vadd.f32 %v588, %v871
    %875 = vrot.lane.b32.xlu0 %v235, 112
    %v876 = vpop.permute.xlu0 %875
    %877 = vrot.lane.b32.xlu0 %v238, 112
    %v878 = vpop.permute.xlu0 %877
    %879 = vrot.lane.b32.xlu0 %v235, 80
    %v880 = vpop.permute.xlu0 %879
    %881 = vrot.lane.b32.xlu0 %v238, 80
    %v882 = vpop.permute.xlu0 %881
    %v883 = vsel %vm246, %v876, 0
    %v885 = vsel %vm246, %v878, 0
    %v887 = vsel %vm246, %v880, 0
    %v889 = vsel %vm246, %v882, 0
    %891 = vmatpush.xpose.msra.mxu0 0.0
    %892 = vmatpush.xpose.msra.mxu0 0.0
    %893 = vmatpush.xpose.msra.mxu0 0.0
    %894 = vmatpush.xpose.msra.mxu0 0.0
    %895 = vmatpush.xpose.msra.mxu0 0.0
    %896 = vmatpush.xpose.msra.mxu0 0.0
    %897 = vmatpush.xpose.msra.mxu0 0.0
    %898 = vmatpush.xpose.msra.mxu0 0.0
    %899 = vmatpush.xpose.msra.mxu0 0.0
    %900 = vmatpush.xpose.msra.mxu0 0.0
    %901 = vmatpush.xpose.msra.mxu0 0.0
    %902 = vmatpush.xpose.msra.mxu0 0.0
    %903 = vmatpush.xpose.msra.mxu0 0.0
    %904 = vmatpush.xpose.msra.mxu0 0.0
    %905 = vmatpush.xpose.msra.mxu0 %v889
    %906 = vmatpush.xpose.msra.mxu0 %v887
    %907 = vmatmul.f32.gmra.mxu0 %v883
    %v908 = vpop.f32.mrf.mxu0
    %v909 = vadd.f32 0.0, %v908
    %910 = vmatmul.f32.gmra.mxu0 %v885
    %v911 = vpop.f32.mrf.mxu0
    %v912 = vadd.f32 0.0, %v911
    %913 = vdwg.mxu0
    %v914 = vmul.f32 %v909, 0.35355338
    %v915 = vmul.f32 %v912, 0.35355338
    %v916 = vsel %vm280, %v914, -inf
    %917 = vmax.xlane.f32.xlu0 %v916
    %v918 = vpop.xlane.xlu0 %917
    %v919 = vsel %vm280, %v915, -inf
    %920 = vmax.xlane.f32.xlu0 %v919
    %v921 = vpop.xlane.xlu0 %920
    %v922 = vsub.f32 %v914, %v918
    %v923 = vsub.f32 %v915, %v921
    %v924 = vmul.f32 %v922, 1.442695
    %v925 = vpow.pop %v924
    %v926 = vmul.f32 %v923, 1.442695
    %v927 = vpow.pop %v926
    %v928 = vsel %vm280, %v925, 0.0
    %929 = vadd.xlane.f32.xlu0 %v928
    %v930 = vpop.xlane.xlu0 %929
    %v931 = vsel %vm280, %v927, 0.0
    %932 = vadd.xlane.f32.xlu0 %v931
    %v933 = vpop.xlane.xlu0 %932
    %v934 = vrcp.pop %v930
    %v935 = vrcp.pop %v933
    %v936 = vmul.f32 %v925, %v934
    %v937 = vmul.f32 %v927, %v935
    %938 = vrot.lane.b32.xlu0 %v235, 48
    %v939 = vpop.permute.xlu0 %938
    %940 = vrot.lane.b32.xlu0 %v238, 48
    %v941 = vpop.permute.xlu0 %940
    %v945 = vsel %vm280, %v936, 0
    %v948 = vsel %vm280, %v937, 0
    %950 = vmatpush.msra.mxu0 0.0
    %951 = vmatpush.msra.mxu0 0.0
    %952 = vmatpush.msra.mxu0 0.0
    %953 = vmatpush.msra.mxu0 0.0
    %954 = vmatpush.msra.mxu0 0.0
    %955 = vmatpush.msra.mxu0 0.0
    %956 = vmatpush.msra.mxu0 0.0
    %957 = vmatpush.msra.mxu0 0.0
    %958 = vmatpush.msra.mxu0 0.0
    %959 = vmatpush.msra.mxu0 0.0
    %960 = vmatpush.msra.mxu0 0.0
    %961 = vmatpush.msra.mxu0 0.0
    %962 = vmatpush.msra.mxu0 0.0
    %963 = vmatpush.msra.mxu0 0.0
    %964 = vmatpush.msra.mxu0 %v941
    %965 = vmatpush.msra.mxu0 %v939
    %966 = vmatmul.f32.gmra.mxu0 %v945
    %v967 = vpop.f32.mrf.mxu0
    %v968 = vadd.f32 0.0, %v967
    %969 = vmatmul.f32.gmra.mxu0 %v948
    %v970 = vpop.f32.mrf.mxu0
    %v971 = vadd.f32 0.0, %v970
    %972 = vdwg.mxu0
    %v974 = vsel %vm246, %v968, 0
    %v977 = vsel %vm246, %v971, 0
    %979 = vmatpush.msra.mxu0 0.0
    %980 = vmatpush.msra.mxu0 0.0
    %981 = vmatpush.msra.mxu0 0.0
    %982 = vmatpush.msra.mxu0 0.0
    %983 = vmatpush.msra.mxu0 0.0
    %984 = vmatpush.msra.mxu0 0.0
    %985 = vmatpush.msra.mxu0 0.0
    %986 = vmatpush.msra.mxu0 0.0
    %987 = vmatpush.msra.mxu0 0.0
    %988 = vmatpush.msra.mxu0 0.0
    %989 = vmatpush.msra.mxu0 0.0
    %990 = vmatpush.msra.mxu0 0.0
    %991 = vmatpush.msra.mxu0 0.0
    %992 = vmatpush.msra.mxu0 0.0
    %993 = vmatpush.msra.mxu0 0.0
    %994 = vmatpush.msra.mxu0 %v197
    %995 = vmatmul.f32.gmra.mxu0 %v974
    %v996 = vpop.f32.mrf.mxu0
    %v997 = vadd.f32 0.0, %v996
    %998 = vmatmul.f32.gmra.mxu0 %v977
    %v999 = vpop.f32.mrf.mxu0
    %v1000 = vadd.f32 0.0, %v999
    %1001 = vdwg.mxu0
    %v1002 = vadd.f32 %v741, %v997
    %v1003 = vadd.f32 %v744, %v1000
    %1004 = vrot.lane.b32.xlu0 %v229, 104
    %v1005 = vpop.permute.xlu0 %1004
    %1006 = vrot.lane.b32.xlu0 %v232, 104
    %v1007 = vpop.permute.xlu0 %1006
    %1008 = vrot.lane.b32.xlu0 %v229, 72
    %v1009 = vpop.permute.xlu0 %1008
    %1010 = vrot.lane.b32.xlu0 %v232, 72
    %v1011 = vpop.permute.xlu0 %1010
    %v1012 = vsel %vm246, %v1005, 0
    %v1014 = vsel %vm246, %v1007, 0
    %v1016 = vsel %vm246, %v1009, 0
    %v1018 = vsel %vm246, %v1011, 0
    %1020 = vmatpush.xpose.msra.mxu0 0.0
    %1021 = vmatpush.xpose.msra.mxu0 0.0
    %1022 = vmatpush.xpose.msra.mxu0 0.0
    %1023 = vmatpush.xpose.msra.mxu0 0.0
    %1024 = vmatpush.xpose.msra.mxu0 0.0
    %1025 = vmatpush.xpose.msra.mxu0 0.0
    %1026 = vmatpush.xpose.msra.mxu0 0.0
    %1027 = vmatpush.xpose.msra.mxu0 0.0
    %1028 = vmatpush.xpose.msra.mxu0 0.0
    %1029 = vmatpush.xpose.msra.mxu0 0.0
    %1030 = vmatpush.xpose.msra.mxu0 0.0
    %1031 = vmatpush.xpose.msra.mxu0 0.0
    %1032 = vmatpush.xpose.msra.mxu0 0.0
    %1033 = vmatpush.xpose.msra.mxu0 0.0
    %1034 = vmatpush.xpose.msra.mxu0 %v1018
    %1035 = vmatpush.xpose.msra.mxu0 %v1016
    %1036 = vmatmul.f32.gmra.mxu0 %v1012
    %v1037 = vpop.f32.mrf.mxu0
    %v1038 = vadd.f32 0.0, %v1037
    %1039 = vmatmul.f32.gmra.mxu0 %v1014
    %v1040 = vpop.f32.mrf.mxu0
    %v1041 = vadd.f32 0.0, %v1040
    %1042 = vdwg.mxu0
    %v1043 = vmul.f32 %v1038, 0.35355338
    %v1044 = vmul.f32 %v1041, 0.35355338
    %v1045 = vsel %vm280, %v1043, -inf
    %1046 = vmax.xlane.f32.xlu0 %v1045
    %v1047 = vpop.xlane.xlu0 %1046
    %v1048 = vsel %vm280, %v1044, -inf
    %1049 = vmax.xlane.f32.xlu0 %v1048
    %v1050 = vpop.xlane.xlu0 %1049
    %v1051 = vsub.f32 %v1043, %v1047
    %v1052 = vsub.f32 %v1044, %v1050
    %v1053 = vmul.f32 %v1051, 1.442695
    %v1054 = vpow.pop %v1053
    %v1055 = vmul.f32 %v1052, 1.442695
    %v1056 = vpow.pop %v1055
    %v1057 = vsel %vm280, %v1054, 0.0
    %1058 = vadd.xlane.f32.xlu0 %v1057
    %v1059 = vpop.xlane.xlu0 %1058
    %v1060 = vsel %vm280, %v1056, 0.0
    %1061 = vadd.xlane.f32.xlu0 %v1060
    %v1062 = vpop.xlane.xlu0 %1061
    %v1063 = vrcp.pop %v1059
    %v1064 = vrcp.pop %v1062
    %v1065 = vmul.f32 %v1054, %v1063
    %v1066 = vmul.f32 %v1056, %v1064
    %1067 = vrot.lane.b32.xlu0 %v229, 40
    %v1068 = vpop.permute.xlu0 %1067
    %1069 = vrot.lane.b32.xlu0 %v232, 40
    %v1070 = vpop.permute.xlu0 %1069
    %v1074 = vsel %vm280, %v1065, 0
    %v1077 = vsel %vm280, %v1066, 0
    %1079 = vmatpush.msra.mxu0 0.0
    %1080 = vmatpush.msra.mxu0 0.0
    %1081 = vmatpush.msra.mxu0 0.0
    %1082 = vmatpush.msra.mxu0 0.0
    %1083 = vmatpush.msra.mxu0 0.0
    %1084 = vmatpush.msra.mxu0 0.0
    %1085 = vmatpush.msra.mxu0 0.0
    %1086 = vmatpush.msra.mxu0 0.0
    %1087 = vmatpush.msra.mxu0 0.0
    %1088 = vmatpush.msra.mxu0 0.0
    %1089 = vmatpush.msra.mxu0 0.0
    %1090 = vmatpush.msra.mxu0 0.0
    %1091 = vmatpush.msra.mxu0 0.0
    %1092 = vmatpush.msra.mxu0 0.0
    %1093 = vmatpush.msra.mxu0 %v1070
    %1094 = vmatpush.msra.mxu0 %v1068
    %1095 = vmatmul.f32.gmra.mxu0 %v1074
    %v1096 = vpop.f32.mrf.mxu0
    %v1097 = vadd.f32 0.0, %v1096
    %1098 = vmatmul.f32.gmra.mxu0 %v1077
    %v1099 = vpop.f32.mrf.mxu0
    %v1100 = vadd.f32 0.0, %v1099
    %1101 = vdwg.mxu0
    %v1103 = vsel %vm246, %v1097, 0
    %v1106 = vsel %vm246, %v1100, 0
    %1108 = vmatpush.msra.mxu0 0.0
    %1109 = vmatpush.msra.mxu0 0.0
    %1110 = vmatpush.msra.mxu0 0.0
    %1111 = vmatpush.msra.mxu0 0.0
    %1112 = vmatpush.msra.mxu0 0.0
    %1113 = vmatpush.msra.mxu0 0.0
    %1114 = vmatpush.msra.mxu0 0.0
    %1115 = vmatpush.msra.mxu0 0.0
    %1116 = vmatpush.msra.mxu0 0.0
    %1117 = vmatpush.msra.mxu0 0.0
    %1118 = vmatpush.msra.mxu0 0.0
    %1119 = vmatpush.msra.mxu0 0.0
    %1120 = vmatpush.msra.mxu0 0.0
    %1121 = vmatpush.msra.mxu0 0.0
    %1122 = vmatpush.msra.mxu0 0.0
    %1123 = vmatpush.msra.mxu0 %v198
    %1124 = vmatmul.f32.gmra.mxu0 %v1103
    %v1125 = vpop.f32.mrf.mxu0
    %v1126 = vadd.f32 0.0, %v1125
    %1127 = vmatmul.f32.gmra.mxu0 %v1106
    %v1128 = vpop.f32.mrf.mxu0
    %v1129 = vadd.f32 0.0, %v1128
    %1130 = vdwg.mxu0
    %v1131 = vadd.f32 %v873, %v1126
    %v1132 = vadd.f32 %v874, %v1129
    %1133 = vrot.lane.b32.xlu0 %v235, 104
    %v1134 = vpop.permute.xlu0 %1133
    %1135 = vrot.lane.b32.xlu0 %v238, 104
    %v1136 = vpop.permute.xlu0 %1135
    %1137 = vrot.lane.b32.xlu0 %v235, 72
    %v1138 = vpop.permute.xlu0 %1137
    %1139 = vrot.lane.b32.xlu0 %v238, 72
    %v1140 = vpop.permute.xlu0 %1139
    %v1141 = vsel %vm246, %v1134, 0
    %v1143 = vsel %vm246, %v1136, 0
    %v1145 = vsel %vm246, %v1138, 0
    %v1147 = vsel %vm246, %v1140, 0
    %1149 = vmatpush.xpose.msra.mxu0 0.0
    %1150 = vmatpush.xpose.msra.mxu0 0.0
    %1151 = vmatpush.xpose.msra.mxu0 0.0
    %1152 = vmatpush.xpose.msra.mxu0 0.0
    %1153 = vmatpush.xpose.msra.mxu0 0.0
    %1154 = vmatpush.xpose.msra.mxu0 0.0
    %1155 = vmatpush.xpose.msra.mxu0 0.0
    %1156 = vmatpush.xpose.msra.mxu0 0.0
    %1157 = vmatpush.xpose.msra.mxu0 0.0
    %1158 = vmatpush.xpose.msra.mxu0 0.0
    %1159 = vmatpush.xpose.msra.mxu0 0.0
    %1160 = vmatpush.xpose.msra.mxu0 0.0
    %1161 = vmatpush.xpose.msra.mxu0 0.0
    %1162 = vmatpush.xpose.msra.mxu0 0.0
    %1163 = vmatpush.xpose.msra.mxu0 %v1147
    %1164 = vmatpush.xpose.msra.mxu0 %v1145
    %1165 = vmatmul.f32.gmra.mxu0 %v1141
    %v1166 = vpop.f32.mrf.mxu0
    %v1167 = vadd.f32 0.0, %v1166
    %1168 = vmatmul.f32.gmra.mxu0 %v1143
    %v1169 = vpop.f32.mrf.mxu0
    %v1170 = vadd.f32 0.0, %v1169
    %1171 = vdwg.mxu0
    %v1172 = vmul.f32 %v1167, 0.35355338
    %v1173 = vmul.f32 %v1170, 0.35355338
    %v1174 = vsel %vm280, %v1172, -inf
    %1175 = vmax.xlane.f32.xlu0 %v1174
    %v1176 = vpop.xlane.xlu0 %1175
    %v1177 = vsel %vm280, %v1173, -inf
    %1178 = vmax.xlane.f32.xlu0 %v1177
    %v1179 = vpop.xlane.xlu0 %1178
    %v1180 = vsub.f32 %v1172, %v1176
    %v1181 = vsub.f32 %v1173, %v1179
    %v1182 = vmul.f32 %v1180, 1.442695
    %v1183 = vpow.pop %v1182
    %v1184 = vmul.f32 %v1181, 1.442695
    %v1185 = vpow.pop %v1184
    %v1186 = vsel %vm280, %v1183, 0.0
    %1187 = vadd.xlane.f32.xlu0 %v1186
    %v1188 = vpop.xlane.xlu0 %1187
    %v1189 = vsel %vm280, %v1185, 0.0
    %1190 = vadd.xlane.f32.xlu0 %v1189
    %v1191 = vpop.xlane.xlu0 %1190
    %v1192 = vrcp.pop %v1188
    %v1193 = vrcp.pop %v1191
    %v1194 = vmul.f32 %v1183, %v1192
    %v1195 = vmul.f32 %v1185, %v1193
    %1196 = vrot.lane.b32.xlu0 %v235, 40
    %v1197 = vpop.permute.xlu0 %1196
    %1198 = vrot.lane.b32.xlu0 %v238, 40
    %v1199 = vpop.permute.xlu0 %1198
    %v1203 = vsel %vm280, %v1194, 0
    %v1206 = vsel %vm280, %v1195, 0
    %1208 = vmatpush.msra.mxu0 0.0
    %1209 = vmatpush.msra.mxu0 0.0
    %1210 = vmatpush.msra.mxu0 0.0
    %1211 = vmatpush.msra.mxu0 0.0
    %1212 = vmatpush.msra.mxu0 0.0
    %1213 = vmatpush.msra.mxu0 0.0
    %1214 = vmatpush.msra.mxu0 0.0
    %1215 = vmatpush.msra.mxu0 0.0
    %1216 = vmatpush.msra.mxu0 0.0
    %1217 = vmatpush.msra.mxu0 0.0
    %1218 = vmatpush.msra.mxu0 0.0
    %1219 = vmatpush.msra.mxu0 0.0
    %1220 = vmatpush.msra.mxu0 0.0
    %1221 = vmatpush.msra.mxu0 0.0
    %1222 = vmatpush.msra.mxu0 %v1199
    %1223 = vmatpush.msra.mxu0 %v1197
    %1224 = vmatmul.f32.gmra.mxu0 %v1203
    %v1225 = vpop.f32.mrf.mxu0
    %v1226 = vadd.f32 0.0, %v1225
    %1227 = vmatmul.f32.gmra.mxu0 %v1206
    %v1228 = vpop.f32.mrf.mxu0
    %v1229 = vadd.f32 0.0, %v1228
    %1230 = vdwg.mxu0
    %v1232 = vsel %vm246, %v1226, 0
    %v1235 = vsel %vm246, %v1229, 0
    %1237 = vmatpush.msra.mxu0 0.0
    %1238 = vmatpush.msra.mxu0 0.0
    %1239 = vmatpush.msra.mxu0 0.0
    %1240 = vmatpush.msra.mxu0 0.0
    %1241 = vmatpush.msra.mxu0 0.0
    %1242 = vmatpush.msra.mxu0 0.0
    %1243 = vmatpush.msra.mxu0 0.0
    %1244 = vmatpush.msra.mxu0 0.0
    %1245 = vmatpush.msra.mxu0 0.0
    %1246 = vmatpush.msra.mxu0 0.0
    %1247 = vmatpush.msra.mxu0 0.0
    %1248 = vmatpush.msra.mxu0 0.0
    %1249 = vmatpush.msra.mxu0 0.0
    %1250 = vmatpush.msra.mxu0 0.0
    %1251 = vmatpush.msra.mxu0 0.0
    %1252 = vmatpush.msra.mxu0 %v198
    %1253 = vmatmul.f32.gmra.mxu0 %v1232
    %v1254 = vpop.f32.mrf.mxu0
    %v1255 = vadd.f32 0.0, %v1254
    %1256 = vmatmul.f32.gmra.mxu0 %v1235
    %v1257 = vpop.f32.mrf.mxu0
    %v1258 = vadd.f32 0.0, %v1257
    %1259 = vdwg.mxu0
    %v1260 = vadd.f32 %v1002, %v1255
    %v1261 = vadd.f32 %v1003, %v1258
    %v1262 = vadd.f32 %v15, %v1131
    %v1263 = vadd.f32 %v16, %v1132
    %v1264 = vadd.f32 %v17, %v1260
    %v1265 = vadd.f32 %v18, %v1261
    %v1266 = vld [vmem:[%s2 + $0x50] sm:$0x1]
    %v1267 = vld [vmem:[%s2 + $0x58] sm:$0x1]
    %v1268 = vsel %vm21, %v1262, 0.0
    %1269 = vadd.xlane.f32.xlu0 %v1268
    %v1270 = vpop.xlane.xlu0 %1269
    %v1271 = vsel %vm21, %v1263, 0.0
    %1272 = vadd.xlane.f32.xlu0 %v1271
    %v1273 = vpop.xlane.xlu0 %1272
    %v1274 = vsel %vm21, %v1264, 0.0
    %1275 = vadd.xlane.f32.xlu0 %v1274
    %v1276 = vpop.xlane.xlu0 %1275
    %v1277 = vsel %vm21, %v1265, 0.0
    %1278 = vadd.xlane.f32.xlu0 %v1277
    %v1279 = vpop.xlane.xlu0 %1278
    %v1280 = vmul.f32 %v1270, %v40
    %v1281 = vmul.f32 %v1273, %v40
    %v1282 = vmul.f32 %v1276, %v40
    %v1283 = vmul.f32 %v1279, %v40
    %v1284 = vsub.f32 %v1262, %v1280
    %v1285 = vsub.f32 %v1263, %v1281
    %v1286 = vsub.f32 %v1264, %v1282
    %v1287 = vsub.f32 %v1265, %v1283
    %v1288 = vmul.f32 %v1284, %v1284
    %v1289 = vmul.f32 %v1285, %v1285
    %v1290 = vmul.f32 %v1286, %v1286
    %v1291 = vmul.f32 %v1287, %v1287
    %v1292 = vsel %vm21, %v1288, 0.0
    %1293 = vadd.xlane.f32.xlu0 %v1292
    %v1294 = vpop.xlane.xlu0 %1293
    %v1295 = vsel %vm21, %v1289, 0.0
    %1296 = vadd.xlane.f32.xlu0 %v1295
    %v1297 = vpop.xlane.xlu0 %1296
    %v1298 = vsel %vm21, %v1290, 0.0
    %1299 = vadd.xlane.f32.xlu0 %v1298
    %v1300 = vpop.xlane.xlu0 %1299
    %v1301 = vsel %vm21, %v1291, 0.0
    %1302 = vadd.xlane.f32.xlu0 %v1301
    %v1303 = vpop.xlane.xlu0 %1302
    %v1304 = vmul.f32 %v1294, 0.032258064
    %v1305 = vmul.f32 %v1297, 0.032258064
    %v1306 = vmul.f32 %v1300, 0.032258064
    %v1307 = vmul.f32 %v1303, 0.032258064
    %v1308 = vrsqrt.pop %v1304
    %v1309 = vmul.f32 %v1308, %v1304
    %v1310 = vmul.f32 %v1309, %v1308
    %v1311 = vmul.f32 0.5, %v1310
    %v1312 = vsub.f32 1.5, %v1311
    %v1313 = vmul.f32 %v1308, %v1312
    %v1314 = vmul.f32 %v1304, %v1313
    %vm1315 = vcmp.eq.f32.partialorder %v1304, inf
    %v1316 = vsel %vm1315, %v1304, %v1314
    %vm1317 = vcmp.eq.f32.partialorder %v1304, 0.0
    %v1318 = vand.u32 %v1304, 2147483648
    %v1319 = vsel %vm1317, %v1318, %v1316
    %v1320 = vrsqrt.pop %v1305
    %v1321 = vmul.f32 %v1320, %v1305
    %v1322 = vmul.f32 %v1321, %v1320
    %v1323 = vmul.f32 0.5, %v1322
    %v1324 = vsub.f32 1.5, %v1323
    %v1325 = vmul.f32 %v1320, %v1324
    %v1326 = vmul.f32 %v1305, %v1325
    %vm1327 = vcmp.eq.f32.partialorder %v1305, inf
    %v1328 = vsel %vm1327, %v1305, %v1326
    %vm1329 = vcmp.eq.f32.partialorder %v1305, 0.0
    %v1330 = vand.u32 %v1305, 2147483648
    %v1331 = vsel %vm1329, %v1330, %v1328
    %v1332 = vrsqrt.pop %v1306
    %v1333 = vmul.f32 %v1332, %v1306
    %v1334 = vmul.f32 %v1333, %v1332
    %v1335 = vmul.f32 0.5, %v1334
    %v1336 = vsub.f32 1.5, %v1335
    %v1337 = vmul.f32 %v1332, %v1336
    %v1338 = vmul.f32 %v1306, %v1337
    %vm1339 = vcmp.eq.f32.partialorder %v1306, inf
    %v1340 = vsel %vm1339, %v1306, %v1338
    %vm1341 = vcmp.eq.f32.partialorder %v1306, 0.0
    %v1342 = vand.u32 %v1306, 2147483648
    %v1343 = vsel %vm1341, %v1342, %v1340
    %v1344 = vrsqrt.pop %v1307
    %v1345 = vmul.f32 %v1344, %v1307
    %v1346 = vmul.f32 %v1345, %v1344
    %v1347 = vmul.f32 0.5, %v1346
    %v1348 = vsub.f32 1.5, %v1347
    %v1349 = vmul.f32 %v1344, %v1348
    %v1350 = vmul.f32 %v1307, %v1349
    %vm1351 = vcmp.eq.f32.partialorder %v1307, inf
    %v1352 = vsel %vm1351, %v1307, %v1350
    %vm1353 = vcmp.eq.f32.partialorder %v1307, 0.0
    %v1354 = vand.u32 %v1307, 2147483648
    %v1355 = vsel %vm1353, %v1354, %v1352
    %v1356 = vadd.f32 %v1319, 1e-05
    %v1357 = vadd.f32 %v1331, 1e-05
    %v1358 = vadd.f32 %v1343, 1e-05
    %v1359 = vadd.f32 %v1355, 1e-05
    %v1360 = vrcp.pop %v1356
    %v1361 = vmul.f32 %v1356, %v1360
    %v1362 = vsub.f32 1.0, %v1361
    %v1363 = vmul.f32 %v1360, %v1362
    %v1364 = vadd.f32 %v1360, %v1363
    %vm1365 = vweird.f32 %v1356
    %vm1366 = vweird.f32 %v1360
    %vm1367 = vmor %vm1365, %vm1366
    %v1368 = vsel %vm1367, %v1360, %v1364
    %v1369 = vand.u32 2147483647, %v1356
    %vm1370 = vcmp.eq.f32.partialorder %v1369, 8.507059e+37
    %v1371 = vand.u32 %v1356, 2147483648
    %v1372 = vor.u32 1.1754944e-38, %v1371
    %v1373 = vsel %vm1370, %v1372, %v1368
    %v1374 = vmul.f32 %v1284, %v1373
    %v1375 = vrcp.pop %v1357
    %v1376 = vmul.f32 %v1357, %v1375
    %v1377 = vsub.f32 1.0, %v1376
    %v1378 = vmul.f32 %v1375, %v1377
    %v1379 = vadd.f32 %v1375, %v1378
    %vm1380 = vweird.f32 %v1357
    %vm1381 = vweird.f32 %v1375
    %vm1382 = vmor %vm1380, %vm1381
    %v1383 = vsel %vm1382, %v1375, %v1379
    %v1384 = vand.u32 2147483647, %v1357
    %vm1385 = vcmp.eq.f32.partialorder %v1384, 8.507059e+37
    %v1386 = vand.u32 %v1357, 2147483648
    %v1387 = vor.u32 1.1754944e-38, %v1386
    %v1388 = vsel %vm1385, %v1387, %v1383
    %v1389 = vmul.f32 %v1285, %v1388
    %v1390 = vrcp.pop %v1358
    %v1391 = vmul.f32 %v1358, %v1390
    %v1392 = vsub.f32 1.0, %v1391
    %v1393 = vmul.f32 %v1390, %v1392
    %v1394 = vadd.f32 %v1390, %v1393
    %vm1395 = vweird.f32 %v1358
    %vm1396 = vweird.f32 %v1390
    %vm1397 = vmor %vm1395, %vm1396
    %v1398 = vsel %vm1397, %v1390, %v1394
    %v1399 = vand.u32 2147483647, %v1358
    %vm1400 = vcmp.eq.f32.partialorder %v1399, 8.507059e+37
    %v1401 = vand.u32 %v1358, 2147483648
    %v1402 = vor.u32 1.1754944e-38, %v1401
    %v1403 = vsel %vm1400, %v1402, %v1398
    %v1404 = vmul.f32 %v1286, %v1403
    %v1405 = vrcp.pop %v1359
    %v1406 = vmul.f32 %v1359, %v1405
    %v1407 = vsub.f32 1.0, %v1406
    %v1408 = vmul.f32 %v1405, %v1407
    %v1409 = vadd.f32 %v1405, %v1408
    %vm1410 = vweird.f32 %v1359
    %vm1411 = vweird.f32 %v1405
    %vm1412 = vmor %vm1410, %vm1411
    %v1413 = vsel %vm1412, %v1405, %v1409
    %v1414 = vand.u32 2147483647, %v1359
    %vm1415 = vcmp.eq.f32.partialorder %v1414, 8.507059e+37
    %v1416 = vand.u32 %v1359, 2147483648
    %v1417 = vor.u32 1.1754944e-38, %v1416
    %v1418 = vsel %vm1415, %v1417, %v1413
    %v1419 = vmul.f32 %v1287, %v1418
    %v1420 = vperm.slane %v1266, 0
    %v1421 = vmul.f32 %v1420, %v1374
    %v1422 = vmul.f32 %v1420, %v1389
    %v1423 = vmul.f32 %v1420, %v1404
    %v1424 = vmul.f32 %v1420, %v1419
    %v1425 = vperm.slane %v1267, 0
    %v1426 = vadd.f32 %v1421, %v1425
    %v1427 = vadd.f32 %v1422, %v1425
    %v1428 = vadd.f32 %v1423, %v1425
    %v1429 = vadd.f32 %v1424, %v1425
    %v1430 = vld [vmem:[%s2 + $0x60] sm:$0xff]
    %v1431 = vld [vmem:[%s2 + $0x68] sm:$0xff]
    %v1432 = vld [vmem:[%s2 + $0x70] sm:$0xff]
    %v1433 = vld [vmem:[%s2 + $0x78] sm:$0xff]
    %v1434 = vld [vmem:[%s2 + $0x80] sm:$0x1]
    %v1435 = vld [vmem:[%s2 + $0x88] sm:$0xff]
    %v1436 = vld [vmem:[%s2 + $0x90] sm:$0xff]
    %v1437 = vld [vmem:[%s2 + $0x98] sm:$0xff]
    %v1438 = vld [vmem:[%s2 + $0xa0] sm:$0xff]
    %v1439 = vld [vmem:[%s2 + $0xa8] sm:$0xff]
    %v1440 = vld [vmem:[%s2 + $0xb0] sm:$0xff]
    %v1441 = vld [vmem:[%s2 + $0xb8] sm:$0xff]
    %v1442 = vld [vmem:[%s2 + $0xc0] sm:$0xff]
    %v1443 = vld [vmem:[%s2 + $0xc8] sm:$0x1]
    %v1444 = vperm.slane %v1434, 0
    %v1446 = vsel %vm21, %v1426, 0
    %v1449 = vsel %vm21, %v1427, 0
    %v1452 = vsel %vm21, %v1428, 0
    %v1455 = vsel %vm21, %v1429, 0
    %1457 = vmatpush.msra.mxu0 0.0
    %1458 = vmatpush.msra.mxu0 0.0
    %1459 = vmatpush.msra.mxu0 0.0
    %1460 = vmatpush.msra.mxu0 0.0
    %1461 = vmatpush.msra.mxu0 0.0
    %1462 = vmatpush.msra.mxu0 0.0
    %1463 = vmatpush.msra.mxu0 0.0
    %1464 = vmatpush.msra.mxu0 0.0
    %1465 = vmatpush.msra.mxu0 0.0
    %1466 = vmatpush.msra.mxu0 0.0
    %1467 = vmatpush.msra.mxu0 0.0
    %1468 = vmatpush.msra.mxu0 0.0
    %1469 = vmatpush.msra.mxu0 %v1433
    %1470 = vmatpush.msra.mxu0 %v1432
    %1471 = vmatpush.msra.mxu0 %v1431
    %1472 = vmatpush.msra.mxu0 %v1430
    %1473 = vmatmul.f32.gmra.mxu0 %v1446
    %v1474 = vpop.f32.mrf.mxu0
    %v1475 = vadd.f32 %v1444, %v1474
    %1476 = vmatmul.f32.gmra.mxu0 %v1449
    %v1477 = vpop.f32.mrf.mxu0
    %v1478 = vadd.f32 %v1444, %v1477
    %1479 = vmatmul.f32.gmra.mxu0 %v1452
    %v1480 = vpop.f32.mrf.mxu0
    %v1481 = vadd.f32 %v1444, %v1480
    %1482 = vmatmul.f32.gmra.mxu0 %v1455
    %v1483 = vpop.f32.mrf.mxu0
    %v1484 = vadd.f32 %v1444, %v1483
    %1485 = vdwg.mxu0
    %v1486 = vmax.f32 %v1475, 0.0
    %v1487 = vmax.f32 %v1478, 0.0
    %v1488 = vmax.f32 %v1481, 0.0
    %v1489 = vmax.f32 %v1484, 0.0
    %v1490 = vperm.slane %v1443, 0
    %vm1491 = vcmask 523264
    %v1493 = vsel %vm1491, %v1486, 0
    %v1496 = vsel %vm1491, %v1487, 0
    %v1499 = vsel %vm1491, %v1488, 0
    %v1502 = vsel %vm1491, %v1489, 0
    %1504 = vmatpush.msra.mxu0 0.0
    %1505 = vmatpush.msra.mxu0 0.0
    %1506 = vmatpush.msra.mxu0 0.0
    %1507 = vmatpush.msra.mxu0 0.0
    %1508 = vmatpush.msra.mxu0 0.0
    %1509 = vmatpush.msra.mxu0 0.0
    %1510 = vmatpush.msra.mxu0 0.0
    %1511 = vmatpush.msra.mxu0 0.0
    %1512 = vmatpush.msra.mxu0 %v1442
    %1513 = vmatpush.msra.mxu0 %v1441
    %1514 = vmatpush.msra.mxu0 %v1440
    %1515 = vmatpush.msra.mxu0 %v1439
    %1516 = vmatpush.msra.mxu0 %v1438
    %1517 = vmatpush.msra.mxu0 %v1437
    %1518 = vmatpush.msra.mxu0 %v1436
    %1519 = vmatpush.msra.mxu0 %v1435
    %1520 = vmatmul.f32.gmra.mxu0 %v1493
    %v1521 = vpop.f32.mrf.mxu0
    %v1522 = vadd.f32 %v1490, %v1521
    %1523 = vmatmul.f32.gmra.mxu0 %v1496
    %v1524 = vpop.f32.mrf.mxu0
    %v1525 = vadd.f32 %v1490, %v1524
    %1526 = vmatmul.f32.gmra.mxu0 %v1499
    %v1527 = vpop.f32.mrf.mxu0
    %v1528 = vadd.f32 %v1490, %v1527
    %1529 = vmatmul.f32.gmra.mxu0 %v1502
    %v1530 = vpop.f32.mrf.mxu0
    %v1531 = vadd.f32 %v1490, %v1530
    %1532 = vdwg.mxu0
    %v1533 = vadd.f32 %v1262, %v1522
    %v1534 = vadd.f32 %v1263, %v1525
    %v1535 = vadd.f32 %v1264, %v1528
    %v1536 = vadd.f32 %v1265, %v1531
    %v1537 = vld [vmem:[%s2 + $0xd0] sm:$0x1]
    %v1538 = vld [vmem:[%s2 + $0xd8] sm:$0x1]
    %v1539 = vsel %vm21, %v1533, 0.0
    %1540 = vadd.xlane.f32.xlu0 %v1539
    %v1541 = vpop.xlane.xlu0 %1540
    %v1542 = vsel %vm21, %v1534, 0.0
    %1543 = vadd.xlane.f32.xlu0 %v1542
    %v1544 = vpop.xlane.xlu0 %1543
    %v1545 = vsel %vm21, %v1535, 0.0
    %1546 = vadd.xlane.f32.xlu0 %v1545
    %v1547 = vpop.xlane.xlu0 %1546
    %v1548 = vsel %vm21, %v1536, 0.0
    %1549 = vadd.xlane.f32.xlu0 %v1548
    %v1550 = vpop.xlane.xlu0 %1549
    %v1551 = vmul.f32 %v1541, %v40
    %v1552 = vmul.f32 %v1544, %v40
    %v1553 = vmul.f32 %v1547, %v40
    %v1554 = vmul.f32 %v1550, %v40
    %v1555 = vsub.f32 %v1533, %v1551
    %v1556 = vsub.f32 %v1534, %v1552
    %v1557 = vsub.f32 %v1535, %v1553
    %v1558 = vsub.f32 %v1536, %v1554
    %v1559 = vmul.f32 %v1555, %v1555
    %v1560 = vmul.f32 %v1556, %v1556
    %v1561 = vmul.f32 %v1557, %v1557
    %v1562 = vmul.f32 %v1558, %v1558
    %v1563 = vsel %vm21, %v1559, 0.0
    %1564 = vadd.xlane.f32.xlu0 %v1563
    %v1565 = vpop.xlane.xlu0 %1564
    %v1566 = vsel %vm21, %v1560, 0.0
    %1567 = vadd.xlane.f32.xlu0 %v1566
    %v1568 = vpop.xlane.xlu0 %1567
    %v1569 = vsel %vm21, %v1561, 0.0
    %1570 = vadd.xlane.f32.xlu0 %v1569
    %v1571 = vpop.xlane.xlu0 %1570
    %v1572 = vsel %vm21, %v1562, 0.0
    %1573 = vadd.xlane.f32.xlu0 %v1572
    %v1574 = vpop.xlane.xlu0 %1573
    %v1575 = vmul.f32 %v1565, 0.032258064
    %v1576 = vmul.f32 %v1568, 0.032258064
    %v1577 = vmul.f32 %v1571, 0.032258064
    %v1578 = vmul.f32 %v1574, 0.032258064
    %v1579 = vrsqrt.pop %v1575
    %v1580 = vmul.f32 %v1579, %v1575
    %v1581 = vmul.f32 %v1580, %v1579
    %v1582 = vmul.f32 0.5, %v1581
    %v1583 = vsub.f32 1.5, %v1582
    %v1584 = vmul.f32 %v1579, %v1583
    %v1585 = vmul.f32 %v1575, %v1584
    %vm1586 = vcmp.eq.f32.partialorder %v1575, inf
    %v1587 = vsel %vm1586, %v1575, %v1585
    %vm1588 = vcmp.eq.f32.partialorder %v1575, 0.0
    %v1589 = vand.u32 %v1575, 2147483648
    %v1590 = vsel %vm1588, %v1589, %v1587
    %v1591 = vrsqrt.pop %v1576
    %v1592 = vmul.f32 %v1591, %v1576
    %v1593 = vmul.f32 %v1592, %v1591
    %v1594 = vmul.f32 0.5, %v1593
    %v1595 = vsub.f32 1.5, %v1594
    %v1596 = vmul.f32 %v1591, %v1595
    %v1597 = vmul.f32 %v1576, %v1596
    %vm1598 = vcmp.eq.f32.partialorder %v1576, inf
    %v1599 = vsel %vm1598, %v1576, %v1597
    %vm1600 = vcmp.eq.f32.partialorder %v1576, 0.0
    %v1601 = vand.u32 %v1576, 2147483648
    %v1602 = vsel %vm1600, %v1601, %v1599
    %v1603 = vrsqrt.pop %v1577
    %v1604 = vmul.f32 %v1603, %v1577
    %v1605 = vmul.f32 %v1604, %v1603
    %v1606 = vmul.f32 0.5, %v1605
    %v1607 = vsub.f32 1.5, %v1606
    %v1608 = vmul.f32 %v1603, %v1607
    %v1609 = vmul.f32 %v1577, %v1608
    %vm1610 = vcmp.eq.f32.partialorder %v1577, inf
    %v1611 = vsel %vm1610, %v1577, %v1609
    %vm1612 = vcmp.eq.f32.partialorder %v1577, 0.0
    %v1613 = vand.u32 %v1577, 2147483648
    %v1614 = vsel %vm1612, %v1613, %v1611
    %v1615 = vrsqrt.pop %v1578
    %v1616 = vmul.f32 %v1615, %v1578
    %v1617 = vmul.f32 %v1616, %v1615
    %v1618 = vmul.f32 0.5, %v1617
    %v1619 = vsub.f32 1.5, %v1618
    %v1620 = vmul.f32 %v1615, %v1619
    %v1621 = vmul.f32 %v1578, %v1620
    %vm1622 = vcmp.eq.f32.partialorder %v1578, inf
    %v1623 = vsel %vm1622, %v1578, %v1621
    %vm1624 = vcmp.eq.f32.partialorder %v1578, 0.0
    %v1625 = vand.u32 %v1578, 2147483648
    %v1626 = vsel %vm1624, %v1625, %v1623
    %v1627 = vadd.f32 %v1590, 1e-05
    %v1628 = vadd.f32 %v1602, 1e-05
    %v1629 = vadd.f32 %v1614, 1e-05
    %v1630 = vadd.f32 %v1626, 1e-05
    %v1631 = vrcp.pop %v1627
    %v1632 = vmul.f32 %v1627, %v1631
    %v1633 = vsub.f32 1.0, %v1632
    %v1634 = vmul.f32 %v1631, %v1633
    %v1635 = vadd.f32 %v1631, %v1634
    %vm1636 = vweird.f32 %v1627
    %vm1637 = vweird.f32 %v1631
    %vm1638 = vmor %vm1636, %vm1637
    %v1639 = vsel %vm1638, %v1631, %v1635
    %v1640 = vand.u32 2147483647, %v1627
    %vm1641 = vcmp.eq.f32.partialorder %v1640, 8.507059e+37
    %v1642 = vand.u32 %v1627, 2147483648
    %v1643 = vor.u32 1.1754944e-38, %v1642
    %v1644 = vsel %vm1641, %v1643, %v1639
    %v1645 = vmul.f32 %v1555, %v1644
    %v1646 = vrcp.pop %v1628
    %v1647 = vmul.f32 %v1628, %v1646
    %v1648 = vsub.f32 1.0, %v1647
    %v1649 = vmul.f32 %v1646, %v1648
    %v1650 = vadd.f32 %v1646, %v1649
    %vm1651 = vweird.f32 %v1628
    %vm1652 = vweird.f32 %v1646
    %vm1653 = vmor %vm1651, %vm1652
    %v1654 = vsel %vm1653, %v1646, %v1650
    %v1655 = vand.u32 2147483647, %v1628
    %vm1656 = vcmp.eq.f32.partialorder %v1655, 8.507059e+37
    %v1657 = vand.u32 %v1628, 2147483648
    %v1658 = vor.u32 1.1754944e-38, %v1657
    %v1659 = vsel %vm1656, %v1658, %v1654
    %v1660 = vmul.f32 %v1556, %v1659
    %v1661 = vrcp.pop %v1629
    %v1662 = vmul.f32 %v1629, %v1661
    %v1663 = vsub.f32 1.0, %v1662
    %v1664 = vmul.f32 %v1661, %v1663
    %v1665 = vadd.f32 %v1661, %v1664
    %vm1666 = vweird.f32 %v1629
    %vm1667 = vweird.f32 %v1661
    %vm1668 = vmor %vm1666, %vm1667
    %v1669 = vsel %vm1668, %v1661, %v1665
    %v1670 = vand.u32 2147483647, %v1629
    %vm1671 = vcmp.eq.f32.partialorder %v1670, 8.507059e+37
    %v1672 = vand.u32 %v1629, 2147483648
    %v1673 = vor.u32 1.1754944e-38, %v1672
    %v1674 = vsel %vm1671, %v1673, %v1669
    %v1675 = vmul.f32 %v1557, %v1674
    %v1676 = vrcp.pop %v1630
    %v1677 = vmul.f32 %v1630, %v1676
    %v1678 = vsub.f32 1.0, %v1677
    %v1679 = vmul.f32 %v1676, %v1678
    %v1680 = vadd.f32 %v1676, %v1679
    %vm1681 = vweird.f32 %v1630
    %vm1682 = vweird.f32 %v1676
    %vm1683 = vmor %vm1681, %vm1682
    %v1684 = vsel %vm1683, %v1676, %v1680
    %v1685 = vand.u32 2147483647, %v1630
    %vm1686 = vcmp.eq.f32.partialorder %v1685, 8.507059e+37
    %v1687 = vand.u32 %v1630, 2147483648
    %v1688 = vor.u32 1.1754944e-38, %v1687
    %v1689 = vsel %vm1686, %v1688, %v1684
    %v1690 = vmul.f32 %v1558, %v1689
    %v1691 = vperm.slane %v1537, 0
    %v1692 = vmul.f32 %v1691, %v1645
    %v1693 = vmul.f32 %v1691, %v1660
    %v1694 = vmul.f32 %v1691, %v1675
    %v1695 = vmul.f32 %v1691, %v1690
    %v1696 = vperm.slane %v1538, 0
    %v1697 = vadd.f32 %v1692, %v1696
    %v1698 = vadd.f32 %v1693, %v1696
    %v1699 = vadd.f32 %v1694, %v1696
    %v1700 = vadd.f32 %v1695, %v1696
    %v1701 = vld [vmem:[%s2 + $0xe0] sm:$0xff]
    %v1702 = vld [vmem:[%s2 + $0xe8] sm:$0xff]
    %v1703 = vld [vmem:[%s2 + $0xf0] sm:$0xff]
    %v1704 = vld [vmem:[%s2 + $0xf8] sm:$0xff]
    %v1705 = vld [vmem:[%s2 + $0x100] sm:$0xff]
    %v1706 = vld [vmem:[%s2 + $0x108] sm:$0xff]
    %v1707 = vld [vmem:[%s2 + $0x110] sm:$0xff]
    %v1708 = vld [vmem:[%s2 + $0x118] sm:$0xff]
    %v1710 = vsel %vm21, %v1697, 0
    %v1713 = vsel %vm21, %v1698, 0
    %v1716 = vsel %vm21, %v1699, 0
    %v1719 = vsel %vm21, %v1700, 0
    %1721 = vmatpush.msra.mxu0 0.0
    %1722 = vmatpush.msra.mxu0 0.0
    %1723 = vmatpush.msra.mxu0 0.0
    %1724 = vmatpush.msra.mxu0 0.0
    %1725 = vmatpush.msra.mxu0 0.0
    %1726 = vmatpush.msra.mxu0 0.0
    %1727 = vmatpush.msra.mxu0 0.0
    %1728 = vmatpush.msra.mxu0 0.0
    %1729 = vmatpush.msra.mxu0 0.0
    %1730 = vmatpush.msra.mxu0 0.0
    %1731 = vmatpush.msra.mxu0 0.0
    %1732 = vmatpush.msra.mxu0 0.0
    %1733 = vmatpush.msra.mxu0 %v1704
    %1734 = vmatpush.msra.mxu0 %v1703
    %1735 = vmatpush.msra.mxu0 %v1702
    %1736 = vmatpush.msra.mxu0 %v1701
    %1737 = vmatmul.f32.gmra.mxu0 %v1710
    %v1738 = vpop.f32.mrf.mxu0
    %v1739 = vadd.f32 0.0, %v1738
    %1740 = vmatmul.f32.gmra.mxu0 %v1713
    %v1741 = vpop.f32.mrf.mxu0
    %v1742 = vadd.f32 0.0, %v1741
    %1743 = vmatmul.f32.gmra.mxu0 %v1716
    %v1744 = vpop.f32.mrf.mxu0
    %v1745 = vadd.f32 0.0, %v1744
    %1746 = vmatmul.f32.gmra.mxu0 %v1719
    %v1747 = vpop.f32.mrf.mxu0
    %v1748 = vadd.f32 0.0, %v1747
    %1749 = vdwg.mxu0
    %1752 = vrot.lane.b32.xlu0 %v1739, 96
    %v1753 = vpop.permute.xlu0 %1752
    %1754 = vrot.lane.b32.xlu0 %v1742, 96
    %v1755 = vpop.permute.xlu0 %1754
    %v1756 = vsel %vm246, %v1739, 0
    %v1758 = vsel %vm246, %v1742, 0
    %v1760 = vsel %vm246, %v1753, 0
    %v1762 = vsel %vm246, %v1755, 0
    %1764 = vmatpush.xpose.msra.mxu0 0.0
    %1765 = vmatpush.xpose.msra.mxu0 0.0
    %1766 = vmatpush.xpose.msra.mxu0 0.0
    %1767 = vmatpush.xpose.msra.mxu0 0.0
    %1768 = vmatpush.xpose.msra.mxu0 0.0
    %1769 = vmatpush.xpose.msra.mxu0 0.0
    %1770 = vmatpush.xpose.msra.mxu0 0.0
    %1771 = vmatpush.xpose.msra.mxu0 0.0
    %1772 = vmatpush.xpose.msra.mxu0 0.0
    %1773 = vmatpush.xpose.msra.mxu0 0.0
    %1774 = vmatpush.xpose.msra.mxu0 0.0
    %1775 = vmatpush.xpose.msra.mxu0 0.0
    %1776 = vmatpush.xpose.msra.mxu0 0.0
    %1777 = vmatpush.xpose.msra.mxu0 0.0
    %1778 = vmatpush.xpose.msra.mxu0 %v1762
    %1779 = vmatpush.xpose.msra.mxu0 %v1760
    %1780 = vmatmul.f32.gmra.mxu0 %v1756
    %v1781 = vpop.f32.mrf.mxu0
    %v1782 = vadd.f32 0.0, %v1781
    %1783 = vmatmul.f32.gmra.mxu0 %v1758
    %v1784 = vpop.f32.mrf.mxu0
    %v1785 = vadd.f32 0.0, %v1784
    %1786 = vdwg.mxu0
    %v1787 = vmul.f32 %v1782, 0.35355338
    %v1788 = vmul.f32 %v1785, 0.35355338
    %v1789 = vsel %vm280, %v1787, -inf
    %1790 = vmax.xlane.f32.xlu0 %v1789
    %v1791 = vpop.xlane.xlu0 %1790
    %v1792 = vsel %vm280, %v1788, -inf
    %1793 = vmax.xlane.f32.xlu0 %v1792
    %v1794 = vpop.xlane.xlu0 %1793
    %v1795 = vsub.f32 %v1787, %v1791
    %v1796 = vsub.f32 %v1788, %v1794
    %v1797 = vmul.f32 %v1795, 1.442695
    %v1798 = vpow.pop %v1797
    %v1799 = vmul.f32 %v1796, 1.442695
    %v1800 = vpow.pop %v1799
    %v1801 = vsel %vm280, %v1798, 0.0
    %1802 = vadd.xlane.f32.xlu0 %v1801
    %v1803 = vpop.xlane.xlu0 %1802
    %v1804 = vsel %vm280, %v1800, 0.0
    %1805 = vadd.xlane.f32.xlu0 %v1804
    %v1806 = vpop.xlane.xlu0 %1805
    %v1807 = vrcp.pop %v1803
    %v1808 = vrcp.pop %v1806
    %v1809 = vmul.f32 %v1798, %v1807
    %v1810 = vmul.f32 %v1800, %v1808
    %1811 = vrot.lane.b32.xlu0 %v1739, 64
    %v1812 = vpop.permute.xlu0 %1811
    %1813 = vrot.lane.b32.xlu0 %v1742, 64
    %v1814 = vpop.permute.xlu0 %1813
    %v1818 = vsel %vm280, %v1809, 0
    %v1821 = vsel %vm280, %v1810, 0
    %1823 = vmatpush.msra.mxu0 0.0
    %1824 = vmatpush.msra.mxu0 0.0
    %1825 = vmatpush.msra.mxu0 0.0
    %1826 = vmatpush.msra.mxu0 0.0
    %1827 = vmatpush.msra.mxu0 0.0
    %1828 = vmatpush.msra.mxu0 0.0
    %1829 = vmatpush.msra.mxu0 0.0
    %1830 = vmatpush.msra.mxu0 0.0
    %1831 = vmatpush.msra.mxu0 0.0
    %1832 = vmatpush.msra.mxu0 0.0
    %1833 = vmatpush.msra.mxu0 0.0
    %1834 = vmatpush.msra.mxu0 0.0
    %1835 = vmatpush.msra.mxu0 0.0
    %1836 = vmatpush.msra.mxu0 0.0
    %1837 = vmatpush.msra.mxu0 %v1814
    %1838 = vmatpush.msra.mxu0 %v1812
    %1839 = vmatmul.f32.gmra.mxu0 %v1818
    %v1840 = vpop.f32.mrf.mxu0
    %v1841 = vadd.f32 0.0, %v1840
    %1842 = vmatmul.f32.gmra.mxu0 %v1821
    %v1843 = vpop.f32.mrf.mxu0
    %v1844 = vadd.f32 0.0, %v1843
    %1845 = vdwg.mxu0
    %1848 = vrot.lane.b32.xlu0 %v1745, 96
    %v1849 = vpop.permute.xlu0 %1848
    %1850 = vrot.lane.b32.xlu0 %v1748, 96
    %v1851 = vpop.permute.xlu0 %1850
    %v1852 = vsel %vm246, %v1745, 0
    %v1854 = vsel %vm246, %v1748, 0
    %v1856 = vsel %vm246, %v1849, 0
    %v1858 = vsel %vm246, %v1851, 0
    %1860 = vmatpush.xpose.msra.mxu0 0.0
    %1861 = vmatpush.xpose.msra.mxu0 0.0
    %1862 = vmatpush.xpose.msra.mxu0 0.0
    %1863 = vmatpush.xpose.msra.mxu0 0.0
    %1864 = vmatpush.xpose.msra.mxu0 0.0
    %1865 = vmatpush.xpose.msra.mxu0 0.0
    %1866 = vmatpush.xpose.msra.mxu0 0.0
    %1867 = vmatpush.xpose.msra.mxu0 0.0
    %1868 = vmatpush.xpose.msra.mxu0 0.0
    %1869 = vmatpush.xpose.msra.mxu0 0.0
    %1870 = vmatpush.xpose.msra.mxu0 0.0
    %1871 = vmatpush.xpose.msra.mxu0 0.0
    %1872 = vmatpush.xpose.msra.mxu0 0.0
    %1873 = vmatpush.xpose.msra.mxu0 0.0
    %1874 = vmatpush.xpose.msra.mxu0 %v1858
    %1875 = vmatpush.xpose.msra.mxu0 %v1856
    %1876 = vmatmul.f32.gmra.mxu0 %v1852
    %v1877 = vpop.f32.mrf.mxu0
    %v1878 = vadd.f32 0.0, %v1877
    %1879 = vmatmul.f32.gmra.mxu0 %v1854
    %v1880 = vpop.f32.mrf.mxu0
    %v1881 = vadd.f32 0.0, %v1880
    %1882 = vdwg.mxu0
    %v1883 = vmul.f32 %v1878, 0.35355338
    %v1884 = vmul.f32 %v1881, 0.35355338
    %v1885 = vsel %vm280, %v1883, -inf
    %1886 = vmax.xlane.f32.xlu0 %v1885
    %v1887 = vpop.xlane.xlu0 %1886
    %v1888 = vsel %vm280, %v1884, -inf
    %1889 = vmax.xlane.f32.xlu0 %v1888
    %v1890 = vpop.xlane.xlu0 %1889
    %v1891 = vsub.f32 %v1883, %v1887
    %v1892 = vsub.f32 %v1884, %v1890
    %v1893 = vmul.f32 %v1891, 1.442695
    %v1894 = vpow.pop %v1893
    %v1895 = vmul.f32 %v1892, 1.442695
    %v1896 = vpow.pop %v1895
    %v1897 = vsel %vm280, %v1894, 0.0
    %1898 = vadd.xlane.f32.xlu0 %v1897
    %v1899 = vpop.xlane.xlu0 %1898
    %v1900 = vsel %vm280, %v1896, 0.0
    %1901 = vadd.xlane.f32.xlu0 %v1900
    %v1902 = vpop.xlane.xlu0 %1901
    %v1903 = vrcp.pop %v1899
    %v1904 = vrcp.pop %v1902
    %v1905 = vmul.f32 %v1894, %v1903
    %v1906 = vmul.f32 %v1896, %v1904
    %1907 = vrot.lane.b32.xlu0 %v1745, 64
    %v1908 = vpop.permute.xlu0 %1907
    %1909 = vrot.lane.b32.xlu0 %v1748, 64
    %v1910 = vpop.permute.xlu0 %1909
    %v1914 = vsel %vm280, %v1905, 0
    %v1917 = vsel %vm280, %v1906, 0
    %1919 = vmatpush.msra.mxu0 0.0
    %1920 = vmatpush.msra.mxu0 0.0
    %1921 = vmatpush.msra.mxu0 0.0
    %1922 = vmatpush.msra.mxu0 0.0
    %1923 = vmatpush.msra.mxu0 0.0
    %1924 = vmatpush.msra.mxu0 0.0
    %1925 = vmatpush.msra.mxu0 0.0
    %1926 = vmatpush.msra.mxu0 0.0
    %1927 = vmatpush.msra.mxu0 0.0
    %1928 = vmatpush.msra.mxu0 0.0
    %1929 = vmatpush.msra.mxu0 0.0
    %1930 = vmatpush.msra.mxu0 0.0
    %1931 = vmatpush.msra.mxu0 0.0
    %1932 = vmatpush.msra.mxu0 0.0
    %1933 = vmatpush.msra.mxu0 %v1910
    %1934 = vmatpush.msra.mxu0 %v1908
    %1935 = vmatmul.f32.gmra.mxu0 %v1914
    %v1936 = vpop.f32.mrf.mxu0
    %v1937 = vadd.f32 0.0, %v1936
    %1938 = vmatmul.f32.gmra.mxu0 %v1917
    %v1939 = vpop.f32.mrf.mxu0
    %v1940 = vadd.f32 0.0, %v1939
    %1941 = vdwg.mxu0
    %1942 = vrot.lane.b32.xlu0 %v1739, 120
    %v1943 = vpop.permute.xlu0 %1942
    %1944 = vrot.lane.b32.xlu0 %v1742, 120
    %v1945 = vpop.permute.xlu0 %1944
    %1946 = vrot.lane.b32.xlu0 %v1739, 88
    %v1947 = vpop.permute.xlu0 %1946
    %1948 = vrot.lane.b32.xlu0 %v1742, 88
    %v1949 = vpop.permute.xlu0 %1948
    %v1950 = vsel %vm246, %v1943, 0
    %v1952 = vsel %vm246, %v1945, 0
    %v1954 = vsel %vm246, %v1947, 0
    %v1956 = vsel %vm246, %v1949, 0
    %1958 = vmatpush.xpose.msra.mxu0 0.0
    %1959 = vmatpush.xpose.msra.mxu0 0.0
    %1960 = vmatpush.xpose.msra.mxu0 0.0
    %1961 = vmatpush.xpose.msra.mxu0 0.0
    %1962 = vmatpush.xpose.msra.mxu0 0.0
    %1963 = vmatpush.xpose.msra.mxu0 0.0
    %1964 = vmatpush.xpose.msra.mxu0 0.0
    %1965 = vmatpush.xpose.msra.mxu0 0.0
    %1966 = vmatpush.xpose.msra.mxu0 0.0
    %1967 = vmatpush.xpose.msra.mxu0 0.0
    %1968 = vmatpush.xpose.msra.mxu0 0.0
    %1969 = vmatpush.xpose.msra.mxu0 0.0
    %1970 = vmatpush.xpose.msra.mxu0 0.0
    %1971 = vmatpush.xpose.msra.mxu0 0.0
    %1972 = vmatpush.xpose.msra.mxu0 %v1956
    %1973 = vmatpush.xpose.msra.mxu0 %v1954
    %1974 = vmatmul.f32.gmra.mxu0 %v1950
    %v1975 = vpop.f32.mrf.mxu0
    %v1976 = vadd.f32 0.0, %v1975
    %1977 = vmatmul.f32.gmra.mxu0 %v1952
    %v1978 = vpop.f32.mrf.mxu0
    %v1979 = vadd.f32 0.0, %v1978
    %1980 = vdwg.mxu0
    %v1981 = vmul.f32 %v1976, 0.35355338
    %v1982 = vmul.f32 %v1979, 0.35355338
    %v1983 = vsel %vm280, %v1981, -inf
    %1984 = vmax.xlane.f32.xlu0 %v1983
    %v1985 = vpop.xlane.xlu0 %1984
    %v1986 = vsel %vm280, %v1982, -inf
    %1987 = vmax.xlane.f32.xlu0 %v1986
    %v1988 = vpop.xlane.xlu0 %1987
    %v1989 = vsub.f32 %v1981, %v1985
    %v1990 = vsub.f32 %v1982, %v1988
    %v1991 = vmul.f32 %v1989, 1.442695
    %v1992 = vpow.pop %v1991
    %v1993 = vmul.f32 %v1990, 1.442695
    %v1994 = vpow.pop %v1993
    %v1995 = vsel %vm280, %v1992, 0.0
    %1996 = vadd.xlane.f32.xlu0 %v1995
    %v1997 = vpop.xlane.xlu0 %1996
    %v1998 = vsel %vm280, %v1994, 0.0
    %1999 = vadd.xlane.f32.xlu0 %v1998
    %v2000 = vpop.xlane.xlu0 %1999
    %v2001 = vrcp.pop %v1997
    %v2002 = vrcp.pop %v2000
    %v2003 = vmul.f32 %v1992, %v2001
    %v2004 = vmul.f32 %v1994, %v2002
    %2005 = vrot.lane.b32.xlu0 %v1739, 56
    %v2006 = vpop.permute.xlu0 %2005
    %2007 = vrot.lane.b32.xlu0 %v1742, 56
    %v2008 = vpop.permute.xlu0 %2007
    %v2012 = vsel %vm280, %v2003, 0
    %v2015 = vsel %vm280, %v2004, 0
    %2017 = vmatpush.msra.mxu0 0.0
    %2018 = vmatpush.msra.mxu0 0.0
    %2019 = vmatpush.msra.mxu0 0.0
    %2020 = vmatpush.msra.mxu0 0.0
    %2021 = vmatpush.msra.mxu0 0.0
    %2022 = vmatpush.msra.mxu0 0.0
    %2023 = vmatpush.msra.mxu0 0.0
    %2024 = vmatpush.msra.mxu0 0.0
    %2025 = vmatpush.msra.mxu0 0.0
    %2026 = vmatpush.msra.mxu0 0.0
    %2027 = vmatpush.msra.mxu0 0.0
    %2028 = vmatpush.msra.mxu0 0.0
    %2029 = vmatpush.msra.mxu0 0.0
    %2030 = vmatpush.msra.mxu0 0.0
    %2031 = vmatpush.msra.mxu0 %v2008
    %2032 = vmatpush.msra.mxu0 %v2006
    %2033 = vmatmul.f32.gmra.mxu0 %v2012
    %v2034 = vpop.f32.mrf.mxu0
    %v2035 = vadd.f32 0.0, %v2034
    %2036 = vmatmul.f32.gmra.mxu0 %v2015
    %v2037 = vpop.f32.mrf.mxu0
    %v2038 = vadd.f32 0.0, %v2037
    %2039 = vdwg.mxu0
    %v2041 = vsel %vm246, %v2035, 0
    %v2044 = vsel %vm246, %v2038, 0
    %2046 = vmatpush.msra.mxu0 0.0
    %2047 = vmatpush.msra.mxu0 0.0
    %2048 = vmatpush.msra.mxu0 0.0
    %2049 = vmatpush.msra.mxu0 0.0
    %2050 = vmatpush.msra.mxu0 0.0
    %2051 = vmatpush.msra.mxu0 0.0
    %2052 = vmatpush.msra.mxu0 0.0
    %2053 = vmatpush.msra.mxu0 0.0
    %2054 = vmatpush.msra.mxu0 0.0
    %2055 = vmatpush.msra.mxu0 0.0
    %2056 = vmatpush.msra.mxu0 0.0
    %2057 = vmatpush.msra.mxu0 0.0
    %2058 = vmatpush.msra.mxu0 0.0
    %2059 = vmatpush.msra.mxu0 0.0
    %2060 = vmatpush.msra.mxu0 0.0
    %2061 = vmatpush.msra.mxu0 %v1706
    %2062 = vmatmul.f32.gmra.mxu0 %v2041
    %v2063 = vpop.f32.mrf.mxu0
    %v2064 = vadd.f32 0.0, %v2063
    %2065 = vmatmul.f32.gmra.mxu0 %v2044
    %v2066 = vpop.f32.mrf.mxu0
    %v2067 = vadd.f32 0.0, %v2066
    %2068 = vdwg.mxu0
    %v2070 = vsel %vm246, %v1841, 0
    %v2073 = vsel %vm246, %v1844, 0
    %2075 = vmatpush.msra.mxu0 0.0
    %2076 = vmatpush.msra.mxu0 0.0
    %2077 = vmatpush.msra.mxu0 0.0
    %2078 = vmatpush.msra.mxu0 0.0
    %2079 = vmatpush.msra.mxu0 0.0
    %2080 = vmatpush.msra.mxu0 0.0
    %2081 = vmatpush.msra.mxu0 0.0
    %2082 = vmatpush.msra.mxu0 0.0
    %2083 = vmatpush.msra.mxu0 0.0
    %2084 = vmatpush.msra.mxu0 0.0
    %2085 = vmatpush.msra.mxu0 0.0
    %2086 = vmatpush.msra.mxu0 0.0
    %2087 = vmatpush.msra.mxu0 0.0
    %2088 = vmatpush.msra.mxu0 0.0
    %2089 = vmatpush.msra.mxu0 0.0
    %2090 = vmatpush.msra.mxu0 %v1705
    %2091 = vmatmul.f32.gmra.mxu0 %v2070
    %v2092 = vpop.f32.mrf.mxu0
    %v2093 = vadd.f32 %v2064, %v2092
    %2094 = vmatmul.f32.gmra.mxu0 %v2073
    %v2095 = vpop.f32.mrf.mxu0
    %v2096 = vadd.f32 %v2067, %v2095
    %2097 = vdwg.mxu0
    %2098 = vrot.lane.b32.xlu0 %v1745, 120
    %v2099 = vpop.permute.xlu0 %2098
    %2100 = vrot.lane.b32.xlu0 %v1748, 120
    %v2101 = vpop.permute.xlu0 %2100
    %2102 = vrot.lane.b32.xlu0 %v1745, 88
    %v2103 = vpop.permute.xlu0 %2102
    %2104 = vrot.lane.b32.xlu0 %v1748, 88
    %v2105 = vpop.permute.xlu0 %2104
    %v2106 = vsel %vm246, %v2099, 0
    %v2108 = vsel %vm246, %v2101, 0
    %v2110 = vsel %vm246, %v2103, 0
    %v2112 = vsel %vm246, %v2105, 0
    %2114 = vmatpush.xpose.msra.mxu0 0.0
    %2115 = vmatpush.xpose.msra.mxu0 0.0
    %2116 = vmatpush.xpose.msra.mxu0 0.0
    %2117 = vmatpush.xpose.msra.mxu0 0.0
    %2118 = vmatpush.xpose.msra.mxu0 0.0
    %2119 = vmatpush.xpose.msra.mxu0 0.0
    %2120 = vmatpush.xpose.msra.mxu0 0.0
    %2121 = vmatpush.xpose.msra.mxu0 0.0
    %2122 = vmatpush.xpose.msra.mxu0 0.0
    %2123 = vmatpush.xpose.msra.mxu0 0.0
    %2124 = vmatpush.xpose.msra.mxu0 0.0
    %2125 = vmatpush.xpose.msra.mxu0 0.0
    %2126 = vmatpush.xpose.msra.mxu0 0.0
    %2127 = vmatpush.xpose.msra.mxu0 0.0
    %2128 = vmatpush.xpose.msra.mxu0 %v2112
    %2129 = vmatpush.xpose.msra.mxu0 %v2110
    %2130 = vmatmul.f32.gmra.mxu0 %v2106
    %v2131 = vpop.f32.mrf.mxu0
    %v2132 = vadd.f32 0.0, %v2131
    %2133 = vmatmul.f32.gmra.mxu0 %v2108
    %v2134 = vpop.f32.mrf.mxu0
    %v2135 = vadd.f32 0.0, %v2134
    %2136 = vdwg.mxu0
    %v2137 = vmul.f32 %v2132, 0.35355338
    %v2138 = vmul.f32 %v2135, 0.35355338
    %v2139 = vsel %vm280, %v2137, -inf
    %2140 = vmax.xlane.f32.xlu0 %v2139
    %v2141 = vpop.xlane.xlu0 %2140
    %v2142 = vsel %vm280, %v2138, -inf
    %2143 = vmax.xlane.f32.xlu0 %v2142
    %v2144 = vpop.xlane.xlu0 %2143
    %v2145 = vsub.f32 %v2137, %v2141
    %v2146 = vsub.f32 %v2138, %v2144
    %v2147 = vmul.f32 %v2145, 1.442695
    %v2148 = vpow.pop %v2147
    %v2149 = vmul.f32 %v2146, 1.442695
    %v2150 = vpow.pop %v2149
    %v2151 = vsel %vm280, %v2148, 0.0
    %2152 = vadd.xlane.f32.xlu0 %v2151
    %v2153 = vpop.xlane.xlu0 %2152
    %v2154 = vsel %vm280, %v2150, 0.0
    %2155 = vadd.xlane.f32.xlu0 %v2154
    %v2156 = vpop.xlane.xlu0 %2155
    %v2157 = vrcp.pop %v2153
    %v2158 = vrcp.pop %v2156
    %v2159 = vmul.f32 %v2148, %v2157
    %v2160 = vmul.f32 %v2150, %v2158
    %2161 = vrot.lane.b32.xlu0 %v1745, 56
    %v2162 = vpop.permute.xlu0 %2161
    %2163 = vrot.lane.b32.xlu0 %v1748, 56
    %v2164 = vpop.permute.xlu0 %2163
    %v2168 = vsel %vm280, %v2159, 0
    %v2171 = vsel %vm280, %v2160, 0
    %2173 = vmatpush.msra.mxu0 0.0
    %2174 = vmatpush.msra.mxu0 0.0
    %2175 = vmatpush.msra.mxu0 0.0
    %2176 = vmatpush.msra.mxu0 0.0
    %2177 = vmatpush.msra.mxu0 0.0
    %2178 = vmatpush.msra.mxu0 0.0
    %2179 = vmatpush.msra.mxu0 0.0
    %2180 = vmatpush.msra.mxu0 0.0
    %2181 = vmatpush.msra.mxu0 0.0
    %2182 = vmatpush.msra.mxu0 0.0
    %2183 = vmatpush.msra.mxu0 0.0
    %2184 = vmatpush.msra.mxu0 0.0
    %2185 = vmatpush.msra.mxu0 0.0
    %2186 = vmatpush.msra.mxu0 0.0
    %2187 = vmatpush.msra.mxu0 %v2164
    %2188 = vmatpush.msra.mxu0 %v2162
    %2189 = vmatmul.f32.gmra.mxu0 %v2168
    %v2190 = vpop.f32.mrf.mxu0
    %v2191 = vadd.f32 0.0, %v2190
    %2192 = vmatmul.f32.gmra.mxu0 %v2171
    %v2193 = vpop.f32.mrf.mxu0
    %v2194 = vadd.f32 0.0, %v2193
    %2195 = vdwg.mxu0
    %v2197 = vsel %vm246, %v2191, 0
    %v2200 = vsel %vm246, %v2194, 0
    %2202 = vmatpush.msra.mxu0 0.0
    %2203 = vmatpush.msra.mxu0 0.0
    %2204 = vmatpush.msra.mxu0 0.0
    %2205 = vmatpush.msra.mxu0 0.0
    %2206 = vmatpush.msra.mxu0 0.0
    %2207 = vmatpush.msra.mxu0 0.0
    %2208 = vmatpush.msra.mxu0 0.0
    %2209 = vmatpush.msra.mxu0 0.0
    %2210 = vmatpush.msra.mxu0 0.0
    %2211 = vmatpush.msra.mxu0 0.0
    %2212 = vmatpush.msra.mxu0 0.0
    %2213 = vmatpush.msra.mxu0 0.0
    %2214 = vmatpush.msra.mxu0 0.0
    %2215 = vmatpush.msra.mxu0 0.0
    %2216 = vmatpush.msra.mxu0 0.0
    %2217 = vmatpush.msra.mxu0 %v1706
    %2218 = vmatmul.f32.gmra.mxu0 %v2197
    %v2219 = vpop.f32.mrf.mxu0
    %v2220 = vadd.f32 0.0, %v2219
    %2221 = vmatmul.f32.gmra.mxu0 %v2200
    %v2222 = vpop.f32.mrf.mxu0
    %v2223 = vadd.f32 0.0, %v2222
    %2224 = vdwg.mxu0
    %v2226 = vsel %vm246, %v1937, 0
    %v2229 = vsel %vm246, %v1940, 0
    %2231 = vmatpush.msra.mxu0 0.0
    %2232 = vmatpush.msra.mxu0 0.0
    %2233 = vmatpush.msra.mxu0 0.0
    %2234 = vmatpush.msra.mxu0 0.0
    %2235 = vmatpush.msra.mxu0 0.0
    %2236 = vmatpush.msra.mxu0 0.0
    %2237 = vmatpush.msra.mxu0 0.0
    %2238 = vmatpush.msra.mxu0 0.0
    %2239 = vmatpush.msra.mxu0 0.0
    %2240 = vmatpush.msra.mxu0 0.0
    %2241 = vmatpush.msra.mxu0 0.0
    %2242 = vmatpush.msra.mxu0 0.0
    %2243 = vmatpush.msra.mxu0 0.0
    %2244 = vmatpush.msra.mxu0 0.0
    %2245 = vmatpush.msra.mxu0 0.0
    %2246 = vmatpush.msra.mxu0 %v1705
    %2247 = vmatmul.f32.gmra.mxu0 %v2226
    %v2248 = vpop.f32.mrf.mxu0
    %v2249 = vadd.f32 %v2220, %v2248
    %2250 = vmatmul.f32.gmra.mxu0 %v2229
    %v2251 = vpop.f32.mrf.mxu0
    %v2252 = vadd.f32 %v2223, %v2251
    %2253 = vdwg.mxu0
    %2254 = vrot.lane.b32.xlu0 %v1739, 112
    %v2255 = vpop.permute.xlu0 %2254
    %2256 = vrot.lane.b32.xlu0 %v1742, 112
    %v2257 = vpop.permute.xlu0 %2256
    %2258 = vrot.lane.b32.xlu0 %v1739, 80
    %v2259 = vpop.permute.xlu0 %2258
    %2260 = vrot.lane.b32.xlu0 %v1742, 80
    %v2261 = vpop.permute.xlu0 %2260
    %v2262 = vsel %vm246, %v2255, 0
    %v2264 = vsel %vm246, %v2257, 0
    %v2266 = vsel %vm246, %v2259, 0
    %v2268 = vsel %vm246, %v2261, 0
    %2270 = vmatpush.xpose.msra.mxu0 0.0
    %2271 = vmatpush.xpose.msra.mxu0 0.0
    %2272 = vmatpush.xpose.msra.mxu0 0.0
    %2273 = vmatpush.xpose.msra.mxu0 0.0
    %2274 = vmatpush.xpose.msra.mxu0 0.0
    %2275 = vmatpush.xpose.msra.mxu0 0.0
    %2276 = vmatpush.xpose.msra.mxu0 0.0
    %2277 = vmatpush.xpose.msra.mxu0 0.0
    %2278 = vmatpush.xpose.msra.mxu0 0.0
    %2279 = vmatpush.xpose.msra.mxu0 0.0
    %2280 = vmatpush.xpose.msra.mxu0 0.0
    %2281 = vmatpush.xpose.msra.mxu0 0.0
    %2282 = vmatpush.xpose.msra.mxu0 0.0
    %2283 = vmatpush.xpose.msra.mxu0 0.0
    %2284 = vmatpush.xpose.msra.mxu0 %v2268
    %2285 = vmatpush.xpose.msra.mxu0 %v2266
    %2286 = vmatmul.f32.gmra.mxu0 %v2262
    %v2287 = vpop.f32.mrf.mxu0
    %v2288 = vadd.f32 0.0, %v2287
    %2289 = vmatmul.f32.gmra.mxu0 %v2264
    %v2290 = vpop.f32.mrf.mxu0
    %v2291 = vadd.f32 0.0, %v2290
    %2292 = vdwg.mxu0
    %v2293 = vmul.f32 %v2288, 0.35355338
    %v2294 = vmul.f32 %v2291, 0.35355338
    %v2295 = vsel %vm280, %v2293, -inf
    %2296 = vmax.xlane.f32.xlu0 %v2295
    %v2297 = vpop.xlane.xlu0 %2296
    %v2298 = vsel %vm280, %v2294, -inf
    %2299 = vmax.xlane.f32.xlu0 %v2298
    %v2300 = vpop.xlane.xlu0 %2299
    %v2301 = vsub.f32 %v2293, %v2297
    %v2302 = vsub.f32 %v2294, %v2300
    %v2303 = vmul.f32 %v2301, 1.442695
    %v2304 = vpow.pop %v2303
    %v2305 = vmul.f32 %v2302, 1.442695
    %v2306 = vpow.pop %v2305
    %v2307 = vsel %vm280, %v2304, 0.0
    %2308 = vadd.xlane.f32.xlu0 %v2307
    %v2309 = vpop.xlane.xlu0 %2308
    %v2310 = vsel %vm280, %v2306, 0.0
    %2311 = vadd.xlane.f32.xlu0 %v2310
    %v2312 = vpop.xlane.xlu0 %2311
    %v2313 = vrcp.pop %v2309
    %v2314 = vrcp.pop %v2312
    %v2315 = vmul.f32 %v2304, %v2313
    %v2316 = vmul.f32 %v2306, %v2314
    %2317 = vrot.lane.b32.xlu0 %v1739, 48
    %v2318 = vpop.permute.xlu0 %2317
    %2319 = vrot.lane.b32.xlu0 %v1742, 48
    %v2320 = vpop.permute.xlu0 %2319
    %v2324 = vsel %vm280, %v2315, 0
    %v2327 = vsel %vm280, %v2316, 0
    %2329 = vmatpush.msra.mxu0 0.0
    %2330 = vmatpush.msra.mxu0 0.0
    %2331 = vmatpush.msra.mxu0 0.0
    %2332 = vmatpush.msra.mxu0 0.0
    %2333 = vmatpush.msra.mxu0 0.0
    %2334 = vmatpush.msra.mxu0 0.0
    %2335 = vmatpush.msra.mxu0 0.0
    %2336 = vmatpush.msra.mxu0 0.0
    %2337 = vmatpush.msra.mxu0 0.0
    %2338 = vmatpush.msra.mxu0 0.0
    %2339 = vmatpush.msra.mxu0 0.0
    %2340 = vmatpush.msra.mxu0 0.0
    %2341 = vmatpush.msra.mxu0 0.0
    %2342 = vmatpush.msra.mxu0 0.0
    %2343 = vmatpush.msra.mxu0 %v2320
    %2344 = vmatpush.msra.mxu0 %v2318
    %2345 = vmatmul.f32.gmra.mxu0 %v2324
    %v2346 = vpop.f32.mrf.mxu0
    %v2347 = vadd.f32 0.0, %v2346
    %2348 = vmatmul.f32.gmra.mxu0 %v2327
    %v2349 = vpop.f32.mrf.mxu0
    %v2350 = vadd.f32 0.0, %v2349
    %2351 = vdwg.mxu0
    %v2353 = vsel %vm246, %v2347, 0
    %v2356 = vsel %vm246, %v2350, 0
    %2358 = vmatpush.msra.mxu0 0.0
    %2359 = vmatpush.msra.mxu0 0.0
    %2360 = vmatpush.msra.mxu0 0.0
    %2361 = vmatpush.msra.mxu0 0.0
    %2362 = vmatpush.msra.mxu0 0.0
    %2363 = vmatpush.msra.mxu0 0.0
    %2364 = vmatpush.msra.mxu0 0.0
    %2365 = vmatpush.msra.mxu0 0.0
    %2366 = vmatpush.msra.mxu0 0.0
    %2367 = vmatpush.msra.mxu0 0.0
    %2368 = vmatpush.msra.mxu0 0.0
    %2369 = vmatpush.msra.mxu0 0.0
    %2370 = vmatpush.msra.mxu0 0.0
    %2371 = vmatpush.msra.mxu0 0.0
    %2372 = vmatpush.msra.mxu0 0.0
    %2373 = vmatpush.msra.mxu0 %v1707
    %2374 = vmatmul.f32.gmra.mxu0 %v2353
    %v2375 = vpop.f32.mrf.mxu0
    %v2376 = vadd.f32 0.0, %v2375
    %2377 = vmatmul.f32.gmra.mxu0 %v2356
    %v2378 = vpop.f32.mrf.mxu0
    %v2379 = vadd.f32 0.0, %v2378
    %2380 = vdwg.mxu0
    %v2381 = vadd.f32 %v2093, %v2376
    %v2382 = vadd.f32 %v2096, %v2379
    %2383 = vrot.lane.b32.xlu0 %v1745, 112
    %v2384 = vpop.permute.xlu0 %2383
    %2385 = vrot.lane.b32.xlu0 %v1748, 112
    %v2386 = vpop.permute.xlu0 %2385
    %2387 = vrot.lane.b32.xlu0 %v1745, 80
    %v2388 = vpop.permute.xlu0 %2387
    %2389 = vrot.lane.b32.xlu0 %v1748, 80
    %v2390 = vpop.permute.xlu0 %2389
    %v2391 = vsel %vm246, %v2384, 0
    %v2393 = vsel %vm246, %v2386, 0
    %v2395 = vsel %vm246, %v2388, 0
    %v2397 = vsel %vm246, %v2390, 0
    %2399 = vmatpush.xpose.msra.mxu0 0.0
    %2400 = vmatpush.xpose.msra.mxu0 0.0
    %2401 = vmatpush.xpose.msra.mxu0 0.0
    %2402 = vmatpush.xpose.msra.mxu0 0.0
    %2403 = vmatpush.xpose.msra.mxu0 0.0
    %2404 = vmatpush.xpose.msra.mxu0 0.0
    %2405 = vmatpush.xpose.msra.mxu0 0.0
    %2406 = vmatpush.xpose.msra.mxu0 0.0
    %2407 = vmatpush.xpose.msra.mxu0 0.0
    %2408 = vmatpush.xpose.msra.mxu0 0.0
    %2409 = vmatpush.xpose.msra.mxu0 0.0
    %2410 = vmatpush.xpose.msra.mxu0 0.0
    %2411 = vmatpush.xpose.msra.mxu0 0.0
    %2412 = vmatpush.xpose.msra.mxu0 0.0
    %2413 = vmatpush.xpose.msra.mxu0 %v2397
    %2414 = vmatpush.xpose.msra.mxu0 %v2395
    %2415 = vmatmul.f32.gmra.mxu0 %v2391
    %v2416 = vpop.f32.mrf.mxu0
    %v2417 = vadd.f32 0.0, %v2416
    %2418 = vmatmul.f32.gmra.mxu0 %v2393
    %v2419 = vpop.f32.mrf.mxu0
    %v2420 = vadd.f32 0.0, %v2419
    %2421 = vdwg.mxu0
    %v2422 = vmul.f32 %v2417, 0.35355338
    %v2423 = vmul.f32 %v2420, 0.35355338
    %v2424 = vsel %vm280, %v2422, -inf
    %2425 = vmax.xlane.f32.xlu0 %v2424
    %v2426 = vpop.xlane.xlu0 %2425
    %v2427 = vsel %vm280, %v2423, -inf
    %2428 = vmax.xlane.f32.xlu0 %v2427
    %v2429 = vpop.xlane.xlu0 %2428
    %v2430 = vsub.f32 %v2422, %v2426
    %v2431 = vsub.f32 %v2423, %v2429
    %v2432 = vmul.f32 %v2430, 1.442695
    %v2433 = vpow.pop %v2432
    %v2434 = vmul.f32 %v2431, 1.442695
    %v2435 = vpow.pop %v2434
    %v2436 = vsel %vm280, %v2433, 0.0
    %2437 = vadd.xlane.f32.xlu0 %v2436
    %v2438 = vpop.xlane.xlu0 %2437
    %v2439 = vsel %vm280, %v2435, 0.0
    %2440 = vadd.xlane.f32.xlu0 %v2439
    %v2441 = vpop.xlane.xlu0 %2440
    %v2442 = vrcp.pop %v2438
    %v2443 = vrcp.pop %v2441
    %v2444 = vmul.f32 %v2433, %v2442
    %v2445 = vmul.f32 %v2435, %v2443
    %2446 = vrot.lane.b32.xlu0 %v1745, 48
    %v2447 = vpop.permute.xlu0 %2446
    %2448 = vrot.lane.b32.xlu0 %v1748, 48
    %v2449 = vpop.permute.xlu0 %2448
    %v2453 = vsel %vm280, %v2444, 0
    %v2456 = vsel %vm280, %v2445, 0
    %2458 = vmatpush.msra.mxu0 0.0
    %2459 = vmatpush.msra.mxu0 0.0
    %2460 = vmatpush.msra.mxu0 0.0
    %2461 = vmatpush.msra.mxu0 0.0
    %2462 = vmatpush.msra.mxu0 0.0
    %2463 = vmatpush.msra.mxu0 0.0
    %2464 = vmatpush.msra.mxu0 0.0
    %2465 = vmatpush.msra.mxu0 0.0
    %2466 = vmatpush.msra.mxu0 0.0
    %2467 = vmatpush.msra.mxu0 0.0
    %2468 = vmatpush.msra.mxu0 0.0
    %2469 = vmatpush.msra.mxu0 0.0
    %2470 = vmatpush.msra.mxu0 0.0
    %2471 = vmatpush.msra.mxu0 0.0
    %2472 = vmatpush.msra.mxu0 %v2449
    %2473 = vmatpush.msra.mxu0 %v2447
    %2474 = vmatmul.f32.gmra.mxu0 %v2453
    %v2475 = vpop.f32.mrf.mxu0
    %v2476 = vadd.f32 0.0, %v2475
    %2477 = vmatmul.f32.gmra.mxu0 %v2456
    %v2478 = vpop.f32.mrf.mxu0
    %v2479 = vadd.f32 0.0, %v2478
    %2480 = vdwg.mxu0
    %v2482 = vsel %vm246, %v2476, 0
    %v2485 = vsel %vm246, %v2479, 0
    %2487 = vmatpush.msra.mxu0 0.0
    %2488 = vmatpush.msra.mxu0 0.0
    %2489 = vmatpush.msra.mxu0 0.0
    %2490 = vmatpush.msra.mxu0 0.0
    %2491 = vmatpush.msra.mxu0 0.0
    %2492 = vmatpush.msra.mxu0 0.0
    %2493 = vmatpush.msra.mxu0 0.0
    %2494 = vmatpush.msra.mxu0 0.0
    %2495 = vmatpush.msra.mxu0 0.0
    %2496 = vmatpush.msra.mxu0 0.0
    %2497 = vmatpush.msra.mxu0 0.0
    %2498 = vmatpush.msra.mxu0 0.0
    %2499 = vmatpush.msra.mxu0 0.0
    %2500 = vmatpush.msra.mxu0 0.0
    %2501 = vmatpush.msra.mxu0 0.0
    %2502 = vmatpush.msra.mxu0 %v1707
    %2503 = vmatmul.f32.gmra.mxu0 %v2482
    %v2504 = vpop.f32.mrf.mxu0
    %v2505 = vadd.f32 0.0, %v2504
    %2506 = vmatmul.f32.gmra.mxu0 %v2485
    %v2507 = vpop.f32.mrf.mxu0
    %v2508 = vadd.f32 0.0, %v2507
    %2509 = vdwg.mxu0
    %v2510 = vadd.f32 %v2249, %v2505
    %v2511 = vadd.f32 %v2252, %v2508
    %2512 = vrot.lane.b32.xlu0 %v1739, 104
    %v2513 = vpop.permute.xlu0 %2512
    %2514 = vrot.lane.b32.xlu0 %v1742, 104
    %v2515 = vpop.permute.xlu0 %2514
    %2516 = vrot.lane.b32.xlu0 %v1739, 72
    %v2517 = vpop.permute.xlu0 %2516
    %2518 = vrot.lane.b32.xlu0 %v1742, 72
    %v2519 = vpop.permute.xlu0 %2518
    %v2520 = vsel %vm246, %v2513, 0
    %v2522 = vsel %vm246, %v2515, 0
    %v2524 = vsel %vm246, %v2517, 0
    %v2526 = vsel %vm246, %v2519, 0
    %2528 = vmatpush.xpose.msra.mxu0 0.0
    %2529 = vmatpush.xpose.msra.mxu0 0.0
    %2530 = vmatpush.xpose.msra.mxu0 0.0
    %2531 = vmatpush.xpose.msra.mxu0 0.0
    %2532 = vmatpush.xpose.msra.mxu0 0.0
    %2533 = vmatpush.xpose.msra.mxu0 0.0
    %2534 = vmatpush.xpose.msra.mxu0 0.0
    %2535 = vmatpush.xpose.msra.mxu0 0.0
    %2536 = vmatpush.xpose.msra.mxu0 0.0
    %2537 = vmatpush.xpose.msra.mxu0 0.0
    %2538 = vmatpush.xpose.msra.mxu0 0.0
    %2539 = vmatpush.xpose.msra.mxu0 0.0
    %2540 = vmatpush.xpose.msra.mxu0 0.0
    %2541 = vmatpush.xpose.msra.mxu0 0.0
    %2542 = vmatpush.xpose.msra.mxu0 %v2526
    %2543 = vmatpush.xpose.msra.mxu0 %v2524
    %2544 = vmatmul.f32.gmra.mxu0 %v2520
    %v2545 = vpop.f32.mrf.mxu0
    %v2546 = vadd.f32 0.0, %v2545
    %2547 = vmatmul.f32.gmra.mxu0 %v2522
    %v2548 = vpop.f32.mrf.mxu0
    %v2549 = vadd.f32 0.0, %v2548
    %2550 = vdwg.mxu0
    %v2551 = vmul.f32 %v2546, 0.35355338
    %v2552 = vmul.f32 %v2549, 0.35355338
    %v2553 = vsel %vm280, %v2551, -inf
    %2554 = vmax.xlane.f32.xlu0 %v2553
    %v2555 = vpop.xlane.xlu0 %2554
    %v2556 = vsel %vm280, %v2552, -inf
    %2557 = vmax.xlane.f32.xlu0 %v2556
    %v2558 = vpop.xlane.xlu0 %2557
    %v2559 = vsub.f32 %v2551, %v2555
    %v2560 = vsub.f32 %v2552, %v2558
    %v2561 = vmul.f32 %v2559, 1.442695
    %v2562 = vpow.pop %v2561
    %v2563 = vmul.f32 %v2560, 1.442695
    %v2564 = vpow.pop %v2563
    %v2565 = vsel %vm280, %v2562, 0.0
    %2566 = vadd.xlane.f32.xlu0 %v2565
    %v2567 = vpop.xlane.xlu0 %2566
    %v2568 = vsel %vm280, %v2564, 0.0
    %2569 = vadd.xlane.f32.xlu0 %v2568
    %v2570 = vpop.xlane.xlu0 %2569
    %v2571 = vrcp.pop %v2567
    %v2572 = vrcp.pop %v2570
    %v2573 = vmul.f32 %v2562, %v2571
    %v2574 = vmul.f32 %v2564, %v2572
    %2575 = vrot.lane.b32.xlu0 %v1739, 40
    %v2576 = vpop.permute.xlu0 %2575
    %2577 = vrot.lane.b32.xlu0 %v1742, 40
    %v2578 = vpop.permute.xlu0 %2577
    %v2582 = vsel %vm280, %v2573, 0
    %v2585 = vsel %vm280, %v2574, 0
    %2587 = vmatpush.msra.mxu0 0.0
    %2588 = vmatpush.msra.mxu0 0.0
    %2589 = vmatpush.msra.mxu0 0.0
    %2590 = vmatpush.msra.mxu0 0.0
    %2591 = vmatpush.msra.mxu0 0.0
    %2592 = vmatpush.msra.mxu0 0.0
    %2593 = vmatpush.msra.mxu0 0.0
    %2594 = vmatpush.msra.mxu0 0.0
    %2595 = vmatpush.msra.mxu0 0.0
    %2596 = vmatpush.msra.mxu0 0.0
    %2597 = vmatpush.msra.mxu0 0.0
    %2598 = vmatpush.msra.mxu0 0.0
    %2599 = vmatpush.msra.mxu0 0.0
    %2600 = vmatpush.msra.mxu0 0.0
    %2601 = vmatpush.msra.mxu0 %v2578
    %2602 = vmatpush.msra.mxu0 %v2576
    %2603 = vmatmul.f32.gmra.mxu0 %v2582
    %v2604 = vpop.f32.mrf.mxu0
    %v2605 = vadd.f32 0.0, %v2604
    %2606 = vmatmul.f32.gmra.mxu0 %v2585
    %v2607 = vpop.f32.mrf.mxu0
    %v2608 = vadd.f32 0.0, %v2607
    %2609 = vdwg.mxu0
    %v2611 = vsel %vm246, %v2605, 0
    %v2614 = vsel %vm246, %v2608, 0
    %2616 = vmatpush.msra.mxu0 0.0
    %2617 = vmatpush.msra.mxu0 0.0
    %2618 = vmatpush.msra.mxu0 0.0
    %2619 = vmatpush.msra.mxu0 0.0
    %2620 = vmatpush.msra.mxu0 0.0
    %2621 = vmatpush.msra.mxu0 0.0
    %2622 = vmatpush.msra.mxu0 0.0
    %2623 = vmatpush.msra.mxu0 0.0
    %2624 = vmatpush.msra.mxu0 0.0
    %2625 = vmatpush.msra.mxu0 0.0
    %2626 = vmatpush.msra.mxu0 0.0
    %2627 = vmatpush.msra.mxu0 0.0
    %2628 = vmatpush.msra.mxu0 0.0
    %2629 = vmatpush.msra.mxu0 0.0
    %2630 = vmatpush.msra.mxu0 0.0
    %2631 = vmatpush.msra.mxu0 %v1708
    %2632 = vmatmul.f32.gmra.mxu0 %v2611
    %v2633 = vpop.f32.mrf.mxu0
    %v2634 = vadd.f32 0.0, %v2633
    %2635 = vmatmul.f32.gmra.mxu0 %v2614
    %v2636 = vpop.f32.mrf.mxu0
    %v2637 = vadd.f32 0.0, %v2636
    %2638 = vdwg.mxu0
    %v2639 = vadd.f32 %v2381, %v2634
    %v2640 = vadd.f32 %v2382, %v2637
    %2641 = vrot.lane.b32.xlu0 %v1745, 104
    %v2642 = vpop.permute.xlu0 %2641
    %2643 = vrot.lane.b32.xlu0 %v1748, 104
    %v2644 = vpop.permute.xlu0 %2643
    %2645 = vrot.lane.b32.xlu0 %v1745, 72
    %v2646 = vpop.permute.xlu0 %2645
    %2647 = vrot.lane.b32.xlu0 %v1748, 72
    %v2648 = vpop.permute.xlu0 %2647
    %v2649 = vsel %vm246, %v2642, 0
    %v2651 = vsel %vm246, %v2644, 0
    %v2653 = vsel %vm246, %v2646, 0
    %v2655 = vsel %vm246, %v2648, 0
    %2657 = vmatpush.xpose.msra.mxu0 0.0
    %2658 = vmatpush.xpose.msra.mxu0 0.0
    %2659 = vmatpush.xpose.msra.mxu0 0.0
    %2660 = vmatpush.xpose.msra.mxu0 0.0
    %2661 = vmatpush.xpose.msra.mxu0 0.0
    %2662 = vmatpush.xpose.msra.mxu0 0.0
    %2663 = vmatpush.xpose.msra.mxu0 0.0
    %2664 = vmatpush.xpose.msra.mxu0 0.0
    %2665 = vmatpush.xpose.msra.mxu0 0.0
    %2666 = vmatpush.xpose.msra.mxu0 0.0
    %2667 = vmatpush.xpose.msra.mxu0 0.0
    %2668 = vmatpush.xpose.msra.mxu0 0.0
    %2669 = vmatpush.xpose.msra.mxu0 0.0
    %2670 = vmatpush.xpose.msra.mxu0 0.0
    %2671 = vmatpush.xpose.msra.mxu0 %v2655
    %2672 = vmatpush.xpose.msra.mxu0 %v2653
    %2673 = vmatmul.f32.gmra.mxu0 %v2649
    %v2674 = vpop.f32.mrf.mxu0
    %v2675 = vadd.f32 0.0, %v2674
    %2676 = vmatmul.f32.gmra.mxu0 %v2651
    %v2677 = vpop.f32.mrf.mxu0
    %v2678 = vadd.f32 0.0, %v2677
    %2679 = vdwg.mxu0
    %v2680 = vmul.f32 %v2675, 0.35355338
    %v2681 = vmul.f32 %v2678, 0.35355338
    %v2682 = vsel %vm280, %v2680, -inf
    %2683 = vmax.xlane.f32.xlu0 %v2682
    %v2684 = vpop.xlane.xlu0 %2683
    %v2685 = vsel %vm280, %v2681, -inf
    %2686 = vmax.xlane.f32.xlu0 %v2685
    %v2687 = vpop.xlane.xlu0 %2686
    %v2688 = vsub.f32 %v2680, %v2684
    %v2689 = vsub.f32 %v2681, %v2687
    %v2690 = vmul.f32 %v2688, 1.442695
    %v2691 = vpow.pop %v2690
    %v2692 = vmul.f32 %v2689, 1.442695
    %v2693 = vpow.pop %v2692
    %v2694 = vsel %vm280, %v2691, 0.0
    %2695 = vadd.xlane.f32.xlu0 %v2694
    %v2696 = vpop.xlane.xlu0 %2695
    %v2697 = vsel %vm280, %v2693, 0.0
    %2698 = vadd.xlane.f32.xlu0 %v2697
    %v2699 = vpop.xlane.xlu0 %2698
    %v2700 = vrcp.pop %v2696
    %v2701 = vrcp.pop %v2699
    %v2702 = vmul.f32 %v2691, %v2700
    %v2703 = vmul.f32 %v2693, %v2701
    %2704 = vrot.lane.b32.xlu0 %v1745, 40
    %v2705 = vpop.permute.xlu0 %2704
    %2706 = vrot.lane.b32.xlu0 %v1748, 40
    %v2707 = vpop.permute.xlu0 %2706
    %v2711 = vsel %vm280, %v2702, 0
    %v2714 = vsel %vm280, %v2703, 0
    %2716 = vmatpush.msra.mxu0 0.0
    %2717 = vmatpush.msra.mxu0 0.0
    %2718 = vmatpush.msra.mxu0 0.0
    %2719 = vmatpush.msra.mxu0 0.0
    %2720 = vmatpush.msra.mxu0 0.0
    %2721 = vmatpush.msra.mxu0 0.0
    %2722 = vmatpush.msra.mxu0 0.0
    %2723 = vmatpush.msra.mxu0 0.0
    %2724 = vmatpush.msra.mxu0 0.0
    %2725 = vmatpush.msra.mxu0 0.0
    %2726 = vmatpush.msra.mxu0 0.0
    %2727 = vmatpush.msra.mxu0 0.0
    %2728 = vmatpush.msra.mxu0 0.0
    %2729 = vmatpush.msra.mxu0 0.0
    %2730 = vmatpush.msra.mxu0 %v2707
    %2731 = vmatpush.msra.mxu0 %v2705
    %2732 = vmatmul.f32.gmra.mxu0 %v2711
    %v2733 = vpop.f32.mrf.mxu0
    %v2734 = vadd.f32 0.0, %v2733
    %2735 = vmatmul.f32.gmra.mxu0 %v2714
    %v2736 = vpop.f32.mrf.mxu0
    %v2737 = vadd.f32 0.0, %v2736
    %2738 = vdwg.mxu0
    %v2740 = vsel %vm246, %v2734, 0
    %v2743 = vsel %vm246, %v2737, 0
    %2745 = vmatpush.msra.mxu0 0.0
    %2746 = vmatpush.msra.mxu0 0.0
    %2747 = vmatpush.msra.mxu0 0.0
    %2748 = vmatpush.msra.mxu0 0.0
    %2749 = vmatpush.msra.mxu0 0.0
    %2750 = vmatpush.msra.mxu0 0.0
    %2751 = vmatpush.msra.mxu0 0.0
    %2752 = vmatpush.msra.mxu0 0.0
    %2753 = vmatpush.msra.mxu0 0.0
    %2754 = vmatpush.msra.mxu0 0.0
    %2755 = vmatpush.msra.mxu0 0.0
    %2756 = vmatpush.msra.mxu0 0.0
    %2757 = vmatpush.msra.mxu0 0.0
    %2758 = vmatpush.msra.mxu0 0.0
    %2759 = vmatpush.msra.mxu0 0.0
    %2760 = vmatpush.msra.mxu0 %v1708
    %2761 = vmatmul.f32.gmra.mxu0 %v2740
    %v2762 = vpop.f32.mrf.mxu0
    %v2763 = vadd.f32 0.0, %v2762
    %2764 = vmatmul.f32.gmra.mxu0 %v2743
    %v2765 = vpop.f32.mrf.mxu0
    %v2766 = vadd.f32 0.0, %v2765
    %2767 = vdwg.mxu0
    %v2768 = vadd.f32 %v2510, %v2763
    %v2769 = vadd.f32 %v2511, %v2766
    %v2770 = vadd.f32 %v1533, %v2639
    %v2771 = vadd.f32 %v1534, %v2640
    %v2772 = vadd.f32 %v1535, %v2768
    %v2773 = vadd.f32 %v1536, %v2769
    %v2774 = vld [vmem:[%s2 + $0x120] sm:$0x1]
    %v2775 = vld [vmem:[%s2 + $0x128] sm:$0x1]
    %v2776 = vsel %vm21, %v2770, 0.0
    %2777 = vadd.xlane.f32.xlu0 %v2776
    %v2778 = vpop.xlane.xlu0 %2777
    %v2779 = vsel %vm21, %v2771, 0.0
    %2780 = vadd.xlane.f32.xlu0 %v2779
    %v2781 = vpop.xlane.xlu0 %2780
    %v2782 = vsel %vm21, %v2772, 0.0
    %2783 = vadd.xlane.f32.xlu0 %v2782
    %v2784 = vpop.xlane.xlu0 %2783
    %v2785 = vsel %vm21, %v2773, 0.0
    %2786 = vadd.xlane.f32.xlu0 %v2785
    %v2787 = vpop.xlane.xlu0 %2786
    %v2788 = vmul.f32 %v2778, %v40
    %v2789 = vmul.f32 %v2781, %v40
    %v2790 = vmul.f32 %v2784, %v40
    %v2791 = vmul.f32 %v2787, %v40
    %v2792 = vsub.f32 %v2770, %v2788
    %v2793 = vsub.f32 %v2771, %v2789
    %v2794 = vsub.f32 %v2772, %v2790
    %v2795 = vsub.f32 %v2773, %v2791
    %v2796 = vmul.f32 %v2792, %v2792
    %v2797 = vmul.f32 %v2793, %v2793
    %v2798 = vmul.f32 %v2794, %v2794
    %v2799 = vmul.f32 %v2795, %v2795
    %v2800 = vsel %vm21, %v2796, 0.0
    %2801 = vadd.xlane.f32.xlu0 %v2800
    %v2802 = vpop.xlane.xlu0 %2801
    %v2803 = vsel %vm21, %v2797, 0.0
    %2804 = vadd.xlane.f32.xlu0 %v2803
    %v2805 = vpop.xlane.xlu0 %2804
    %v2806 = vsel %vm21, %v2798, 0.0
    %2807 = vadd.xlane.f32.xlu0 %v2806
    %v2808 = vpop.xlane.xlu0 %2807
    %v2809 = vsel %vm21, %v2799, 0.0
    %2810 = vadd.xlane.f32.xlu0 %v2809
    %v2811 = vpop.xlane.xlu0 %2810
    %v2812 = vmul.f32 %v2802, 0.032258064
    %v2813 = vmul.f32 %v2805, 0.032258064
    %v2814 = vmul.f32 %v2808, 0.032258064
    %v2815 = vmul.f32 %v2811, 0.032258064
    %v2816 = vrsqrt.pop %v2812
    %v2817 = vmul.f32 %v2816, %v2812
    %v2818 = vmul.f32 %v2817, %v2816
    %v2819 = vmul.f32 0.5, %v2818
    %v2820 = vsub.f32 1.5, %v2819
    %v2821 = vmul.f32 %v2816, %v2820
    %v2822 = vmul.f32 %v2812, %v2821
    %vm2823 = vcmp.eq.f32.partialorder %v2812, inf
    %v2824 = vsel %vm2823, %v2812, %v2822
    %vm2825 = vcmp.eq.f32.partialorder %v2812, 0.0
    %v2826 = vand.u32 %v2812, 2147483648
    %v2827 = vsel %vm2825, %v2826, %v2824
    %v2828 = vrsqrt.pop %v2813
    %v2829 = vmul.f32 %v2828, %v2813
    %v2830 = vmul.f32 %v2829, %v2828
    %v2831 = vmul.f32 0.5, %v2830
    %v2832 = vsub.f32 1.5, %v2831
    %v2833 = vmul.f32 %v2828, %v2832
    %v2834 = vmul.f32 %v2813, %v2833
    %vm2835 = vcmp.eq.f32.partialorder %v2813, inf
    %v2836 = vsel %vm2835, %v2813, %v2834
    %vm2837 = vcmp.eq.f32.partialorder %v2813, 0.0
    %v2838 = vand.u32 %v2813, 2147483648
    %v2839 = vsel %vm2837, %v2838, %v2836
    %v2840 = vrsqrt.pop %v2814
    %v2841 = vmul.f32 %v2840, %v2814
    %v2842 = vmul.f32 %v2841, %v2840
    %v2843 = vmul.f32 0.5, %v2842
    %v2844 = vsub.f32 1.5, %v2843
    %v2845 = vmul.f32 %v2840, %v2844
    %v2846 = vmul.f32 %v2814, %v2845
    %vm2847 = vcmp.eq.f32.partialorder %v2814, inf
    %v2848 = vsel %vm2847, %v2814, %v2846
    %vm2849 = vcmp.eq.f32.partialorder %v2814, 0.0
    %v2850 = vand.u32 %v2814, 2147483648
    %v2851 = vsel %vm2849, %v2850, %v2848
    %v2852 = vrsqrt.pop %v2815
    %v2853 = vmul.f32 %v2852, %v2815
    %v2854 = vmul.f32 %v2853, %v2852
    %v2855 = vmul.f32 0.5, %v2854
    %v2856 = vsub.f32 1.5, %v2855
    %v2857 = vmul.f32 %v2852, %v2856
    %v2858 = vmul.f32 %v2815, %v2857
    %vm2859 = vcmp.eq.f32.partialorder %v2815, inf
    %v2860 = vsel %vm2859, %v2815, %v2858
    %vm2861 = vcmp.eq.f32.partialorder %v2815, 0.0
    %v2862 = vand.u32 %v2815, 2147483648
    %v2863 = vsel %vm2861, %v2862, %v2860
    %v2864 = vadd.f32 %v2827, 1e-05
    %v2865 = vadd.f32 %v2839, 1e-05
    %v2866 = vadd.f32 %v2851, 1e-05
    %v2867 = vadd.f32 %v2863, 1e-05
    %v2868 = vrcp.pop %v2864
    %v2869 = vmul.f32 %v2864, %v2868
    %v2870 = vsub.f32 1.0, %v2869
    %v2871 = vmul.f32 %v2868, %v2870
    %v2872 = vadd.f32 %v2868, %v2871
    %vm2873 = vweird.f32 %v2864
    %vm2874 = vweird.f32 %v2868
    %vm2875 = vmor %vm2873, %vm2874
    %v2876 = vsel %vm2875, %v2868, %v2872
    %v2877 = vand.u32 2147483647, %v2864
    %vm2878 = vcmp.eq.f32.partialorder %v2877, 8.507059e+37
    %v2879 = vand.u32 %v2864, 2147483648
    %v2880 = vor.u32 1.1754944e-38, %v2879
    %v2881 = vsel %vm2878, %v2880, %v2876
    %v2882 = vmul.f32 %v2792, %v2881
    %v2883 = vrcp.pop %v2865
    %v2884 = vmul.f32 %v2865, %v2883
    %v2885 = vsub.f32 1.0, %v2884
    %v2886 = vmul.f32 %v2883, %v2885
    %v2887 = vadd.f32 %v2883, %v2886
    %vm2888 = vweird.f32 %v2865
    %vm2889 = vweird.f32 %v2883
    %vm2890 = vmor %vm2888, %vm2889
    %v2891 = vsel %vm2890, %v2883, %v2887
    %v2892 = vand.u32 2147483647, %v2865
    %vm2893 = vcmp.eq.f32.partialorder %v2892, 8.507059e+37
    %v2894 = vand.u32 %v2865, 2147483648
    %v2895 = vor.u32 1.1754944e-38, %v2894
    %v2896 = vsel %vm2893, %v2895, %v2891
    %v2897 = vmul.f32 %v2793, %v2896
    %v2898 = vrcp.pop %v2866
    %v2899 = vmul.f32 %v2866, %v2898
    %v2900 = vsub.f32 1.0, %v2899
    %v2901 = vmul.f32 %v2898, %v2900
    %v2902 = vadd.f32 %v2898, %v2901
    %vm2903 = vweird.f32 %v2866
    %vm2904 = vweird.f32 %v2898
    %vm2905 = vmor %vm2903, %vm2904
    %v2906 = vsel %vm2905, %v2898, %v2902
    %v2907 = vand.u32 2147483647, %v2866
    %vm2908 = vcmp.eq.f32.partialorder %v2907, 8.507059e+37
    %v2909 = vand.u32 %v2866, 2147483648
    %v2910 = vor.u32 1.1754944e-38, %v2909
    %v2911 = vsel %vm2908, %v2910, %v2906
    %v2912 = vmul.f32 %v2794, %v2911
    %v2913 = vrcp.pop %v2867
    %v2914 = vmul.f32 %v2867, %v2913
    %v2915 = vsub.f32 1.0, %v2914
    %v2916 = vmul.f32 %v2913, %v2915
    %v2917 = vadd.f32 %v2913, %v2916
    %vm2918 = vweird.f32 %v2867
    %vm2919 = vweird.f32 %v2913
    %vm2920 = vmor %vm2918, %vm2919
    %v2921 = vsel %vm2920, %v2913, %v2917
    %v2922 = vand.u32 2147483647, %v2867
    %vm2923 = vcmp.eq.f32.partialorder %v2922, 8.507059e+37
    %v2924 = vand.u32 %v2867, 2147483648
    %v2925 = vor.u32 1.1754944e-38, %v2924
    %v2926 = vsel %vm2923, %v2925, %v2921
    %v2927 = vmul.f32 %v2795, %v2926
    %v2928 = vperm.slane %v2774, 0
    %v2929 = vmul.f32 %v2928, %v2882
    %v2930 = vmul.f32 %v2928, %v2897
    %v2931 = vmul.f32 %v2928, %v2912
    %v2932 = vmul.f32 %v2928, %v2927
    %v2933 = vperm.slane %v2775, 0
    %v2934 = vadd.f32 %v2929, %v2933
    %v2935 = vadd.f32 %v2930, %v2933
    %v2936 = vadd.f32 %v2931, %v2933
    %v2937 = vadd.f32 %v2932, %v2933
    %v2938 = vld [vmem:[%s2 + $0x130] sm:$0xff]
    %v2939 = vld [vmem:[%s2 + $0x138] sm:$0xff]
    %v2940 = vld [vmem:[%s2 + $0x140] sm:$0xff]
    %v2941 = vld [vmem:[%s2 + $0x148] sm:$0xff]
    %v2942 = vld [vmem:[%s2 + $0x150] sm:$0x1]
    %v2943 = vld [vmem:[%s2 + $0x158] sm:$0xff]
    %v2944 = vld [vmem:[%s2 + $0x160] sm:$0xff]
    %v2945 = vld [vmem:[%s2 + $0x168] sm:$0xff]
    %v2946 = vld [vmem:[%s2 + $0x170] sm:$0xff]
    %v2947 = vld [vmem:[%s2 + $0x178] sm:$0xff]
    %v2948 = vld [vmem:[%s2 + $0x180] sm:$0xff]
    %v2949 = vld [vmem:[%s2 + $0x188] sm:$0xff]
    %v2950 = vld [vmem:[%s2 + $0x190] sm:$0xff]
    %v2951 = vld [vmem:[%s2 + $0x198] sm:$0x1]
    %v2952 = vperm.slane %v2942, 0
    %v2954 = vsel %vm21, %v2934, 0
    %v2957 = vsel %vm21, %v2935, 0
    %v2960 = vsel %vm21, %v2936, 0
    %v2963 = vsel %vm21, %v2937, 0
    %2965 = vmatpush.msra.mxu0 0.0
    %2966 = vmatpush.msra.mxu0 0.0
    %2967 = vmatpush.msra.mxu0 0.0
    %2968 = vmatpush.msra.mxu0 0.0
    %2969 = vmatpush.msra.mxu0 0.0
    %2970 = vmatpush.msra.mxu0 0.0
    %2971 = vmatpush.msra.mxu0 0.0
    %2972 = vmatpush.msra.mxu0 0.0
    %2973 = vmatpush.msra.mxu0 0.0
    %2974 = vmatpush.msra.mxu0 0.0
    %2975 = vmatpush.msra.mxu0 0.0
    %2976 = vmatpush.msra.mxu0 0.0
    %2977 = vmatpush.msra.mxu0 %v2941
    %2978 = vmatpush.msra.mxu0 %v2940
    %2979 = vmatpush.msra.mxu0 %v2939
    %2980 = vmatpush.msra.mxu0 %v2938
    %2981 = vmatmul.f32.gmra.mxu0 %v2954
    %v2982 = vpop.f32.mrf.mxu0
    %v2983 = vadd.f32 %v2952, %v2982
    %2984 = vmatmul.f32.gmra.mxu0 %v2957
    %v2985 = vpop.f32.mrf.mxu0
    %v2986 = vadd.f32 %v2952, %v2985
    %2987 = vmatmul.f32.gmra.mxu0 %v2960
    %v2988 = vpop.f32.mrf.mxu0
    %v2989 = vadd.f32 %v2952, %v2988
    %2990 = vmatmul.f32.gmra.mxu0 %v2963
    %v2991 = vpop.f32.mrf.mxu0
    %v2992 = vadd.f32 %v2952, %v2991
    %2993 = vdwg.mxu0
    %v2994 = vmax.f32 %v2983, 0.0
    %v2995 = vmax.f32 %v2986, 0.0
    %v2996 = vmax.f32 %v2989, 0.0
    %v2997 = vmax.f32 %v2992, 0.0
    %v2998 = vperm.slane %v2951, 0
    %v3000 = vsel %vm1491, %v2994, 0
    %v3003 = vsel %vm1491, %v2995, 0
    %v3006 = vsel %vm1491, %v2996, 0
    %v3009 = vsel %vm1491, %v2997, 0
    %3011 = vmatpush.msra.mxu0 0.0
    %3012 = vmatpush.msra.mxu0 0.0
    %3013 = vmatpush.msra.mxu0 0.0
    %3014 = vmatpush.msra.mxu0 0.0
    %3015 = vmatpush.msra.mxu0 0.0
    %3016 = vmatpush.msra.mxu0 0.0
    %3017 = vmatpush.msra.mxu0 0.0
    %3018 = vmatpush.msra.mxu0 0.0
    %3019 = vmatpush.msra.mxu0 %v2950
    %3020 = vmatpush.msra.mxu0 %v2949
    %3021 = vmatpush.msra.mxu0 %v2948
    %3022 = vmatpush.msra.mxu0 %v2947
    %3023 = vmatpush.msra.mxu0 %v2946
    %3024 = vmatpush.msra.mxu0 %v2945
    %3025 = vmatpush.msra.mxu0 %v2944
    %3026 = vmatpush.msra.mxu0 %v2943
    %3027 = vmatmul.f32.gmra.mxu0 %v3000
    %v3028 = vpop.f32.mrf.mxu0
    %v3029 = vadd.f32 %v2998, %v3028
    %3030 = vmatmul.f32.gmra.mxu0 %v3003
    %v3031 = vpop.f32.mrf.mxu0
    %v3032 = vadd.f32 %v2998, %v3031
    %3033 = vmatmul.f32.gmra.mxu0 %v3006
    %v3034 = vpop.f32.mrf.mxu0
    %v3035 = vadd.f32 %v2998, %v3034
    %3036 = vmatmul.f32.gmra.mxu0 %v3009
    %v3037 = vpop.f32.mrf.mxu0
    %v3038 = vadd.f32 %v2998, %v3037
    %3039 = vdwg.mxu0
    %v3040 = vadd.f32 %v2770, %v3029
    %v3041 = vadd.f32 %v2771, %v3032
    %v3042 = vadd.f32 %v2772, %v3035
    %v3043 = vadd.f32 %v2773, %v3038
    %v3044 = vld [vmem:[%s2 + $0x1a0] sm:$0x1]
    %v3045 = vld [vmem:[%s2 + $0x1a8] sm:$0x1]
    %v3046 = vsel %vm21, %v3040, 0.0
    %3047 = vadd.xlane.f32.xlu0 %v3046
    %v3048 = vpop.xlane.xlu0 %3047
    %v3049 = vsel %vm21, %v3041, 0.0
    %3050 = vadd.xlane.f32.xlu0 %v3049
    %v3051 = vpop.xlane.xlu0 %3050
    %v3052 = vsel %vm21, %v3042, 0.0
    %3053 = vadd.xlane.f32.xlu0 %v3052
    %v3054 = vpop.xlane.xlu0 %3053
    %v3055 = vsel %vm21, %v3043, 0.0
    %3056 = vadd.xlane.f32.xlu0 %v3055
    %v3057 = vpop.xlane.xlu0 %3056
    %v3058 = vmul.f32 %v3048, %v40
    %v3059 = vmul.f32 %v3051, %v40
    %v3060 = vmul.f32 %v3054, %v40
    %v3061 = vmul.f32 %v3057, %v40
    %v3062 = vsub.f32 %v3040, %v3058
    %v3063 = vsub.f32 %v3041, %v3059
    %v3064 = vsub.f32 %v3042, %v3060
    %v3065 = vsub.f32 %v3043, %v3061
    %v3066 = vmul.f32 %v3062, %v3062
    %v3067 = vmul.f32 %v3063, %v3063
    %v3068 = vmul.f32 %v3064, %v3064
    %v3069 = vmul.f32 %v3065, %v3065
    %v3070 = vsel %vm21, %v3066, 0.0
    %3071 = vadd.xlane.f32.xlu0 %v3070
    %v3072 = vpop.xlane.xlu0 %3071
    %v3073 = vsel %vm21, %v3067, 0.0
    %3074 = vadd.xlane.f32.xlu0 %v3073
    %v3075 = vpop.xlane.xlu0 %3074
    %v3076 = vsel %vm21, %v3068, 0.0
    %3077 = vadd.xlane.f32.xlu0 %v3076
    %v3078 = vpop.xlane.xlu0 %3077
    %v3079 = vsel %vm21, %v3069, 0.0
    %3080 = vadd.xlane.f32.xlu0 %v3079
    %v3081 = vpop.xlane.xlu0 %3080
    %v3082 = vmul.f32 %v3072, 0.032258064
    %v3083 = vmul.f32 %v3075, 0.032258064
    %v3084 = vmul.f32 %v3078, 0.032258064
    %v3085 = vmul.f32 %v3081, 0.032258064
    %v3086 = vrsqrt.pop %v3082
    %v3087 = vmul.f32 %v3086, %v3082
    %v3088 = vmul.f32 %v3087, %v3086
    %v3089 = vmul.f32 0.5, %v3088
    %v3090 = vsub.f32 1.5, %v3089
    %v3091 = vmul.f32 %v3086, %v3090
    %v3092 = vmul.f32 %v3082, %v3091
    %vm3093 = vcmp.eq.f32.partialorder %v3082, inf
    %v3094 = vsel %vm3093, %v3082, %v3092
    %vm3095 = vcmp.eq.f32.partialorder %v3082, 0.0
    %v3096 = vand.u32 %v3082, 2147483648
    %v3097 = vsel %vm3095, %v3096, %v3094
    %v3098 = vrsqrt.pop %v3083
    %v3099 = vmul.f32 %v3098, %v3083
    %v3100 = vmul.f32 %v3099, %v3098
    %v3101 = vmul.f32 0.5, %v3100
    %v3102 = vsub.f32 1.5, %v3101
    %v3103 = vmul.f32 %v3098, %v3102
    %v3104 = vmul.f32 %v3083, %v3103
    %vm3105 = vcmp.eq.f32.partialorder %v3083, inf
    %v3106 = vsel %vm3105, %v3083, %v3104
    %vm3107 = vcmp.eq.f32.partialorder %v3083, 0.0
    %v3108 = vand.u32 %v3083, 2147483648
    %v3109 = vsel %vm3107, %v3108, %v3106
    %v3110 = vrsqrt.pop %v3084
    %v3111 = vmul.f32 %v3110, %v3084
    %v3112 = vmul.f32 %v3111, %v3110
    %v3113 = vmul.f32 0.5, %v3112
    %v3114 = vsub.f32 1.5, %v3113
    %v3115 = vmul.f32 %v3110, %v3114
    %v3116 = vmul.f32 %v3084, %v3115
    %vm3117 = vcmp.eq.f32.partialorder %v3084, inf
    %v3118 = vsel %vm3117, %v3084, %v3116
    %vm3119 = vcmp.eq.f32.partialorder %v3084, 0.0
    %v3120 = vand.u32 %v3084, 2147483648
    %v3121 = vsel %vm3119, %v3120, %v3118
    %v3122 = vrsqrt.pop %v3085
    %v3123 = vmul.f32 %v3122, %v3085
    %v3124 = vmul.f32 %v3123, %v3122
    %v3125 = vmul.f32 0.5, %v3124
    %v3126 = vsub.f32 1.5, %v3125
    %v3127 = vmul.f32 %v3122, %v3126
    %v3128 = vmul.f32 %v3085, %v3127
    %vm3129 = vcmp.eq.f32.partialorder %v3085, inf
    %v3130 = vsel %vm3129, %v3085, %v3128
    %vm3131 = vcmp.eq.f32.partialorder %v3085, 0.0
    %v3132 = vand.u32 %v3085, 2147483648
    %v3133 = vsel %vm3131, %v3132, %v3130
    %v3134 = vadd.f32 %v3097, 1e-05
    %v3135 = vadd.f32 %v3109, 1e-05
    %v3136 = vadd.f32 %v3121, 1e-05
    %v3137 = vadd.f32 %v3133, 1e-05
    %v3138 = vrcp.pop %v3134
    %v3139 = vmul.f32 %v3134, %v3138
    %v3140 = vsub.f32 1.0, %v3139
    %v3141 = vmul.f32 %v3138, %v3140
    %v3142 = vadd.f32 %v3138, %v3141
    %vm3143 = vweird.f32 %v3134
    %vm3144 = vweird.f32 %v3138
    %vm3145 = vmor %vm3143, %vm3144
    %v3146 = vsel %vm3145, %v3138, %v3142
    %v3147 = vand.u32 2147483647, %v3134
    %vm3148 = vcmp.eq.f32.partialorder %v3147, 8.507059e+37
    %v3149 = vand.u32 %v3134, 2147483648
    %v3150 = vor.u32 1.1754944e-38, %v3149
    %v3151 = vsel %vm3148, %v3150, %v3146
    %v3152 = vmul.f32 %v3062, %v3151
    %v3153 = vrcp.pop %v3135
    %v3154 = vmul.f32 %v3135, %v3153
    %v3155 = vsub.f32 1.0, %v3154
    %v3156 = vmul.f32 %v3153, %v3155
    %v3157 = vadd.f32 %v3153, %v3156
    %vm3158 = vweird.f32 %v3135
    %vm3159 = vweird.f32 %v3153
    %vm3160 = vmor %vm3158, %vm3159
    %v3161 = vsel %vm3160, %v3153, %v3157
    %v3162 = vand.u32 2147483647, %v3135
    %vm3163 = vcmp.eq.f32.partialorder %v3162, 8.507059e+37
    %v3164 = vand.u32 %v3135, 2147483648
    %v3165 = vor.u32 1.1754944e-38, %v3164
    %v3166 = vsel %vm3163, %v3165, %v3161
    %v3167 = vmul.f32 %v3063, %v3166
    %v3168 = vrcp.pop %v3136
    %v3169 = vmul.f32 %v3136, %v3168
    %v3170 = vsub.f32 1.0, %v3169
    %v3171 = vmul.f32 %v3168, %v3170
    %v3172 = vadd.f32 %v3168, %v3171
    %vm3173 = vweird.f32 %v3136
    %vm3174 = vweird.f32 %v3168
    %vm3175 = vmor %vm3173, %vm3174
    %v3176 = vsel %vm3175, %v3168, %v3172
    %v3177 = vand.u32 2147483647, %v3136
    %vm3178 = vcmp.eq.f32.partialorder %v3177, 8.507059e+37
    %v3179 = vand.u32 %v3136, 2147483648
    %v3180 = vor.u32 1.1754944e-38, %v3179
    %v3181 = vsel %vm3178, %v3180, %v3176
    %v3182 = vmul.f32 %v3064, %v3181
    %v3183 = vrcp.pop %v3137
    %v3184 = vmul.f32 %v3137, %v3183
    %v3185 = vsub.f32 1.0, %v3184
    %v3186 = vmul.f32 %v3183, %v3185
    %v3187 = vadd.f32 %v3183, %v3186
    %vm3188 = vweird.f32 %v3137
    %vm3189 = vweird.f32 %v3183
    %vm3190 = vmor %vm3188, %vm3189
    %v3191 = vsel %vm3190, %v3183, %v3187
    %v3192 = vand.u32 2147483647, %v3137
    %vm3193 = vcmp.eq.f32.partialorder %v3192, 8.507059e+37
    %v3194 = vand.u32 %v3137, 2147483648
    %v3195 = vor.u32 1.1754944e-38, %v3194
    %v3196 = vsel %vm3193, %v3195, %v3191
    %v3197 = vmul.f32 %v3065, %v3196
    %v3198 = vperm.slane %v3044, 0
    %v3199 = vmul.f32 %v3198, %v3152
    %v3200 = vmul.f32 %v3198, %v3167
    %v3201 = vmul.f32 %v3198, %v3182
    %v3202 = vmul.f32 %v3198, %v3197
    %v3203 = vperm.slane %v3045, 0
    %v3204 = vadd.f32 %v3199, %v3203
    %v3205 = vadd.f32 %v3200, %v3203
    %v3206 = vadd.f32 %v3201, %v3203
    %v3207 = vadd.f32 %v3202, %v3203
    %v3208 = vld [vmem:[%s1] sm:$0xff]
    %v3209 = vld [vmem:[%s1 + $0x8] sm:$0xff]
    %v3210 = vld [vmem:[%s2 + $0x1b0] sm:$0x1]
    %v3211 = vld [vmem:[%s2 + $0x1b8] sm:$0x1]
    %v3212 = vsel %vm21, %v3208, 0.0
    %3213 = vadd.xlane.f32.xlu0 %v3212
    %v3214 = vpop.xlane.xlu0 %3213
    %v3215 = vsel %vm21, %v3209, 0.0
    %3216 = vadd.xlane.f32.xlu0 %v3215
    %v3217 = vpop.xlane.xlu0 %3216
    %v3218 = vmul.f32 %v3214, %v40
    %v3219 = vmul.f32 %v3217, %v40
    %v3220 = vsub.f32 %v3208, %v3218
    %v3221 = vsub.f32 %v3209, %v3219
    %v3222 = vmul.f32 %v3220, %v3220
    %v3223 = vmul.f32 %v3221, %v3221
    %v3224 = vsel %vm21, %v3222, 0.0
    %3225 = vadd.xlane.f32.xlu0 %v3224
    %v3226 = vpop.xlane.xlu0 %3225
    %v3227 = vsel %vm21, %v3223, 0.0
    %3228 = vadd.xlane.f32.xlu0 %v3227
    %v3229 = vpop.xlane.xlu0 %3228
    %v3230 = vmul.f32 %v3226, 0.032258064
    %v3231 = vmul.f32 %v3229, 0.032258064
    %v3232 = vrsqrt.pop %v3230
    %v3233 = vmul.f32 %v3232, %v3230
    %v3234 = vmul.f32 %v3233, %v3232
    %v3235 = vmul.f32 0.5, %v3234
    %v3236 = vsub.f32 1.5, %v3235
    %v3237 = vmul.f32 %v3232, %v3236
    %v3238 = vmul.f32 %v3230, %v3237
    %vm3239 = vcmp.eq.f32.partialorder %v3230, inf
    %v3240 = vsel %vm3239, %v3230, %v3238
    %vm3241 = vcmp.eq.f32.partialorder %v3230, 0.0
    %v3242 = vand.u32 %v3230, 2147483648
    %v3243 = vsel %vm3241, %v3242, %v3240
    %v3244 = vrsqrt.pop %v3231
    %v3245 = vmul.f32 %v3244, %v3231
    %v3246 = vmul.f32 %v3245, %v3244
    %v3247 = vmul.f32 0.5, %v3246
    %v3248 = vsub.f32 1.5, %v3247
    %v3249 = vmul.f32 %v3244, %v3248
    %v3250 = vmul.f32 %v3231, %v3249
    %vm3251 = vcmp.eq.f32.partialorder %v3231, inf
    %v3252 = vsel %vm3251, %v3231, %v3250
    %vm3253 = vcmp.eq.f32.partialorder %v3231, 0.0
    %v3254 = vand.u32 %v3231, 2147483648
    %v3255 = vsel %vm3253, %v3254, %v3252
    %v3256 = vadd.f32 %v3243, 1e-05
    %v3257 = vadd.f32 %v3255, 1e-05
    %v3258 = vrcp.pop %v3256
    %v3259 = vmul.f32 %v3256, %v3258
    %v3260 = vsub.f32 1.0, %v3259
    %v3261 = vmul.f32 %v3258, %v3260
    %v3262 = vadd.f32 %v3258, %v3261
    %vm3263 = vweird.f32 %v3256
    %vm3264 = vweird.f32 %v3258
    %vm3265 = vmor %vm3263, %vm3264
    %v3266 = vsel %vm3265, %v3258, %v3262
    %v3267 = vand.u32 2147483647, %v3256
    %vm3268 = vcmp.eq.f32.partialorder %v3267, 8.507059e+37
    %v3269 = vand.u32 %v3256, 2147483648
    %v3270 = vor.u32 1.1754944e-38, %v3269
    %v3271 = vsel %vm3268, %v3270, %v3266
    %v3272 = vmul.f32 %v3220, %v3271
    %v3273 = vrcp.pop %v3257
    %v3274 = vmul.f32 %v3257, %v3273
    %v3275 = vsub.f32 1.0, %v3274
    %v3276 = vmul.f32 %v3273, %v3275
    %v3277 = vadd.f32 %v3273, %v3276
    %vm3278 = vweird.f32 %v3257
    %vm3279 = vweird.f32 %v3273
    %vm3280 = vmor %vm3278, %vm3279
    %v3281 = vsel %vm3280, %v3273, %v3277
    %v3282 = vand.u32 2147483647, %v3257
    %vm3283 = vcmp.eq.f32.partialorder %v3282, 8.507059e+37
    %v3284 = vand.u32 %v3257, 2147483648
    %v3285 = vor.u32 1.1754944e-38, %v3284
    %v3286 = vsel %vm3283, %v3285, %v3281
    %v3287 = vmul.f32 %v3221, %v3286
    %v3288 = vperm.slane %v3210, 0
    %v3289 = vmul.f32 %v3288, %v3272
    %v3290 = vmul.f32 %v3288, %v3287
    %v3291 = vperm.slane %v3211, 0
    %v3292 = vadd.f32 %v3289, %v3291
    %v3293 = vadd.f32 %v3290, %v3291
    %v3294 = vld [vmem:[%s2 + $0x1c0] sm:$0xff]
    %v3295 = vld [vmem:[%s2 + $0x1c8] sm:$0xff]
    %v3296 = vld [vmem:[%s2 + $0x1d0] sm:$0xff]
    %v3297 = vld [vmem:[%s2 + $0x1d8] sm:$0xff]
    %v3298 = vld [vmem:[%s2 + $0x1e0] sm:$0xff]
    %v3299 = vld [vmem:[%s2 + $0x1e8] sm:$0xff]
    %v3300 = vld [vmem:[%s2 + $0x1f0] sm:$0xff]
    %v3301 = vld [vmem:[%s2 + $0x1f8] sm:$0xff]
    %v3303 = vsel %vm21, %v3292, 0
    %v3306 = vsel %vm21, %v3293, 0
    %3308 = vmatpush.msra.mxu0 0.0
    %3309 = vmatpush.msra.mxu0 0.0
    %3310 = vmatpush.msra.mxu0 0.0
    %3311 = vmatpush.msra.mxu0 0.0
    %3312 = vmatpush.msra.mxu0 0.0
    %3313 = vmatpush.msra.mxu0 0.0
    %3314 = vmatpush.msra.mxu0 0.0
    %3315 = vmatpush.msra.mxu0 0.0
    %3316 = vmatpush.msra.mxu0 0.0
    %3317 = vmatpush.msra.mxu0 0.0
    %3318 = vmatpush.msra.mxu0 0.0
    %3319 = vmatpush.msra.mxu0 0.0
    %3320 = vmatpush.msra.mxu0 %v3297
    %3321 = vmatpush.msra.mxu0 %v3296
    %3322 = vmatpush.msra.mxu0 %v3295
    %3323 = vmatpush.msra.mxu0 %v3294
    %3324 = vmatmul.f32.gmra.mxu0 %v3303
    %v3325 = vpop.f32.mrf.mxu0
    %v3326 = vadd.f32 0.0, %v3325
    %3327 = vmatmul.f32.gmra.mxu0 %v3306
    %v3328 = vpop.f32.mrf.mxu0
    %v3329 = vadd.f32 0.0, %v3328
    %3330 = vdwg.mxu0
    %3332 = vrot.lane.b32.xlu0 %v3326, 96
    %v3333 = vpop.permute.xlu0 %3332
    %v3334 = vsel %vm246, %v3326, 0
    %v3336 = vsel %vm246, %v3333, 0
    %3338 = vmatpush.xpose.msra.mxu0 0.0
    %3339 = vmatpush.xpose.msra.mxu0 0.0
    %3340 = vmatpush.xpose.msra.mxu0 0.0
    %3341 = vmatpush.xpose.msra.mxu0 0.0
    %3342 = vmatpush.xpose.msra.mxu0 0.0
    %3343 = vmatpush.xpose.msra.mxu0 0.0
    %3344 = vmatpush.xpose.msra.mxu0 0.0
    %3345 = vmatpush.xpose.msra.mxu0 0.0
    %3346 = vmatpush.xpose.msra.mxu0 0.0
    %3347 = vmatpush.xpose.msra.mxu0 0.0
    %3348 = vmatpush.xpose.msra.mxu0 0.0
    %3349 = vmatpush.xpose.msra.mxu0 0.0
    %3350 = vmatpush.xpose.msra.mxu0 0.0
    %3351 = vmatpush.xpose.msra.mxu0 0.0
    %3352 = vmatpush.xpose.msra.mxu0 0.0
    %3353 = vmatpush.xpose.msra.mxu0 %v3336
    %3354 = vmatmul.f32.gmra.mxu0 %v3334
    %v3355 = vpop.f32.mrf.mxu0
    %v3356 = vadd.f32 0.0, %v3355
    %3357 = vdwg.mxu0
    %v3358 = vmul.f32 %v3356, 0.35355338
    %v3359 = vsel %vm246, %v3358, -inf
    %3360 = vmax.xlane.f32.xlu0 %v3359
    %v3361 = vpop.xlane.xlu0 %3360
    %v3362 = vsub.f32 %v3358, %v3361
    %v3363 = vmul.f32 %v3362, 1.442695
    %v3364 = vpow.pop %v3363
    %v3365 = vsel %vm246, %v3364, 0.0
    %3366 = vadd.xlane.f32.xlu0 %v3365
    %v3367 = vpop.xlane.xlu0 %3366
    %v3368 = vrcp.pop %v3367
    %v3369 = vmul.f32 %v3364, %v3368
    %3370 = vrot.lane.b32.xlu0 %v3326, 64
    %v3371 = vpop.permute.xlu0 %3370
    %v3374 = vsel %vm246, %v3369, 0
    %3376 = vmatpush.msra.mxu0 0.0
    %3377 = vmatpush.msra.mxu0 0.0
    %3378 = vmatpush.msra.mxu0 0.0
    %3379 = vmatpush.msra.mxu0 0.0
    %3380 = vmatpush.msra.mxu0 0.0
    %3381 = vmatpush.msra.mxu0 0.0
    %3382 = vmatpush.msra.mxu0 0.0
    %3383 = vmatpush.msra.mxu0 0.0
    %3384 = vmatpush.msra.mxu0 0.0
    %3385 = vmatpush.msra.mxu0 0.0
    %3386 = vmatpush.msra.mxu0 0.0
    %3387 = vmatpush.msra.mxu0 0.0
    %3388 = vmatpush.msra.mxu0 0.0
    %3389 = vmatpush.msra.mxu0 0.0
    %3390 = vmatpush.msra.mxu0 0.0
    %3391 = vmatpush.msra.mxu0 %v3371
    %3392 = vmatmul.f32.gmra.mxu0 %v3374
    %v3393 = vpop.f32.mrf.mxu0
    %v3394 = vadd.f32 0.0, %v3393
    %3395 = vdwg.mxu0
    %3397 = vrot.lane.b32.xlu0 %v3329, 96
    %v3398 = vpop.permute.xlu0 %3397
    %v3399 = vsel %vm246, %v3329, 0
    %v3401 = vsel %vm246, %v3398, 0
    %3403 = vmatpush.xpose.msra.mxu0 0.0
    %3404 = vmatpush.xpose.msra.mxu0 0.0
    %3405 = vmatpush.xpose.msra.mxu0 0.0
    %3406 = vmatpush.xpose.msra.mxu0 0.0
    %3407 = vmatpush.xpose.msra.mxu0 0.0
    %3408 = vmatpush.xpose.msra.mxu0 0.0
    %3409 = vmatpush.xpose.msra.mxu0 0.0
    %3410 = vmatpush.xpose.msra.mxu0 0.0
    %3411 = vmatpush.xpose.msra.mxu0 0.0
    %3412 = vmatpush.xpose.msra.mxu0 0.0
    %3413 = vmatpush.xpose.msra.mxu0 0.0
    %3414 = vmatpush.xpose.msra.mxu0 0.0
    %3415 = vmatpush.xpose.msra.mxu0 0.0
    %3416 = vmatpush.xpose.msra.mxu0 0.0
    %3417 = vmatpush.xpose.msra.mxu0 0.0
    %3418 = vmatpush.xpose.msra.mxu0 %v3401
    %3419 = vmatmul.f32.gmra.mxu0 %v3399
    %v3420 = vpop.f32.mrf.mxu0
    %v3421 = vadd.f32 0.0, %v3420
    %3422 = vdwg.mxu0
    %v3423 = vmul.f32 %v3421, 0.35355338
    %v3424 = vsel %vm246, %v3423, -inf
    %3425 = vmax.xlane.f32.xlu0 %v3424
    %v3426 = vpop.xlane.xlu0 %3425
    %v3427 = vsub.f32 %v3423, %v3426
    %v3428 = vmul.f32 %v3427, 1.442695
    %v3429 = vpow.pop %v3428
    %v3430 = vsel %vm246, %v3429, 0.0
    %3431 = vadd.xlane.f32.xlu0 %v3430
    %v3432 = vpop.xlane.xlu0 %3431
    %v3433 = vrcp.pop %v3432
    %v3434 = vmul.f32 %v3429, %v3433
    %3435 = vrot.lane.b32.xlu0 %v3329, 64
    %v3436 = vpop.permute.xlu0 %3435
    %v3439 = vsel %vm246, %v3434, 0
    %3441 = vmatpush.msra.mxu0 0.0
    %3442 = vmatpush.msra.mxu0 0.0
    %3443 = vmatpush.msra.mxu0 0.0
    %3444 = vmatpush.msra.mxu0 0.0
    %3445 = vmatpush.msra.mxu0 0.0
    %3446 = vmatpush.msra.mxu0 0.0
    %3447 = vmatpush.msra.mxu0 0.0
    %3448 = vmatpush.msra.mxu0 0.0
    %3449 = vmatpush.msra.mxu0 0.0
    %3450 = vmatpush.msra.mxu0 0.0
    %3451 = vmatpush.msra.mxu0 0.0
    %3452 = vmatpush.msra.mxu0 0.0
    %3453 = vmatpush.msra.mxu0 0.0
    %3454 = vmatpush.msra.mxu0 0.0
    %3455 = vmatpush.msra.mxu0 0.0
    %3456 = vmatpush.msra.mxu0 %v3436
    %3457 = vmatmul.f32.gmra.mxu0 %v3439
    %v3458 = vpop.f32.mrf.mxu0
    %v3459 = vadd.f32 0.0, %v3458
    %3460 = vdwg.mxu0
    %3461 = vrot.lane.b32.xlu0 %v3326, 120
    %v3462 = vpop.permute.xlu0 %3461
    %3463 = vrot.lane.b32.xlu0 %v3326, 88
    %v3464 = vpop.permute.xlu0 %3463
    %v3465 = vsel %vm246, %v3462, 0
    %v3467 = vsel %vm246, %v3464, 0
    %3469 = vmatpush.xpose.msra.mxu0 0.0
    %3470 = vmatpush.xpose.msra.mxu0 0.0
    %3471 = vmatpush.xpose.msra.mxu0 0.0
    %3472 = vmatpush.xpose.msra.mxu0 0.0
    %3473 = vmatpush.xpose.msra.mxu0 0.0
    %3474 = vmatpush.xpose.msra.mxu0 0.0
    %3475 = vmatpush.xpose.msra.mxu0 0.0
    %3476 = vmatpush.xpose.msra.mxu0 0.0
    %3477 = vmatpush.xpose.msra.mxu0 0.0
    %3478 = vmatpush.xpose.msra.mxu0 0.0
    %3479 = vmatpush.xpose.msra.mxu0 0.0
    %3480 = vmatpush.xpose.msra.mxu0 0.0
    %3481 = vmatpush.xpose.msra.mxu0 0.0
    %3482 = vmatpush.xpose.msra.mxu0 0.0
    %3483 = vmatpush.xpose.msra.mxu0 0.0
    %3484 = vmatpush.xpose.msra.mxu0 %v3467
    %3485 = vmatmul.f32.gmra.mxu0 %v3465
    %v3486 = vpop.f32.mrf.mxu0
    %v3487 = vadd.f32 0.0, %v3486
    %3488 = vdwg.mxu0
    %v3489 = vmul.f32 %v3487, 0.35355338
    %v3490 = vsel %vm246, %v3489, -inf
    %3491 = vmax.xlane.f32.xlu0 %v3490
    %v3492 = vpop.xlane.xlu0 %3491
    %v3493 = vsub.f32 %v3489, %v3492
    %v3494 = vmul.f32 %v3493, 1.442695
    %v3495 = vpow.pop %v3494
    %v3496 = vsel %vm246, %v3495, 0.0
    %3497 = vadd.xlane.f32.xlu0 %v3496
    %v3498 = vpop.xlane.xlu0 %3497
    %v3499 = vrcp.pop %v3498
    %v3500 = vmul.f32 %v3495, %v3499
    %3501 = vrot.lane.b32.xlu0 %v3326, 56
    %v3502 = vpop.permute.xlu0 %3501
    %v3505 = vsel %vm246, %v3500, 0
    %3507 = vmatpush.msra.mxu0 0.0
    %3508 = vmatpush.msra.mxu0 0.0
    %3509 = vmatpush.msra.mxu0 0.0
    %3510 = vmatpush.msra.mxu0 0.0
    %3511 = vmatpush.msra.mxu0 0.0
    %3512 = vmatpush.msra.mxu0 0.0
    %3513 = vmatpush.msra.mxu0 0.0
    %3514 = vmatpush.msra.mxu0 0.0
    %3515 = vmatpush.msra.mxu0 0.0
    %3516 = vmatpush.msra.mxu0 0.0
    %3517 = vmatpush.msra.mxu0 0.0
    %3518 = vmatpush.msra.mxu0 0.0
    %3519 = vmatpush.msra.mxu0 0.0
    %3520 = vmatpush.msra.mxu0 0.0
    %3521 = vmatpush.msra.mxu0 0.0
    %3522 = vmatpush.msra.mxu0 %v3502
    %3523 = vmatmul.f32.gmra.mxu0 %v3505
    %v3524 = vpop.f32.mrf.mxu0
    %v3525 = vadd.f32 0.0, %v3524
    %3526 = vdwg.mxu0
    %v3528 = vsel %vm246, %v3525, 0
    %3530 = vmatpush.msra.mxu0 0.0
    %3531 = vmatpush.msra.mxu0 0.0
    %3532 = vmatpush.msra.mxu0 0.0
    %3533 = vmatpush.msra.mxu0 0.0
    %3534 = vmatpush.msra.mxu0 0.0
    %3535 = vmatpush.msra.mxu0 0.0
    %3536 = vmatpush.msra.mxu0 0.0
    %3537 = vmatpush.msra.mxu0 0.0
    %3538 = vmatpush.msra.mxu0 0.0
    %3539 = vmatpush.msra.mxu0 0.0
    %3540 = vmatpush.msra.mxu0 0.0
    %3541 = vmatpush.msra.mxu0 0.0
    %3542 = vmatpush.msra.mxu0 0.0
    %3543 = vmatpush.msra.mxu0 0.0
    %3544 = vmatpush.msra.mxu0 0.0
    %3545 = vmatpush.msra.mxu0 %v3299
    %3546 = vmatmul.f32.gmra.mxu0 %v3528
    %v3547 = vpop.f32.mrf.mxu0
    %v3548 = vadd.f32 0.0, %v3547
    %3549 = vdwg.mxu0
    %v3551 = vsel %vm246, %v3394, 0
    %3553 = vmatpush.msra.mxu0 0.0
    %3554 = vmatpush.msra.mxu0 0.0
    %3555 = vmatpush.msra.mxu0 0.0
    %3556 = vmatpush.msra.mxu0 0.0
    %3557 = vmatpush.msra.mxu0 0.0
    %3558 = vmatpush.msra.mxu0 0.0
    %3559 = vmatpush.msra.mxu0 0.0
    %3560 = vmatpush.msra.mxu0 0.0
    %3561 = vmatpush.msra.mxu0 0.0
    %3562 = vmatpush.msra.mxu0 0.0
    %3563 = vmatpush.msra.mxu0 0.0
    %3564 = vmatpush.msra.mxu0 0.0
    %3565 = vmatpush.msra.mxu0 0.0
    %3566 = vmatpush.msra.mxu0 0.0
    %3567 = vmatpush.msra.mxu0 0.0
    %3568 = vmatpush.msra.mxu0 %v3298
    %3569 = vmatmul.f32.gmra.mxu0 %v3551
    %v3570 = vpop.f32.mrf.mxu0
    %v3571 = vadd.f32 %v3548, %v3570
    %3572 = vdwg.mxu0
    %3573 = vrot.lane.b32.xlu0 %v3329, 120
    %v3574 = vpop.permute.xlu0 %3573
    %3575 = vrot.lane.b32.xlu0 %v3329, 88
    %v3576 = vpop.permute.xlu0 %3575
    %v3577 = vsel %vm246, %v3574, 0
    %v3579 = vsel %vm246, %v3576, 0
    %3581 = vmatpush.xpose.msra.mxu0 0.0
    %3582 = vmatpush.xpose.msra.mxu0 0.0
    %3583 = vmatpush.xpose.msra.mxu0 0.0
    %3584 = vmatpush.xpose.msra.mxu0 0.0
    %3585 = vmatpush.xpose.msra.mxu0 0.0
    %3586 = vmatpush.xpose.msra.mxu0 0.0
    %3587 = vmatpush.xpose.msra.mxu0 0.0
    %3588 = vmatpush.xpose.msra.mxu0 0.0
    %3589 = vmatpush.xpose.msra.mxu0 0.0
    %3590 = vmatpush.xpose.msra.mxu0 0.0
    %3591 = vmatpush.xpose.msra.mxu0 0.0
    %3592 = vmatpush.xpose.msra.mxu0 0.0
    %3593 = vmatpush.xpose.msra.mxu0 0.0
    %3594 = vmatpush.xpose.msra.mxu0 0.0
    %3595 = vmatpush.xpose.msra.mxu0 0.0
    %3596 = vmatpush.xpose.msra.mxu0 %v3579
    %3597 = vmatmul.f32.gmra.mxu0 %v3577
    %v3598 = vpop.f32.mrf.mxu0
    %v3599 = vadd.f32 0.0, %v3598
    %3600 = vdwg.mxu0
    %v3601 = vmul.f32 %v3599, 0.35355338
    %v3602 = vsel %vm246, %v3601, -inf
    %3603 = vmax.xlane.f32.xlu0 %v3602
    %v3604 = vpop.xlane.xlu0 %3603
    %v3605 = vsub.f32 %v3601, %v3604
    %v3606 = vmul.f32 %v3605, 1.442695
    %v3607 = vpow.pop %v3606
    %v3608 = vsel %vm246, %v3607, 0.0
    %3609 = vadd.xlane.f32.xlu0 %v3608
    %v3610 = vpop.xlane.xlu0 %3609
    %v3611 = vrcp.pop %v3610
    %v3612 = vmul.f32 %v3607, %v3611
    %3613 = vrot.lane.b32.xlu0 %v3329, 56
    %v3614 = vpop.permute.xlu0 %3613
    %v3617 = vsel %vm246, %v3612, 0
    %3619 = vmatpush.msra.mxu0 0.0
    %3620 = vmatpush.msra.mxu0 0.0
    %3621 = vmatpush.msra.mxu0 0.0
    %3622 = vmatpush.msra.mxu0 0.0
    %3623 = vmatpush.msra.mxu0 0.0
    %3624 = vmatpush.msra.mxu0 0.0
    %3625 = vmatpush.msra.mxu0 0.0
    %3626 = vmatpush.msra.mxu0 0.0
    %3627 = vmatpush.msra.mxu0 0.0
    %3628 = vmatpush.msra.mxu0 0.0
    %3629 = vmatpush.msra.mxu0 0.0
    %3630 = vmatpush.msra.mxu0 0.0
    %3631 = vmatpush.msra.mxu0 0.0
    %3632 = vmatpush.msra.mxu0 0.0
    %3633 = vmatpush.msra.mxu0 0.0
    %3634 = vmatpush.msra.mxu0 %v3614
    %3635 = vmatmul.f32.gmra.mxu0 %v3617
    %v3636 = vpop.f32.mrf.mxu0
    %v3637 = vadd.f32 0.0, %v3636
    %3638 = vdwg.mxu0
    %v3640 = vsel %vm246, %v3637, 0
    %3642 = vmatpush.msra.mxu0 0.0
    %3643 = vmatpush.msra.mxu0 0.0
    %3644 = vmatpush.msra.mxu0 0.0
    %3645 = vmatpush.msra.mxu0 0.0
    %3646 = vmatpush.msra.mxu0 0.0
    %3647 = vmatpush.msra.mxu0 0.0
    %3648 = vmatpush.msra.mxu0 0.0
    %3649 = vmatpush.msra.mxu0 0.0
    %3650 = vmatpush.msra.mxu0 0.0
    %3651 = vmatpush.msra.mxu0 0.0
    %3652 = vmatpush.msra.mxu0 0.0
    %3653 = vmatpush.msra.mxu0 0.0
    %3654 = vmatpush.msra.mxu0 0.0
    %3655 = vmatpush.msra.mxu0 0.0
    %3656 = vmatpush.msra.mxu0 0.0
    %3657 = vmatpush.msra.mxu0 %v3299
    %3658 = vmatmul.f32.gmra.mxu0 %v3640
    %v3659 = vpop.f32.mrf.mxu0
    %v3660 = vadd.f32 0.0, %v3659
    %3661 = vdwg.mxu0
    %v3663 = vsel %vm246, %v3459, 0
    %3665 = vmatpush.msra.mxu0 0.0
    %3666 = vmatpush.msra.mxu0 0.0
    %3667 = vmatpush.msra.mxu0 0.0
    %3668 = vmatpush.msra.mxu0 0.0
    %3669 = vmatpush.msra.mxu0 0.0
    %3670 = vmatpush.msra.mxu0 0.0
    %3671 = vmatpush.msra.mxu0 0.0
    %3672 = vmatpush.msra.mxu0 0.0
    %3673 = vmatpush.msra.mxu0 0.0
    %3674 = vmatpush.msra.mxu0 0.0
    %3675 = vmatpush.msra.mxu0 0.0
    %3676 = vmatpush.msra.mxu0 0.0
    %3677 = vmatpush.msra.mxu0 0.0
    %3678 = vmatpush.msra.mxu0 0.0
    %3679 = vmatpush.msra.mxu0 0.0
    %3680 = vmatpush.msra.mxu0 %v3298
    %3681 = vmatmul.f32.gmra.mxu0 %v3663
    %v3682 = vpop.f32.mrf.mxu0
    %v3683 = vadd.f32 %v3660, %v3682
    %3684 = vdwg.mxu0
    %3685 = vrot.lane.b32.xlu0 %v3326, 112
    %v3686 = vpop.permute.xlu0 %3685
    %3687 = vrot.lane.b32.xlu0 %v3326, 80
    %v3688 = vpop.permute.xlu0 %3687
    %v3689 = vsel %vm246, %v3686, 0
    %v3691 = vsel %vm246, %v3688, 0
    %3693 = vmatpush.xpose.msra.mxu0 0.0
    %3694 = vmatpush.xpose.msra.mxu0 0.0
    %3695 = vmatpush.xpose.msra.mxu0 0.0
    %3696 = vmatpush.xpose.msra.mxu0 0.0
    %3697 = vmatpush.xpose.msra.mxu0 0.0
    %3698 = vmatpush.xpose.msra.mxu0 0.0
    %3699 = vmatpush.xpose.msra.mxu0 0.0
    %3700 = vmatpush.xpose.msra.mxu0 0.0
    %3701 = vmatpush.xpose.msra.mxu0 0.0
    %3702 = vmatpush.xpose.msra.mxu0 0.0
    %3703 = vmatpush.xpose.msra.mxu0 0.0
    %3704 = vmatpush.xpose.msra.mxu0 0.0
    %3705 = vmatpush.xpose.msra.mxu0 0.0
    %3706 = vmatpush.xpose.msra.mxu0 0.0
    %3707 = vmatpush.xpose.msra.mxu0 0.0
    %3708 = vmatpush.xpose.msra.mxu0 %v3691
    %3709 = vmatmul.f32.gmra.mxu0 %v3689
    %v3710 = vpop.f32.mrf.mxu0
    %v3711 = vadd.f32 0.0, %v3710
    %3712 = vdwg.mxu0
    %v3713 = vmul.f32 %v3711, 0.35355338
    %v3714 = vsel %vm246, %v3713, -inf
    %3715 = vmax.xlane.f32.xlu0 %v3714
    %v3716 = vpop.xlane.xlu0 %3715
    %v3717 = vsub.f32 %v3713, %v3716
    %v3718 = vmul.f32 %v3717, 1.442695
    %v3719 = vpow.pop %v3718
    %v3720 = vsel %vm246, %v3719, 0.0
    %3721 = vadd.xlane.f32.xlu0 %v3720
    %v3722 = vpop.xlane.xlu0 %3721
    %v3723 = vrcp.pop %v3722
    %v3724 = vmul.f32 %v3719, %v3723
    %3725 = vrot.lane.b32.xlu0 %v3326, 48
    %v3726 = vpop.permute.xlu0 %3725
    %v3729 = vsel %vm246, %v3724, 0
    %3731 = vmatpush.msra.mxu0 0.0
    %3732 = vmatpush.msra.mxu0 0.0
    %3733 = vmatpush.msra.mxu0 0.0
    %3734 = vmatpush.msra.mxu0 0.0
    %3735 = vmatpush.msra.mxu0 0.0
    %3736 = vmatpush.msra.mxu0 0.0
    %3737 = vmatpush.msra.mxu0 0.0
    %3738 = vmatpush.msra.mxu0 0.0
    %3739 = vmatpush.msra.mxu0 0.0
    %3740 = vmatpush.msra.mxu0 0.0
    %3741 = vmatpush.msra.mxu0 0.0
    %3742 = vmatpush.msra.mxu0 0.0
    %3743 = vmatpush.msra.mxu0 0.0
    %3744 = vmatpush.msra.mxu0 0.0
    %3745 = vmatpush.msra.mxu0 0.0
    %3746 = vmatpush.msra.mxu0 %v3726
    %3747 = vmatmul.f32.gmra.mxu0 %v3729
    %v3748 = vpop.f32.mrf.mxu0
    %v3749 = vadd.f32 0.0, %v3748
    %3750 = vdwg.mxu0
    %v3752 = vsel %vm246, %v3749, 0
    %3754 = vmatpush.msra.mxu0 0.0
    %3755 = vmatpush.msra.mxu0 0.0
    %3756 = vmatpush.msra.mxu0 0.0
    %3757 = vmatpush.msra.mxu0 0.0
    %3758 = vmatpush.msra.mxu0 0.0
    %3759 = vmatpush.msra.mxu0 0.0
    %3760 = vmatpush.msra.mxu0 0.0
    %3761 = vmatpush.msra.mxu0 0.0
    %3762 = vmatpush.msra.mxu0 0.0
    %3763 = vmatpush.msra.mxu0 0.0
    %3764 = vmatpush.msra.mxu0 0.0
    %3765 = vmatpush.msra.mxu0 0.0
    %3766 = vmatpush.msra.mxu0 0.0
    %3767 = vmatpush.msra.mxu0 0.0
    %3768 = vmatpush.msra.mxu0 0.0
    %3769 = vmatpush.msra.mxu0 %v3300
    %3770 = vmatmul.f32.gmra.mxu0 %v3752
    %v3771 = vpop.f32.mrf.mxu0
    %v3772 = vadd.f32 0.0, %v3771
    %3773 = vdwg.mxu0
    %v3774 = vadd.f32 %v3571, %v3772
    %3775 = vrot.lane.b32.xlu0 %v3329, 112
    %v3776 = vpop.permute.xlu0 %3775
    %3777 = vrot.lane.b32.xlu0 %v3329, 80
    %v3778 = vpop.permute.xlu0 %3777
    %v3779 = vsel %vm246, %v3776, 0
    %v3781 = vsel %vm246, %v3778, 0
    %3783 = vmatpush.xpose.msra.mxu0 0.0
    %3784 = vmatpush.xpose.msra.mxu0 0.0
    %3785 = vmatpush.xpose.msra.mxu0 0.0
    %3786 = vmatpush.xpose.msra.mxu0 0.0
    %3787 = vmatpush.xpose.msra.mxu0 0.0
    %3788 = vmatpush.xpose.msra.mxu0 0.0
    %3789 = vmatpush.xpose.msra.mxu0 0.0
    %3790 = vmatpush.xpose.msra.mxu0 0.0
    %3791 = vmatpush.xpose.msra.mxu0 0.0
    %3792 = vmatpush.xpose.msra.mxu0 0.0
    %3793 = vmatpush.xpose.msra.mxu0 0.0
    %3794 = vmatpush.xpose.msra.mxu0 0.0
    %3795 = vmatpush.xpose.msra.mxu0 0.0
    %3796 = vmatpush.xpose.msra.mxu0 0.0
    %3797 = vmatpush.xpose.msra.mxu0 0.0
    %3798 = vmatpush.xpose.msra.mxu0 %v3781
    %3799 = vmatmul.f32.gmra.mxu0 %v3779
    %v3800 = vpop.f32.mrf.mxu0
    %v3801 = vadd.f32 0.0, %v3800
    %3802 = vdwg.mxu0
    %v3803 = vmul.f32 %v3801, 0.35355338
    %v3804 = vsel %vm246, %v3803, -inf
    %3805 = vmax.xlane.f32.xlu0 %v3804
    %v3806 = vpop.xlane.xlu0 %3805
    %v3807 = vsub.f32 %v3803, %v3806
    %v3808 = vmul.f32 %v3807, 1.442695
    %v3809 = vpow.pop %v3808
    %v3810 = vsel %vm246, %v3809, 0.0
    %3811 = vadd.xlane.f32.xlu0 %v3810
    %v3812 = vpop.xlane.xlu0 %3811
    %v3813 = vrcp.pop %v3812
    %v3814 = vmul.f32 %v3809, %v3813
    %3815 = vrot.lane.b32.xlu0 %v3329, 48
    %v3816 = vpop.permute.xlu0 %3815
    %v3819 = vsel %vm246, %v3814, 0
    %3821 = vmatpush.msra.mxu0 0.0
    %3822 = vmatpush.msra.mxu0 0.0
    %3823 = vmatpush.msra.mxu0 0.0
    %3824 = vmatpush.msra.mxu0 0.0
    %3825 = vmatpush.msra.mxu0 0.0
    %3826 = vmatpush.msra.mxu0 0.0
    %3827 = vmatpush.msra.mxu0 0.0
    %3828 = vmatpush.msra.mxu0 0.0
    %3829 = vmatpush.msra.mxu0 0.0
    %3830 = vmatpush.msra.mxu0 0.0
    %3831 = vmatpush.msra.mxu0 0.0
    %3832 = vmatpush.msra.mxu0 0.0
    %3833 = vmatpush.msra.mxu0 0.0
    %3834 = vmatpush.msra.mxu0 0.0
    %3835 = vmatpush.msra.mxu0 0.0
    %3836 = vmatpush.msra.mxu0 %v3816
    %3837 = vmatmul.f32.gmra.mxu0 %v3819
    %v3838 = vpop.f32.mrf.mxu0
    %v3839 = vadd.f32 0.0, %v3838
    %3840 = vdwg.mxu0
    %v3842 = vsel %vm246, %v3839, 0
    %3844 = vmatpush.msra.mxu0 0.0
    %3845 = vmatpush.msra.mxu0 0.0
    %3846 = vmatpush.msra.mxu0 0.0
    %3847 = vmatpush.msra.mxu0 0.0
    %3848 = vmatpush.msra.mxu0 0.0
    %3849 = vmatpush.msra.mxu0 0.0
    %3850 = vmatpush.msra.mxu0 0.0
    %3851 = vmatpush.msra.mxu0 0.0
    %3852 = vmatpush.msra.mxu0 0.0
    %3853 = vmatpush.msra.mxu0 0.0
    %3854 = vmatpush.msra.mxu0 0.0
    %3855 = vmatpush.msra.mxu0 0.0
    %3856 = vmatpush.msra.mxu0 0.0
    %3857 = vmatpush.msra.mxu0 0.0
    %3858 = vmatpush.msra.mxu0 0.0
    %3859 = vmatpush.msra.mxu0 %v3300
    %3860 = vmatmul.f32.gmra.mxu0 %v3842
    %v3861 = vpop.f32.mrf.mxu0
    %v3862 = vadd.f32 0.0, %v3861
    %3863 = vdwg.mxu0
    %v3864 = vadd.f32 %v3683, %v3862
    %3865 = vrot.lane.b32.xlu0 %v3326, 104
    %v3866 = vpop.permute.xlu0 %3865
    %3867 = vrot.lane.b32.xlu0 %v3326, 72
    %v3868 = vpop.permute.xlu0 %3867
    %v3869 = vsel %vm246, %v3866, 0
    %v3871 = vsel %vm246, %v3868, 0
    %3873 = vmatpush.xpose.msra.mxu0 0.0
    %3874 = vmatpush.xpose.msra.mxu0 0.0
    %3875 = vmatpush.xpose.msra.mxu0 0.0
    %3876 = vmatpush.xpose.msra.mxu0 0.0
    %3877 = vmatpush.xpose.msra.mxu0 0.0
    %3878 = vmatpush.xpose.msra.mxu0 0.0
    %3879 = vmatpush.xpose.msra.mxu0 0.0
    %3880 = vmatpush.xpose.msra.mxu0 0.0
    %3881 = vmatpush.xpose.msra.mxu0 0.0
    %3882 = vmatpush.xpose.msra.mxu0 0.0
    %3883 = vmatpush.xpose.msra.mxu0 0.0
    %3884 = vmatpush.xpose.msra.mxu0 0.0
    %3885 = vmatpush.xpose.msra.mxu0 0.0
    %3886 = vmatpush.xpose.msra.mxu0 0.0
    %3887 = vmatpush.xpose.msra.mxu0 0.0
    %3888 = vmatpush.xpose.msra.mxu0 %v3871
    %3889 = vmatmul.f32.gmra.mxu0 %v3869
    %v3890 = vpop.f32.mrf.mxu0
    %v3891 = vadd.f32 0.0, %v3890
    %3892 = vdwg.mxu0
    %v3893 = vmul.f32 %v3891, 0.35355338
    %v3894 = vsel %vm246, %v3893, -inf
    %3895 = vmax.xlane.f32.xlu0 %v3894
    %v3896 = vpop.xlane.xlu0 %3895
    %v3897 = vsub.f32 %v3893, %v3896
    %v3898 = vmul.f32 %v3897, 1.442695
    %v3899 = vpow.pop %v3898
    %v3900 = vsel %vm246, %v3899, 0.0
    %3901 = vadd.xlane.f32.xlu0 %v3900
    %v3902 = vpop.xlane.xlu0 %3901
    %v3903 = vrcp.pop %v3902
    %v3904 = vmul.f32 %v3899, %v3903
    %3905 = vrot.lane.b32.xlu0 %v3326, 40
    %v3906 = vpop.permute.xlu0 %3905
    %v3909 = vsel %vm246, %v3904, 0
    %3911 = vmatpush.msra.mxu0 0.0
    %3912 = vmatpush.msra.mxu0 0.0
    %3913 = vmatpush.msra.mxu0 0.0
    %3914 = vmatpush.msra.mxu0 0.0
    %3915 = vmatpush.msra.mxu0 0.0
    %3916 = vmatpush.msra.mxu0 0.0
    %3917 = vmatpush.msra.mxu0 0.0
    %3918 = vmatpush.msra.mxu0 0.0
    %3919 = vmatpush.msra.mxu0 0.0
    %3920 = vmatpush.msra.mxu0 0.0
    %3921 = vmatpush.msra.mxu0 0.0
    %3922 = vmatpush.msra.mxu0 0.0
    %3923 = vmatpush.msra.mxu0 0.0
    %3924 = vmatpush.msra.mxu0 0.0
    %3925 = vmatpush.msra.mxu0 0.0
    %3926 = vmatpush.msra.mxu0 %v3906
    %3927 = vmatmul.f32.gmra.mxu0 %v3909
    %v3928 = vpop.f32.mrf.mxu0
    %v3929 = vadd.f32 0.0, %v3928
    %3930 = vdwg.mxu0
    %v3932 = vsel %vm246, %v3929, 0
    %3934 = vmatpush.msra.mxu0 0.0
    %3935 = vmatpush.msra.mxu0 0.0
    %3936 = vmatpush.msra.mxu0 0.0
    %3937 = vmatpush.msra.mxu0 0.0
    %3938 = vmatpush.msra.mxu0 0.0
    %3939 = vmatpush.msra.mxu0 0.0
    %3940 = vmatpush.msra.mxu0 0.0
    %3941 = vmatpush.msra.mxu0 0.0
    %3942 = vmatpush.msra.mxu0 0.0
    %3943 = vmatpush.msra.mxu0 0.0
    %3944 = vmatpush.msra.mxu0 0.0
    %3945 = vmatpush.msra.mxu0 0.0
    %3946 = vmatpush.msra.mxu0 0.0
    %3947 = vmatpush.msra.mxu0 0.0
    %3948 = vmatpush.msra.mxu0 0.0
    %3949 = vmatpush.msra.mxu0 %v3301
    %3950 = vmatmul.f32.gmra.mxu0 %v3932
    %v3951 = vpop.f32.mrf.mxu0
    %v3952 = vadd.f32 0.0, %v3951
    %3953 = vdwg.mxu0
    %v3954 = vadd.f32 %v3774, %v3952
    %3955 = vrot.lane.b32.xlu0 %v3329, 104
    %v3956 = vpop.permute.xlu0 %3955
    %3957 = vrot.lane.b32.xlu0 %v3329, 72
    %v3958 = vpop.permute.xlu0 %3957
    %v3959 = vsel %vm246, %v3956, 0
    %v3961 = vsel %vm246, %v3958, 0
    %3963 = vmatpush.xpose.msra.mxu0 0.0
    %3964 = vmatpush.xpose.msra.mxu0 0.0
    %3965 = vmatpush.xpose.msra.mxu0 0.0
    %3966 = vmatpush.xpose.msra.mxu0 0.0
    %3967 = vmatpush.xpose.msra.mxu0 0.0
    %3968 = vmatpush.xpose.msra.mxu0 0.0
    %3969 = vmatpush.xpose.msra.mxu0 0.0
    %3970 = vmatpush.xpose.msra.mxu0 0.0
    %3971 = vmatpush.xpose.msra.mxu0 0.0
    %3972 = vmatpush.xpose.msra.mxu0 0.0
    %3973 = vmatpush.xpose.msra.mxu0 0.0
    %3974 = vmatpush.xpose.msra.mxu0 0.0
    %3975 = vmatpush.xpose.msra.mxu0 0.0
    %3976 = vmatpush.xpose.msra.mxu0 0.0
    %3977 = vmatpush.xpose.msra.mxu0 0.0
    %3978 = vmatpush.xpose.msra.mxu0 %v3961
    %3979 = vmatmul.f32.gmra.mxu0 %v3959
    %v3980 = vpop.f32.mrf.mxu0
    %v3981 = vadd.f32 0.0, %v3980
    %3982 = vdwg.mxu0
    %v3983 = vmul.f32 %v3981, 0.35355338
    %v3984 = vsel %vm246, %v3983, -inf
    %3985 = vmax.xlane.f32.xlu0 %v3984
    %v3986 = vpop.xlane.xlu0 %3985
    %v3987 = vsub.f32 %v3983, %v3986
    %v3988 = vmul.f32 %v3987, 1.442695
    %v3989 = vpow.pop %v3988
    %v3990 = vsel %vm246, %v3989, 0.0
    %3991 = vadd.xlane.f32.xlu0 %v3990
    %v3992 = vpop.xlane.xlu0 %3991
    %v3993 = vrcp.pop %v3992
    %v3994 = vmul.f32 %v3989, %v3993
    %3995 = vrot.lane.b32.xlu0 %v3329, 40
    %v3996 = vpop.permute.xlu0 %3995
    %v3999 = vsel %vm246, %v3994, 0
    %4001 = vmatpush.msra.mxu0 0.0
    %4002 = vmatpush.msra.mxu0 0.0
    %4003 = vmatpush.msra.mxu0 0.0
    %4004 = vmatpush.msra.mxu0 0.0
    %4005 = vmatpush.msra.mxu0 0.0
    %4006 = vmatpush.msra.mxu0 0.0
    %4007 = vmatpush.msra.mxu0 0.0
    %4008 = vmatpush.msra.mxu0 0.0
    %4009 = vmatpush.msra.mxu0 0.0
    %4010 = vmatpush.msra.mxu0 0.0
    %4011 = vmatpush.msra.mxu0 0.0
    %4012 = vmatpush.msra.mxu0 0.0
    %4013 = vmatpush.msra.mxu0 0.0
    %4014 = vmatpush.msra.mxu0 0.0
    %4015 = vmatpush.msra.mxu0 0.0
    %4016 = vmatpush.msra.mxu0 %v3996
    %4017 = vmatmul.f32.gmra.mxu0 %v3999
    %v4018 = vpop.f32.mrf.mxu0
    %v4019 = vadd.f32 0.0, %v4018
    %4020 = vdwg.mxu0
    %v4022 = vsel %vm246, %v4019, 0
    %4024 = vmatpush.msra.mxu0 0.0
    %4025 = vmatpush.msra.mxu0 0.0
    %4026 = vmatpush.msra.mxu0 0.0
    %4027 = vmatpush.msra.mxu0 0.0
    %4028 = vmatpush.msra.mxu0 0.0
    %4029 = vmatpush.msra.mxu0 0.0
    %4030 = vmatpush.msra.mxu0 0.0
    %4031 = vmatpush.msra.mxu0 0.0
    %4032 = vmatpush.msra.mxu0 0.0
    %4033 = vmatpush.msra.mxu0 0.0
    %4034 = vmatpush.msra.mxu0 0.0
    %4035 = vmatpush.msra.mxu0 0.0
    %4036 = vmatpush.msra.mxu0 0.0
    %4037 = vmatpush.msra.mxu0 0.0
    %4038 = vmatpush.msra.mxu0 0.0
    %4039 = vmatpush.msra.mxu0 %v3301
    %4040 = vmatmul.f32.gmra.mxu0 %v4022
    %v4041 = vpop.f32.mrf.mxu0
    %v4042 = vadd.f32 0.0, %v4041
    %4043 = vdwg.mxu0
    %v4044 = vadd.f32 %v3864, %v4042
    %v4045 = vadd.f32 %v3208, %v3954
    %v4046 = vadd.f32 %v3209, %v4044
    %v4047 = vld [vmem:[%s2 + $0x200] sm:$0x1]
    %v4048 = vld [vmem:[%s2 + $0x208] sm:$0x1]
    %v4049 = vsel %vm21, %v4045, 0.0
    %4050 = vadd.xlane.f32.xlu0 %v4049
    %v4051 = vpop.xlane.xlu0 %4050
    %v4052 = vsel %vm21, %v4046, 0.0
    %4053 = vadd.xlane.f32.xlu0 %v4052
    %v4054 = vpop.xlane.xlu0 %4053
    %v4055 = vmul.f32 %v4051, %v40
    %v4056 = vmul.f32 %v4054, %v40
    %v4057 = vsub.f32 %v4045, %v4055
    %v4058 = vsub.f32 %v4046, %v4056
    %v4059 = vmul.f32 %v4057, %v4057
    %v4060 = vmul.f32 %v4058, %v4058
    %v4061 = vsel %vm21, %v4059, 0.0
    %4062 = vadd.xlane.f32.xlu0 %v4061
    %v4063 = vpop.xlane.xlu0 %4062
    %v4064 = vsel %vm21, %v4060, 0.0
    %4065 = vadd.xlane.f32.xlu0 %v4064
    %v4066 = vpop.xlane.xlu0 %4065
    %v4067 = vmul.f32 %v4063, 0.032258064
    %v4068 = vmul.f32 %v4066, 0.032258064
    %v4069 = vrsqrt.pop %v4067
    %v4070 = vmul.f32 %v4069, %v4067
    %v4071 = vmul.f32 %v4070, %v4069
    %v4072 = vmul.f32 0.5, %v4071
    %v4073 = vsub.f32 1.5, %v4072
    %v4074 = vmul.f32 %v4069, %v4073
    %v4075 = vmul.f32 %v4067, %v4074
    %vm4076 = vcmp.eq.f32.partialorder %v4067, inf
    %v4077 = vsel %vm4076, %v4067, %v4075
    %vm4078 = vcmp.eq.f32.partialorder %v4067, 0.0
    %v4079 = vand.u32 %v4067, 2147483648
    %v4080 = vsel %vm4078, %v4079, %v4077
    %v4081 = vrsqrt.pop %v4068
    %v4082 = vmul.f32 %v4081, %v4068
    %v4083 = vmul.f32 %v4082, %v4081
    %v4084 = vmul.f32 0.5, %v4083
    %v4085 = vsub.f32 1.5, %v4084
    %v4086 = vmul.f32 %v4081, %v4085
    %v4087 = vmul.f32 %v4068, %v4086
    %vm4088 = vcmp.eq.f32.partialorder %v4068, inf
    %v4089 = vsel %vm4088, %v4068, %v4087
    %vm4090 = vcmp.eq.f32.partialorder %v4068, 0.0
    %v4091 = vand.u32 %v4068, 2147483648
    %v4092 = vsel %vm4090, %v4091, %v4089
    %v4093 = vadd.f32 %v4080, 1e-05
    %v4094 = vadd.f32 %v4092, 1e-05
    %v4095 = vrcp.pop %v4093
    %v4096 = vmul.f32 %v4093, %v4095
    %v4097 = vsub.f32 1.0, %v4096
    %v4098 = vmul.f32 %v4095, %v4097
    %v4099 = vadd.f32 %v4095, %v4098
    %vm4100 = vweird.f32 %v4093
    %vm4101 = vweird.f32 %v4095
    %vm4102 = vmor %vm4100, %vm4101
    %v4103 = vsel %vm4102, %v4095, %v4099
    %v4104 = vand.u32 2147483647, %v4093
    %vm4105 = vcmp.eq.f32.partialorder %v4104, 8.507059e+37
    %v4106 = vand.u32 %v4093, 2147483648
    %v4107 = vor.u32 1.1754944e-38, %v4106
    %v4108 = vsel %vm4105, %v4107, %v4103
    %v4109 = vmul.f32 %v4057, %v4108
    %v4110 = vrcp.pop %v4094
    %v4111 = vmul.f32 %v4094, %v4110
    %v4112 = vsub.f32 1.0, %v4111
    %v4113 = vmul.f32 %v4110, %v4112
    %v4114 = vadd.f32 %v4110, %v4113
    %vm4115 = vweird.f32 %v4094
    %vm4116 = vweird.f32 %v4110
    %vm4117 = vmor %vm4115, %vm4116
    %v4118 = vsel %vm4117, %v4110, %v4114
    %v4119 = vand.u32 2147483647, %v4094
    %vm4120 = vcmp.eq.f32.partialorder %v4119, 8.507059e+37
    %v4121 = vand.u32 %v4094, 2147483648
    %v4122 = vor.u32 1.1754944e-38, %v4121
    %v4123 = vsel %vm4120, %v4122, %v4118
    %v4124 = vmul.f32 %v4058, %v4123
    %v4125 = vperm.slane %v4047, 0
    %v4126 = vmul.f32 %v4125, %v4109
    %v4127 = vmul.f32 %v4125, %v4124
    %v4128 = vperm.slane %v4048, 0
    %v4129 = vadd.f32 %v4126, %v4128
    %v4130 = vadd.f32 %v4127, %v4128
    %v4131 = vld [vmem:[%s2 + $0x210] sm:$0xff]
    %v4132 = vld [vmem:[%s2 + $0x218] sm:$0xff]
    %v4133 = vld [vmem:[%s2 + $0x220] sm:$0xff]
    %v4134 = vld [vmem:[%s2 + $0x228] sm:$0xff]
    %v4135 = vld [vmem:[%s2 + $0x230] sm:$0xff]
    %v4136 = vld [vmem:[%s2 + $0x238] sm:$0xff]
    %v4137 = vld [vmem:[%s2 + $0x240] sm:$0xff]
    %v4138 = vld [vmem:[%s2 + $0x248] sm:$0xff]
    %v4140 = vsel %vm21, %v4129, 0
    %v4143 = vsel %vm21, %v4130, 0
    %4145 = vmatpush.msra.mxu0 0.0
    %4146 = vmatpush.msra.mxu0 0.0
    %4147 = vmatpush.msra.mxu0 0.0
    %4148 = vmatpush.msra.mxu0 0.0
    %4149 = vmatpush.msra.mxu0 0.0
    %4150 = vmatpush.msra.mxu0 0.0
    %4151 = vmatpush.msra.mxu0 0.0
    %4152 = vmatpush.msra.mxu0 0.0
    %4153 = vmatpush.msra.mxu0 0.0
    %4154 = vmatpush.msra.mxu0 0.0
    %4155 = vmatpush.msra.mxu0 0.0
    %4156 = vmatpush.msra.mxu0 0.0
    %4157 = vmatpush.msra.mxu0 %v4134
    %4158 = vmatpush.msra.mxu0 %v4133
    %4159 = vmatpush.msra.mxu0 %v4132
    %4160 = vmatpush.msra.mxu0 %v4131
    %4161 = vmatmul.f32.gmra.mxu0 %v4140
    %v4162 = vpop.f32.mrf.mxu0
    %v4163 = vadd.f32 0.0, %v4162
    %4164 = vmatmul.f32.gmra.mxu0 %v4143
    %v4165 = vpop.f32.mrf.mxu0
    %v4166 = vadd.f32 0.0, %v4165
    %4167 = vdwg.mxu0
    %4172 = vrot.lane.b32.xlu0 %v4131, 96
    %v4173 = vpop.permute.xlu0 %4172
    %4174 = vrot.lane.b32.xlu0 %v4132, 96
    %v4175 = vpop.permute.xlu0 %4174
    %4176 = vrot.lane.b32.xlu0 %v4133, 96
    %v4177 = vpop.permute.xlu0 %4176
    %4178 = vrot.lane.b32.xlu0 %v4134, 96
    %v4179 = vpop.permute.xlu0 %4178
    %v4185 = vsel %vm21, %v3204, 0
    %v4188 = vsel %vm21, %v3205, 0
    %v4191 = vsel %vm21, %v3206, 0
    %v4194 = vsel %vm21, %v3207, 0
    %4196 = vmatpush.msra.mxu0 0.0
    %4197 = vmatpush.msra.mxu0 0.0
    %4198 = vmatpush.msra.mxu0 0.0
    %4199 = vmatpush.msra.mxu0 0.0
    %4200 = vmatpush.msra.mxu0 0.0
    %4201 = vmatpush.msra.mxu0 0.0
    %4202 = vmatpush.msra.mxu0 0.0
    %4203 = vmatpush.msra.mxu0 0.0
    %4204 = vmatpush.msra.mxu0 0.0
    %4205 = vmatpush.msra.mxu0 0.0
    %4206 = vmatpush.msra.mxu0 0.0
    %4207 = vmatpush.msra.mxu0 0.0
    %4208 = vmatpush.msra.mxu0 %v4179
    %4209 = vmatpush.msra.mxu0 %v4177
    %4210 = vmatpush.msra.mxu0 %v4175
    %4211 = vmatpush.msra.mxu0 %v4173
    %4212 = vmatmul.f32.gmra.mxu0 %v4185
    %v4213 = vpop.f32.mrf.mxu0
    %v4214 = vadd.f32 0.0, %v4213
    %4215 = vmatmul.f32.gmra.mxu0 %v4188
    %v4216 = vpop.f32.mrf.mxu0
    %v4217 = vadd.f32 0.0, %v4216
    %4218 = vmatmul.f32.gmra.mxu0 %v4191
    %v4219 = vpop.f32.mrf.mxu0
    %v4220 = vadd.f32 0.0, %v4219
    %4221 = vmatmul.f32.gmra.mxu0 %v4194
    %v4222 = vpop.f32.mrf.mxu0
    %v4223 = vadd.f32 0.0, %v4222
    %4224 = vdwg.mxu0
    %v4226 = vsel %vm246, %v4163, 0
    %v4229 = vsel %vm246, %v4214, 0
    %v4232 = vsel %vm246, %v4217, 0
    %4234 = vmatpush.xpose.msra.mxu0 0.0
    %4235 = vmatpush.xpose.msra.mxu0 0.0
    %4236 = vmatpush.xpose.msra.mxu0 0.0
    %4237 = vmatpush.xpose.msra.mxu0 0.0
    %4238 = vmatpush.xpose.msra.mxu0 0.0
    %4239 = vmatpush.xpose.msra.mxu0 0.0
    %4240 = vmatpush.xpose.msra.mxu0 0.0
    %4241 = vmatpush.xpose.msra.mxu0 0.0
    %4242 = vmatpush.xpose.msra.mxu0 0.0
    %4243 = vmatpush.xpose.msra.mxu0 0.0
    %4244 = vmatpush.xpose.msra.mxu0 0.0
    %4245 = vmatpush.xpose.msra.mxu0 0.0
    %4246 = vmatpush.xpose.msra.mxu0 0.0
    %4247 = vmatpush.xpose.msra.mxu0 0.0
    %4248 = vmatpush.xpose.msra.mxu0 %v4232
    %4249 = vmatpush.xpose.msra.mxu0 %v4229
    %4250 = vmatmul.f32.gmra.mxu0 %v4226
    %v4251 = vpop.f32.mrf.mxu0
    %v4252 = vadd.f32 0.0, %v4251
    %4253 = vdwg.mxu0
    %v4254 = vmul.f32 %v4252, 0.35355338
    %v4255 = vsel %vm280, %v4254, -inf
    %4256 = vmax.xlane.f32.xlu0 %v4255
    %v4257 = vpop.xlane.xlu0 %4256
    %v4258 = vsub.f32 %v4254, %v4257
    %v4259 = vmul.f32 %v4258, 1.442695
    %v4260 = vpow.pop %v4259
    %v4261 = vsel %vm280, %v4260, 0.0
    %4262 = vadd.xlane.f32.xlu0 %v4261
    %v4263 = vpop.xlane.xlu0 %4262
    %v4264 = vrcp.pop %v4263
    %v4265 = vmul.f32 %v4260, %v4264
    %4266 = vrot.lane.b32.xlu0 %v4214, 96
    %v4267 = vpop.permute.xlu0 %4266
    %4268 = vrot.lane.b32.xlu0 %v4217, 96
    %v4269 = vpop.permute.xlu0 %4268
    %v4273 = vsel %vm280, %v4265, 0
    %4275 = vmatpush.msra.mxu0 0.0
    %4276 = vmatpush.msra.mxu0 0.0
    %4277 = vmatpush.msra.mxu0 0.0
    %4278 = vmatpush.msra.mxu0 0.0
    %4279 = vmatpush.msra.mxu0 0.0
    %4280 = vmatpush.msra.mxu0 0.0
    %4281 = vmatpush.msra.mxu0 0.0
    %4282 = vmatpush.msra.mxu0 0.0
    %4283 = vmatpush.msra.mxu0 0.0
    %4284 = vmatpush.msra.mxu0 0.0
    %4285 = vmatpush.msra.mxu0 0.0
    %4286 = vmatpush.msra.mxu0 0.0
    %4287 = vmatpush.msra.mxu0 0.0
    %4288 = vmatpush.msra.mxu0 0.0
    %4289 = vmatpush.msra.mxu0 %v4269
    %4290 = vmatpush.msra.mxu0 %v4267
    %4291 = vmatmul.f32.gmra.mxu0 %v4273
    %v4292 = vpop.f32.mrf.mxu0
    %v4293 = vadd.f32 0.0, %v4292
    %4294 = vdwg.mxu0
    %v4296 = vsel %vm246, %v4166, 0
    %v4299 = vsel %vm246, %v4220, 0
    %v4302 = vsel %vm246, %v4223, 0
    %4304 = vmatpush.xpose.msra.mxu0 0.0
    %4305 = vmatpush.xpose.msra.mxu0 0.0
    %4306 = vmatpush.xpose.msra.mxu0 0.0
    %4307 = vmatpush.xpose.msra.mxu0 0.0
    %4308 = vmatpush.xpose.msra.mxu0 0.0
    %4309 = vmatpush.xpose.msra.mxu0 0.0
    %4310 = vmatpush.xpose.msra.mxu0 0.0
    %4311 = vmatpush.xpose.msra.mxu0 0.0
    %4312 = vmatpush.xpose.msra.mxu0 0.0
    %4313 = vmatpush.xpose.msra.mxu0 0.0
    %4314 = vmatpush.xpose.msra.mxu0 0.0
    %4315 = vmatpush.xpose.msra.mxu0 0.0
    %4316 = vmatpush.xpose.msra.mxu0 0.0
    %4317 = vmatpush.xpose.msra.mxu0 0.0
    %4318 = vmatpush.xpose.msra.mxu0 %v4302
    %4319 = vmatpush.xpose.msra.mxu0 %v4299
    %4320 = vmatmul.f32.gmra.mxu0 %v4296
    %v4321 = vpop.f32.mrf.mxu0
    %v4322 = vadd.f32 0.0, %v4321
    %4323 = vdwg.mxu0
    %v4324 = vmul.f32 %v4322, 0.35355338
    %v4325 = vsel %vm280, %v4324, -inf
    %4326 = vmax.xlane.f32.xlu0 %v4325
    %v4327 = vpop.xlane.xlu0 %4326
    %v4328 = vsub.f32 %v4324, %v4327
    %v4329 = vmul.f32 %v4328, 1.442695
    %v4330 = vpow.pop %v4329
    %v4331 = vsel %vm280, %v4330, 0.0
    %4332 = vadd.xlane.f32.xlu0 %v4331
    %v4333 = vpop.xlane.xlu0 %4332
    %v4334 = vrcp.pop %v4333
    %v4335 = vmul.f32 %v4330, %v4334
    %4336 = vrot.lane.b32.xlu0 %v4220, 96
    %v4337 = vpop.permute.xlu0 %4336
    %4338 = vrot.lane.b32.xlu0 %v4223, 96
    %v4339 = vpop.permute.xlu0 %4338
    %v4343 = vsel %vm280, %v4335, 0
    %4345 = vmatpush.msra.mxu0 0.0
    %4346 = vmatpush.msra.mxu0 0.0
    %4347 = vmatpush.msra.mxu0 0.0
    %4348 = vmatpush.msra.mxu0 0.0
    %4349 = vmatpush.msra.mxu0 0.0
    %4350 = vmatpush.msra.mxu0 0.0
    %4351 = vmatpush.msra.mxu0 0.0
    %4352 = vmatpush.msra.mxu0 0.0
    %4353 = vmatpush.msra.mxu0 0.0
    %4354 = vmatpush.msra.mxu0 0.0
    %4355 = vmatpush.msra.mxu0 0.0
    %4356 = vmatpush.msra.mxu0 0.0
    %4357 = vmatpush.msra.mxu0 0.0
    %4358 = vmatpush.msra.mxu0 0.0
    %4359 = vmatpush.msra.mxu0 %v4339
    %4360 = vmatpush.msra.mxu0 %v4337
    %4361 = vmatmul.f32.gmra.mxu0 %v4343
    %v4362 = vpop.f32.mrf.mxu0
    %v4363 = vadd.f32 0.0, %v4362
    %4364 = vdwg.mxu0
    %4365 = vrot.lane.b32.xlu0 %v4163, 120
    %v4366 = vpop.permute.xlu0 %4365
    %4367 = vrot.lane.b32.xlu0 %v4214, 120
    %v4368 = vpop.permute.xlu0 %4367
    %4369 = vrot.lane.b32.xlu0 %v4217, 120
    %v4370 = vpop.permute.xlu0 %4369
    %v4371 = vsel %vm246, %v4366, 0
    %v4373 = vsel %vm246, %v4368, 0
    %v4375 = vsel %vm246, %v4370, 0
    %4377 = vmatpush.xpose.msra.mxu0 0.0
    %4378 = vmatpush.xpose.msra.mxu0 0.0
    %4379 = vmatpush.xpose.msra.mxu0 0.0
    %4380 = vmatpush.xpose.msra.mxu0 0.0
    %4381 = vmatpush.xpose.msra.mxu0 0.0
    %4382 = vmatpush.xpose.msra.mxu0 0.0
    %4383 = vmatpush.xpose.msra.mxu0 0.0
    %4384 = vmatpush.xpose.msra.mxu0 0.0
    %4385 = vmatpush.xpose.msra.mxu0 0.0
    %4386 = vmatpush.xpose.msra.mxu0 0.0
    %4387 = vmatpush.xpose.msra.mxu0 0.0
    %4388 = vmatpush.xpose.msra.mxu0 0.0
    %4389 = vmatpush.xpose.msra.mxu0 0.0
    %4390 = vmatpush.xpose.msra.mxu0 0.0
    %4391 = vmatpush.xpose.msra.mxu0 %v4375
    %4392 = vmatpush.xpose.msra.mxu0 %v4373
    %4393 = vmatmul.f32.gmra.mxu0 %v4371
    %v4394 = vpop.f32.mrf.mxu0
    %v4395 = vadd.f32 0.0, %v4394
    %4396 = vdwg.mxu0
    %v4397 = vmul.f32 %v4395, 0.35355338
    %v4398 = vsel %vm280, %v4397, -inf
    %4399 = vmax.xlane.f32.xlu0 %v4398
    %v4400 = vpop.xlane.xlu0 %4399
    %v4401 = vsub.f32 %v4397, %v4400
    %v4402 = vmul.f32 %v4401, 1.442695
    %v4403 = vpow.pop %v4402
    %v4404 = vsel %vm280, %v4403, 0.0
    %4405 = vadd.xlane.f32.xlu0 %v4404
    %v4406 = vpop.xlane.xlu0 %4405
    %v4407 = vrcp.pop %v4406
    %v4408 = vmul.f32 %v4403, %v4407
    %4409 = vrot.lane.b32.xlu0 %v4214, 88
    %v4410 = vpop.permute.xlu0 %4409
    %4411 = vrot.lane.b32.xlu0 %v4217, 88
    %v4412 = vpop.permute.xlu0 %4411
    %v4416 = vsel %vm280, %v4408, 0
    %4418 = vmatpush.msra.mxu0 0.0
    %4419 = vmatpush.msra.mxu0 0.0
    %4420 = vmatpush.msra.mxu0 0.0
    %4421 = vmatpush.msra.mxu0 0.0
    %4422 = vmatpush.msra.mxu0 0.0
    %4423 = vmatpush.msra.mxu0 0.0
    %4424 = vmatpush.msra.mxu0 0.0
    %4425 = vmatpush.msra.mxu0 0.0
    %4426 = vmatpush.msra.mxu0 0.0
    %4427 = vmatpush.msra.mxu0 0.0
    %4428 = vmatpush.msra.mxu0 0.0
    %4429 = vmatpush.msra.mxu0 0.0
    %4430 = vmatpush.msra.mxu0 0.0
    %4431 = vmatpush.msra.mxu0 0.0
    %4432 = vmatpush.msra.mxu0 %v4412
    %4433 = vmatpush.msra.mxu0 %v4410
    %4434 = vmatmul.f32.gmra.mxu0 %v4416
    %v4435 = vpop.f32.mrf.mxu0
    %v4436 = vadd.f32 0.0, %v4435
    %4437 = vdwg.mxu0
    %v4439 = vsel %vm246, %v4436, 0
    %4441 = vmatpush.msra.mxu0 0.0
    %4442 = vmatpush.msra.mxu0 0.0
    %4443 = vmatpush.msra.mxu0 0.0
    %4444 = vmatpush.msra.mxu0 0.0
    %4445 = vmatpush.msra.mxu0 0.0
    %4446 = vmatpush.msra.mxu0 0.0
    %4447 = vmatpush.msra.mxu0 0.0
    %4448 = vmatpush.msra.mxu0 0.0
    %4449 = vmatpush.msra.mxu0 0.0
    %4450 = vmatpush.msra.mxu0 0.0
    %4451 = vmatpush.msra.mxu0 0.0
    %4452 = vmatpush.msra.mxu0 0.0
    %4453 = vmatpush.msra.mxu0 0.0
    %4454 = vmatpush.msra.mxu0 0.0
    %4455 = vmatpush.msra.mxu0 0.0
    %4456 = vmatpush.msra.mxu0 %v4136
    %4457 = vmatmul.f32.gmra.mxu0 %v4439
    %v4458 = vpop.f32.mrf.mxu0
    %v4459 = vadd.f32 0.0, %v4458
    %4460 = vdwg.mxu0
    %v4462 = vsel %vm246, %v4293, 0
    %4464 = vmatpush.msra.mxu0 0.0
    %4465 = vmatpush.msra.mxu0 0.0
    %4466 = vmatpush.msra.mxu0 0.0
    %4467 = vmatpush.msra.mxu0 0.0
    %4468 = vmatpush.msra.mxu0 0.0
    %4469 = vmatpush.msra.mxu0 0.0
    %4470 = vmatpush.msra.mxu0 0.0
    %4471 = vmatpush.msra.mxu0 0.0
    %4472 = vmatpush.msra.mxu0 0.0
    %4473 = vmatpush.msra.mxu0 0.0
    %4474 = vmatpush.msra.mxu0 0.0
    %4475 = vmatpush.msra.mxu0 0.0
    %4476 = vmatpush.msra.mxu0 0.0
    %4477 = vmatpush.msra.mxu0 0.0
    %4478 = vmatpush.msra.mxu0 0.0
    %4479 = vmatpush.msra.mxu0 %v4135
    %4480 = vmatmul.f32.gmra.mxu0 %v4462
    %v4481 = vpop.f32.mrf.mxu0
    %v4482 = vadd.f32 %v4459, %v4481
    %4483 = vdwg.mxu0
    %4484 = vrot.lane.b32.xlu0 %v4166, 120
    %v4485 = vpop.permute.xlu0 %4484
    %4486 = vrot.lane.b32.xlu0 %v4220, 120
    %v4487 = vpop.permute.xlu0 %4486
    %4488 = vrot.lane.b32.xlu0 %v4223, 120
    %v4489 = vpop.permute.xlu0 %4488
    %v4490 = vsel %vm246, %v4485, 0
    %v4492 = vsel %vm246, %v4487, 0
    %v4494 = vsel %vm246, %v4489, 0
    %4496 = vmatpush.xpose.msra.mxu0 0.0
    %4497 = vmatpush.xpose.msra.mxu0 0.0
    %4498 = vmatpush.xpose.msra.mxu0 0.0
    %4499 = vmatpush.xpose.msra.mxu0 0.0
    %4500 = vmatpush.xpose.msra.mxu0 0.0
    %4501 = vmatpush.xpose.msra.mxu0 0.0
    %4502 = vmatpush.xpose.msra.mxu0 0.0
    %4503 = vmatpush.xpose.msra.mxu0 0.0
    %4504 = vmatpush.xpose.msra.mxu0 0.0
    %4505 = vmatpush.xpose.msra.mxu0 0.0
    %4506 = vmatpush.xpose.msra.mxu0 0.0
    %4507 = vmatpush.xpose.msra.mxu0 0.0
    %4508 = vmatpush.xpose.msra.mxu0 0.0
    %4509 = vmatpush.xpose.msra.mxu0 0.0
    %4510 = vmatpush.xpose.msra.mxu0 %v4494
    %4511 = vmatpush.xpose.msra.mxu0 %v4492
    %4512 = vmatmul.f32.gmra.mxu0 %v4490
    %v4513 = vpop.f32.mrf.mxu0
    %v4514 = vadd.f32 0.0, %v4513
    %4515 = vdwg.mxu0
    %v4516 = vmul.f32 %v4514, 0.35355338
    %v4517 = vsel %vm280, %v4516, -inf
    %4518 = vmax.xlane.f32.xlu0 %v4517
    %v4519 = vpop.xlane.xlu0 %4518
    %v4520 = vsub.f32 %v4516, %v4519
    %v4521 = vmul.f32 %v4520, 1.442695
    %v4522 = vpow.pop %v4521
    %v4523 = vsel %vm280, %v4522, 0.0
    %4524 = vadd.xlane.f32.xlu0 %v4523
    %v4525 = vpop.xlane.xlu0 %4524
    %v4526 = vrcp.pop %v4525
    %v4527 = vmul.f32 %v4522, %v4526
    %4528 = vrot.lane.b32.xlu0 %v4220, 88
    %v4529 = vpop.permute.xlu0 %4528
    %4530 = vrot.lane.b32.xlu0 %v4223, 88
    %v4531 = vpop.permute.xlu0 %4530
    %v4535 = vsel %vm280, %v4527, 0
    %4537 = vmatpush.msra.mxu0 0.0
    %4538 = vmatpush.msra.mxu0 0.0
    %4539 = vmatpush.msra.mxu0 0.0
    %4540 = vmatpush.msra.mxu0 0.0
    %4541 = vmatpush.msra.mxu0 0.0
    %4542 = vmatpush.msra.mxu0 0.0
    %4543 = vmatpush.msra.mxu0 0.0
    %4544 = vmatpush.msra.mxu0 0.0
    %4545 = vmatpush.msra.mxu0 0.0
    %4546 = vmatpush.msra.mxu0 0.0
    %4547 = vmatpush.msra.mxu0 0.0
    %4548 = vmatpush.msra.mxu0 0.0
    %4549 = vmatpush.msra.mxu0 0.0
    %4550 = vmatpush.msra.mxu0 0.0
    %4551 = vmatpush.msra.mxu0 %v4531
    %4552 = vmatpush.msra.mxu0 %v4529
    %4553 = vmatmul.f32.gmra.mxu0 %v4535
    %v4554 = vpop.f32.mrf.mxu0
    %v4555 = vadd.f32 0.0, %v4554
    %4556 = vdwg.mxu0
    %v4558 = vsel %vm246, %v4555, 0
    %4560 = vmatpush.msra.mxu0 0.0
    %4561 = vmatpush.msra.mxu0 0.0
    %4562 = vmatpush.msra.mxu0 0.0
    %4563 = vmatpush.msra.mxu0 0.0
    %4564 = vmatpush.msra.mxu0 0.0
    %4565 = vmatpush.msra.mxu0 0.0
    %4566 = vmatpush.msra.mxu0 0.0
    %4567 = vmatpush.msra.mxu0 0.0
    %4568 = vmatpush.msra.mxu0 0.0
    %4569 = vmatpush.msra.mxu0 0.0
    %4570 = vmatpush.msra.mxu0 0.0
    %4571 = vmatpush.msra.mxu0 0.0
    %4572 = vmatpush.msra.mxu0 0.0
    %4573 = vmatpush.msra.mxu0 0.0
    %4574 = vmatpush.msra.mxu0 0.0
    %4575 = vmatpush.msra.mxu0 %v4136
    %4576 = vmatmul.f32.gmra.mxu0 %v4558
    %v4577 = vpop.f32.mrf.mxu0
    %v4578 = vadd.f32 0.0, %v4577
    %4579 = vdwg.mxu0
    %v4581 = vsel %vm246, %v4363, 0
    %4583 = vmatpush.msra.mxu0 0.0
    %4584 = vmatpush.msra.mxu0 0.0
    %4585 = vmatpush.msra.mxu0 0.0
    %4586 = vmatpush.msra.mxu0 0.0
    %4587 = vmatpush.msra.mxu0 0.0
    %4588 = vmatpush.msra.mxu0 0.0
    %4589 = vmatpush.msra.mxu0 0.0
    %4590 = vmatpush.msra.mxu0 0.0
    %4591 = vmatpush.msra.mxu0 0.0
    %4592 = vmatpush.msra.mxu0 0.0
    %4593 = vmatpush.msra.mxu0 0.0
    %4594 = vmatpush.msra.mxu0 0.0
    %4595 = vmatpush.msra.mxu0 0.0
    %4596 = vmatpush.msra.mxu0 0.0
    %4597 = vmatpush.msra.mxu0 0.0
    %4598 = vmatpush.msra.mxu0 %v4135
    %4599 = vmatmul.f32.gmra.mxu0 %v4581
    %v4600 = vpop.f32.mrf.mxu0
    %v4601 = vadd.f32 %v4578, %v4600
    %4602 = vdwg.mxu0
    %4603 = vrot.lane.b32.xlu0 %v4163, 112
    %v4604 = vpop.permute.xlu0 %4603
    %4605 = vrot.lane.b32.xlu0 %v4214, 112
    %v4606 = vpop.permute.xlu0 %4605
    %4607 = vrot.lane.b32.xlu0 %v4217, 112
    %v4608 = vpop.permute.xlu0 %4607
    %v4609 = vsel %vm246, %v4604, 0
    %v4611 = vsel %vm246, %v4606, 0
    %v4613 = vsel %vm246, %v4608, 0
    %4615 = vmatpush.xpose.msra.mxu0 0.0
    %4616 = vmatpush.xpose.msra.mxu0 0.0
    %4617 = vmatpush.xpose.msra.mxu0 0.0
    %4618 = vmatpush.xpose.msra.mxu0 0.0
    %4619 = vmatpush.xpose.msra.mxu0 0.0
    %4620 = vmatpush.xpose.msra.mxu0 0.0
    %4621 = vmatpush.xpose.msra.mxu0 0.0
    %4622 = vmatpush.xpose.msra.mxu0 0.0
    %4623 = vmatpush.xpose.msra.mxu0 0.0
    %4624 = vmatpush.xpose.msra.mxu0 0.0
    %4625 = vmatpush.xpose.msra.mxu0 0.0
    %4626 = vmatpush.xpose.msra.mxu0 0.0
    %4627 = vmatpush.xpose.msra.mxu0 0.0
    %4628 = vmatpush.xpose.msra.mxu0 0.0
    %4629 = vmatpush.xpose.msra.mxu0 %v4613
    %4630 = vmatpush.xpose.msra.mxu0 %v4611
    %4631 = vmatmul.f32.gmra.mxu0 %v4609
    %v4632 = vpop.f32.mrf.mxu0
    %v4633 = vadd.f32 0.0, %v4632
    %4634 = vdwg.mxu0
    %v4635 = vmul.f32 %v4633, 0.35355338
    %v4636 = vsel %vm280, %v4635, -inf
    %4637 = vmax.xlane.f32.xlu0 %v4636
    %v4638 = vpop.xlane.xlu0 %4637
    %v4639 = vsub.f32 %v4635, %v4638
    %v4640 = vmul.f32 %v4639, 1.442695
    %v4641 = vpow.pop %v4640
    %v4642 = vsel %vm280, %v4641, 0.0
    %4643 = vadd.xlane.f32.xlu0 %v4642
    %v4644 = vpop.xlane.xlu0 %4643
    %v4645 = vrcp.pop %v4644
    %v4646 = vmul.f32 %v4641, %v4645
    %4647 = vrot.lane.b32.xlu0 %v4214, 80
    %v4648 = vpop.permute.xlu0 %4647
    %4649 = vrot.lane.b32.xlu0 %v4217, 80
    %v4650 = vpop.permute.xlu0 %4649
    %v4654 = vsel %vm280, %v4646, 0
    %4656 = vmatpush.msra.mxu0 0.0
    %4657 = vmatpush.msra.mxu0 0.0
    %4658 = vmatpush.msra.mxu0 0.0
    %4659 = vmatpush.msra.mxu0 0.0
    %4660 = vmatpush.msra.mxu0 0.0
    %4661 = vmatpush.msra.mxu0 0.0
    %4662 = vmatpush.msra.mxu0 0.0
    %4663 = vmatpush.msra.mxu0 0.0
    %4664 = vmatpush.msra.mxu0 0.0
    %4665 = vmatpush.msra.mxu0 0.0
    %4666 = vmatpush.msra.mxu0 0.0
    %4667 = vmatpush.msra.mxu0 0.0
    %4668 = vmatpush.msra.mxu0 0.0
    %4669 = vmatpush.msra.mxu0 0.0
    %4670 = vmatpush.msra.mxu0 %v4650
    %4671 = vmatpush.msra.mxu0 %v4648
    %4672 = vmatmul.f32.gmra.mxu0 %v4654
    %v4673 = vpop.f32.mrf.mxu0
    %v4674 = vadd.f32 0.0, %v4673
    %4675 = vdwg.mxu0
    %v4677 = vsel %vm246, %v4674, 0
    %4679 = vmatpush.msra.mxu0 0.0
    %4680 = vmatpush.msra.mxu0 0.0
    %4681 = vmatpush.msra.mxu0 0.0
    %4682 = vmatpush.msra.mxu0 0.0
    %4683 = vmatpush.msra.mxu0 0.0
    %4684 = vmatpush.msra.mxu0 0.0
    %4685 = vmatpush.msra.mxu0 0.0
    %4686 = vmatpush.msra.mxu0 0.0
    %4687 = vmatpush.msra.mxu0 0.0
    %4688 = vmatpush.msra.mxu0 0.0
    %4689 = vmatpush.msra.mxu0 0.0
    %4690 = vmatpush.msra.mxu0 0.0
    %4691 = vmatpush.msra.mxu0 0.0
    %4692 = vmatpush.msra.mxu0 0.0
    %4693 = vmatpush.msra.mxu0 0.0
    %4694 = vmatpush.msra.mxu0 %v4137
    %4695 = vmatmul.f32.gmra.mxu0 %v4677
    %v4696 = vpop.f32.mrf.mxu0
    %v4697 = vadd.f32 0.0, %v4696
    %4698 = vdwg.mxu0
    %v4699 = vadd.f32 %v4482, %v4697
    %4700 = vrot.lane.b32.xlu0 %v4166, 112
    %v4701 = vpop.permute.xlu0 %4700
    %4702 = vrot.lane.b32.xlu0 %v4220, 112
    %v4703 = vpop.permute.xlu0 %4702
    %4704 = vrot.lane.b32.xlu0 %v4223, 112
    %v4705 = vpop.permute.xlu0 %4704
    %v4706 = vsel %vm246, %v4701, 0
    %v4708 = vsel %vm246, %v4703, 0
    %v4710 = vsel %vm246, %v4705, 0
    %4712 = vmatpush.xpose.msra.mxu0 0.0
    %4713 = vmatpush.xpose.msra.mxu0 0.0
    %4714 = vmatpush.xpose.msra.mxu0 0.0
    %4715 = vmatpush.xpose.msra.mxu0 0.0
    %4716 = vmatpush.xpose.msra.mxu0 0.0
    %4717 = vmatpush.xpose.msra.mxu0 0.0
    %4718 = vmatpush.xpose.msra.mxu0 0.0
    %4719 = vmatpush.xpose.msra.mxu0 0.0
    %4720 = vmatpush.xpose.msra.mxu0 0.0
    %4721 = vmatpush.xpose.msra.mxu0 0.0
    %4722 = vmatpush.xpose.msra.mxu0 0.0
    %4723 = vmatpush.xpose.msra.mxu0 0.0
    %4724 = vmatpush.xpose.msra.mxu0 0.0
    %4725 = vmatpush.xpose.msra.mxu0 0.0
    %4726 = vmatpush.xpose.msra.mxu0 %v4710
    %4727 = vmatpush.xpose.msra.mxu0 %v4708
    %4728 = vmatmul.f32.gmra.mxu0 %v4706
    %v4729 = vpop.f32.mrf.mxu0
    %v4730 = vadd.f32 0.0, %v4729
    %4731 = vdwg.mxu0
    %v4732 = vmul.f32 %v4730, 0.35355338
    %v4733 = vsel %vm280, %v4732, -inf
    %4734 = vmax.xlane.f32.xlu0 %v4733
    %v4735 = vpop.xlane.xlu0 %4734
    %v4736 = vsub.f32 %v4732, %v4735
    %v4737 = vmul.f32 %v4736, 1.442695
    %v4738 = vpow.pop %v4737
    %v4739 = vsel %vm280, %v4738, 0.0
    %4740 = vadd.xlane.f32.xlu0 %v4739
    %v4741 = vpop.xlane.xlu0 %4740
    %v4742 = vrcp.pop %v4741
    %v4743 = vmul.f32 %v4738, %v4742
    %4744 = vrot.lane.b32.xlu0 %v4220, 80
    %v4745 = vpop.permute.xlu0 %4744
    %4746 = vrot.lane.b32.xlu0 %v4223, 80
    %v4747 = vpop.permute.xlu0 %4746
    %v4751 = vsel %vm280, %v4743, 0
    %4753 = vmatpush.msra.mxu0 0.0
    %4754 = vmatpush.msra.mxu0 0.0
    %4755 = vmatpush.msra.mxu0 0.0
    %4756 = vmatpush.msra.mxu0 0.0
    %4757 = vmatpush.msra.mxu0 0.0
    %4758 = vmatpush.msra.mxu0 0.0
    %4759 = vmatpush.msra.mxu0 0.0
    %4760 = vmatpush.msra.mxu0 0.0
    %4761 = vmatpush.msra.mxu0 0.0
    %4762 = vmatpush.msra.mxu0 0.0
    %4763 = vmatpush.msra.mxu0 0.0
    %4764 = vmatpush.msra.mxu0 0.0
    %4765 = vmatpush.msra.mxu0 0.0
    %4766 = vmatpush.msra.mxu0 0.0
    %4767 = vmatpush.msra.mxu0 %v4747
    %4768 = vmatpush.msra.mxu0 %v4745
    %4769 = vmatmul.f32.gmra.mxu0 %v4751
    %v4770 = vpop.f32.mrf.mxu0
    %v4771 = vadd.f32 0.0, %v4770
    %4772 = vdwg.mxu0
    %v4774 = vsel %vm246, %v4771, 0
    %4776 = vmatpush.msra.mxu0 0.0
    %4777 = vmatpush.msra.mxu0 0.0
    %4778 = vmatpush.msra.mxu0 0.0
    %4779 = vmatpush.msra.mxu0 0.0
    %4780 = vmatpush.msra.mxu0 0.0
    %4781 = vmatpush.msra.mxu0 0.0
    %4782 = vmatpush.msra.mxu0 0.0
    %4783 = vmatpush.msra.mxu0 0.0
    %4784 = vmatpush.msra.mxu0 0.0
    %4785 = vmatpush.msra.mxu0 0.0
    %4786 = vmatpush.msra.mxu0 0.0
    %4787 = vmatpush.msra.mxu0 0.0
    %4788 = vmatpush.msra.mxu0 0.0
    %4789 = vmatpush.msra.mxu0 0.0
    %4790 = vmatpush.msra.mxu0 0.0
    %4791 = vmatpush.msra.mxu0 %v4137
    %4792 = vmatmul.f32.gmra.mxu0 %v4774
    %v4793 = vpop.f32.mrf.mxu0
    %v4794 = vadd.f32 0.0, %v4793
    %4795 = vdwg.mxu0
    %v4796 = vadd.f32 %v4601, %v4794
    %4797 = vrot.lane.b32.xlu0 %v4163, 104
    %v4798 = vpop.permute.xlu0 %4797
    %4799 = vrot.lane.b32.xlu0 %v4214, 104
    %v4800 = vpop.permute.xlu0 %4799
    %4801 = vrot.lane.b32.xlu0 %v4217, 104
    %v4802 = vpop.permute.xlu0 %4801
    %v4803 = vsel %vm246, %v4798, 0
    %v4805 = vsel %vm246, %v4800, 0
    %v4807 = vsel %vm246, %v4802, 0
    %4809 = vmatpush.xpose.msra.mxu0 0.0
    %4810 = vmatpush.xpose.msra.mxu0 0.0
    %4811 = vmatpush.xpose.msra.mxu0 0.0
    %4812 = vmatpush.xpose.msra.mxu0 0.0
    %4813 = vmatpush.xpose.msra.mxu0 0.0
    %4814 = vmatpush.xpose.msra.mxu0 0.0
    %4815 = vmatpush.xpose.msra.mxu0 0.0
    %4816 = vmatpush.xpose.msra.mxu0 0.0
    %4817 = vmatpush.xpose.msra.mxu0 0.0
    %4818 = vmatpush.xpose.msra.mxu0 0.0
    %4819 = vmatpush.xpose.msra.mxu0 0.0
    %4820 = vmatpush.xpose.msra.mxu0 0.0
    %4821 = vmatpush.xpose.msra.mxu0 0.0
    %4822 = vmatpush.xpose.msra.mxu0 0.0
    %4823 = vmatpush.xpose.msra.mxu0 %v4807
    %4824 = vmatpush.xpose.msra.mxu0 %v4805
    %4825 = vmatmul.f32.gmra.mxu0 %v4803
    %v4826 = vpop.f32.mrf.mxu0
    %v4827 = vadd.f32 0.0, %v4826
    %4828 = vdwg.mxu0
    %v4829 = vmul.f32 %v4827, 0.35355338
    %v4830 = vsel %vm280, %v4829, -inf
    %4831 = vmax.xlane.f32.xlu0 %v4830
    %v4832 = vpop.xlane.xlu0 %4831
    %v4833 = vsub.f32 %v4829, %v4832
    %v4834 = vmul.f32 %v4833, 1.442695
    %v4835 = vpow.pop %v4834
    %v4836 = vsel %vm280, %v4835, 0.0
    %4837 = vadd.xlane.f32.xlu0 %v4836
    %v4838 = vpop.xlane.xlu0 %4837
    %v4839 = vrcp.pop %v4838
    %v4840 = vmul.f32 %v4835, %v4839
    %4841 = vrot.lane.b32.xlu0 %v4214, 72
    %v4842 = vpop.permute.xlu0 %4841
    %4843 = vrot.lane.b32.xlu0 %v4217, 72
    %v4844 = vpop.permute.xlu0 %4843
    %v4848 = vsel %vm280, %v4840, 0
    %4850 = vmatpush.msra.mxu0 0.0
    %4851 = vmatpush.msra.mxu0 0.0
    %4852 = vmatpush.msra.mxu0 0.0
    %4853 = vmatpush.msra.mxu0 0.0
    %4854 = vmatpush.msra.mxu0 0.0
    %4855 = vmatpush.msra.mxu0 0.0
    %4856 = vmatpush.msra.mxu0 0.0
    %4857 = vmatpush.msra.mxu0 0.0
    %4858 = vmatpush.msra.mxu0 0.0
    %4859 = vmatpush.msra.mxu0 0.0
    %4860 = vmatpush.msra.mxu0 0.0
    %4861 = vmatpush.msra.mxu0 0.0
    %4862 = vmatpush.msra.mxu0 0.0
    %4863 = vmatpush.msra.mxu0 0.0
    %4864 = vmatpush.msra.mxu0 %v4844
    %4865 = vmatpush.msra.mxu0 %v4842
    %4866 = vmatmul.f32.gmra.mxu0 %v4848
    %v4867 = vpop.f32.mrf.mxu0
    %v4868 = vadd.f32 0.0, %v4867
    %4869 = vdwg.mxu0
    %v4871 = vsel %vm246, %v4868, 0
    %4873 = vmatpush.msra.mxu0 0.0
    %4874 = vmatpush.msra.mxu0 0.0
    %4875 = vmatpush.msra.mxu0 0.0
    %4876 = vmatpush.msra.mxu0 0.0
    %4877 = vmatpush.msra.mxu0 0.0
    %4878 = vmatpush.msra.mxu0 0.0
    %4879 = vmatpush.msra.mxu0 0.0
    %4880 = vmatpush.msra.mxu0 0.0
    %4881 = vmatpush.msra.mxu0 0.0
    %4882 = vmatpush.msra.mxu0 0.0
    %4883 = vmatpush.msra.mxu0 0.0
    %4884 = vmatpush.msra.mxu0 0.0
    %4885 = vmatpush.msra.mxu0 0.0
    %4886 = vmatpush.msra.mxu0 0.0
    %4887 = vmatpush.msra.mxu0 0.0
    %4888 = vmatpush.msra.mxu0 %v4138
    %4889 = vmatmul.f32.gmra.mxu0 %v4871
    %v4890 = vpop.f32.mrf.mxu0
    %v4891 = vadd.f32 0.0, %v4890
    %4892 = vdwg.mxu0
    %v4893 = vadd.f32 %v4699, %v4891
    %4894 = vrot.lane.b32.xlu0 %v4166, 104
    %v4895 = vpop.permute.xlu0 %4894
    %4896 = vrot.lane.b32.xlu0 %v4220, 104
    %v4897 = vpop.permute.xlu0 %4896
    %4898 = vrot.lane.b32.xlu0 %v4223, 104
    %v4899 = vpop.permute.xlu0 %4898
    %v4900 = vsel %vm246, %v4895, 0
    %v4902 = vsel %vm246, %v4897, 0
    %v4904 = vsel %vm246, %v4899, 0
    %4906 = vmatpush.xpose.msra.mxu0 0.0
    %4907 = vmatpush.xpose.msra.mxu0 0.0
    %4908 = vmatpush.xpose.msra.mxu0 0.0
    %4909 = vmatpush.xpose.msra.mxu0 0.0
    %4910 = vmatpush.xpose.msra.mxu0 0.0
    %4911 = vmatpush.xpose.msra.mxu0 0.0
    %4912 = vmatpush.xpose.msra.mxu0 0.0
    %4913 = vmatpush.xpose.msra.mxu0 0.0
    %4914 = vmatpush.xpose.msra.mxu0 0.0
    %4915 = vmatpush.xpose.msra.mxu0 0.0
    %4916 = vmatpush.xpose.msra.mxu0 0.0
    %4917 = vmatpush.xpose.msra.mxu0 0.0
    %4918 = vmatpush.xpose.msra.mxu0 0.0
    %4919 = vmatpush.xpose.msra.mxu0 0.0
    %4920 = vmatpush.xpose.msra.mxu0 %v4904
    %4921 = vmatpush.xpose.msra.mxu0 %v4902
    %4922 = vmatmul.f32.gmra.mxu0 %v4900
    %v4923 = vpop.f32.mrf.mxu0
    %v4924 = vadd.f32 0.0, %v4923
    %4925 = vdwg.mxu0
    %v4926 = vmul.f32 %v4924, 0.35355338
    %v4927 = vsel %vm280, %v4926, -inf
    %4928 = vmax.xlane.f32.xlu0 %v4927
    %v4929 = vpop.xlane.xlu0 %4928
    %v4930 = vsub.f32 %v4926, %v4929
    %v4931 = vmul.f32 %v4930, 1.442695
    %v4932 = vpow.pop %v4931
    %v4933 = vsel %vm280, %v4932, 0.0
    %4934 = vadd.xlane.f32.xlu0 %v4933
    %v4935 = vpop.xlane.xlu0 %4934
    %v4936 = vrcp.pop %v4935
    %v4937 = vmul.f32 %v4932, %v4936
    %4938 = vrot.lane.b32.xlu0 %v4220, 72
    %v4939 = vpop.permute.xlu0 %4938
    %4940 = vrot.lane.b32.xlu0 %v4223, 72
    %v4941 = vpop.permute.xlu0 %4940
    %v4945 = vsel %vm280, %v4937, 0
    %4947 = vmatpush.msra.mxu0 0.0
    %4948 = vmatpush.msra.mxu0 0.0
    %4949 = vmatpush.msra.mxu0 0.0
    %4950 = vmatpush.msra.mxu0 0.0
    %4951 = vmatpush.msra.mxu0 0.0
    %4952 = vmatpush.msra.mxu0 0.0
    %4953 = vmatpush.msra.mxu0 0.0
    %4954 = vmatpush.msra.mxu0 0.0
    %4955 = vmatpush.msra.mxu0 0.0
    %4956 = vmatpush.msra.mxu0 0.0
    %4957 = vmatpush.msra.mxu0 0.0
    %4958 = vmatpush.msra.mxu0 0.0
    %4959 = vmatpush.msra.mxu0 0.0
    %4960 = vmatpush.msra.mxu0 0.0
    %4961 = vmatpush.msra.mxu0 %v4941
    %4962 = vmatpush.msra.mxu0 %v4939
    %4963 = vmatmul.f32.gmra.mxu0 %v4945
    %v4964 = vpop.f32.mrf.mxu0
    %v4965 = vadd.f32 0.0, %v4964
    %4966 = vdwg.mxu0
    %v4968 = vsel %vm246, %v4965, 0
    %4970 = vmatpush.msra.mxu0 0.0
    %4971 = vmatpush.msra.mxu0 0.0
    %4972 = vmatpush.msra.mxu0 0.0
    %4973 = vmatpush.msra.mxu0 0.0
    %4974 = vmatpush.msra.mxu0 0.0
    %4975 = vmatpush.msra.mxu0 0.0
    %4976 = vmatpush.msra.mxu0 0.0
    %4977 = vmatpush.msra.mxu0 0.0
    %4978 = vmatpush.msra.mxu0 0.0
    %4979 = vmatpush.msra.mxu0 0.0
    %4980 = vmatpush.msra.mxu0 0.0
    %4981 = vmatpush.msra.mxu0 0.0
    %4982 = vmatpush.msra.mxu0 0.0
    %4983 = vmatpush.msra.mxu0 0.0
    %4984 = vmatpush.msra.mxu0 0.0
    %4985 = vmatpush.msra.mxu0 %v4138
    %4986 = vmatmul.f32.gmra.mxu0 %v4968
    %v4987 = vpop.f32.mrf.mxu0
    %v4988 = vadd.f32 0.0, %v4987
    %4989 = vdwg.mxu0
    %v4990 = vadd.f32 %v4796, %v4988
    %v4991 = vadd.f32 %v4045, %v4893
    %v4992 = vadd.f32 %v4046, %v4990
    %v4993 = vld [vmem:[%s2 + $0x250] sm:$0x1]
    %v4994 = vld [vmem:[%s2 + $0x258] sm:$0x1]
    %v4995 = vsel %vm21, %v4991, 0.0
    %4996 = vadd.xlane.f32.xlu0 %v4995
    %v4997 = vpop.xlane.xlu0 %4996
    %v4998 = vsel %vm21, %v4992, 0.0
    %4999 = vadd.xlane.f32.xlu0 %v4998
    %v5000 = vpop.xlane.xlu0 %4999
    %v5001 = vmul.f32 %v4997, %v40
    %v5002 = vmul.f32 %v5000, %v40
    %v5003 = vsub.f32 %v4991, %v5001
    %v5004 = vsub.f32 %v4992, %v5002
    %v5005 = vmul.f32 %v5003, %v5003
    %v5006 = vmul.f32 %v5004, %v5004
    %v5007 = vsel %vm21, %v5005, 0.0
    %5008 = vadd.xlane.f32.xlu0 %v5007
    %v5009 = vpop.xlane.xlu0 %5008
    %v5010 = vsel %vm21, %v5006, 0.0
    %5011 = vadd.xlane.f32.xlu0 %v5010
    %v5012 = vpop.xlane.xlu0 %5011
    %v5013 = vmul.f32 %v5009, 0.032258064
    %v5014 = vmul.f32 %v5012, 0.032258064
    %v5015 = vrsqrt.pop %v5013
    %v5016 = vmul.f32 %v5015, %v5013
    %v5017 = vmul.f32 %v5016, %v5015
    %v5018 = vmul.f32 0.5, %v5017
    %v5019 = vsub.f32 1.5, %v5018
    %v5020 = vmul.f32 %v5015, %v5019
    %v5021 = vmul.f32 %v5013, %v5020
    %vm5022 = vcmp.eq.f32.partialorder %v5013, inf
    %v5023 = vsel %vm5022, %v5013, %v5021
    %vm5024 = vcmp.eq.f32.partialorder %v5013, 0.0
    %v5025 = vand.u32 %v5013, 2147483648
    %v5026 = vsel %vm5024, %v5025, %v5023
    %v5027 = vrsqrt.pop %v5014
    %v5028 = vmul.f32 %v5027, %v5014
    %v5029 = vmul.f32 %v5028, %v5027
    %v5030 = vmul.f32 0.5, %v5029
    %v5031 = vsub.f32 1.5, %v5030
    %v5032 = vmul.f32 %v5027, %v5031
    %v5033 = vmul.f32 %v5014, %v5032
    %vm5034 = vcmp.eq.f32.partialorder %v5014, inf
    %v5035 = vsel %vm5034, %v5014, %v5033
    %vm5036 = vcmp.eq.f32.partialorder %v5014, 0.0
    %v5037 = vand.u32 %v5014, 2147483648
    %v5038 = vsel %vm5036, %v5037, %v5035
    %v5039 = vadd.f32 %v5026, 1e-05
    %v5040 = vadd.f32 %v5038, 1e-05
    %v5041 = vrcp.pop %v5039
    %v5042 = vmul.f32 %v5039, %v5041
    %v5043 = vsub.f32 1.0, %v5042
    %v5044 = vmul.f32 %v5041, %v5043
    %v5045 = vadd.f32 %v5041, %v5044
    %vm5046 = vweird.f32 %v5039
    %vm5047 = vweird.f32 %v5041
    %vm5048 = vmor %vm5046, %vm5047
    %v5049 = vsel %vm5048, %v5041, %v5045
    %v5050 = vand.u32 2147483647, %v5039
    %vm5051 = vcmp.eq.f32.partialorder %v5050, 8.507059e+37
    %v5052 = vand.u32 %v5039, 2147483648
    %v5053 = vor.u32 1.1754944e-38, %v5052
    %v5054 = vsel %vm5051, %v5053, %v5049
    %v5055 = vmul.f32 %v5003, %v5054
    %v5056 = vrcp.pop %v5040
    %v5057 = vmul.f32 %v5040, %v5056
    %v5058 = vsub.f32 1.0, %v5057
    %v5059 = vmul.f32 %v5056, %v5058
    %v5060 = vadd.f32 %v5056, %v5059
    %vm5061 = vweird.f32 %v5040
    %vm5062 = vweird.f32 %v5056
    %vm5063 = vmor %vm5061, %vm5062
    %v5064 = vsel %vm5063, %v5056, %v5060
    %v5065 = vand.u32 2147483647, %v5040
    %vm5066 = vcmp.eq.f32.partialorder %v5065, 8.507059e+37
    %v5067 = vand.u32 %v5040, 2147483648
    %v5068 = vor.u32 1.1754944e-38, %v5067
    %v5069 = vsel %vm5066, %v5068, %v5064
    %v5070 = vmul.f32 %v5004, %v5069
    %v5071 = vperm.slane %v4993, 0
    %v5072 = vmul.f32 %v5071, %v5055
    %v5073 = vmul.f32 %v5071, %v5070
    %v5074 = vperm.slane %v4994, 0
    %v5075 = vadd.f32 %v5072, %v5074
    %v5076 = vadd.f32 %v5073, %v5074
    %v5077 = vld [vmem:[%s2 + $0x260] sm:$0xff]
    %v5078 = vld [vmem:[%s2 + $0x268] sm:$0xff]
    %v5079 = vld [vmem:[%s2 + $0x270] sm:$0xff]
    %v5080 = vld [vmem:[%s2 + $0x278] sm:$0xff]
    %v5081 = vld [vmem:[%s2 + $0x280] sm:$0x1]
    %v5082 = vld [vmem:[%s2 + $0x288] sm:$0xff]
    %v5083 = vld [vmem:[%s2 + $0x290] sm:$0xff]
    %v5084 = vld [vmem:[%s2 + $0x298] sm:$0xff]
    %v5085 = vld [vmem:[%s2 + $0x2a0] sm:$0xff]
    %v5086 = vld [vmem:[%s2 + $0x2a8] sm:$0xff]
    %v5087 = vld [vmem:[%s2 + $0x2b0] sm:$0xff]
    %v5088 = vld [vmem:[%s2 + $0x2b8] sm:$0xff]
    %v5089 = vld [vmem:[%s2 + $0x2c0] sm:$0xff]
    %v5090 = vld [vmem:[%s2 + $0x2c8] sm:$0x1]
    %v5091 = vperm.slane %v5081, 0
    %v5093 = vsel %vm21, %v5075, 0
    %v5096 = vsel %vm21, %v5076, 0
    %5098 = vmatpush.msra.mxu0 0.0
    %5099 = vmatpush.msra.mxu0 0.0
    %5100 = vmatpush.msra.mxu0 0.0
    %5101 = vmatpush.msra.mxu0 0.0
    %5102 = vmatpush.msra.mxu0 0.0
    %5103 = vmatpush.msra.mxu0 0.0
    %5104 = vmatpush.msra.mxu0 0.0
    %5105 = vmatpush.msra.mxu0 0.0
    %5106 = vmatpush.msra.mxu0 0.0
    %5107 = vmatpush.msra.mxu0 0.0
    %5108 = vmatpush.msra.mxu0 0.0
    %5109 = vmatpush.msra.mxu0 0.0
    %5110 = vmatpush.msra.mxu0 %v5080
    %5111 = vmatpush.msra.mxu0 %v5079
    %5112 = vmatpush.msra.mxu0 %v5078
    %5113 = vmatpush.msra.mxu0 %v5077
    %5114 = vmatmul.f32.gmra.mxu0 %v5093
    %v5115 = vpop.f32.mrf.mxu0
    %v5116 = vadd.f32 %v5091, %v5115
    %5117 = vmatmul.f32.gmra.mxu0 %v5096
    %v5118 = vpop.f32.mrf.mxu0
    %v5119 = vadd.f32 %v5091, %v5118
    %5120 = vdwg.mxu0
    %v5121 = vmax.f32 %v5116, 0.0
    %v5122 = vmax.f32 %v5119, 0.0
    %v5123 = vperm.slane %v5090, 0
    %v5125 = vsel %vm1491, %v5121, 0
    %v5128 = vsel %vm1491, %v5122, 0
    %5130 = vmatpush.msra.mxu0 0.0
    %5131 = vmatpush.msra.mxu0 0.0
    %5132 = vmatpush.msra.mxu0 0.0
    %5133 = vmatpush.msra.mxu0 0.0
    %5134 = vmatpush.msra.mxu0 0.0
    %5135 = vmatpush.msra.mxu0 0.0
    %5136 = vmatpush.msra.mxu0 0.0
    %5137 = vmatpush.msra.mxu0 0.0
    %5138 = vmatpush.msra.mxu0 %v5089
    %5139 = vmatpush.msra.mxu0 %v5088
    %5140 = vmatpush.msra.mxu0 %v5087
    %5141 = vmatpush.msra.mxu0 %v5086
    %5142 = vmatpush.msra.mxu0 %v5085
    %5143 = vmatpush.msra.mxu0 %v5084
    %5144 = vmatpush.msra.mxu0 %v5083
    %5145 = vmatpush.msra.mxu0 %v5082
    %5146 = vmatmul.f32.gmra.mxu0 %v5125
    %v5147 = vpop.f32.mrf.mxu0
    %v5148 = vadd.f32 %v5123, %v5147
    %5149 = vmatmul.f32.gmra.mxu0 %v5128
    %v5150 = vpop.f32.mrf.mxu0
    %v5151 = vadd.f32 %v5123, %v5150
    %5152 = vdwg.mxu0
    %v5153 = vadd.f32 %v4991, %v5148
    %v5154 = vadd.f32 %v4992, %v5151
    %v5155 = vld [vmem:[%s2 + $0x2d0] sm:$0x1]
    %v5156 = vld [vmem:[%s2 + $0x2d8] sm:$0x1]
    %v5157 = vsel %vm21, %v5153, 0.0
    %5158 = vadd.xlane.f32.xlu0 %v5157
    %v5159 = vpop.xlane.xlu0 %5158
    %v5160 = vsel %vm21, %v5154, 0.0
    %5161 = vadd.xlane.f32.xlu0 %v5160
    %v5162 = vpop.xlane.xlu0 %5161
    %v5163 = vmul.f32 %v5159, %v40
    %v5164 = vmul.f32 %v5162, %v40
    %v5165 = vsub.f32 %v5153, %v5163
    %v5166 = vsub.f32 %v5154, %v5164
    %v5167 = vmul.f32 %v5165, %v5165
    %v5168 = vmul.f32 %v5166, %v5166
    %v5169 = vsel %vm21, %v5167, 0.0
    %5170 = vadd.xlane.f32.xlu0 %v5169
    %v5171 = vpop.xlane.xlu0 %5170
    %v5172 = vsel %vm21, %v5168, 0.0
    %5173 = vadd.xlane.f32.xlu0 %v5172
    %v5174 = vpop.xlane.xlu0 %5173
    %v5175 = vmul.f32 %v5171, 0.032258064
    %v5176 = vmul.f32 %v5174, 0.032258064
    %v5177 = vrsqrt.pop %v5175
    %v5178 = vmul.f32 %v5177, %v5175
    %v5179 = vmul.f32 %v5178, %v5177
    %v5180 = vmul.f32 0.5, %v5179
    %v5181 = vsub.f32 1.5, %v5180
    %v5182 = vmul.f32 %v5177, %v5181
    %v5183 = vmul.f32 %v5175, %v5182
    %vm5184 = vcmp.eq.f32.partialorder %v5175, inf
    %v5185 = vsel %vm5184, %v5175, %v5183
    %vm5186 = vcmp.eq.f32.partialorder %v5175, 0.0
    %v5187 = vand.u32 %v5175, 2147483648
    %v5188 = vsel %vm5186, %v5187, %v5185
    %v5189 = vrsqrt.pop %v5176
    %v5190 = vmul.f32 %v5189, %v5176
    %v5191 = vmul.f32 %v5190, %v5189
    %v5192 = vmul.f32 0.5, %v5191
    %v5193 = vsub.f32 1.5, %v5192
    %v5194 = vmul.f32 %v5189, %v5193
    %v5195 = vmul.f32 %v5176, %v5194
    %vm5196 = vcmp.eq.f32.partialorder %v5176, inf
    %v5197 = vsel %vm5196, %v5176, %v5195
    %vm5198 = vcmp.eq.f32.partialorder %v5176, 0.0
    %v5199 = vand.u32 %v5176, 2147483648
    %v5200 = vsel %vm5198, %v5199, %v5197
    %v5201 = vadd.f32 %v5188, 1e-05
    %v5202 = vadd.f32 %v5200, 1e-05
    %v5203 = vrcp.pop %v5201
    %v5204 = vmul.f32 %v5201, %v5203
    %v5205 = vsub.f32 1.0, %v5204
    %v5206 = vmul.f32 %v5203, %v5205
    %v5207 = vadd.f32 %v5203, %v5206
    %vm5208 = vweird.f32 %v5201
    %vm5209 = vweird.f32 %v5203
    %vm5210 = vmor %vm5208, %vm5209
    %v5211 = vsel %vm5210, %v5203, %v5207
    %v5212 = vand.u32 2147483647, %v5201
    %vm5213 = vcmp.eq.f32.partialorder %v5212, 8.507059e+37
    %v5214 = vand.u32 %v5201, 2147483648
    %v5215 = vor.u32 1.1754944e-38, %v5214
    %v5216 = vsel %vm5213, %v5215, %v5211
    %v5217 = vmul.f32 %v5165, %v5216
    %v5218 = vrcp.pop %v5202
    %v5219 = vmul.f32 %v5202, %v5218
    %v5220 = vsub.f32 1.0, %v5219
    %v5221 = vmul.f32 %v5218, %v5220
    %v5222 = vadd.f32 %v5218, %v5221
    %vm5223 = vweird.f32 %v5202
    %vm5224 = vweird.f32 %v5218
    %vm5225 = vmor %vm5223, %vm5224
    %v5226 = vsel %vm5225, %v5218, %v5222
    %v5227 = vand.u32 2147483647, %v5202
    %vm5228 = vcmp.eq.f32.partialorder %v5227, 8.507059e+37
    %v5229 = vand.u32 %v5202, 2147483648
    %v5230 = vor.u32 1.1754944e-38, %v5229
    %v5231 = vsel %vm5228, %v5230, %v5226
    %v5232 = vmul.f32 %v5166, %v5231
    %v5233 = vperm.slane %v5155, 0
    %v5234 = vmul.f32 %v5233, %v5217
    %v5235 = vmul.f32 %v5233, %v5232
    %v5236 = vperm.slane %v5156, 0
    %v5237 = vadd.f32 %v5234, %v5236
    %v5238 = vadd.f32 %v5235, %v5236
    %v5239 = vld [vmem:[%s2 + $0x2e0] sm:$0xff]
    %v5240 = vld [vmem:[%s2 + $0x2e8] sm:$0xff]
    %v5241 = vld [vmem:[%s2 + $0x2f0] sm:$0xff]
    %v5242 = vld [vmem:[%s2 + $0x2f8] sm:$0xff]
    %v5243 = vld [vmem:[%s2 + $0x300] sm:$0xff]
    %v5244 = vld [vmem:[%s2 + $0x308] sm:$0xff]
    %v5245 = vld [vmem:[%s2 + $0x310] sm:$0xff]
    %v5246 = vld [vmem:[%s2 + $0x318] sm:$0xff]
    %v5248 = vsel %vm21, %v5237, 0
    %v5251 = vsel %vm21, %v5238, 0
    %5253 = vmatpush.msra.mxu0 0.0
    %5254 = vmatpush.msra.mxu0 0.0
    %5255 = vmatpush.msra.mxu0 0.0
    %5256 = vmatpush.msra.mxu0 0.0
    %5257 = vmatpush.msra.mxu0 0.0
    %5258 = vmatpush.msra.mxu0 0.0
    %5259 = vmatpush.msra.mxu0 0.0
    %5260 = vmatpush.msra.mxu0 0.0
    %5261 = vmatpush.msra.mxu0 0.0
    %5262 = vmatpush.msra.mxu0 0.0
    %5263 = vmatpush.msra.mxu0 0.0
    %5264 = vmatpush.msra.mxu0 0.0
    %5265 = vmatpush.msra.mxu0 %v5242
    %5266 = vmatpush.msra.mxu0 %v5241
    %5267 = vmatpush.msra.mxu0 %v5240
    %5268 = vmatpush.msra.mxu0 %v5239
    %5269 = vmatmul.f32.gmra.mxu0 %v5248
    %v5270 = vpop.f32.mrf.mxu0
    %v5271 = vadd.f32 0.0, %v5270
    %5272 = vmatmul.f32.gmra.mxu0 %v5251
    %v5273 = vpop.f32.mrf.mxu0
    %v5274 = vadd.f32 0.0, %v5273
    %5275 = vdwg.mxu0
    %5277 = vrot.lane.b32.xlu0 %v5271, 96
    %v5278 = vpop.permute.xlu0 %5277
    %v5279 = vsel %vm246, %v5271, 0
    %v5281 = vsel %vm246, %v5278, 0
    %5283 = vmatpush.xpose.msra.mxu0 0.0
    %5284 = vmatpush.xpose.msra.mxu0 0.0
    %5285 = vmatpush.xpose.msra.mxu0 0.0
    %5286 = vmatpush.xpose.msra.mxu0 0.0
    %5287 = vmatpush.xpose.msra.mxu0 0.0
    %5288 = vmatpush.xpose.msra.mxu0 0.0
    %5289 = vmatpush.xpose.msra.mxu0 0.0
    %5290 = vmatpush.xpose.msra.mxu0 0.0
    %5291 = vmatpush.xpose.msra.mxu0 0.0
    %5292 = vmatpush.xpose.msra.mxu0 0.0
    %5293 = vmatpush.xpose.msra.mxu0 0.0
    %5294 = vmatpush.xpose.msra.mxu0 0.0
    %5295 = vmatpush.xpose.msra.mxu0 0.0
    %5296 = vmatpush.xpose.msra.mxu0 0.0
    %5297 = vmatpush.xpose.msra.mxu0 0.0
    %5298 = vmatpush.xpose.msra.mxu0 %v5281
    %5299 = vmatmul.f32.gmra.mxu0 %v5279
    %v5300 = vpop.f32.mrf.mxu0
    %v5301 = vadd.f32 0.0, %v5300
    %5302 = vdwg.mxu0
    %v5303 = vmul.f32 %v5301, 0.35355338
    %v5304 = vsel %vm246, %v5303, -inf
    %5305 = vmax.xlane.f32.xlu0 %v5304
    %v5306 = vpop.xlane.xlu0 %5305
    %v5307 = vsub.f32 %v5303, %v5306
    %v5308 = vmul.f32 %v5307, 1.442695
    %v5309 = vpow.pop %v5308
    %v5310 = vsel %vm246, %v5309, 0.0
    %5311 = vadd.xlane.f32.xlu0 %v5310
    %v5312 = vpop.xlane.xlu0 %5311
    %v5313 = vrcp.pop %v5312
    %v5314 = vmul.f32 %v5309, %v5313
    %5315 = vrot.lane.b32.xlu0 %v5271, 64
    %v5316 = vpop.permute.xlu0 %5315
    %v5319 = vsel %vm246, %v5314, 0
    %5321 = vmatpush.msra.mxu0 0.0
    %5322 = vmatpush.msra.mxu0 0.0
    %5323 = vmatpush.msra.mxu0 0.0
    %5324 = vmatpush.msra.mxu0 0.0
    %5325 = vmatpush.msra.mxu0 0.0
    %5326 = vmatpush.msra.mxu0 0.0
    %5327 = vmatpush.msra.mxu0 0.0
    %5328 = vmatpush.msra.mxu0 0.0
    %5329 = vmatpush.msra.mxu0 0.0
    %5330 = vmatpush.msra.mxu0 0.0
    %5331 = vmatpush.msra.mxu0 0.0
    %5332 = vmatpush.msra.mxu0 0.0
    %5333 = vmatpush.msra.mxu0 0.0
    %5334 = vmatpush.msra.mxu0 0.0
    %5335 = vmatpush.msra.mxu0 0.0
    %5336 = vmatpush.msra.mxu0 %v5316
    %5337 = vmatmul.f32.gmra.mxu0 %v5319
    %v5338 = vpop.f32.mrf.mxu0
    %v5339 = vadd.f32 0.0, %v5338
    %5340 = vdwg.mxu0
    %5342 = vrot.lane.b32.xlu0 %v5274, 96
    %v5343 = vpop.permute.xlu0 %5342
    %v5344 = vsel %vm246, %v5274, 0
    %v5346 = vsel %vm246, %v5343, 0
    %5348 = vmatpush.xpose.msra.mxu0 0.0
    %5349 = vmatpush.xpose.msra.mxu0 0.0
    %5350 = vmatpush.xpose.msra.mxu0 0.0
    %5351 = vmatpush.xpose.msra.mxu0 0.0
    %5352 = vmatpush.xpose.msra.mxu0 0.0
    %5353 = vmatpush.xpose.msra.mxu0 0.0
    %5354 = vmatpush.xpose.msra.mxu0 0.0
    %5355 = vmatpush.xpose.msra.mxu0 0.0
    %5356 = vmatpush.xpose.msra.mxu0 0.0
    %5357 = vmatpush.xpose.msra.mxu0 0.0
    %5358 = vmatpush.xpose.msra.mxu0 0.0
    %5359 = vmatpush.xpose.msra.mxu0 0.0
    %5360 = vmatpush.xpose.msra.mxu0 0.0
    %5361 = vmatpush.xpose.msra.mxu0 0.0
    %5362 = vmatpush.xpose.msra.mxu0 0.0
    %5363 = vmatpush.xpose.msra.mxu0 %v5346
    %5364 = vmatmul.f32.gmra.mxu0 %v5344
    %v5365 = vpop.f32.mrf.mxu0
    %v5366 = vadd.f32 0.0, %v5365
    %5367 = vdwg.mxu0
    %v5368 = vmul.f32 %v5366, 0.35355338
    %v5369 = vsel %vm246, %v5368, -inf
    %5370 = vmax.xlane.f32.xlu0 %v5369
    %v5371 = vpop.xlane.xlu0 %5370
    %v5372 = vsub.f32 %v5368, %v5371
    %v5373 = vmul.f32 %v5372, 1.442695
    %v5374 = vpow.pop %v5373
    %v5375 = vsel %vm246, %v5374, 0.0
    %5376 = vadd.xlane.f32.xlu0 %v5375
    %v5377 = vpop.xlane.xlu0 %5376
    %v5378 = vrcp.pop %v5377
    %v5379 = vmul.f32 %v5374, %v5378
    %5380 = vrot.lane.b32.xlu0 %v5274, 64
    %v5381 = vpop.permute.xlu0 %5380
    %v5384 = vsel %vm246, %v5379, 0
    %5386 = vmatpush.msra.mxu0 0.0
    %5387 = vmatpush.msra.mxu0 0.0
    %5388 = vmatpush.msra.mxu0 0.0
    %5389 = vmatpush.msra.mxu0 0.0
    %5390 = vmatpush.msra.mxu0 0.0
    %5391 = vmatpush.msra.mxu0 0.0
    %5392 = vmatpush.msra.mxu0 0.0
    %5393 = vmatpush.msra.mxu0 0.0
    %5394 = vmatpush.msra.mxu0 0.0
    %5395 = vmatpush.msra.mxu0 0.0
    %5396 = vmatpush.msra.mxu0 0.0
    %5397 = vmatpush.msra.mxu0 0.0
    %5398 = vmatpush.msra.mxu0 0.0
    %5399 = vmatpush.msra.mxu0 0.0
    %5400 = vmatpush.msra.mxu0 0.0
    %5401 = vmatpush.msra.mxu0 %v5381
    %5402 = vmatmul.f32.gmra.mxu0 %v5384
    %v5403 = vpop.f32.mrf.mxu0
    %v5404 = vadd.f32 0.0, %v5403
    %5405 = vdwg.mxu0
    %5406 = vrot.lane.b32.xlu0 %v5271, 120
    %v5407 = vpop.permute.xlu0 %5406
    %5408 = vrot.lane.b32.xlu0 %v5271, 88
    %v5409 = vpop.permute.xlu0 %5408
    %v5410 = vsel %vm246, %v5407, 0
    %v5412 = vsel %vm246, %v5409, 0
    %5414 = vmatpush.xpose.msra.mxu0 0.0
    %5415 = vmatpush.xpose.msra.mxu0 0.0
    %5416 = vmatpush.xpose.msra.mxu0 0.0
    %5417 = vmatpush.xpose.msra.mxu0 0.0
    %5418 = vmatpush.xpose.msra.mxu0 0.0
    %5419 = vmatpush.xpose.msra.mxu0 0.0
    %5420 = vmatpush.xpose.msra.mxu0 0.0
    %5421 = vmatpush.xpose.msra.mxu0 0.0
    %5422 = vmatpush.xpose.msra.mxu0 0.0
    %5423 = vmatpush.xpose.msra.mxu0 0.0
    %5424 = vmatpush.xpose.msra.mxu0 0.0
    %5425 = vmatpush.xpose.msra.mxu0 0.0
    %5426 = vmatpush.xpose.msra.mxu0 0.0
    %5427 = vmatpush.xpose.msra.mxu0 0.0
    %5428 = vmatpush.xpose.msra.mxu0 0.0
    %5429 = vmatpush.xpose.msra.mxu0 %v5412
    %5430 = vmatmul.f32.gmra.mxu0 %v5410
    %v5431 = vpop.f32.mrf.mxu0
    %v5432 = vadd.f32 0.0, %v5431
    %5433 = vdwg.mxu0
    %v5434 = vmul.f32 %v5432, 0.35355338
    %v5435 = vsel %vm246, %v5434, -inf
    %5436 = vmax.xlane.f32.xlu0 %v5435
    %v5437 = vpop.xlane.xlu0 %5436
    %v5438 = vsub.f32 %v5434, %v5437
    %v5439 = vmul.f32 %v5438, 1.442695
    %v5440 = vpow.pop %v5439
    %v5441 = vsel %vm246, %v5440, 0.0
    %5442 = vadd.xlane.f32.xlu0 %v5441
    %v5443 = vpop.xlane.xlu0 %5442
    %v5444 = vrcp.pop %v5443
    %v5445 = vmul.f32 %v5440, %v5444
    %5446 = vrot.lane.b32.xlu0 %v5271, 56
    %v5447 = vpop.permute.xlu0 %5446
    %v5450 = vsel %vm246, %v5445, 0
    %5452 = vmatpush.msra.mxu0 0.0
    %5453 = vmatpush.msra.mxu0 0.0
    %5454 = vmatpush.msra.mxu0 0.0
    %5455 = vmatpush.msra.mxu0 0.0
    %5456 = vmatpush.msra.mxu0 0.0
    %5457 = vmatpush.msra.mxu0 0.0
    %5458 = vmatpush.msra.mxu0 0.0
    %5459 = vmatpush.msra.mxu0 0.0
    %5460 = vmatpush.msra.mxu0 0.0
    %5461 = vmatpush.msra.mxu0 0.0
    %5462 = vmatpush.msra.mxu0 0.0
    %5463 = vmatpush.msra.mxu0 0.0
    %5464 = vmatpush.msra.mxu0 0.0
    %5465 = vmatpush.msra.mxu0 0.0
    %5466 = vmatpush.msra.mxu0 0.0
    %5467 = vmatpush.msra.mxu0 %v5447
    %5468 = vmatmul.f32.gmra.mxu0 %v5450
    %v5469 = vpop.f32.mrf.mxu0
    %v5470 = vadd.f32 0.0, %v5469
    %5471 = vdwg.mxu0
    %v5473 = vsel %vm246, %v5470, 0
    %5475 = vmatpush.msra.mxu0 0.0
    %5476 = vmatpush.msra.mxu0 0.0
    %5477 = vmatpush.msra.mxu0 0.0
    %5478 = vmatpush.msra.mxu0 0.0
    %5479 = vmatpush.msra.mxu0 0.0
    %5480 = vmatpush.msra.mxu0 0.0
    %5481 = vmatpush.msra.mxu0 0.0
    %5482 = vmatpush.msra.mxu0 0.0
    %5483 = vmatpush.msra.mxu0 0.0
    %5484 = vmatpush.msra.mxu0 0.0
    %5485 = vmatpush.msra.mxu0 0.0
    %5486 = vmatpush.msra.mxu0 0.0
    %5487 = vmatpush.msra.mxu0 0.0
    %5488 = vmatpush.msra.mxu0 0.0
    %5489 = vmatpush.msra.mxu0 0.0
    %5490 = vmatpush.msra.mxu0 %v5244
    %5491 = vmatmul.f32.gmra.mxu0 %v5473
    %v5492 = vpop.f32.mrf.mxu0
    %v5493 = vadd.f32 0.0, %v5492
    %5494 = vdwg.mxu0
    %v5496 = vsel %vm246, %v5339, 0
    %5498 = vmatpush.msra.mxu0 0.0
    %5499 = vmatpush.msra.mxu0 0.0
    %5500 = vmatpush.msra.mxu0 0.0
    %5501 = vmatpush.msra.mxu0 0.0
    %5502 = vmatpush.msra.mxu0 0.0
    %5503 = vmatpush.msra.mxu0 0.0
    %5504 = vmatpush.msra.mxu0 0.0
    %5505 = vmatpush.msra.mxu0 0.0
    %5506 = vmatpush.msra.mxu0 0.0
    %5507 = vmatpush.msra.mxu0 0.0
    %5508 = vmatpush.msra.mxu0 0.0
    %5509 = vmatpush.msra.mxu0 0.0
    %5510 = vmatpush.msra.mxu0 0.0
    %5511 = vmatpush.msra.mxu0 0.0
    %5512 = vmatpush.msra.mxu0 0.0
    %5513 = vmatpush.msra.mxu0 %v5243
    %5514 = vmatmul.f32.gmra.mxu0 %v5496
    %v5515 = vpop.f32.mrf.mxu0
    %v5516 = vadd.f32 %v5493, %v5515
    %5517 = vdwg.mxu0
    %5518 = vrot.lane.b32.xlu0 %v5274, 120
    %v5519 = vpop.permute.xlu0 %5518
    %5520 = vrot.lane.b32.xlu0 %v5274, 88
    %v5521 = vpop.permute.xlu0 %5520
    %v5522 = vsel %vm246, %v5519, 0
    %v5524 = vsel %vm246, %v5521, 0
    %5526 = vmatpush.xpose.msra.mxu0 0.0
    %5527 = vmatpush.xpose.msra.mxu0 0.0
    %5528 = vmatpush.xpose.msra.mxu0 0.0
    %5529 = vmatpush.xpose.msra.mxu0 0.0
    %5530 = vmatpush.xpose.msra.mxu0 0.0
    %5531 = vmatpush.xpose.msra.mxu0 0.0
    %5532 = vmatpush.xpose.msra.mxu0 0.0
    %5533 = vmatpush.xpose.msra.mxu0 0.0
    %5534 = vmatpush.xpose.msra.mxu0 0.0
    %5535 = vmatpush.xpose.msra.mxu0 0.0
    %5536 = vmatpush.xpose.msra.mxu0 0.0
    %5537 = vmatpush.xpose.msra.mxu0 0.0
    %5538 = vmatpush.xpose.msra.mxu0 0.0
    %5539 = vmatpush.xpose.msra.mxu0 0.0
    %5540 = vmatpush.xpose.msra.mxu0 0.0
    %5541 = vmatpush.xpose.msra.mxu0 %v5524
    %5542 = vmatmul.f32.gmra.mxu0 %v5522
    %v5543 = vpop.f32.mrf.mxu0
    %v5544 = vadd.f32 0.0, %v5543
    %5545 = vdwg.mxu0
    %v5546 = vmul.f32 %v5544, 0.35355338
    %v5547 = vsel %vm246, %v5546, -inf
    %5548 = vmax.xlane.f32.xlu0 %v5547
    %v5549 = vpop.xlane.xlu0 %5548
    %v5550 = vsub.f32 %v5546, %v5549
    %v5551 = vmul.f32 %v5550, 1.442695
    %v5552 = vpow.pop %v5551
    %v5553 = vsel %vm246, %v5552, 0.0
    %5554 = vadd.xlane.f32.xlu0 %v5553
    %v5555 = vpop.xlane.xlu0 %5554
    %v5556 = vrcp.pop %v5555
    %v5557 = vmul.f32 %v5552, %v5556
    %5558 = vrot.lane.b32.xlu0 %v5274, 56
    %v5559 = vpop.permute.xlu0 %5558
    %v5562 = vsel %vm246, %v5557, 0
    %5564 = vmatpush.msra.mxu0 0.0
    %5565 = vmatpush.msra.mxu0 0.0
    %5566 = vmatpush.msra.mxu0 0.0
    %5567 = vmatpush.msra.mxu0 0.0
    %5568 = vmatpush.msra.mxu0 0.0
    %5569 = vmatpush.msra.mxu0 0.0
    %5570 = vmatpush.msra.mxu0 0.0
    %5571 = vmatpush.msra.mxu0 0.0
    %5572 = vmatpush.msra.mxu0 0.0
    %5573 = vmatpush.msra.mxu0 0.0
    %5574 = vmatpush.msra.mxu0 0.0
    %5575 = vmatpush.msra.mxu0 0.0
    %5576 = vmatpush.msra.mxu0 0.0
    %5577 = vmatpush.msra.mxu0 0.0
    %5578 = vmatpush.msra.mxu0 0.0
    %5579 = vmatpush.msra.mxu0 %v5559
    %5580 = vmatmul.f32.gmra.mxu0 %v5562
    %v5581 = vpop.f32.mrf.mxu0
    %v5582 = vadd.f32 0.0, %v5581
    %5583 = vdwg.mxu0
    %v5585 = vsel %vm246, %v5582, 0
    %5587 = vmatpush.msra.mxu0 0.0
    %5588 = vmatpush.msra.mxu0 0.0
    %5589 = vmatpush.msra.mxu0 0.0
    %5590 = vmatpush.msra.mxu0 0.0
    %5591 = vmatpush.msra.mxu0 0.0
    %5592 = vmatpush.msra.mxu0 0.0
    %5593 = vmatpush.msra.mxu0 0.0
    %5594 = vmatpush.msra.mxu0 0.0
    %5595 = vmatpush.msra.mxu0 0.0
    %5596 = vmatpush.msra.mxu0 0.0
    %5597 = vmatpush.msra.mxu0 0.0
    %5598 = vmatpush.msra.mxu0 0.0
    %5599 = vmatpush.msra.mxu0 0.0
    %5600 = vmatpush.msra.mxu0 0.0
    %5601 = vmatpush.msra.mxu0 0.0
    %5602 = vmatpush.msra.mxu0 %v5244
    %5603 = vmatmul.f32.gmra.mxu0 %v5585
    %v5604 = vpop.f32.mrf.mxu0
    %v5605 = vadd.f32 0.0, %v5604
    %5606 = vdwg.mxu0
    %v5608 = vsel %vm246, %v5404, 0
    %5610 = vmatpush.msra.mxu0 0.0
    %5611 = vmatpush.msra.mxu0 0.0
    %5612 = vmatpush.msra.mxu0 0.0
    %5613 = vmatpush.msra.mxu0 0.0
    %5614 = vmatpush.msra.mxu0 0.0
    %5615 = vmatpush.msra.mxu0 0.0
    %5616 = vmatpush.msra.mxu0 0.0
    %5617 = vmatpush.msra.mxu0 0.0
    %5618 = vmatpush.msra.mxu0 0.0
    %5619 = vmatpush.msra.mxu0 0.0
    %5620 = vmatpush.msra.mxu0 0.0
    %5621 = vmatpush.msra.mxu0 0.0
    %5622 = vmatpush.msra.mxu0 0.0
    %5623 = vmatpush.msra.mxu0 0.0
    %5624 = vmatpush.msra.mxu0 0.0
    %5625 = vmatpush.msra.mxu0 %v5243
    %5626 = vmatmul.f32.gmra.mxu0 %v5608
    %v5627 = vpop.f32.mrf.mxu0
    %v5628 = vadd.f32 %v5605, %v5627
    %5629 = vdwg.mxu0
    %5630 = vrot.lane.b32.xlu0 %v5271, 112
    %v5631 = vpop.permute.xlu0 %5630
    %5632 = vrot.lane.b32.xlu0 %v5271, 80
    %v5633 = vpop.permute.xlu0 %5632
    %v5634 = vsel %vm246, %v5631, 0
    %v5636 = vsel %vm246, %v5633, 0
    %5638 = vmatpush.xpose.msra.mxu0 0.0
    %5639 = vmatpush.xpose.msra.mxu0 0.0
    %5640 = vmatpush.xpose.msra.mxu0 0.0
    %5641 = vmatpush.xpose.msra.mxu0 0.0
    %5642 = vmatpush.xpose.msra.mxu0 0.0
    %5643 = vmatpush.xpose.msra.mxu0 0.0
    %5644 = vmatpush.xpose.msra.mxu0 0.0
    %5645 = vmatpush.xpose.msra.mxu0 0.0
    %5646 = vmatpush.xpose.msra.mxu0 0.0
    %5647 = vmatpush.xpose.msra.mxu0 0.0
    %5648 = vmatpush.xpose.msra.mxu0 0.0
    %5649 = vmatpush.xpose.msra.mxu0 0.0
    %5650 = vmatpush.xpose.msra.mxu0 0.0
    %5651 = vmatpush.xpose.msra.mxu0 0.0
    %5652 = vmatpush.xpose.msra.mxu0 0.0
    %5653 = vmatpush.xpose.msra.mxu0 %v5636
    %5654 = vmatmul.f32.gmra.mxu0 %v5634
    %v5655 = vpop.f32.mrf.mxu0
    %v5656 = vadd.f32 0.0, %v5655
    %5657 = vdwg.mxu0
    %v5658 = vmul.f32 %v5656, 0.35355338
    %v5659 = vsel %vm246, %v5658, -inf
    %5660 = vmax.xlane.f32.xlu0 %v5659
    %v5661 = vpop.xlane.xlu0 %5660
    %v5662 = vsub.f32 %v5658, %v5661
    %v5663 = vmul.f32 %v5662, 1.442695
    %v5664 = vpow.pop %v5663
    %v5665 = vsel %vm246, %v5664, 0.0
    %5666 = vadd.xlane.f32.xlu0 %v5665
    %v5667 = vpop.xlane.xlu0 %5666
    %v5668 = vrcp.pop %v5667
    %v5669 = vmul.f32 %v5664, %v5668
    %5670 = vrot.lane.b32.xlu0 %v5271, 48
    %v5671 = vpop.permute.xlu0 %5670
    %v5674 = vsel %vm246, %v5669, 0
    %5676 = vmatpush.msra.mxu0 0.0
    %5677 = vmatpush.msra.mxu0 0.0
    %5678 = vmatpush.msra.mxu0 0.0
    %5679 = vmatpush.msra.mxu0 0.0
    %5680 = vmatpush.msra.mxu0 0.0
    %5681 = vmatpush.msra.mxu0 0.0
    %5682 = vmatpush.msra.mxu0 0.0
    %5683 = vmatpush.msra.mxu0 0.0
    %5684 = vmatpush.msra.mxu0 0.0
    %5685 = vmatpush.msra.mxu0 0.0
    %5686 = vmatpush.msra.mxu0 0.0
    %5687 = vmatpush.msra.mxu0 0.0
    %5688 = vmatpush.msra.mxu0 0.0
    %5689 = vmatpush.msra.mxu0 0.0
    %5690 = vmatpush.msra.mxu0 0.0
    %5691 = vmatpush.msra.mxu0 %v5671
    %5692 = vmatmul.f32.gmra.mxu0 %v5674
    %v5693 = vpop.f32.mrf.mxu0
    %v5694 = vadd.f32 0.0, %v5693
    %5695 = vdwg.mxu0
    %v5697 = vsel %vm246, %v5694, 0
    %5699 = vmatpush.msra.mxu0 0.0
    %5700 = vmatpush.msra.mxu0 0.0
    %5701 = vmatpush.msra.mxu0 0.0
    %5702 = vmatpush.msra.mxu0 0.0
    %5703 = vmatpush.msra.mxu0 0.0
    %5704 = vmatpush.msra.mxu0 0.0
    %5705 = vmatpush.msra.mxu0 0.0
    %5706 = vmatpush.msra.mxu0 0.0
    %5707 = vmatpush.msra.mxu0 0.0
    %5708 = vmatpush.msra.mxu0 0.0
    %5709 = vmatpush.msra.mxu0 0.0
    %5710 = vmatpush.msra.mxu0 0.0
    %5711 = vmatpush.msra.mxu0 0.0
    %5712 = vmatpush.msra.mxu0 0.0
    %5713 = vmatpush.msra.mxu0 0.0
    %5714 = vmatpush.msra.mxu0 %v5245
    %5715 = vmatmul.f32.gmra.mxu0 %v5697
    %v5716 = vpop.f32.mrf.mxu0
    %v5717 = vadd.f32 0.0, %v5716
    %5718 = vdwg.mxu0
    %v5719 = vadd.f32 %v5516, %v5717
    %5720 = vrot.lane.b32.xlu0 %v5274, 112
    %v5721 = vpop.permute.xlu0 %5720
    %5722 = vrot.lane.b32.xlu0 %v5274, 80
    %v5723 = vpop.permute.xlu0 %5722
    %v5724 = vsel %vm246, %v5721, 0
    %v5726 = vsel %vm246, %v5723, 0
    %5728 = vmatpush.xpose.msra.mxu0 0.0
    %5729 = vmatpush.xpose.msra.mxu0 0.0
    %5730 = vmatpush.xpose.msra.mxu0 0.0
    %5731 = vmatpush.xpose.msra.mxu0 0.0
    %5732 = vmatpush.xpose.msra.mxu0 0.0
    %5733 = vmatpush.xpose.msra.mxu0 0.0
    %5734 = vmatpush.xpose.msra.mxu0 0.0
    %5735 = vmatpush.xpose.msra.mxu0 0.0
    %5736 = vmatpush.xpose.msra.mxu0 0.0
    %5737 = vmatpush.xpose.msra.mxu0 0.0
    %5738 = vmatpush.xpose.msra.mxu0 0.0
    %5739 = vmatpush.xpose.msra.mxu0 0.0
    %5740 = vmatpush.xpose.msra.mxu0 0.0
    %5741 = vmatpush.xpose.msra.mxu0 0.0
    %5742 = vmatpush.xpose.msra.mxu0 0.0
    %5743 = vmatpush.xpose.msra.mxu0 %v5726
    %5744 = vmatmul.f32.gmra.mxu0 %v5724
    %v5745 = vpop.f32.mrf.mxu0
    %v5746 = vadd.f32 0.0, %v5745
    %5747 = vdwg.mxu0
    %v5748 = vmul.f32 %v5746, 0.35355338
    %v5749 = vsel %vm246, %v5748, -inf
    %5750 = vmax.xlane.f32.xlu0 %v5749
    %v5751 = vpop.xlane.xlu0 %5750
    %v5752 = vsub.f32 %v5748, %v5751
    %v5753 = vmul.f32 %v5752, 1.442695
    %v5754 = vpow.pop %v5753
    %v5755 = vsel %vm246, %v5754, 0.0
    %5756 = vadd.xlane.f32.xlu0 %v5755
    %v5757 = vpop.xlane.xlu0 %5756
    %v5758 = vrcp.pop %v5757
    %v5759 = vmul.f32 %v5754, %v5758
    %5760 = vrot.lane.b32.xlu0 %v5274, 48
    %v5761 = vpop.permute.xlu0 %5760
    %v5764 = vsel %vm246, %v5759, 0
    %5766 = vmatpush.msra.mxu0 0.0
    %5767 = vmatpush.msra.mxu0 0.0
    %5768 = vmatpush.msra.mxu0 0.0
    %5769 = vmatpush.msra.mxu0 0.0
    %5770 = vmatpush.msra.mxu0 0.0
    %5771 = vmatpush.msra.mxu0 0.0
    %5772 = vmatpush.msra.mxu0 0.0
    %5773 = vmatpush.msra.mxu0 0.0
    %5774 = vmatpush.msra.mxu0 0.0
    %5775 = vmatpush.msra.mxu0 0.0
    %5776 = vmatpush.msra.mxu0 0.0
    %5777 = vmatpush.msra.mxu0 0.0
    %5778 = vmatpush.msra.mxu0 0.0
    %5779 = vmatpush.msra.mxu0 0.0
    %5780 = vmatpush.msra.mxu0 0.0
    %5781 = vmatpush.msra.mxu0 %v5761
    %5782 = vmatmul.f32.gmra.mxu0 %v5764
    %v5783 = vpop.f32.mrf.mxu0
    %v5784 = vadd.f32 0.0, %v5783
    %5785 = vdwg.mxu0
    %v5787 = vsel %vm246, %v5784, 0
    %5789 = vmatpush.msra.mxu0 0.0
    %5790 = vmatpush.msra.mxu0 0.0
    %5791 = vmatpush.msra.mxu0 0.0
    %5792 = vmatpush.msra.mxu0 0.0
    %5793 = vmatpush.msra.mxu0 0.0
    %5794 = vmatpush.msra.mxu0 0.0
    %5795 = vmatpush.msra.mxu0 0.0
    %5796 = vmatpush.msra.mxu0 0.0
    %5797 = vmatpush.msra.mxu0 0.0
    %5798 = vmatpush.msra.mxu0 0.0
    %5799 = vmatpush.msra.mxu0 0.0
    %5800 = vmatpush.msra.mxu0 0.0
    %5801 = vmatpush.msra.mxu0 0.0
    %5802 = vmatpush.msra.mxu0 0.0
    %5803 = vmatpush.msra.mxu0 0.0
    %5804 = vmatpush.msra.mxu0 %v5245
    %5805 = vmatmul.f32.gmra.mxu0 %v5787
    %v5806 = vpop.f32.mrf.mxu0
    %v5807 = vadd.f32 0.0, %v5806
    %5808 = vdwg.mxu0
    %v5809 = vadd.f32 %v5628, %v5807
    %5810 = vrot.lane.b32.xlu0 %v5271, 104
    %v5811 = vpop.permute.xlu0 %5810
    %5812 = vrot.lane.b32.xlu0 %v5271, 72
    %v5813 = vpop.permute.xlu0 %5812
    %v5814 = vsel %vm246, %v5811, 0
    %v5816 = vsel %vm246, %v5813, 0
    %5818 = vmatpush.xpose.msra.mxu0 0.0
    %5819 = vmatpush.xpose.msra.mxu0 0.0
    %5820 = vmatpush.xpose.msra.mxu0 0.0
    %5821 = vmatpush.xpose.msra.mxu0 0.0
    %5822 = vmatpush.xpose.msra.mxu0 0.0
    %5823 = vmatpush.xpose.msra.mxu0 0.0
    %5824 = vmatpush.xpose.msra.mxu0 0.0
    %5825 = vmatpush.xpose.msra.mxu0 0.0
    %5826 = vmatpush.xpose.msra.mxu0 0.0
    %5827 = vmatpush.xpose.msra.mxu0 0.0
    %5828 = vmatpush.xpose.msra.mxu0 0.0
    %5829 = vmatpush.xpose.msra.mxu0 0.0
    %5830 = vmatpush.xpose.msra.mxu0 0.0
    %5831 = vmatpush.xpose.msra.mxu0 0.0
    %5832 = vmatpush.xpose.msra.mxu0 0.0
    %5833 = vmatpush.xpose.msra.mxu0 %v5816
    %5834 = vmatmul.f32.gmra.mxu0 %v5814
    %v5835 = vpop.f32.mrf.mxu0
    %v5836 = vadd.f32 0.0, %v5835
    %5837 = vdwg.mxu0
    %v5838 = vmul.f32 %v5836, 0.35355338
    %v5839 = vsel %vm246, %v5838, -inf
    %5840 = vmax.xlane.f32.xlu0 %v5839
    %v5841 = vpop.xlane.xlu0 %5840
    %v5842 = vsub.f32 %v5838, %v5841
    %v5843 = vmul.f32 %v5842, 1.442695
    %v5844 = vpow.pop %v5843
    %v5845 = vsel %vm246, %v5844, 0.0
    %5846 = vadd.xlane.f32.xlu0 %v5845
    %v5847 = vpop.xlane.xlu0 %5846
    %v5848 = vrcp.pop %v5847
    %v5849 = vmul.f32 %v5844, %v5848
    %5850 = vrot.lane.b32.xlu0 %v5271, 40
    %v5851 = vpop.permute.xlu0 %5850
    %v5854 = vsel %vm246, %v5849, 0
    %5856 = vmatpush.msra.mxu0 0.0
    %5857 = vmatpush.msra.mxu0 0.0
    %5858 = vmatpush.msra.mxu0 0.0
    %5859 = vmatpush.msra.mxu0 0.0
    %5860 = vmatpush.msra.mxu0 0.0
    %5861 = vmatpush.msra.mxu0 0.0
    %5862 = vmatpush.msra.mxu0 0.0
    %5863 = vmatpush.msra.mxu0 0.0
    %5864 = vmatpush.msra.mxu0 0.0
    %5865 = vmatpush.msra.mxu0 0.0
    %5866 = vmatpush.msra.mxu0 0.0
    %5867 = vmatpush.msra.mxu0 0.0
    %5868 = vmatpush.msra.mxu0 0.0
    %5869 = vmatpush.msra.mxu0 0.0
    %5870 = vmatpush.msra.mxu0 0.0
    %5871 = vmatpush.msra.mxu0 %v5851
    %5872 = vmatmul.f32.gmra.mxu0 %v5854
    %v5873 = vpop.f32.mrf.mxu0
    %v5874 = vadd.f32 0.0, %v5873
    %5875 = vdwg.mxu0
    %v5877 = vsel %vm246, %v5874, 0
    %5879 = vmatpush.msra.mxu0 0.0
    %5880 = vmatpush.msra.mxu0 0.0
    %5881 = vmatpush.msra.mxu0 0.0
    %5882 = vmatpush.msra.mxu0 0.0
    %5883 = vmatpush.msra.mxu0 0.0
    %5884 = vmatpush.msra.mxu0 0.0
    %5885 = vmatpush.msra.mxu0 0.0
    %5886 = vmatpush.msra.mxu0 0.0
    %5887 = vmatpush.msra.mxu0 0.0
    %5888 = vmatpush.msra.mxu0 0.0
    %5889 = vmatpush.msra.mxu0 0.0
    %5890 = vmatpush.msra.mxu0 0.0
    %5891 = vmatpush.msra.mxu0 0.0
    %5892 = vmatpush.msra.mxu0 0.0
    %5893 = vmatpush.msra.mxu0 0.0
    %5894 = vmatpush.msra.mxu0 %v5246
    %5895 = vmatmul.f32.gmra.mxu0 %v5877
    %v5896 = vpop.f32.mrf.mxu0
    %v5897 = vadd.f32 0.0, %v5896
    %5898 = vdwg.mxu0
    %v5899 = vadd.f32 %v5719, %v5897
    %5900 = vrot.lane.b32.xlu0 %v5274, 104
    %v5901 = vpop.permute.xlu0 %5900
    %5902 = vrot.lane.b32.xlu0 %v5274, 72
    %v5903 = vpop.permute.xlu0 %5902
    %v5904 = vsel %vm246, %v5901, 0
    %v5906 = vsel %vm246, %v5903, 0
    %5908 = vmatpush.xpose.msra.mxu0 0.0
    %5909 = vmatpush.xpose.msra.mxu0 0.0
    %5910 = vmatpush.xpose.msra.mxu0 0.0
    %5911 = vmatpush.xpose.msra.mxu0 0.0
    %5912 = vmatpush.xpose.msra.mxu0 0.0
    %5913 = vmatpush.xpose.msra.mxu0 0.0
    %5914 = vmatpush.xpose.msra.mxu0 0.0
    %5915 = vmatpush.xpose.msra.mxu0 0.0
    %5916 = vmatpush.xpose.msra.mxu0 0.0
    %5917 = vmatpush.xpose.msra.mxu0 0.0
    %5918 = vmatpush.xpose.msra.mxu0 0.0
    %5919 = vmatpush.xpose.msra.mxu0 0.0
    %5920 = vmatpush.xpose.msra.mxu0 0.0
    %5921 = vmatpush.xpose.msra.mxu0 0.0
    %5922 = vmatpush.xpose.msra.mxu0 0.0
    %5923 = vmatpush.xpose.msra.mxu0 %v5906
    %5924 = vmatmul.f32.gmra.mxu0 %v5904
    %v5925 = vpop.f32.mrf.mxu0
    %v5926 = vadd.f32 0.0, %v5925
    %5927 = vdwg.mxu0
    %v5928 = vmul.f32 %v5926, 0.35355338
    %v5929 = vsel %vm246, %v5928, -inf
    %5930 = vmax.xlane.f32.xlu0 %v5929
    %v5931 = vpop.xlane.xlu0 %5930
    %v5932 = vsub.f32 %v5928, %v5931
    %v5933 = vmul.f32 %v5932, 1.442695
    %v5934 = vpow.pop %v5933
    %v5935 = vsel %vm246, %v5934, 0.0
    %5936 = vadd.xlane.f32.xlu0 %v5935
    %v5937 = vpop.xlane.xlu0 %5936
    %v5938 = vrcp.pop %v5937
    %v5939 = vmul.f32 %v5934, %v5938
    %5940 = vrot.lane.b32.xlu0 %v5274, 40
    %v5941 = vpop.permute.xlu0 %5940
    %v5944 = vsel %vm246, %v5939, 0
    %5946 = vmatpush.msra.mxu0 0.0
    %5947 = vmatpush.msra.mxu0 0.0
    %5948 = vmatpush.msra.mxu0 0.0
    %5949 = vmatpush.msra.mxu0 0.0
    %5950 = vmatpush.msra.mxu0 0.0
    %5951 = vmatpush.msra.mxu0 0.0
    %5952 = vmatpush.msra.mxu0 0.0
    %5953 = vmatpush.msra.mxu0 0.0
    %5954 = vmatpush.msra.mxu0 0.0
    %5955 = vmatpush.msra.mxu0 0.0
    %5956 = vmatpush.msra.mxu0 0.0
    %5957 = vmatpush.msra.mxu0 0.0
    %5958 = vmatpush.msra.mxu0 0.0
    %5959 = vmatpush.msra.mxu0 0.0
    %5960 = vmatpush.msra.mxu0 0.0
    %5961 = vmatpush.msra.mxu0 %v5941
    %5962 = vmatmul.f32.gmra.mxu0 %v5944
    %v5963 = vpop.f32.mrf.mxu0
    %v5964 = vadd.f32 0.0, %v5963
    %5965 = vdwg.mxu0
    %v5967 = vsel %vm246, %v5964, 0
    %5969 = vmatpush.msra.mxu0 0.0
    %5970 = vmatpush.msra.mxu0 0.0
    %5971 = vmatpush.msra.mxu0 0.0
    %5972 = vmatpush.msra.mxu0 0.0
    %5973 = vmatpush.msra.mxu0 0.0
    %5974 = vmatpush.msra.mxu0 0.0
    %5975 = vmatpush.msra.mxu0 0.0
    %5976 = vmatpush.msra.mxu0 0.0
    %5977 = vmatpush.msra.mxu0 0.0
    %5978 = vmatpush.msra.mxu0 0.0
    %5979 = vmatpush.msra.mxu0 0.0
    %5980 = vmatpush.msra.mxu0 0.0
    %5981 = vmatpush.msra.mxu0 0.0
    %5982 = vmatpush.msra.mxu0 0.0
    %5983 = vmatpush.msra.mxu0 0.0
    %5984 = vmatpush.msra.mxu0 %v5246
    %5985 = vmatmul.f32.gmra.mxu0 %v5967
    %v5986 = vpop.f32.mrf.mxu0
    %v5987 = vadd.f32 0.0, %v5986
    %5988 = vdwg.mxu0
    %v5989 = vadd.f32 %v5809, %v5987
    %v5990 = vadd.f32 %v5153, %v5899
    %v5991 = vadd.f32 %v5154, %v5989
    %v5992 = vld [vmem:[%s2 + $0x320] sm:$0x1]
    %v5993 = vld [vmem:[%s2 + $0x328] sm:$0x1]
    %v5994 = vsel %vm21, %v5990, 0.0
    %5995 = vadd.xlane.f32.xlu0 %v5994
    %v5996 = vpop.xlane.xlu0 %5995
    %v5997 = vsel %vm21, %v5991, 0.0
    %5998 = vadd.xlane.f32.xlu0 %v5997
    %v5999 = vpop.xlane.xlu0 %5998
    %v6000 = vmul.f32 %v5996, %v40
    %v6001 = vmul.f32 %v5999, %v40
    %v6002 = vsub.f32 %v5990, %v6000
    %v6003 = vsub.f32 %v5991, %v6001
    %v6004 = vmul.f32 %v6002, %v6002
    %v6005 = vmul.f32 %v6003, %v6003
    %v6006 = vsel %vm21, %v6004, 0.0
    %6007 = vadd.xlane.f32.xlu0 %v6006
    %v6008 = vpop.xlane.xlu0 %6007
    %v6009 = vsel %vm21, %v6005, 0.0
    %6010 = vadd.xlane.f32.xlu0 %v6009
    %v6011 = vpop.xlane.xlu0 %6010
    %v6012 = vmul.f32 %v6008, 0.032258064
    %v6013 = vmul.f32 %v6011, 0.032258064
    %v6014 = vrsqrt.pop %v6012
    %v6015 = vmul.f32 %v6014, %v6012
    %v6016 = vmul.f32 %v6015, %v6014
    %v6017 = vmul.f32 0.5, %v6016
    %v6018 = vsub.f32 1.5, %v6017
    %v6019 = vmul.f32 %v6014, %v6018
    %v6020 = vmul.f32 %v6012, %v6019
    %vm6021 = vcmp.eq.f32.partialorder %v6012, inf
    %v6022 = vsel %vm6021, %v6012, %v6020
    %vm6023 = vcmp.eq.f32.partialorder %v6012, 0.0
    %v6024 = vand.u32 %v6012, 2147483648
    %v6025 = vsel %vm6023, %v6024, %v6022
    %v6026 = vrsqrt.pop %v6013
    %v6027 = vmul.f32 %v6026, %v6013
    %v6028 = vmul.f32 %v6027, %v6026
    %v6029 = vmul.f32 0.5, %v6028
    %v6030 = vsub.f32 1.5, %v6029
    %v6031 = vmul.f32 %v6026, %v6030
    %v6032 = vmul.f32 %v6013, %v6031
    %vm6033 = vcmp.eq.f32.partialorder %v6013, inf
    %v6034 = vsel %vm6033, %v6013, %v6032
    %vm6035 = vcmp.eq.f32.partialorder %v6013, 0.0
    %v6036 = vand.u32 %v6013, 2147483648
    %v6037 = vsel %vm6035, %v6036, %v6034
    %v6038 = vadd.f32 %v6025, 1e-05
    %v6039 = vadd.f32 %v6037, 1e-05
    %v6040 = vrcp.pop %v6038
    %v6041 = vmul.f32 %v6038, %v6040
    %v6042 = vsub.f32 1.0, %v6041
    %v6043 = vmul.f32 %v6040, %v6042
    %v6044 = vadd.f32 %v6040, %v6043
    %vm6045 = vweird.f32 %v6038
    %vm6046 = vweird.f32 %v6040
    %vm6047 = vmor %vm6045, %vm6046
    %v6048 = vsel %vm6047, %v6040, %v6044
    %v6049 = vand.u32 2147483647, %v6038
    %vm6050 = vcmp.eq.f32.partialorder %v6049, 8.507059e+37
    %v6051 = vand.u32 %v6038, 2147483648
    %v6052 = vor.u32 1.1754944e-38, %v6051
    %v6053 = vsel %vm6050, %v6052, %v6048
    %v6054 = vmul.f32 %v6002, %v6053
    %v6055 = vrcp.pop %v6039
    %v6056 = vmul.f32 %v6039, %v6055
    %v6057 = vsub.f32 1.0, %v6056
    %v6058 = vmul.f32 %v6055, %v6057
    %v6059 = vadd.f32 %v6055, %v6058
    %vm6060 = vweird.f32 %v6039
    %vm6061 = vweird.f32 %v6055
    %vm6062 = vmor %vm6060, %vm6061
    %v6063 = vsel %vm6062, %v6055, %v6059
    %v6064 = vand.u32 2147483647, %v6039
    %vm6065 = vcmp.eq.f32.partialorder %v6064, 8.507059e+37
    %v6066 = vand.u32 %v6039, 2147483648
    %v6067 = vor.u32 1.1754944e-38, %v6066
    %v6068 = vsel %vm6065, %v6067, %v6063
    %v6069 = vmul.f32 %v6003, %v6068
    %v6070 = vperm.slane %v5992, 0
    %v6071 = vmul.f32 %v6070, %v6054
    %v6072 = vmul.f32 %v6070, %v6069
    %v6073 = vperm.slane %v5993, 0
    %v6074 = vadd.f32 %v6071, %v6073
    %v6075 = vadd.f32 %v6072, %v6073
    %v6076 = vld [vmem:[%s2 + $0x330] sm:$0xff]
    %v6077 = vld [vmem:[%s2 + $0x338] sm:$0xff]
    %v6078 = vld [vmem:[%s2 + $0x340] sm:$0xff]
    %v6079 = vld [vmem:[%s2 + $0x348] sm:$0xff]
    %v6080 = vld [vmem:[%s2 + $0x350] sm:$0xff]
    %v6081 = vld [vmem:[%s2 + $0x358] sm:$0xff]
    %v6082 = vld [vmem:[%s2 + $0x360] sm:$0xff]
    %v6083 = vld [vmem:[%s2 + $0x368] sm:$0xff]
    %v6085 = vsel %vm21, %v6074, 0
    %v6088 = vsel %vm21, %v6075, 0
    %6090 = vmatpush.msra.mxu0 0.0
    %6091 = vmatpush.msra.mxu0 0.0
    %6092 = vmatpush.msra.mxu0 0.0
    %6093 = vmatpush.msra.mxu0 0.0
    %6094 = vmatpush.msra.mxu0 0.0
    %6095 = vmatpush.msra.mxu0 0.0
    %6096 = vmatpush.msra.mxu0 0.0
    %6097 = vmatpush.msra.mxu0 0.0
    %6098 = vmatpush.msra.mxu0 0.0
    %6099 = vmatpush.msra.mxu0 0.0
    %6100 = vmatpush.msra.mxu0 0.0
    %6101 = vmatpush.msra.mxu0 0.0
    %6102 = vmatpush.msra.mxu0 %v6079
    %6103 = vmatpush.msra.mxu0 %v6078
    %6104 = vmatpush.msra.mxu0 %v6077
    %6105 = vmatpush.msra.mxu0 %v6076
    %6106 = vmatmul.f32.gmra.mxu0 %v6085
    %v6107 = vpop.f32.mrf.mxu0
    %v6108 = vadd.f32 0.0, %v6107
    %6109 = vmatmul.f32.gmra.mxu0 %v6088
    %v6110 = vpop.f32.mrf.mxu0
    %v6111 = vadd.f32 0.0, %v6110
    %6112 = vdwg.mxu0
    %6117 = vrot.lane.b32.xlu0 %v6076, 96
    %v6118 = vpop.permute.xlu0 %6117
    %6119 = vrot.lane.b32.xlu0 %v6077, 96
    %v6120 = vpop.permute.xlu0 %6119
    %6121 = vrot.lane.b32.xlu0 %v6078, 96
    %v6122 = vpop.permute.xlu0 %6121
    %6123 = vrot.lane.b32.xlu0 %v6079, 96
    %v6124 = vpop.permute.xlu0 %6123
    %6129 = vmatpush.msra.mxu0 0.0
    %6130 = vmatpush.msra.mxu0 0.0
    %6131 = vmatpush.msra.mxu0 0.0
    %6132 = vmatpush.msra.mxu0 0.0
    %6133 = vmatpush.msra.mxu0 0.0
    %6134 = vmatpush.msra.mxu0 0.0
    %6135 = vmatpush.msra.mxu0 0.0
    %6136 = vmatpush.msra.mxu0 0.0
    %6137 = vmatpush.msra.mxu0 0.0
    %6138 = vmatpush.msra.mxu0 0.0
    %6139 = vmatpush.msra.mxu0 0.0
    %6140 = vmatpush.msra.mxu0 0.0
    %6141 = vmatpush.msra.mxu0 %v6124
    %6142 = vmatpush.msra.mxu0 %v6122
    %6143 = vmatpush.msra.mxu0 %v6120
    %6144 = vmatpush.msra.mxu0 %v6118
    %6145 = vmatmul.f32.gmra.mxu0 %v4185
    %v6146 = vpop.f32.mrf.mxu0
    %v6147 = vadd.f32 0.0, %v6146
    %6148 = vmatmul.f32.gmra.mxu0 %v4188
    %v6149 = vpop.f32.mrf.mxu0
    %v6150 = vadd.f32 0.0, %v6149
    %6151 = vmatmul.f32.gmra.mxu0 %v4191
    %v6152 = vpop.f32.mrf.mxu0
    %v6153 = vadd.f32 0.0, %v6152
    %6154 = vmatmul.f32.gmra.mxu0 %v4194
    %v6155 = vpop.f32.mrf.mxu0
    %v6156 = vadd.f32 0.0, %v6155
    %6157 = vdwg.mxu0
    %v6159 = vsel %vm246, %v6108, 0
    %v6162 = vsel %vm246, %v6147, 0
    %v6165 = vsel %vm246, %v6150, 0
    %6167 = vmatpush.xpose.msra.mxu0 0.0
    %6168 = vmatpush.xpose.msra.mxu0 0.0
    %6169 = vmatpush.xpose.msra.mxu0 0.0
    %6170 = vmatpush.xpose.msra.mxu0 0.0
    %6171 = vmatpush.xpose.msra.mxu0 0.0
    %6172 = vmatpush.xpose.msra.mxu0 0.0
    %6173 = vmatpush.xpose.msra.mxu0 0.0
    %6174 = vmatpush.xpose.msra.mxu0 0.0
    %6175 = vmatpush.xpose.msra.mxu0 0.0
    %6176 = vmatpush.xpose.msra.mxu0 0.0
    %6177 = vmatpush.xpose.msra.mxu0 0.0
    %6178 = vmatpush.xpose.msra.mxu0 0.0
    %6179 = vmatpush.xpose.msra.mxu0 0.0
    %6180 = vmatpush.xpose.msra.mxu0 0.0
    %6181 = vmatpush.xpose.msra.mxu0 %v6165
    %6182 = vmatpush.xpose.msra.mxu0 %v6162
    %6183 = vmatmul.f32.gmra.mxu0 %v6159
    %v6184 = vpop.f32.mrf.mxu0
    %v6185 = vadd.f32 0.0, %v6184
    %6186 = vdwg.mxu0
    %v6187 = vmul.f32 %v6185, 0.35355338
    %v6188 = vsel %vm280, %v6187, -inf
    %6189 = vmax.xlane.f32.xlu0 %v6188
    %v6190 = vpop.xlane.xlu0 %6189
    %v6191 = vsub.f32 %v6187, %v6190
    %v6192 = vmul.f32 %v6191, 1.442695
    %v6193 = vpow.pop %v6192
    %v6194 = vsel %vm280, %v6193, 0.0
    %6195 = vadd.xlane.f32.xlu0 %v6194
    %v6196 = vpop.xlane.xlu0 %6195
    %v6197 = vrcp.pop %v6196
    %v6198 = vmul.f32 %v6193, %v6197
    %6199 = vrot.lane.b32.xlu0 %v6147, 96
    %v6200 = vpop.permute.xlu0 %6199
    %6201 = vrot.lane.b32.xlu0 %v6150, 96
    %v6202 = vpop.permute.xlu0 %6201
    %v6206 = vsel %vm280, %v6198, 0
    %6208 = vmatpush.msra.mxu0 0.0
    %6209 = vmatpush.msra.mxu0 0.0
    %6210 = vmatpush.msra.mxu0 0.0
    %6211 = vmatpush.msra.mxu0 0.0
    %6212 = vmatpush.msra.mxu0 0.0
    %6213 = vmatpush.msra.mxu0 0.0
    %6214 = vmatpush.msra.mxu0 0.0
    %6215 = vmatpush.msra.mxu0 0.0
    %6216 = vmatpush.msra.mxu0 0.0
    %6217 = vmatpush.msra.mxu0 0.0
    %6218 = vmatpush.msra.mxu0 0.0
    %6219 = vmatpush.msra.mxu0 0.0
    %6220 = vmatpush.msra.mxu0 0.0
    %6221 = vmatpush.msra.mxu0 0.0
    %6222 = vmatpush.msra.mxu0 %v6202
    %6223 = vmatpush.msra.mxu0 %v6200
    %6224 = vmatmul.f32.gmra.mxu0 %v6206
    %v6225 = vpop.f32.mrf.mxu0
    %v6226 = vadd.f32 0.0, %v6225
    %6227 = vdwg.mxu0
    %v6229 = vsel %vm246, %v6111, 0
    %v6232 = vsel %vm246, %v6153, 0
    %v6235 = vsel %vm246, %v6156, 0
    %6237 = vmatpush.xpose.msra.mxu0 0.0
    %6238 = vmatpush.xpose.msra.mxu0 0.0
    %6239 = vmatpush.xpose.msra.mxu0 0.0
    %6240 = vmatpush.xpose.msra.mxu0 0.0
    %6241 = vmatpush.xpose.msra.mxu0 0.0
    %6242 = vmatpush.xpose.msra.mxu0 0.0
    %6243 = vmatpush.xpose.msra.mxu0 0.0
    %6244 = vmatpush.xpose.msra.mxu0 0.0
    %6245 = vmatpush.xpose.msra.mxu0 0.0
    %6246 = vmatpush.xpose.msra.mxu0 0.0
    %6247 = vmatpush.xpose.msra.mxu0 0.0
    %6248 = vmatpush.xpose.msra.mxu0 0.0
    %6249 = vmatpush.xpose.msra.mxu0 0.0
    %6250 = vmatpush.xpose.msra.mxu0 0.0
    %6251 = vmatpush.xpose.msra.mxu0 %v6235
    %6252 = vmatpush.xpose.msra.mxu0 %v6232
    %6253 = vmatmul.f32.gmra.mxu0 %v6229
    %v6254 = vpop.f32.mrf.mxu0
    %v6255 = vadd.f32 0.0, %v6254
    %6256 = vdwg.mxu0
    %v6257 = vmul.f32 %v6255, 0.35355338
    %v6258 = vsel %vm280, %v6257, -inf
    %6259 = vmax.xlane.f32.xlu0 %v6258
    %v6260 = vpop.xlane.xlu0 %6259
    %v6261 = vsub.f32 %v6257, %v6260
    %v6262 = vmul.f32 %v6261, 1.442695
    %v6263 = vpow.pop %v6262
    %v6264 = vsel %vm280, %v6263, 0.0
    %6265 = vadd.xlane.f32.xlu0 %v6264
    %v6266 = vpop.xlane.xlu0 %6265
    %v6267 = vrcp.pop %v6266
    %v6268 = vmul.f32 %v6263, %v6267
    %6269 = vrot.lane.b32.xlu0 %v6153, 96
    %v6270 = vpop.permute.xlu0 %6269
    %6271 = vrot.lane.b32.xlu0 %v6156, 96
    %v6272 = vpop.permute.xlu0 %6271
    %v6276 = vsel %vm280, %v6268, 0
    %6278 = vmatpush.msra.mxu0 0.0
    %6279 = vmatpush.msra.mxu0 0.0
    %6280 = vmatpush.msra.mxu0 0.0
    %6281 = vmatpush.msra.mxu0 0.0
    %6282 = vmatpush.msra.mxu0 0.0
    %6283 = vmatpush.msra.mxu0 0.0
    %6284 = vmatpush.msra.mxu0 0.0
    %6285 = vmatpush.msra.mxu0 0.0
    %6286 = vmatpush.msra.mxu0 0.0
    %6287 = vmatpush.msra.mxu0 0.0
    %6288 = vmatpush.msra.mxu0 0.0
    %6289 = vmatpush.msra.mxu0 0.0
    %6290 = vmatpush.msra.mxu0 0.0
    %6291 = vmatpush.msra.mxu0 0.0
    %6292 = vmatpush.msra.mxu0 %v6272
    %6293 = vmatpush.msra.mxu0 %v6270
    %6294 = vmatmul.f32.gmra.mxu0 %v6276
    %v6295 = vpop.f32.mrf.mxu0
    %v6296 = vadd.f32 0.0, %v6295
    %6297 = vdwg.mxu0
    %6298 = vrot.lane.b32.xlu0 %v6108, 120
    %v6299 = vpop.permute.xlu0 %6298
    %6300 = vrot.lane.b32.xlu0 %v6147, 120
    %v6301 = vpop.permute.xlu0 %6300
    %6302 = vrot.lane.b32.xlu0 %v6150, 120
    %v6303 = vpop.permute.xlu0 %6302
    %v6304 = vsel %vm246, %v6299, 0
    %v6306 = vsel %vm246, %v6301, 0
    %v6308 = vsel %vm246, %v6303, 0
    %6310 = vmatpush.xpose.msra.mxu0 0.0
    %6311 = vmatpush.xpose.msra.mxu0 0.0
    %6312 = vmatpush.xpose.msra.mxu0 0.0
    %6313 = vmatpush.xpose.msra.mxu0 0.0
    %6314 = vmatpush.xpose.msra.mxu0 0.0
    %6315 = vmatpush.xpose.msra.mxu0 0.0
    %6316 = vmatpush.xpose.msra.mxu0 0.0
    %6317 = vmatpush.xpose.msra.mxu0 0.0
    %6318 = vmatpush.xpose.msra.mxu0 0.0
    %6319 = vmatpush.xpose.msra.mxu0 0.0
    %6320 = vmatpush.xpose.msra.mxu0 0.0
    %6321 = vmatpush.xpose.msra.mxu0 0.0
    %6322 = vmatpush.xpose.msra.mxu0 0.0
    %6323 = vmatpush.xpose.msra.mxu0 0.0
    %6324 = vmatpush.xpose.msra.mxu0 %v6308
    %6325 = vmatpush.xpose.msra.mxu0 %v6306
    %6326 = vmatmul.f32.gmra.mxu0 %v6304
    %v6327 = vpop.f32.mrf.mxu0
    %v6328 = vadd.f32 0.0, %v6327
    %6329 = vdwg.mxu0
    %v6330 = vmul.f32 %v6328, 0.35355338
    %v6331 = vsel %vm280, %v6330, -inf
    %6332 = vmax.xlane.f32.xlu0 %v6331
    %v6333 = vpop.xlane.xlu0 %6332
    %v6334 = vsub.f32 %v6330, %v6333
    %v6335 = vmul.f32 %v6334, 1.442695
    %v6336 = vpow.pop %v6335
    %v6337 = vsel %vm280, %v6336, 0.0
    %6338 = vadd.xlane.f32.xlu0 %v6337
    %v6339 = vpop.xlane.xlu0 %6338
    %v6340 = vrcp.pop %v6339
    %v6341 = vmul.f32 %v6336, %v6340
    %6342 = vrot.lane.b32.xlu0 %v6147, 88
    %v6343 = vpop.permute.xlu0 %6342
    %6344 = vrot.lane.b32.xlu0 %v6150, 88
    %v6345 = vpop.permute.xlu0 %6344
    %v6349 = vsel %vm280, %v6341, 0
    %6351 = vmatpush.msra.mxu0 0.0
    %6352 = vmatpush.msra.mxu0 0.0
    %6353 = vmatpush.msra.mxu0 0.0
    %6354 = vmatpush.msra.mxu0 0.0
    %6355 = vmatpush.msra.mxu0 0.0
    %6356 = vmatpush.msra.mxu0 0.0
    %6357 = vmatpush.msra.mxu0 0.0
    %6358 = vmatpush.msra.mxu0 0.0
    %6359 = vmatpush.msra.mxu0 0.0
    %6360 = vmatpush.msra.mxu0 0.0
    %6361 = vmatpush.msra.mxu0 0.0
    %6362 = vmatpush.msra.mxu0 0.0
    %6363 = vmatpush.msra.mxu0 0.0
    %6364 = vmatpush.msra.mxu0 0.0
    %6365 = vmatpush.msra.mxu0 %v6345
    %6366 = vmatpush.msra.mxu0 %v6343
    %6367 = vmatmul.f32.gmra.mxu0 %v6349
    %v6368 = vpop.f32.mrf.mxu0
    %v6369 = vadd.f32 0.0, %v6368
    %6370 = vdwg.mxu0
    %v6372 = vsel %vm246, %v6369, 0
    %6374 = vmatpush.msra.mxu0 0.0
    %6375 = vmatpush.msra.mxu0 0.0
    %6376 = vmatpush.msra.mxu0 0.0
    %6377 = vmatpush.msra.mxu0 0.0
    %6378 = vmatpush.msra.mxu0 0.0
    %6379 = vmatpush.msra.mxu0 0.0
    %6380 = vmatpush.msra.mxu0 0.0
    %6381 = vmatpush.msra.mxu0 0.0
    %6382 = vmatpush.msra.mxu0 0.0
    %6383 = vmatpush.msra.mxu0 0.0
    %6384 = vmatpush.msra.mxu0 0.0
    %6385 = vmatpush.msra.mxu0 0.0
    %6386 = vmatpush.msra.mxu0 0.0
    %6387 = vmatpush.msra.mxu0 0.0
    %6388 = vmatpush.msra.mxu0 0.0
    %6389 = vmatpush.msra.mxu0 %v6081
    %6390 = vmatmul.f32.gmra.mxu0 %v6372
    %v6391 = vpop.f32.mrf.mxu0
    %v6392 = vadd.f32 0.0, %v6391
    %6393 = vdwg.mxu0
    %v6395 = vsel %vm246, %v6226, 0
    %6397 = vmatpush.msra.mxu0 0.0
    %6398 = vmatpush.msra.mxu0 0.0
    %6399 = vmatpush.msra.mxu0 0.0
    %6400 = vmatpush.msra.mxu0 0.0
    %6401 = vmatpush.msra.mxu0 0.0
    %6402 = vmatpush.msra.mxu0 0.0
    %6403 = vmatpush.msra.mxu0 0.0
    %6404 = vmatpush.msra.mxu0 0.0
    %6405 = vmatpush.msra.mxu0 0.0
    %6406 = vmatpush.msra.mxu0 0.0
    %6407 = vmatpush.msra.mxu0 0.0
    %6408 = vmatpush.msra.mxu0 0.0
    %6409 = vmatpush.msra.mxu0 0.0
    %6410 = vmatpush.msra.mxu0 0.0
    %6411 = vmatpush.msra.mxu0 0.0
    %6412 = vmatpush.msra.mxu0 %v6080
    %6413 = vmatmul.f32.gmra.mxu0 %v6395
    %v6414 = vpop.f32.mrf.mxu0
    %v6415 = vadd.f32 %v6392, %v6414
    %6416 = vdwg.mxu0
    %6417 = vrot.lane.b32.xlu0 %v6111, 120
    %v6418 = vpop.permute.xlu0 %6417
    %6419 = vrot.lane.b32.xlu0 %v6153, 120
    %v6420 = vpop.permute.xlu0 %6419
    %6421 = vrot.lane.b32.xlu0 %v6156, 120
    %v6422 = vpop.permute.xlu0 %6421
    %v6423 = vsel %vm246, %v6418, 0
    %v6425 = vsel %vm246, %v6420, 0
    %v6427 = vsel %vm246, %v6422, 0
    %6429 = vmatpush.xpose.msra.mxu0 0.0
    %6430 = vmatpush.xpose.msra.mxu0 0.0
    %6431 = vmatpush.xpose.msra.mxu0 0.0
    %6432 = vmatpush.xpose.msra.mxu0 0.0
    %6433 = vmatpush.xpose.msra.mxu0 0.0
    %6434 = vmatpush.xpose.msra.mxu0 0.0
    %6435 = vmatpush.xpose.msra.mxu0 0.0
    %6436 = vmatpush.xpose.msra.mxu0 0.0
    %6437 = vmatpush.xpose.msra.mxu0 0.0
    %6438 = vmatpush.xpose.msra.mxu0 0.0
    %6439 = vmatpush.xpose.msra.mxu0 0.0
    %6440 = vmatpush.xpose.msra.mxu0 0.0
    %6441 = vmatpush.xpose.msra.mxu0 0.0
    %6442 = vmatpush.xpose.msra.mxu0 0.0
    %6443 = vmatpush.xpose.msra.mxu0 %v6427
    %6444 = vmatpush.xpose.msra.mxu0 %v6425
    %6445 = vmatmul.f32.gmra.mxu0 %v6423
    %v6446 = vpop.f32.mrf.mxu0
    %v6447 = vadd.f32 0.0, %v6446
    %6448 = vdwg.mxu0
    %v6449 = vmul.f32 %v6447, 0.35355338
    %v6450 = vsel %vm280, %v6449, -inf
    %6451 = vmax.xlane.f32.xlu0 %v6450
    %v6452 = vpop.xlane.xlu0 %6451
    %v6453 = vsub.f32 %v6449, %v6452
    %v6454 = vmul.f32 %v6453, 1.442695
    %v6455 = vpow.pop %v6454
    %v6456 = vsel %vm280, %v6455, 0.0
    %6457 = vadd.xlane.f32.xlu0 %v6456
    %v6458 = vpop.xlane.xlu0 %6457
    %v6459 = vrcp.pop %v6458
    %v6460 = vmul.f32 %v6455, %v6459
    %6461 = vrot.lane.b32.xlu0 %v6153, 88
    %v6462 = vpop.permute.xlu0 %6461
    %6463 = vrot.lane.b32.xlu0 %v6156, 88
    %v6464 = vpop.permute.xlu0 %6463
    %v6468 = vsel %vm280, %v6460, 0
    %6470 = vmatpush.msra.mxu0 0.0
    %6471 = vmatpush.msra.mxu0 0.0
    %6472 = vmatpush.msra.mxu0 0.0
    %6473 = vmatpush.msra.mxu0 0.0
    %6474 = vmatpush.msra.mxu0 0.0
    %6475 = vmatpush.msra.mxu0 0.0
    %6476 = vmatpush.msra.mxu0 0.0
    %6477 = vmatpush.msra.mxu0 0.0
    %6478 = vmatpush.msra.mxu0 0.0
    %6479 = vmatpush.msra.mxu0 0.0
    %6480 = vmatpush.msra.mxu0 0.0
    %6481 = vmatpush.msra.mxu0 0.0
    %6482 = vmatpush.msra.mxu0 0.0
    %6483 = vmatpush.msra.mxu0 0.0
    %6484 = vmatpush.msra.mxu0 %v6464
    %6485 = vmatpush.msra.mxu0 %v6462
    %6486 = vmatmul.f32.gmra.mxu0 %v6468
    %v6487 = vpop.f32.mrf.mxu0
    %v6488 = vadd.f32 0.0, %v6487
    %6489 = vdwg.mxu0
    %v6491 = vsel %vm246, %v6488, 0
    %6493 = vmatpush.msra.mxu0 0.0
    %6494 = vmatpush.msra.mxu0 0.0
    %6495 = vmatpush.msra.mxu0 0.0
    %6496 = vmatpush.msra.mxu0 0.0
    %6497 = vmatpush.msra.mxu0 0.0
    %6498 = vmatpush.msra.mxu0 0.0
    %6499 = vmatpush.msra.mxu0 0.0
    %6500 = vmatpush.msra.mxu0 0.0
    %6501 = vmatpush.msra.mxu0 0.0
    %6502 = vmatpush.msra.mxu0 0.0
    %6503 = vmatpush.msra.mxu0 0.0
    %6504 = vmatpush.msra.mxu0 0.0
    %6505 = vmatpush.msra.mxu0 0.0
    %6506 = vmatpush.msra.mxu0 0.0
    %6507 = vmatpush.msra.mxu0 0.0
    %6508 = vmatpush.msra.mxu0 %v6081
    %6509 = vmatmul.f32.gmra.mxu0 %v6491
    %v6510 = vpop.f32.mrf.mxu0
    %v6511 = vadd.f32 0.0, %v6510
    %6512 = vdwg.mxu0
    %v6514 = vsel %vm246, %v6296, 0
    %6516 = vmatpush.msra.mxu0 0.0
    %6517 = vmatpush.msra.mxu0 0.0
    %6518 = vmatpush.msra.mxu0 0.0
    %6519 = vmatpush.msra.mxu0 0.0
    %6520 = vmatpush.msra.mxu0 0.0
    %6521 = vmatpush.msra.mxu0 0.0
    %6522 = vmatpush.msra.mxu0 0.0
    %6523 = vmatpush.msra.mxu0 0.0
    %6524 = vmatpush.msra.mxu0 0.0
    %6525 = vmatpush.msra.mxu0 0.0
    %6526 = vmatpush.msra.mxu0 0.0
    %6527 = vmatpush.msra.mxu0 0.0
    %6528 = vmatpush.msra.mxu0 0.0
    %6529 = vmatpush.msra.mxu0 0.0
    %6530 = vmatpush.msra.mxu0 0.0
    %6531 = vmatpush.msra.mxu0 %v6080
    %6532 = vmatmul.f32.gmra.mxu0 %v6514
    %v6533 = vpop.f32.mrf.mxu0
    %v6534 = vadd.f32 %v6511, %v6533
    %6535 = vdwg.mxu0
    %6536 = vrot.lane.b32.xlu0 %v6108, 112
    %v6537 = vpop.permute.xlu0 %6536
    %6538 = vrot.lane.b32.xlu0 %v6147, 112
    %v6539 = vpop.permute.xlu0 %6538
    %6540 = vrot.lane.b32.xlu0 %v6150, 112
    %v6541 = vpop.permute.xlu0 %6540
    %v6542 = vsel %vm246, %v6537, 0
    %v6544 = vsel %vm246, %v6539, 0
    %v6546 = vsel %vm246, %v6541, 0
    %6548 = vmatpush.xpose.msra.mxu0 0.0
    %6549 = vmatpush.xpose.msra.mxu0 0.0
    %6550 = vmatpush.xpose.msra.mxu0 0.0
    %6551 = vmatpush.xpose.msra.mxu0 0.0
    %6552 = vmatpush.xpose.msra.mxu0 0.0
    %6553 = vmatpush.xpose.msra.mxu0 0.0
    %6554 = vmatpush.xpose.msra.mxu0 0.0
    %6555 = vmatpush.xpose.msra.mxu0 0.0
    %6556 = vmatpush.xpose.msra.mxu0 0.0
    %6557 = vmatpush.xpose.msra.mxu0 0.0
    %6558 = vmatpush.xpose.msra.mxu0 0.0
    %6559 = vmatpush.xpose.msra.mxu0 0.0
    %6560 = vmatpush.xpose.msra.mxu0 0.0
    %6561 = vmatpush.xpose.msra.mxu0 0.0
    %6562 = vmatpush.xpose.msra.mxu0 %v6546
    %6563 = vmatpush.xpose.msra.mxu0 %v6544
    %6564 = vmatmul.f32.gmra.mxu0 %v6542
    %v6565 = vpop.f32.mrf.mxu0
    %v6566 = vadd.f32 0.0, %v6565
    %6567 = vdwg.mxu0
    %v6568 = vmul.f32 %v6566, 0.35355338
    %v6569 = vsel %vm280, %v6568, -inf
    %6570 = vmax.xlane.f32.xlu0 %v6569
    %v6571 = vpop.xlane.xlu0 %6570
    %v6572 = vsub.f32 %v6568, %v6571
    %v6573 = vmul.f32 %v6572, 1.442695
    %v6574 = vpow.pop %v6573
    %v6575 = vsel %vm280, %v6574, 0.0
    %6576 = vadd.xlane.f32.xlu0 %v6575
    %v6577 = vpop.xlane.xlu0 %6576
    %v6578 = vrcp.pop %v6577
    %v6579 = vmul.f32 %v6574, %v6578
    %6580 = vrot.lane.b32.xlu0 %v6147, 80
    %v6581 = vpop.permute.xlu0 %6580
    %6582 = vrot.lane.b32.xlu0 %v6150, 80
    %v6583 = vpop.permute.xlu0 %6582
    %v6587 = vsel %vm280, %v6579, 0
    %6589 = vmatpush.msra.mxu0 0.0
    %6590 = vmatpush.msra.mxu0 0.0
    %6591 = vmatpush.msra.mxu0 0.0
    %6592 = vmatpush.msra.mxu0 0.0
    %6593 = vmatpush.msra.mxu0 0.0
    %6594 = vmatpush.msra.mxu0 0.0
    %6595 = vmatpush.msra.mxu0 0.0
    %6596 = vmatpush.msra.mxu0 0.0
    %6597 = vmatpush.msra.mxu0 0.0
    %6598 = vmatpush.msra.mxu0 0.0
    %6599 = vmatpush.msra.mxu0 0.0
    %6600 = vmatpush.msra.mxu0 0.0
    %6601 = vmatpush.msra.mxu0 0.0
    %6602 = vmatpush.msra.mxu0 0.0
    %6603 = vmatpush.msra.mxu0 %v6583
    %6604 = vmatpush.msra.mxu0 %v6581
    %6605 = vmatmul.f32.gmra.mxu0 %v6587
    %v6606 = vpop.f32.mrf.mxu0
    %v6607 = vadd.f32 0.0, %v6606
    %6608 = vdwg.mxu0
    %v6610 = vsel %vm246, %v6607, 0
    %6612 = vmatpush.msra.mxu0 0.0
    %6613 = vmatpush.msra.mxu0 0.0
    %6614 = vmatpush.msra.mxu0 0.0
    %6615 = vmatpush.msra.mxu0 0.0
    %6616 = vmatpush.msra.mxu0 0.0
    %6617 = vmatpush.msra.mxu0 0.0
    %6618 = vmatpush.msra.mxu0 0.0
    %6619 = vmatpush.msra.mxu0 0.0
    %6620 = vmatpush.msra.mxu0 0.0
    %6621 = vmatpush.msra.mxu0 0.0
    %6622 = vmatpush.msra.mxu0 0.0
    %6623 = vmatpush.msra.mxu0 0.0
    %6624 = vmatpush.msra.mxu0 0.0
    %6625 = vmatpush.msra.mxu0 0.0
    %6626 = vmatpush.msra.mxu0 0.0
    %6627 = vmatpush.msra.mxu0 %v6082
    %6628 = vmatmul.f32.gmra.mxu0 %v6610
    %v6629 = vpop.f32.mrf.mxu0
    %v6630 = vadd.f32 0.0, %v6629
    %6631 = vdwg.mxu0
    %v6632 = vadd.f32 %v6415, %v6630
    %6633 = vrot.lane.b32.xlu0 %v6111, 112
    %v6634 = vpop.permute.xlu0 %6633
    %6635 = vrot.lane.b32.xlu0 %v6153, 112
    %v6636 = vpop.permute.xlu0 %6635
    %6637 = vrot.lane.b32.xlu0 %v6156, 112
    %v6638 = vpop.permute.xlu0 %6637
    %v6639 = vsel %vm246, %v6634, 0
    %v6641 = vsel %vm246, %v6636, 0
    %v6643 = vsel %vm246, %v6638, 0
    %6645 = vmatpush.xpose.msra.mxu0 0.0
    %6646 = vmatpush.xpose.msra.mxu0 0.0
    %6647 = vmatpush.xpose.msra.mxu0 0.0
    %6648 = vmatpush.xpose.msra.mxu0 0.0
    %6649 = vmatpush.xpose.msra.mxu0 0.0
    %6650 = vmatpush.xpose.msra.mxu0 0.0
    %6651 = vmatpush.xpose.msra.mxu0 0.0
    %6652 = vmatpush.xpose.msra.mxu0 0.0
    %6653 = vmatpush.xpose.msra.mxu0 0.0
    %6654 = vmatpush.xpose.msra.mxu0 0.0
    %6655 = vmatpush.xpose.msra.mxu0 0.0
    %6656 = vmatpush.xpose.msra.mxu0 0.0
    %6657 = vmatpush.xpose.msra.mxu0 0.0
    %6658 = vmatpush.xpose.msra.mxu0 0.0
    %6659 = vmatpush.xpose.msra.mxu0 %v6643
    %6660 = vmatpush.xpose.msra.mxu0 %v6641
    %6661 = vmatmul.f32.gmra.mxu0 %v6639
    %v6662 = vpop.f32.mrf.mxu0
    %v6663 = vadd.f32 0.0, %v6662
    %6664 = vdwg.mxu0
    %v6665 = vmul.f32 %v6663, 0.35355338
    %v6666 = vsel %vm280, %v6665, -inf
    %6667 = vmax.xlane.f32.xlu0 %v6666
    %v6668 = vpop.xlane.xlu0 %6667
    %v6669 = vsub.f32 %v6665, %v6668
    %v6670 = vmul.f32 %v6669, 1.442695
    %v6671 = vpow.pop %v6670
    %v6672 = vsel %vm280, %v6671, 0.0
    %6673 = vadd.xlane.f32.xlu0 %v6672
    %v6674 = vpop.xlane.xlu0 %6673
    %v6675 = vrcp.pop %v6674
    %v6676 = vmul.f32 %v6671, %v6675
    %6677 = vrot.lane.b32.xlu0 %v6153, 80
    %v6678 = vpop.permute.xlu0 %6677
    %6679 = vrot.lane.b32.xlu0 %v6156, 80
    %v6680 = vpop.permute.xlu0 %6679
    %v6684 = vsel %vm280, %v6676, 0
    %6686 = vmatpush.msra.mxu0 0.0
    %6687 = vmatpush.msra.mxu0 0.0
    %6688 = vmatpush.msra.mxu0 0.0
    %6689 = vmatpush.msra.mxu0 0.0
    %6690 = vmatpush.msra.mxu0 0.0
    %6691 = vmatpush.msra.mxu0 0.0
    %6692 = vmatpush.msra.mxu0 0.0
    %6693 = vmatpush.msra.mxu0 0.0
    %6694 = vmatpush.msra.mxu0 0.0
    %6695 = vmatpush.msra.mxu0 0.0
    %6696 = vmatpush.msra.mxu0 0.0
    %6697 = vmatpush.msra.mxu0 0.0
    %6698 = vmatpush.msra.mxu0 0.0
    %6699 = vmatpush.msra.mxu0 0.0
    %6700 = vmatpush.msra.mxu0 %v6680
    %6701 = vmatpush.msra.mxu0 %v6678
    %6702 = vmatmul.f32.gmra.mxu0 %v6684
    %v6703 = vpop.f32.mrf.mxu0
    %v6704 = vadd.f32 0.0, %v6703
    %6705 = vdwg.mxu0
    %v6707 = vsel %vm246, %v6704, 0
    %6709 = vmatpush.msra.mxu0 0.0
    %6710 = vmatpush.msra.mxu0 0.0
    %6711 = vmatpush.msra.mxu0 0.0
    %6712 = vmatpush.msra.mxu0 0.0
    %6713 = vmatpush.msra.mxu0 0.0
    %6714 = vmatpush.msra.mxu0 0.0
    %6715 = vmatpush.msra.mxu0 0.0
    %6716 = vmatpush.msra.mxu0 0.0
    %6717 = vmatpush.msra.mxu0 0.0
    %6718 = vmatpush.msra.mxu0 0.0
    %6719 = vmatpush.msra.mxu0 0.0
    %6720 = vmatpush.msra.mxu0 0.0
    %6721 = vmatpush.msra.mxu0 0.0
    %6722 = vmatpush.msra.mxu0 0.0
    %6723 = vmatpush.msra.mxu0 0.0
    %6724 = vmatpush.msra.mxu0 %v6082
    %6725 = vmatmul.f32.gmra.mxu0 %v6707
    %v6726 = vpop.f32.mrf.mxu0
    %v6727 = vadd.f32 0.0, %v6726
    %6728 = vdwg.mxu0
    %v6729 = vadd.f32 %v6534, %v6727
    %6730 = vrot.lane.b32.xlu0 %v6108, 104
    %v6731 = vpop.permute.xlu0 %6730
    %6732 = vrot.lane.b32.xlu0 %v6147, 104
    %v6733 = vpop.permute.xlu0 %6732
    %6734 = vrot.lane.b32.xlu0 %v6150, 104
    %v6735 = vpop.permute.xlu0 %6734
    %v6736 = vsel %vm246, %v6731, 0
    %v6738 = vsel %vm246, %v6733, 0
    %v6740 = vsel %vm246, %v6735, 0
    %6742 = vmatpush.xpose.msra.mxu0 0.0
    %6743 = vmatpush.xpose.msra.mxu0 0.0
    %6744 = vmatpush.xpose.msra.mxu0 0.0
    %6745 = vmatpush.xpose.msra.mxu0 0.0
    %6746 = vmatpush.xpose.msra.mxu0 0.0
    %6747 = vmatpush.xpose.msra.mxu0 0.0
    %6748 = vmatpush.xpose.msra.mxu0 0.0
    %6749 = vmatpush.xpose.msra.mxu0 0.0
    %6750 = vmatpush.xpose.msra.mxu0 0.0
    %6751 = vmatpush.xpose.msra.mxu0 0.0
    %6752 = vmatpush.xpose.msra.mxu0 0.0
    %6753 = vmatpush.xpose.msra.mxu0 0.0
    %6754 = vmatpush.xpose.msra.mxu0 0.0
    %6755 = vmatpush.xpose.msra.mxu0 0.0
    %6756 = vmatpush.xpose.msra.mxu0 %v6740
    %6757 = vmatpush.xpose.msra.mxu0 %v6738
    %6758 = vmatmul.f32.gmra.mxu0 %v6736
    %v6759 = vpop.f32.mrf.mxu0
    %v6760 = vadd.f32 0.0, %v6759
    %6761 = vdwg.mxu0
    %v6762 = vmul.f32 %v6760, 0.35355338
    %v6763 = vsel %vm280, %v6762, -inf
    %6764 = vmax.xlane.f32.xlu0 %v6763
    %v6765 = vpop.xlane.xlu0 %6764
    %v6766 = vsub.f32 %v6762, %v6765
    %v6767 = vmul.f32 %v6766, 1.442695
    %v6768 = vpow.pop %v6767
    %v6769 = vsel %vm280, %v6768, 0.0
    %6770 = vadd.xlane.f32.xlu0 %v6769
    %v6771 = vpop.xlane.xlu0 %6770
    %v6772 = vrcp.pop %v6771
    %v6773 = vmul.f32 %v6768, %v6772
    %6774 = vrot.lane.b32.xlu0 %v6147, 72
    %v6775 = vpop.permute.xlu0 %6774
    %6776 = vrot.lane.b32.xlu0 %v6150, 72
    %v6777 = vpop.permute.xlu0 %6776
    %v6781 = vsel %vm280, %v6773, 0
    %6783 = vmatpush.msra.mxu0 0.0
    %6784 = vmatpush.msra.mxu0 0.0
    %6785 = vmatpush.msra.mxu0 0.0
    %6786 = vmatpush.msra.mxu0 0.0
    %6787 = vmatpush.msra.mxu0 0.0
    %6788 = vmatpush.msra.mxu0 0.0
    %6789 = vmatpush.msra.mxu0 0.0
    %6790 = vmatpush.msra.mxu0 0.0
    %6791 = vmatpush.msra.mxu0 0.0
    %6792 = vmatpush.msra.mxu0 0.0
    %6793 = vmatpush.msra.mxu0 0.0
    %6794 = vmatpush.msra.mxu0 0.0
    %6795 = vmatpush.msra.mxu0 0.0
    %6796 = vmatpush.msra.mxu0 0.0
    %6797 = vmatpush.msra.mxu0 %v6777
    %6798 = vmatpush.msra.mxu0 %v6775
    %6799 = vmatmul.f32.gmra.mxu0 %v6781
    %v6800 = vpop.f32.mrf.mxu0
    %v6801 = vadd.f32 0.0, %v6800
    %6802 = vdwg.mxu0
    %v6804 = vsel %vm246, %v6801, 0
    %6806 = vmatpush.msra.mxu0 0.0
    %6807 = vmatpush.msra.mxu0 0.0
    %6808 = vmatpush.msra.mxu0 0.0
    %6809 = vmatpush.msra.mxu0 0.0
    %6810 = vmatpush.msra.mxu0 0.0
    %6811 = vmatpush.msra.mxu0 0.0
    %6812 = vmatpush.msra.mxu0 0.0
    %6813 = vmatpush.msra.mxu0 0.0
    %6814 = vmatpush.msra.mxu0 0.0
    %6815 = vmatpush.msra.mxu0 0.0
    %6816 = vmatpush.msra.mxu0 0.0
    %6817 = vmatpush.msra.mxu0 0.0
    %6818 = vmatpush.msra.mxu0 0.0
    %6819 = vmatpush.msra.mxu0 0.0
    %6820 = vmatpush.msra.mxu0 0.0
    %6821 = vmatpush.msra.mxu0 %v6083
    %6822 = vmatmul.f32.gmra.mxu0 %v6804
    %v6823 = vpop.f32.mrf.mxu0
    %v6824 = vadd.f32 0.0, %v6823
    %6825 = vdwg.mxu0
    %v6826 = vadd.f32 %v6632, %v6824
    %6827 = vrot.lane.b32.xlu0 %v6111, 104
    %v6828 = vpop.permute.xlu0 %6827
    %6829 = vrot.lane.b32.xlu0 %v6153, 104
    %v6830 = vpop.permute.xlu0 %6829
    %6831 = vrot.lane.b32.xlu0 %v6156, 104
    %v6832 = vpop.permute.xlu0 %6831
    %v6833 = vsel %vm246, %v6828, 0
    %v6835 = vsel %vm246, %v6830, 0
    %v6837 = vsel %vm246, %v6832, 0
    %6839 = vmatpush.xpose.msra.mxu0 0.0
    %6840 = vmatpush.xpose.msra.mxu0 0.0
    %6841 = vmatpush.xpose.msra.mxu0 0.0
    %6842 = vmatpush.xpose.msra.mxu0 0.0
    %6843 = vmatpush.xpose.msra.mxu0 0.0
    %6844 = vmatpush.xpose.msra.mxu0 0.0
    %6845 = vmatpush.xpose.msra.mxu0 0.0
    %6846 = vmatpush.xpose.msra.mxu0 0.0
    %6847 = vmatpush.xpose.msra.mxu0 0.0
    %6848 = vmatpush.xpose.msra.mxu0 0.0
    %6849 = vmatpush.xpose.msra.mxu0 0.0
    %6850 = vmatpush.xpose.msra.mxu0 0.0
    %6851 = vmatpush.xpose.msra.mxu0 0.0
    %6852 = vmatpush.xpose.msra.mxu0 0.0
    %6853 = vmatpush.xpose.msra.mxu0 %v6837
    %6854 = vmatpush.xpose.msra.mxu0 %v6835
    %6855 = vmatmul.f32.gmra.mxu0 %v6833
    %v6856 = vpop.f32.mrf.mxu0
    %v6857 = vadd.f32 0.0, %v6856
    %6858 = vdwg.mxu0
    %v6859 = vmul.f32 %v6857, 0.35355338
    %v6860 = vsel %vm280, %v6859, -inf
    %6861 = vmax.xlane.f32.xlu0 %v6860
    %v6862 = vpop.xlane.xlu0 %6861
    %v6863 = vsub.f32 %v6859, %v6862
    %v6864 = vmul.f32 %v6863, 1.442695
    %v6865 = vpow.pop %v6864
    %v6866 = vsel %vm280, %v6865, 0.0
    %6867 = vadd.xlane.f32.xlu0 %v6866
    %v6868 = vpop.xlane.xlu0 %6867
    %v6869 = vrcp.pop %v6868
    %v6870 = vmul.f32 %v6865, %v6869
    %6871 = vrot.lane.b32.xlu0 %v6153, 72
    %v6872 = vpop.permute.xlu0 %6871
    %6873 = vrot.lane.b32.xlu0 %v6156, 72
    %v6874 = vpop.permute.xlu0 %6873
    %v6878 = vsel %vm280, %v6870, 0
    %6880 = vmatpush.msra.mxu0 0.0
    %6881 = vmatpush.msra.mxu0 0.0
    %6882 = vmatpush.msra.mxu0 0.0
    %6883 = vmatpush.msra.mxu0 0.0
    %6884 = vmatpush.msra.mxu0 0.0
    %6885 = vmatpush.msra.mxu0 0.0
    %6886 = vmatpush.msra.mxu0 0.0
    %6887 = vmatpush.msra.mxu0 0.0
    %6888 = vmatpush.msra.mxu0 0.0
    %6889 = vmatpush.msra.mxu0 0.0
    %6890 = vmatpush.msra.mxu0 0.0
    %6891 = vmatpush.msra.mxu0 0.0
    %6892 = vmatpush.msra.mxu0 0.0
    %6893 = vmatpush.msra.mxu0 0.0
    %6894 = vmatpush.msra.mxu0 %v6874
    %6895 = vmatpush.msra.mxu0 %v6872
    %6896 = vmatmul.f32.gmra.mxu0 %v6878
    %v6897 = vpop.f32.mrf.mxu0
    %v6898 = vadd.f32 0.0, %v6897
    %6899 = vdwg.mxu0
    %v6901 = vsel %vm246, %v6898, 0
    %6903 = vmatpush.msra.mxu0 0.0
    %6904 = vmatpush.msra.mxu0 0.0
    %6905 = vmatpush.msra.mxu0 0.0
    %6906 = vmatpush.msra.mxu0 0.0
    %6907 = vmatpush.msra.mxu0 0.0
    %6908 = vmatpush.msra.mxu0 0.0
    %6909 = vmatpush.msra.mxu0 0.0
    %6910 = vmatpush.msra.mxu0 0.0
    %6911 = vmatpush.msra.mxu0 0.0
    %6912 = vmatpush.msra.mxu0 0.0
    %6913 = vmatpush.msra.mxu0 0.0
    %6914 = vmatpush.msra.mxu0 0.0
    %6915 = vmatpush.msra.mxu0 0.0
    %6916 = vmatpush.msra.mxu0 0.0
    %6917 = vmatpush.msra.mxu0 0.0
    %6918 = vmatpush.msra.mxu0 %v6083
    %6919 = vmatmul.f32.gmra.mxu0 %v6901
    %v6920 = vpop.f32.mrf.mxu0
    %v6921 = vadd.f32 0.0, %v6920
    %6922 = vdwg.mxu0
    %v6923 = vadd.f32 %v6729, %v6921
    %v6924 = vadd.f32 %v5990, %v6826
    %v6925 = vadd.f32 %v5991, %v6923
    %v6926 = vld [vmem:[%s2 + $0x370] sm:$0x1]
    %v6927 = vld [vmem:[%s2 + $0x378] sm:$0x1]
    %v6928 = vsel %vm21, %v6924, 0.0
    %6929 = vadd.xlane.f32.xlu0 %v6928
    %v6930 = vpop.xlane.xlu0 %6929
    %v6931 = vsel %vm21, %v6925, 0.0
    %6932 = vadd.xlane.f32.xlu0 %v6931
    %v6933 = vpop.xlane.xlu0 %6932
    %v6934 = vmul.f32 %v6930, %v40
    %v6935 = vmul.f32 %v6933, %v40
    %v6936 = vsub.f32 %v6924, %v6934
    %v6937 = vsub.f32 %v6925, %v6935
    %v6938 = vmul.f32 %v6936, %v6936
    %v6939 = vmul.f32 %v6937, %v6937
    %v6940 = vsel %vm21, %v6938, 0.0
    %6941 = vadd.xlane.f32.xlu0 %v6940
    %v6942 = vpop.xlane.xlu0 %6941
    %v6943 = vsel %vm21, %v6939, 0.0
    %6944 = vadd.xlane.f32.xlu0 %v6943
    %v6945 = vpop.xlane.xlu0 %6944
    %v6946 = vmul.f32 %v6942, 0.032258064
    %v6947 = vmul.f32 %v6945, 0.032258064
    %v6948 = vrsqrt.pop %v6946
    %v6949 = vmul.f32 %v6948, %v6946
    %v6950 = vmul.f32 %v6949, %v6948
    %v6951 = vmul.f32 0.5, %v6950
    %v6952 = vsub.f32 1.5, %v6951
    %v6953 = vmul.f32 %v6948, %v6952
    %v6954 = vmul.f32 %v6946, %v6953
    %vm6955 = vcmp.eq.f32.partialorder %v6946, inf
    %v6956 = vsel %vm6955, %v6946, %v6954
    %vm6957 = vcmp.eq.f32.partialorder %v6946, 0.0
    %v6958 = vand.u32 %v6946, 2147483648
    %v6959 = vsel %vm6957, %v6958, %v6956
    %v6960 = vrsqrt.pop %v6947
    %v6961 = vmul.f32 %v6960, %v6947
    %v6962 = vmul.f32 %v6961, %v6960
    %v6963 = vmul.f32 0.5, %v6962
    %v6964 = vsub.f32 1.5, %v6963
    %v6965 = vmul.f32 %v6960, %v6964
    %v6966 = vmul.f32 %v6947, %v6965
    %vm6967 = vcmp.eq.f32.partialorder %v6947, inf
    %v6968 = vsel %vm6967, %v6947, %v6966
    %vm6969 = vcmp.eq.f32.partialorder %v6947, 0.0
    %v6970 = vand.u32 %v6947, 2147483648
    %v6971 = vsel %vm6969, %v6970, %v6968
    %v6972 = vadd.f32 %v6959, 1e-05
    %v6973 = vadd.f32 %v6971, 1e-05
    %v6974 = vrcp.pop %v6972
    %v6975 = vmul.f32 %v6972, %v6974
    %v6976 = vsub.f32 1.0, %v6975
    %v6977 = vmul.f32 %v6974, %v6976
    %v6978 = vadd.f32 %v6974, %v6977
    %vm6979 = vweird.f32 %v6972
    %vm6980 = vweird.f32 %v6974
    %vm6981 = vmor %vm6979, %vm6980
    %v6982 = vsel %vm6981, %v6974, %v6978
    %v6983 = vand.u32 2147483647, %v6972
    %vm6984 = vcmp.eq.f32.partialorder %v6983, 8.507059e+37
    %v6985 = vand.u32 %v6972, 2147483648
    %v6986 = vor.u32 1.1754944e-38, %v6985
    %v6987 = vsel %vm6984, %v6986, %v6982
    %v6988 = vmul.f32 %v6936, %v6987
    %v6989 = vrcp.pop %v6973
    %v6990 = vmul.f32 %v6973, %v6989
    %v6991 = vsub.f32 1.0, %v6990
    %v6992 = vmul.f32 %v6989, %v6991
    %v6993 = vadd.f32 %v6989, %v6992
    %vm6994 = vweird.f32 %v6973
    %vm6995 = vweird.f32 %v6989
    %vm6996 = vmor %vm6994, %vm6995
    %v6997 = vsel %vm6996, %v6989, %v6993
    %v6998 = vand.u32 2147483647, %v6973
    %vm6999 = vcmp.eq.f32.partialorder %v6998, 8.507059e+37
    %v7000 = vand.u32 %v6973, 2147483648
    %v7001 = vor.u32 1.1754944e-38, %v7000
    %v7002 = vsel %vm6999, %v7001, %v6997
    %v7003 = vmul.f32 %v6937, %v7002
    %v7004 = vperm.slane %v6926, 0
    %v7005 = vmul.f32 %v7004, %v6988
    %v7006 = vmul.f32 %v7004, %v7003
    %v7007 = vperm.slane %v6927, 0
    %v7008 = vadd.f32 %v7005, %v7007
    %v7009 = vadd.f32 %v7006, %v7007
    %v7010 = vld [vmem:[%s2 + $0x380] sm:$0xff]
    %v7011 = vld [vmem:[%s2 + $0x388] sm:$0xff]
    %v7012 = vld [vmem:[%s2 + $0x390] sm:$0xff]
    %v7013 = vld [vmem:[%s2 + $0x398] sm:$0xff]
    %v7014 = vld [vmem:[%s2 + $0x3a0] sm:$0x1]
    %v7015 = vld [vmem:[%s2 + $0x3a8] sm:$0xff]
    %v7016 = vld [vmem:[%s2 + $0x3b0] sm:$0xff]
    %v7017 = vld [vmem:[%s2 + $0x3b8] sm:$0xff]
    %v7018 = vld [vmem:[%s2 + $0x3c0] sm:$0xff]
    %v7019 = vld [vmem:[%s2 + $0x3c8] sm:$0xff]
    %v7020 = vld [vmem:[%s2 + $0x3d0] sm:$0xff]
    %v7021 = vld [vmem:[%s2 + $0x3d8] sm:$0xff]
    %v7022 = vld [vmem:[%s2 + $0x3e0] sm:$0xff]
    %v7023 = vld [vmem:[%s2 + $0x3e8] sm:$0x1]
    %v7024 = vperm.slane %v7014, 0
    %v7026 = vsel %vm21, %v7008, 0
    %v7029 = vsel %vm21, %v7009, 0
    %7031 = vmatpush.msra.mxu0 0.0
    %7032 = vmatpush.msra.mxu0 0.0
    %7033 = vmatpush.msra.mxu0 0.0
    %7034 = vmatpush.msra.mxu0 0.0
    %7035 = vmatpush.msra.mxu0 0.0
    %7036 = vmatpush.msra.mxu0 0.0
    %7037 = vmatpush.msra.mxu0 0.0
    %7038 = vmatpush.msra.mxu0 0.0
    %7039 = vmatpush.msra.mxu0 0.0
    %7040 = vmatpush.msra.mxu0 0.0
    %7041 = vmatpush.msra.mxu0 0.0
    %7042 = vmatpush.msra.mxu0 0.0
    %7043 = vmatpush.msra.mxu0 %v7013
    %7044 = vmatpush.msra.mxu0 %v7012
    %7045 = vmatpush.msra.mxu0 %v7011
    %7046 = vmatpush.msra.mxu0 %v7010
    %7047 = vmatmul.f32.gmra.mxu0 %v7026
    %v7048 = vpop.f32.mrf.mxu0
    %v7049 = vadd.f32 %v7024, %v7048
    %7050 = vmatmul.f32.gmra.mxu0 %v7029
    %v7051 = vpop.f32.mrf.mxu0
    %v7052 = vadd.f32 %v7024, %v7051
    %7053 = vdwg.mxu0
    %v7054 = vmax.f32 %v7049, 0.0
    %v7055 = vmax.f32 %v7052, 0.0
    %v7056 = vperm.slane %v7023, 0
    %v7058 = vsel %vm1491, %v7054, 0
    %v7061 = vsel %vm1491, %v7055, 0
    %7063 = vmatpush.msra.mxu0 0.0
    %7064 = vmatpush.msra.mxu0 0.0
    %7065 = vmatpush.msra.mxu0 0.0
    %7066 = vmatpush.msra.mxu0 0.0
    %7067 = vmatpush.msra.mxu0 0.0
    %7068 = vmatpush.msra.mxu0 0.0
    %7069 = vmatpush.msra.mxu0 0.0
    %7070 = vmatpush.msra.mxu0 0.0
    %7071 = vmatpush.msra.mxu0 %v7022
    %7072 = vmatpush.msra.mxu0 %v7021
    %7073 = vmatpush.msra.mxu0 %v7020
    %7074 = vmatpush.msra.mxu0 %v7019
    %7075 = vmatpush.msra.mxu0 %v7018
    %7076 = vmatpush.msra.mxu0 %v7017
    %7077 = vmatpush.msra.mxu0 %v7016
    %7078 = vmatpush.msra.mxu0 %v7015
    %7079 = vmatmul.f32.gmra.mxu0 %v7058
    %v7080 = vpop.f32.mrf.mxu0
    %v7081 = vadd.f32 %v7056, %v7080
    %7082 = vmatmul.f32.gmra.mxu0 %v7061
    %v7083 = vpop.f32.mrf.mxu0
    %v7084 = vadd.f32 %v7056, %v7083
    %7085 = vdwg.mxu0
    %v7086 = vadd.f32 %v6924, %v7081
    %v7087 = vadd.f32 %v6925, %v7084
    %v7088 = vld [vmem:[%s2 + $0x3f0] sm:$0x1]
    %v7089 = vld [vmem:[%s2 + $0x3f8] sm:$0x1]
    %v7090 = vsel %vm21, %v7086, 0.0
    %7091 = vadd.xlane.f32.xlu0 %v7090
    %v7092 = vpop.xlane.xlu0 %7091
    %v7093 = vsel %vm21, %v7087, 0.0
    %7094 = vadd.xlane.f32.xlu0 %v7093
    %v7095 = vpop.xlane.xlu0 %7094
    %v7096 = vmul.f32 %v7092, %v40
    %v7097 = vmul.f32 %v7095, %v40
    %v7098 = vsub.f32 %v7086, %v7096
    %v7099 = vsub.f32 %v7087, %v7097
    %v7100 = vmul.f32 %v7098, %v7098
    %v7101 = vmul.f32 %v7099, %v7099
    %v7102 = vsel %vm21, %v7100, 0.0
    %7103 = vadd.xlane.f32.xlu0 %v7102
    %v7104 = vpop.xlane.xlu0 %7103
    %v7105 = vsel %vm21, %v7101, 0.0
    %7106 = vadd.xlane.f32.xlu0 %v7105
    %v7107 = vpop.xlane.xlu0 %7106
    %v7108 = vmul.f32 %v7104, 0.032258064
    %v7109 = vmul.f32 %v7107, 0.032258064
    %v7110 = vrsqrt.pop %v7108
    %v7111 = vmul.f32 %v7110, %v7108
    %v7112 = vmul.f32 %v7111, %v7110
    %v7113 = vmul.f32 0.5, %v7112
    %v7114 = vsub.f32 1.5, %v7113
    %v7115 = vmul.f32 %v7110, %v7114
    %v7116 = vmul.f32 %v7108, %v7115
    %vm7117 = vcmp.eq.f32.partialorder %v7108, inf
    %v7118 = vsel %vm7117, %v7108, %v7116
    %vm7119 = vcmp.eq.f32.partialorder %v7108, 0.0
    %v7120 = vand.u32 %v7108, 2147483648
    %v7121 = vsel %vm7119, %v7120, %v7118
    %v7122 = vrsqrt.pop %v7109
    %v7123 = vmul.f32 %v7122, %v7109
    %v7124 = vmul.f32 %v7123, %v7122
    %v7125 = vmul.f32 0.5, %v7124
    %v7126 = vsub.f32 1.5, %v7125
    %v7127 = vmul.f32 %v7122, %v7126
    %v7128 = vmul.f32 %v7109, %v7127
    %vm7129 = vcmp.eq.f32.partialorder %v7109, inf
    %v7130 = vsel %vm7129, %v7109, %v7128
    %vm7131 = vcmp.eq.f32.partialorder %v7109, 0.0
    %v7132 = vand.u32 %v7109, 2147483648
    %v7133 = vsel %vm7131, %v7132, %v7130
    %v7134 = vadd.f32 %v7121, 1e-05
    %v7135 = vadd.f32 %v7133, 1e-05
    %v7136 = vrcp.pop %v7134
    %v7137 = vmul.f32 %v7134, %v7136
    %v7138 = vsub.f32 1.0, %v7137
    %v7139 = vmul.f32 %v7136, %v7138
    %v7140 = vadd.f32 %v7136, %v7139
    %vm7141 = vweird.f32 %v7134
    %vm7142 = vweird.f32 %v7136
    %vm7143 = vmor %vm7141, %vm7142
    %v7144 = vsel %vm7143, %v7136, %v7140
    %v7145 = vand.u32 2147483647, %v7134
    %vm7146 = vcmp.eq.f32.partialorder %v7145, 8.507059e+37
    %v7147 = vand.u32 %v7134, 2147483648
    %v7148 = vor.u32 1.1754944e-38, %v7147
    %v7149 = vsel %vm7146, %v7148, %v7144
    %v7150 = vmul.f32 %v7098, %v7149
    %v7151 = vrcp.pop %v7135
    %v7152 = vmul.f32 %v7135, %v7151
    %v7153 = vsub.f32 1.0, %v7152
    %v7154 = vmul.f32 %v7151, %v7153
    %v7155 = vadd.f32 %v7151, %v7154
    %vm7156 = vweird.f32 %v7135
    %vm7157 = vweird.f32 %v7151
    %vm7158 = vmor %vm7156, %vm7157
    %v7159 = vsel %vm7158, %v7151, %v7155
    %v7160 = vand.u32 2147483647, %v7135
    %vm7161 = vcmp.eq.f32.partialorder %v7160, 8.507059e+37
    %v7162 = vand.u32 %v7135, 2147483648
    %v7163 = vor.u32 1.1754944e-38, %v7162
    %v7164 = vsel %vm7161, %v7163, %v7159
    %v7165 = vmul.f32 %v7099, %v7164
    %v7166 = vperm.slane %v7088, 0
    %v7167 = vmul.f32 %v7166, %v7150
    %v7168 = vmul.f32 %v7166, %v7165
    %v7169 = vperm.slane %v7089, 0
    %v7170 = vadd.f32 %v7167, %v7169
    %v7171 = vadd.f32 %v7168, %v7169
    %7172 = vst.msk [vmem:[#allocation2] sm:$0xff] %vm21, %v7170
    %7173 = vst.msk [vmem:[#allocation2 + $0x8] sm:$0xff] %vm21, %v7171
    // Predicated region
    $region14: #{transformer_forward.1} parent=1 // pred_check
      _
    $region15: #{transformer_forward.1} parent=1 // pred_check_branch
      %7175 = sbr.rel (0) target = $region17
    $region16: #{transformer_forward.1} parent=1 // pred_region
      %7177 = vsyncadd [#allocation3], 0
      %s7178 = sshll.u32 [#allocation2], 4
      %s7179 = int_to_ptr.vmem [resolvable:$true] %s7178
      %s7180 = sshll.u32 %s3, 4
      %s7181 = int_to_ptr.hbm [resolvable:$true] %s7180
      %7186 = dma.vmem_to_hbm [thread:$0]  %s7179, 256, %s7181, [#allocation3], 128, 128, 8
    $region17: #{transformer_forward.1} parent=1 // pred_fallthru
      _
    // Predicated region
    $region18: #{transformer_forward.1} parent=1 // pred_check
      _
    $region19: #{transformer_forward.1} parent=1 // pred_check_branch
      %7188 = sbr.rel (0) target = $region21
    $region20: #{transformer_forward.1} parent=1 // pred_region
      %7190 = dma.done [#allocation3], 256
    $region21: #{transformer_forward.1} parent=1 // pred_fallthru
      _
    %7191 = vsyncpa [#allocation3], 1

</llo_original>
